<compile_context>
chip_gen: v5e
topology: v5e:2x2
jax: 0.10.0
libtpu: 0.0.40
codegen_flags: <defaults>
</compile_context>

<pallas_src>
import functools
import math

import jax
import jax.numpy as jnp
from jax.experimental import pallas as pl
from jax.experimental.pallas import tpu as pltpu

NEG_SLOPE = 0.2
BN_EPS = 1e-5
LANE = 128


def _round_up(x, m):
    return (x + m - 1) // m * m


def _pick_lane_tile(dim, cap):
    """Largest multiple of 128 that divides `dim` (dim % 128 == 0) and is <= cap."""
    t = max(LANE, (min(cap, dim) // LANE) * LANE)
    while dim % t:
        t -= LANE
    return t


def _default_vmem_limit():
    try:
        cap = pltpu.get_tpu_info().vmem_capacity_bytes
        if cap >= 100 * 1024 * 1024:      # v5e / v6e (128 MiB)
            return 64 * 1024 * 1024
    except Exception:
        pass
    return 32 * 1024 * 1024               # safe everywhere (incl. 64-MiB v7x)


VMEM_LIMIT = _default_vmem_limit()


# ----------------------------- Pallas kernels ------------------------------ #
def _conv_kernel(x_ref, w_ref, *out_refs, keff, ho, wo, act, compute_stats):
    """Fused (im2col-free) valid conv for one (batch element, cout tile).

    x_ref : (1, ho+keff-1, wo+keff-1, cin_eff) bf16  pre-padded / s2d input window
    w_ref : (keff*keff, cin_eff, tn)           bf16  per-tap weight slab
    y_ref : (1, ho, wo, tn)                          conv output (opt. LeakyReLU)
    psum_ref / pssq_ref : (1, 1, tn) f32             per-channel partial sums
    """
    if compute_stats:
        y_ref, psum_ref, pssq_ref = out_refs
    else:
        (y_ref,) = out_refs
    cin = x_ref.shape[-1]
    tn = y_ref.shape[-1]

    acc = jnp.zeros((ho * wo, tn), jnp.float32)
    for t in range(keff * keff):                      # static tap loop -> MXU dots
        dh, dw = t // keff, t % keff
        xt = x_ref[:, dh:dh + ho, dw:dw + wo, :].reshape(ho * wo, cin)
        acc = acc + jnp.dot(xt, w_ref[t], preferred_element_type=jnp.float32)

    if compute_stats:
        # f32 partial sums (training-mode BatchNorm batch statistics);
        # reduced over the batch axis on the JAX side.
        psum_ref[...] = jnp.sum(acc, axis=0).reshape(1, 1, tn)
        pssq_ref[...] = jnp.sum(acc * acc, axis=0).reshape(1, 1, tn)
    if act:
        acc = jnp.where(acc > 0, acc, NEG_SLOPE * acc)
    y_ref[...] = acc.reshape(1, ho, wo, tn).astype(y_ref.dtype)


def _bn_act_kernel(y_ref, scale_ref, shift_ref, o_ref, *, act):
    """out = leaky_relu(y * scale + shift); bf16 in, f32 math, bf16 out."""
    y = y_ref[...].astype(jnp.float32)                # (1, ho, wo, tn)
    scale = scale_ref[...].reshape(1, 1, 1, -1)
    shift = shift_ref[...].reshape(1, 1, 1, -1)
    out = y * scale + shift
    if act:
        out = jnp.where(out > 0, out, NEG_SLOPE * out)
    o_ref[...] = out.astype(o_ref.dtype)


# ----------------------------- kernel wrappers ----------------------------- #
def conv_block(xin, w_km, *, keff, ho, wo, compute_stats, act, out_dtype, tn_cap=256):
    b, hin, win, cin_eff = xin.shape
    ktot, cin_w, cout_p = w_km.shape
    assert ktot == keff * keff and cin_w == cin_eff
    assert hin == ho + keff - 1 and win == wo + keff - 1
    tn = _pick_lane_tile(cout_p, tn_cap)
    nn = cout_p // tn

    kernel = functools.partial(_conv_kernel, keff=keff, ho=ho, wo=wo,
                               act=act, compute_stats=compute_stats)

    out_shape = [jax.ShapeDtypeStruct((b, ho, wo, cout_p), out_dtype)]
    out_specs = [pl.BlockSpec((1, ho, wo, tn), lambda bb, n: (bb, 0, 0, n))]
    if compute_stats:
        out_shape += [jax.ShapeDtypeStruct((b, 1, cout_p), jnp.float32)] * 2
        out_specs += [pl.BlockSpec((1, 1, tn), lambda bb, n: (bb, 0, n))] * 2

    grid_spec = pltpu.PrefetchScalarGridSpec(
        num_scalar_prefetch=0,
        grid=(b, nn),
        in_specs=[
            pl.BlockSpec((1, hin, win, cin_eff), lambda bb, n: (bb, 0, 0, 0)),
            pl.BlockSpec((keff * keff, cin_eff, tn), lambda bb, n: (0, 0, n)),
        ],
        out_specs=tuple(out_specs),
    )
    out = pl.pallas_call(
        kernel,
        out_shape=tuple(out_shape),
        grid_spec=grid_spec,
        compiler_params=pltpu.CompilerParams(
            dimension_semantics=("parallel", "parallel"),
            vmem_limit_bytes=VMEM_LIMIT),
    )(xin, w_km)
    if compute_stats:
        return out[0], out[1], out[2]
    return out[0]


def bn_act(y, scale, shift, *, act, out_dtype, tn_cap=512):
    b, ho, wo, cout_p = y.shape
    tn = _pick_lane_tile(cout_p, tn_cap)
    nn = cout_p // tn
    kernel = functools.partial(_bn_act_kernel, act=act)
    return pl.pallas_call(
        kernel,
        out_shape=jax.ShapeDtypeStruct((b, ho, wo, cout_p), out_dtype),
        grid_spec=pltpu.PrefetchScalarGridSpec(
            num_scalar_prefetch=0,
            grid=(b, nn),
            in_specs=[
                pl.BlockSpec((1, ho, wo, tn), lambda bb, n: (bb, 0, 0, n)),
                pl.BlockSpec((1, tn), lambda bb, n: (0, n)),
                pl.BlockSpec((1, tn), lambda bb, n: (0, n)),
            ],
            out_specs=pl.BlockSpec((1, ho, wo, tn), lambda bb, n: (bb, 0, 0, n)),
        ),
        compiler_params=pltpu.CompilerParams(
            dimension_semantics=("parallel", "parallel"),
            vmem_limit_bytes=VMEM_LIMIT),
    )(y, scale, shift)


# -------------------------------- JAX glue --------------------------------- #
def space_to_depth_pad(x, pad=1):
    """Pad spatially by `pad`, then 2x2 space-to-depth (channel order (r, c, cin)).
    A 4x4 stride-2 pad-1 conv on x == 2x2 stride-1 valid conv on this tensor."""
    b, h, w, c = x.shape
    xp = jnp.pad(x, ((0, 0), (pad, pad), (pad, pad), (0, 0)))
    hp, wp = h + 2 * pad, w + 2 * pad
    xs = xp.reshape(b, hp // 2, 2, wp // 2, 2, c)
    xs = xs.transpose(0, 1, 3, 2, 4, 5).reshape(b, hp // 2, wp // 2, 4 * c)
    return xs


def make_discriminator_params(conv_dim, img_size, key):
    """Synthetic parameters matching the PyTorch module shapes (bias=False)."""
    nlayers = int(math.log2(img_size)) - 2
    specs = [dict(cin=3, cout=conv_dim, stride=2, use_bn=False, use_act=True)]
    for i in range(nlayers):
        specs.append(dict(cin=conv_dim * 2 ** i, cout=conv_dim * 2 ** (i + 1),
                          stride=2, use_bn=True, use_act=True))
    specs.append(dict(cin=conv_dim * 2 ** nlayers, cout=1,
                      stride=1, use_bn=False, use_act=False))

    params = []
    cin_carry = 3          # channels physically present in the carried activation
    for s in specs:
        cin, cout, stride = s["cin"], s["cout"], s["stride"]
        key, wkey = jax.random.split(key)
        w = jax.random.normal(wkey, (cout, cin, 4, 4), jnp.float32) * 0.05
        cout_p = _round_up(cout, LANE)
        cin_p = cin_carry
        assert cin_p >= cin
        if stride == 2:
            # kh = 2*dh + r, kw = 2*dw + c; per-tap K layout: ((r*2+c)*cin_p + cin)
            w6 = w.reshape(cout, cin, 2, 2, 2, 2)          # (o, cin, dh, r, dw, c)
            w6 = jnp.transpose(w6, (2, 4, 3, 5, 1, 0))      # (dh, dw, r, c, cin, o)
            w6 = jnp.pad(w6, ((0, 0),) * 4 + ((0, cin_p - cin), (0, cout_p - cout)))
            w_km = w6.reshape(4, 4 * cin_p, cout_p).astype(jnp.bfloat16)
            keff = 2
        else:
            w4 = jnp.transpose(w, (2, 3, 1, 0))             # (kh, kw, cin, o)
            w4 = jnp.pad(w4, ((0, 0), (0, 0), (0, cin_p - cin), (0, cout_p - cout)))
            w_km = w4.reshape(16, cin_p, cout_p).astype(jnp.bfloat16)
            keff = 4
        params.append(dict(
            w=w_km, keff=keff, stride=stride,
            gamma=jnp.ones((cout_p,), jnp.float32),
            beta=jnp.zeros((cout_p,), jnp.float32),
            cout=cout, cout_p=cout_p,
            use_bn=s["use_bn"], use_act=s["use_act"],
        ))
        cin_carry = cout_p
    return params


def discriminator_forward(x_nchw, params):
    """x: (B, 3, H, W) NCHW f32 -> logits (B, 1) f32."""
    b = x_nchw.shape[0]
    x = jnp.transpose(x_nchw, (0, 2, 3, 1)).astype(jnp.bfloat16)   # NHWC bf16
    n_layers = len(params)
    for li, p in enumerate(params):
        is_last = li == n_layers - 1
        _, h, w, _ = x.shape
        if p["stride"] == 2:
            xin = space_to_depth_pad(x, pad=1)
            ho, wo = h // 2, w // 2
        else:
            xin = jnp.pad(x, ((0, 0), (1, 1), (1, 1), (0, 0)))
            ho, wo = h - 1, w - 1
        if p["use_bn"]:
            # Pass 1: fused conv + per-(batch, channel) partial sums; y in bf16.
            y, psum, pssq = conv_block(xin, p["w"], keff=p["keff"], ho=ho, wo=wo,
                                       compute_stats=True, act=False,
                                       out_dtype=jnp.bfloat16)
            m = b * ho * wo
            mean = jnp.sum(psum, axis=(0, 1)) / m
            # E[x^2]-E[x]^2 in f32 (clamped) — adequate at BN-scale activations.
            var = jnp.maximum(jnp.sum(pssq, axis=(0, 1)) / m - mean * mean, 0.0)
            scale = p["gamma"] * jax.lax.rsqrt(var + BN_EPS)
            shift = p["beta"] - mean * scale
            # Pass 2: normalize + LeakyReLU (bf16 in / bf16 out).
            x = bn_act(y, scale.reshape(1, -1), shift.reshape(1, -1),
                       act=p["use_act"], out_dtype=jnp.bfloat16)
        else:
            x = conv_block(xin, p["w"], keff=p["keff"], ho=ho, wo=wo,
                           compute_stats=False, act=p["use_act"],
                           out_dtype=jnp.float32 if is_last else jnp.bfloat16)
    # Final layer: (B, 1, 1, cout_p) f32; real logits are channel 0.
    return x[..., :params[-1]["cout"]].reshape(b, -1).astype(jnp.float32)


# ---------------------------------- main ------------------------------------ #
if __name__ == "__main__":
    CONV_DIM = 8
    IMG_SIZE = 16   # nlayers = 2: 16 -> 8 -> 4 -> 2, final 2 -> 1, logits (B, 1)
    BATCH = 2

    key = jax.random.PRNGKey(0)
    key, xkey = jax.random.split(key)
    x = jax.random.normal(xkey, (BATCH, 3, IMG_SIZE, IMG_SIZE), jnp.float32)

    params = make_discriminator_params(CONV_DIM, IMG_SIZE, key)

    fwd = jax.jit(functools.partial(discriminator_forward, params=params))
    logits = jax.block_until_ready(fwd(x))

    assert logits.shape == (BATCH, 1), logits.shape
    assert bool(jnp.all(jnp.isfinite(logits))), "non-finite logits"
    print("KERNEL_OK")
</pallas_src>

<mosaic_0001>
module attributes {stable_mosaic.version = 11 : i64} {
  func.func @_conv_kernel(%arg0: i32, %arg1: i32, %arg2: memref<1x9x9x12xbf16, #tpu.memory_space<vmem>>, %arg3: memref<4x12x128xbf16, #tpu.memory_space<vmem>>, %arg4: memref<1x8x8x128xbf16, #tpu.memory_space<vmem>>) attributes {dimension_semantics = [#tpu.dimension_semantics<parallel>, #tpu.dimension_semantics<parallel>], iteration_bounds = array<i64: 2, 1>, scalar_prefetch = 0 : i64, scratch_operands = 0 : i64, tpu.core_type = #tpu.core_type<tc>, window_params = [{transform_indices = @transform_0, window_bounds = array<i64: 1, 9, 9, 12>}, {transform_indices = @transform_1, window_bounds = array<i64: 4, 12, 128>}, {transform_indices = @transform_2, window_bounds = array<i64: 1, 8, 8, 128>}]} {
    %cst = arith.constant 0.000000e+00 : f32
    %0 = vector.broadcast %cst : f32 to vector<64x128xf32>
    %c0 = arith.constant 0 : index
    %c0_0 = arith.constant 0 : index
    %c0_1 = arith.constant 0 : index
    %c0_2 = arith.constant 0 : index
    %1 = vector.load %arg2[%c0, %c0_0, %c0_1, %c0_2] : memref<1x9x9x12xbf16, #tpu.memory_space<vmem>>, vector<1x8x8x12xbf16>
    %2 = vector.shape_cast %1 : vector<1x8x8x12xbf16> to vector<64x12xbf16>
    %c0_3 = arith.constant 0 : index
    %c0_4 = arith.constant 0 : index
    %c0_5 = arith.constant 0 : index
    %3 = vector.load %arg3[%c0_3, %c0_4, %c0_5] : memref<4x12x128xbf16, #tpu.memory_space<vmem>>, vector<1x12x128xbf16>
    %4 = vector.shape_cast %3 : vector<1x12x128xbf16> to vector<12x128xbf16>
    %cst_6 = arith.constant dense<0.000000e+00> : vector<64x128xf32>
    %5 = tpu.matmul %2, %4, %cst_6 {dimension_numbers = #tpu.dot_dimension_numbers<[1], [0], [0], [1], [0, 0, 1, 1], [], []>} : vector<64x12xbf16>, vector<12x128xbf16>, vector<64x128xf32> -> vector<64x128xf32>
    %6 = arith.addf %0, %5 : vector<64x128xf32>
    %c0_7 = arith.constant 0 : index
    %c0_8 = arith.constant 0 : index
    %c1 = arith.constant 1 : index
    %c0_9 = arith.constant 0 : index
    %7 = vector.load %arg2[%c0_7, %c0_8, %c1, %c0_9] : memref<1x9x9x12xbf16, #tpu.memory_space<vmem>>, vector<1x8x8x12xbf16>
    %8 = vector.shape_cast %7 : vector<1x8x8x12xbf16> to vector<64x12xbf16>
    %c1_10 = arith.constant 1 : index
    %c0_11 = arith.constant 0 : index
    %c0_12 = arith.constant 0 : index
    %9 = vector.load %arg3[%c1_10, %c0_11, %c0_12] : memref<4x12x128xbf16, #tpu.memory_space<vmem>>, vector<1x12x128xbf16>
    %10 = vector.shape_cast %9 : vector<1x12x128xbf16> to vector<12x128xbf16>
    %cst_13 = arith.constant dense<0.000000e+00> : vector<64x128xf32>
    %11 = tpu.matmul %8, %10, %cst_13 {dimension_numbers = #tpu.dot_dimension_numbers<[1], [0], [0], [1], [0, 0, 1, 1], [], []>} : vector<64x12xbf16>, vector<12x128xbf16>, vector<64x128xf32> -> vector<64x128xf32>
    %12 = arith.addf %6, %11 : vector<64x128xf32>
    %c0_14 = arith.constant 0 : index
    %c1_15 = arith.constant 1 : index
    %c0_16 = arith.constant 0 : index
    %c0_17 = arith.constant 0 : index
    %13 = vector.load %arg2[%c0_14, %c1_15, %c0_16, %c0_17] : memref<1x9x9x12xbf16, #tpu.memory_space<vmem>>, vector<1x8x8x12xbf16>
    %14 = vector.shape_cast %13 : vector<1x8x8x12xbf16> to vector<64x12xbf16>
    %c2 = arith.constant 2 : index
    %c0_18 = arith.constant 0 : index
    %c0_19 = arith.constant 0 : index
    %15 = vector.load %arg3[%c2, %c0_18, %c0_19] : memref<4x12x128xbf16, #tpu.memory_space<vmem>>, vector<1x12x128xbf16>
    %16 = vector.shape_cast %15 : vector<1x12x128xbf16> to vector<12x128xbf16>
    %cst_20 = arith.constant dense<0.000000e+00> : vector<64x128xf32>
    %17 = tpu.matmul %14, %16, %cst_20 {dimension_numbers = #tpu.dot_dimension_numbers<[1], [0], [0], [1], [0, 0, 1, 1], [], []>} : vector<64x12xbf16>, vector<12x128xbf16>, vector<64x128xf32> -> vector<64x128xf32>
    %18 = arith.addf %12, %17 : vector<64x128xf32>
    %c0_21 = arith.constant 0 : index
    %c1_22 = arith.constant 1 : index
    %c1_23 = arith.constant 1 : index
    %c0_24 = arith.constant 0 : index
    %19 = vector.load %arg2[%c0_21, %c1_22, %c1_23, %c0_24] : memref<1x9x9x12xbf16, #tpu.memory_space<vmem>>, vector<1x8x8x12xbf16>
    %20 = vector.shape_cast %19 : vector<1x8x8x12xbf16> to vector<64x12xbf16>
    %c3 = arith.constant 3 : index
    %c0_25 = arith.constant 0 : index
    %c0_26 = arith.constant 0 : index
    %21 = vector.load %arg3[%c3, %c0_25, %c0_26] : memref<4x12x128xbf16, #tpu.memory_space<vmem>>, vector<1x12x128xbf16>
    %22 = vector.shape_cast %21 : vector<1x12x128xbf16> to vector<12x128xbf16>
    %cst_27 = arith.constant dense<0.000000e+00> : vector<64x128xf32>
    %23 = tpu.matmul %20, %22, %cst_27 {dimension_numbers = #tpu.dot_dimension_numbers<[1], [0], [0], [1], [0, 0, 1, 1], [], []>} : vector<64x12xbf16>, vector<12x128xbf16>, vector<64x128xf32> -> vector<64x128xf32>
    %24 = arith.addf %18, %23 : vector<64x128xf32>
    %cst_28 = arith.constant 0.000000e+00 : f32
    %25 = vector.broadcast %cst_28 : f32 to vector<64x128xf32>
    %26 = arith.cmpf ogt, %24, %25 : vector<64x128xf32>
    %cst_29 = arith.constant 2.000000e-01 : f32
    %27 = vector.broadcast %cst_29 : f32 to vector<64x128xf32>
    %28 = arith.mulf %27, %24 : vector<64x128xf32>
    %29 = arith.select %26, %24, %28 : vector<64x128xi1>, vector<64x128xf32>
    %30 = vector.shape_cast %29 : vector<64x128xf32> to vector<1x8x8x128xf32>
    %31 = arith.truncf %30 : vector<1x8x8x128xf32> to vector<1x8x8x128xbf16>
    %c0_30 = arith.constant 0 : index
    %c0_31 = arith.constant 0 : index
    %c0_32 = arith.constant 0 : index
    %c0_33 = arith.constant 0 : index
    %32 = vector.load %arg4[%c0_30, %c0_31, %c0_32, %c0_33] : memref<1x8x8x128xbf16, #tpu.memory_space<vmem>>, vector<1x8x8x128xbf16>
    tpu.vector_store %arg4[%c0_30, %c0_31, %c0_32, %c0_33], %31 {strides = array<i32>} : memref<1x8x8x128xbf16, #tpu.memory_space<vmem>>, vector<1x8x8x128xbf16>,
    return
  }
  func.func @transform_0(%arg0: i32, %arg1: i32) -> (i32, i32, i32, i32) {
    %c0_i32 = arith.constant 0 : i32
    %c0_i32_0 = arith.constant 0 : i32
    %c0_i32_1 = arith.constant 0 : i32
    %c0_i32_2 = arith.constant 0 : i32
    return %arg0, %c0_i32, %c0_i32_0, %c0_i32_1 : i32, i32, i32, i32
  }
  func.func @transform_1(%arg0: i32, %arg1: i32) -> (i32, i32, i32) {
    %c0_i32 = arith.constant 0 : i32
    %c0_i32_0 = arith.constant 0 : i32
    %c0_i32_1 = arith.constant 0 : i32
    return %c0_i32, %c0_i32_0, %arg1 : i32, i32, i32
  }
  func.func @transform_2(%arg0: i32, %arg1: i32) -> (i32, i32, i32, i32) {
    %c0_i32 = arith.constant 0 : i32
    %c0_i32_0 = arith.constant 0 : i32
    %c0_i32_1 = arith.constant 0 : i32
    return %arg0, %c0_i32, %c0_i32_0, %arg1 : i32, i32, i32, i32
  }
}

module attributes {stable_mosaic.version = 11 : i64} {
  func.func @_bn_act_kernel(%arg0: i32, %arg1: i32, %arg2: memref<1x4x4x128xbf16, #tpu.memory_space<vmem>>, %arg3: memref<1x128xf32, #tpu.memory_space<vmem>>, %arg4: memref<1x128xf32, #tpu.memory_space<vmem>>, %arg5: memref<1x4x4x128xbf16, #tpu.memory_space<vmem>>) attributes {dimension_semantics = [#tpu.dimension_semantics<parallel>, #tpu.dimension_semantics<parallel>], iteration_bounds = array<i64: 2, 1>, scalar_prefetch = 0 : i64, scratch_operands = 0 : i64, tpu.core_type = #tpu.core_type<tc>, window_params = [{transform_indices = @transform_0, window_bounds = array<i64: 1, 4, 4, 128>}, {transform_indices = @transform_1, window_bounds = array<i64: 1, 128>}, {transform_indices = @transform_2, window_bounds = array<i64: 1, 128>}, {transform_indices = @transform_3, window_bounds = array<i64: 1, 4, 4, 128>}]} {
    %c0 = arith.constant 0 : index
    %c0_0 = arith.constant 0 : index
    %c0_1 = arith.constant 0 : index
    %c0_2 = arith.constant 0 : index
    %0 = vector.load %arg2[%c0, %c0_0, %c0_1, %c0_2] : memref<1x4x4x128xbf16, #tpu.memory_space<vmem>>, vector<1x4x4x128xbf16>
    %1 = arith.extf %0 : vector<1x4x4x128xbf16> to vector<1x4x4x128xf32>
    %c0_3 = arith.constant 0 : index
    %c0_4 = arith.constant 0 : index
    %2 = vector.load %arg3[%c0_3, %c0_4] : memref<1x128xf32, #tpu.memory_space<vmem>>, vector<1x128xf32>
    %3 = vector.shape_cast %2 : vector<1x128xf32> to vector<1x1x1x128xf32>
    %c0_5 = arith.constant 0 : index
    %c0_6 = arith.constant 0 : index
    %4 = vector.load %arg4[%c0_5, %c0_6] : memref<1x128xf32, #tpu.memory_space<vmem>>, vector<1x128xf32>
    %5 = vector.shape_cast %4 : vector<1x128xf32> to vector<1x1x1x128xf32>
    %6 = vector.broadcast %3 : vector<1x1x1x128xf32> to vector<1x4x4x128xf32>
    %7 = arith.mulf %1, %6 : vector<1x4x4x128xf32>
    %8 = vector.broadcast %5 : vector<1x1x1x128xf32> to vector<1x4x4x128xf32>
    %9 = arith.addf %7, %8 : vector<1x4x4x128xf32>
    %cst = arith.constant 0.000000e+00 : f32
    %10 = vector.broadcast %cst : f32 to vector<1x4x4x128xf32>
    %11 = arith.cmpf ogt, %9, %10 : vector<1x4x4x128xf32>
    %cst_7 = arith.constant 2.000000e-01 : f32
    %12 = vector.broadcast %cst_7 : f32 to vector<1x4x4x128xf32>
    %13 = arith.mulf %12, %9 : vector<1x4x4x128xf32>
    %14 = arith.select %11, %9, %13 : vector<1x4x4x128xi1>, vector<1x4x4x128xf32>
    %15 = arith.truncf %14 : vector<1x4x4x128xf32> to vector<1x4x4x128xbf16>
    %c0_8 = arith.constant 0 : index
    %c0_9 = arith.constant 0 : index
    %c0_10 = arith.constant 0 : index
    %c0_11 = arith.constant 0 : index
    %16 = vector.load %arg5[%c0_8, %c0_9, %c0_10, %c0_11] : memref<1x4x4x128xbf16, #tpu.memory_space<vmem>>, vector<1x4x4x128xbf16>
    tpu.vector_store %arg5[%c0_8, %c0_9, %c0_10, %c0_11], %15 {strides = array<i32>} : memref<1x4x4x128xbf16, #tpu.memory_space<vmem>>, vector<1x4x4x128xbf16>,
    return
  }
  func.func @transform_0(%arg0: i32, %arg1: i32) -> (i32, i32, i32, i32) {
    %c0_i32 = arith.constant 0 : i32
    %c0_i32_0 = arith.constant 0 : i32
    %c0_i32_1 = arith.constant 0 : i32
    return %arg0, %c0_i32, %c0_i32_0, %arg1 : i32, i32, i32, i32
  }
  func.func @transform_1(%arg0: i32, %arg1: i32) -> (i32, i32) {
    %c0_i32 = arith.constant 0 : i32
    %c0_i32_0 = arith.constant 0 : i32
    return %c0_i32, %arg1 : i32, i32
  }
  func.func @transform_2(%arg0: i32, %arg1: i32) -> (i32, i32) {
    %c0_i32 = arith.constant 0 : i32
    %c0_i32_0 = arith.constant 0 : i32
    return %c0_i32, %arg1 : i32, i32
  }
  func.func @transform_3(%arg0: i32, %arg1: i32) -> (i32, i32, i32, i32) {
    %c0_i32 = arith.constant 0 : i32
    %c0_i32_0 = arith.constant 0 : i32
    %c0_i32_1 = arith.constant 0 : i32
    return %arg0, %c0_i32, %c0_i32_0, %arg1 : i32, i32, i32, i32
  }
}

module attributes {stable_mosaic.version = 11 : i64} {
  func.func @_conv_kernel(%arg0: i32, %arg1: i32, %arg2: memref<1x5x5x512xbf16, #tpu.memory_space<vmem>>, %arg3: memref<4x512x128xbf16, #tpu.memory_space<vmem>>, %arg4: memref<1x4x4x128xbf16, #tpu.memory_space<vmem>>, %arg5: memref<1x1x128xf32, #tpu.memory_space<vmem>>, %arg6: memref<1x1x128xf32, #tpu.memory_space<vmem>>) attributes {dimension_semantics = [#tpu.dimension_semantics<parallel>, #tpu.dimension_semantics<parallel>], iteration_bounds = array<i64: 2, 1>, scalar_prefetch = 0 : i64, scratch_operands = 0 : i64, tpu.core_type = #tpu.core_type<tc>, window_params = [{transform_indices = @transform_0, window_bounds = array<i64: 1, 5, 5, 512>}, {transform_indices = @transform_1, window_bounds = array<i64: 4, 512, 128>}, {transform_indices = @transform_2, window_bounds = array<i64: 1, 4, 4, 128>}, {transform_indices = @transform_3, window_bounds = array<i64: 1, 1, 128>}, {transform_indices = @transform_4, window_bounds = array<i64: 1, 1, 128>}]} {
    %cst = arith.constant 0.000000e+00 : f32
    %0 = vector.broadcast %cst : f32 to vector<16x128xf32>
    %c0 = arith.constant 0 : index
    %c0_0 = arith.constant 0 : index
    %c0_1 = arith.constant 0 : index
    %c0_2 = arith.constant 0 : index
    %1 = vector.load %arg2[%c0, %c0_0, %c0_1, %c0_2] : memref<1x5x5x512xbf16, #tpu.memory_space<vmem>>, vector<1x4x4x512xbf16>
    %2 = vector.shape_cast %1 : vector<1x4x4x512xbf16> to vector<16x512xbf16>
    %c0_3 = arith.constant 0 : index
    %c0_4 = arith.constant 0 : index
    %c0_5 = arith.constant 0 : index
    %3 = vector.load %arg3[%c0_3, %c0_4, %c0_5] : memref<4x512x128xbf16, #tpu.memory_space<vmem>>, vector<1x512x128xbf16>
    %4 = vector.shape_cast %3 : vector<1x512x128xbf16> to vector<512x128xbf16>
    %cst_6 = arith.constant dense<0.000000e+00> : vector<16x128xf32>
    %5 = tpu.matmul %2, %4, %cst_6 {dimension_numbers = #tpu.dot_dimension_numbers<[1], [0], [0], [1], [0, 0, 1, 1], [], []>} : vector<16x512xbf16>, vector<512x128xbf16>, vector<16x128xf32> -> vector<16x128xf32>
    %6 = arith.addf %0, %5 : vector<16x128xf32>
    %c0_7 = arith.constant 0 : index
    %c0_8 = arith.constant 0 : index
    %c1 = arith.constant 1 : index
    %c0_9 = arith.constant 0 : index
    %7 = vector.load %arg2[%c0_7, %c0_8, %c1, %c0_9] : memref<1x5x5x512xbf16, #tpu.memory_space<vmem>>, vector<1x4x4x512xbf16>
    %8 = vector.shape_cast %7 : vector<1x4x4x512xbf16> to vector<16x512xbf16>
    %c1_10 = arith.constant 1 : index
    %c0_11 = arith.constant 0 : index
    %c0_12 = arith.constant 0 : index
    %9 = vector.load %arg3[%c1_10, %c0_11, %c0_12] : memref<4x512x128xbf16, #tpu.memory_space<vmem>>, vector<1x512x128xbf16>
    %10 = vector.shape_cast %9 : vector<1x512x128xbf16> to vector<512x128xbf16>
    %cst_13 = arith.constant dense<0.000000e+00> : vector<16x128xf32>
    %11 = tpu.matmul %8, %10, %cst_13 {dimension_numbers = #tpu.dot_dimension_numbers<[1], [0], [0], [1], [0, 0, 1, 1], [], []>} : vector<16x512xbf16>, vector<512x128xbf16>, vector<16x128xf32> -> vector<16x128xf32>
    %12 = arith.addf %6, %11 : vector<16x128xf32>
    %c0_14 = arith.constant 0 : index
    %c1_15 = arith.constant 1 : index
    %c0_16 = arith.constant 0 : index
    %c0_17 = arith.constant 0 : index
    %13 = vector.load %arg2[%c0_14, %c1_15, %c0_16, %c0_17] : memref<1x5x5x512xbf16, #tpu.memory_space<vmem>>, vector<1x4x4x512xbf16>
    %14 = vector.shape_cast %13 : vector<1x4x4x512xbf16> to vector<16x512xbf16>
    %c2 = arith.constant 2 : index
    %c0_18 = arith.constant 0 : index
    %c0_19 = arith.constant 0 : index
    %15 = vector.load %arg3[%c2, %c0_18, %c0_19] : memref<4x512x128xbf16, #tpu.memory_space<vmem>>, vector<1x512x128xbf16>
    %16 = vector.shape_cast %15 : vector<1x512x128xbf16> to vector<512x128xbf16>
    %cst_20 = arith.constant dense<0.000000e+00> : vector<16x128xf32>
    %17 = tpu.matmul %14, %16, %cst_20 {dimension_numbers = #tpu.dot_dimension_numbers<[1], [0], [0], [1], [0, 0, 1, 1], [], []>} : vector<16x512xbf16>, vector<512x128xbf16>, vector<16x128xf32> -> vector<16x128xf32>
    %18 = arith.addf %12, %17 : vector<16x128xf32>
    %c0_21 = arith.constant 0 : index
    %c1_22 = arith.constant 1 : index
    %c1_23 = arith.constant 1 : index
    %c0_24 = arith.constant 0 : index
    %19 = vector.load %arg2[%c0_21, %c1_22, %c1_23, %c0_24] : memref<1x5x5x512xbf16, #tpu.memory_space<vmem>>, vector<1x4x4x512xbf16>
    %20 = vector.shape_cast %19 : vector<1x4x4x512xbf16> to vector<16x512xbf16>
    %c3 = arith.constant 3 : index
    %c0_25 = arith.constant 0 : index
    %c0_26 = arith.constant 0 : index
    %21 = vector.load %arg3[%c3, %c0_25, %c0_26] : memref<4x512x128xbf16, #tpu.memory_space<vmem>>, vector<1x512x128xbf16>
    %22 = vector.shape_cast %21 : vector<1x512x128xbf16> to vector<512x128xbf16>
    %cst_27 = arith.constant dense<0.000000e+00> : vector<16x128xf32>
    %23 = tpu.matmul %20, %22, %cst_27 {dimension_numbers = #tpu.dot_dimension_numbers<[1], [0], [0], [1], [0, 0, 1, 1], [], []>} : vector<16x512xbf16>, vector<512x128xbf16>, vector<16x128xf32> -> vector<16x128xf32>
    %24 = arith.addf %18, %23 : vector<16x128xf32>
    %cst_28 = arith.constant dense<0.000000e+00> : vector<128xf32>
    %25 = vector.multi_reduction <add>, %24, %cst_28 [0] : vector<16x128xf32> to vector<128xf32>
    %26 = vector.shape_cast %25 : vector<128xf32> to vector<1x1x128xf32>
    %c0_29 = arith.constant 0 : index
    %c0_30 = arith.constant 0 : index
    %c0_31 = arith.constant 0 : index
    %27 = vector.load %arg5[%c0_29, %c0_30, %c0_31] : memref<1x1x128xf32, #tpu.memory_space<vmem>>, vector<1x1x128xf32>
    tpu.vector_store %arg5[%c0_29, %c0_30, %c0_31], %26 {strides = array<i32>} : memref<1x1x128xf32, #tpu.memory_space<vmem>>, vector<1x1x128xf32>,
    %28 = arith.mulf %24, %24 : vector<16x128xf32>
    %cst_32 = arith.constant dense<0.000000e+00> : vector<128xf32>
    %29 = vector.multi_reduction <add>, %28, %cst_32 [0] : vector<16x128xf32> to vector<128xf32>
    %30 = vector.shape_cast %29 : vector<128xf32> to vector<1x1x128xf32>
    %c0_33 = arith.constant 0 : index
    %c0_34 = arith.constant 0 : index
    %c0_35 = arith.constant 0 : index
    %31 = vector.load %arg6[%c0_33, %c0_34, %c0_35] : memref<1x1x128xf32, #tpu.memory_space<vmem>>, vector<1x1x128xf32>
    tpu.vector_store %arg6[%c0_33, %c0_34, %c0_35], %30 {strides = array<i32>} : memref<1x1x128xf32, #tpu.memory_space<vmem>>, vector<1x1x128xf32>,
    %32 = vector.shape_cast %24 : vector<16x128xf32> to vector<1x4x4x128xf32>
    %33 = arith.truncf %32 : vector<1x4x4x128xf32> to vector<1x4x4x128xbf16>
    %c0_36 = arith.constant 0 : index
    %c0_37 = arith.constant 0 : index
    %c0_38 = arith.constant 0 : index
    %c0_39 = arith.constant 0 : index
    %34 = vector.load %arg4[%c0_36, %c0_37, %c0_38, %c0_39] : memref<1x4x4x128xbf16, #tpu.memory_space<vmem>>, vector<1x4x4x128xbf16>
    tpu.vector_store %arg4[%c0_36, %c0_37, %c0_38, %c0_39], %33 {strides = array<i32>} : memref<1x4x4x128xbf16, #tpu.memory_space<vmem>>, vector<1x4x4x128xbf16>,
    return
  }
  func.func @transform_0(%arg0: i32, %arg1: i32) -> (i32, i32, i32, i32) {
    %c0_i32 = arith.constant 0 : i32
    %c0_i32_0 = arith.constant 0 : i32
    %c0_i32_1 = arith.constant 0 : i32
    %c0_i32_2 = arith.constant 0 : i32
    return %arg0, %c0_i32, %c0_i32_0, %c0_i32_1 : i32, i32, i32, i32
  }
  func.func @transform_1(%arg0: i32, %arg1: i32) -> (i32, i32, i32) {
    %c0_i32 = arith.constant 0 : i32
    %c0_i32_0 = arith.constant 0 : i32
    %c0_i32_1 = arith.constant 0 : i32
    return %c0_i32, %c0_i32_0, %arg1 : i32, i32, i32
  }
  func.func @transform_2(%arg0: i32, %arg1: i32) -> (i32, i32, i32, i32) {
    %c0_i32 = arith.constant 0 : i32
    %c0_i32_0 = arith.constant 0 : i32
    %c0_i32_1 = arith.constant 0 : i32
    return %arg0, %c0_i32, %c0_i32_0, %arg1 : i32, i32, i32, i32
  }
  func.func @transform_3(%arg0: i32, %arg1: i32) -> (i32, i32, i32) {
    %c0_i32 = arith.constant 0 : i32
    %c0_i32_0 = arith.constant 0 : i32
    return %arg0, %c0_i32, %arg1 : i32, i32, i32
  }
  func.func @transform_4(%arg0: i32, %arg1: i32) -> (i32, i32, i32) {
    %c0_i32 = arith.constant 0 : i32
    %c0_i32_0 = arith.constant 0 : i32
    return %arg0, %c0_i32, %arg1 : i32, i32, i32
  }
}

module attributes {stable_mosaic.version = 11 : i64} {
  func.func @_conv_kernel(%arg0: i32, %arg1: i32, %arg2: memref<1x3x3x512xbf16, #tpu.memory_space<vmem>>, %arg3: memref<4x512x128xbf16, #tpu.memory_space<vmem>>, %arg4: memref<1x2x2x128xbf16, #tpu.memory_space<vmem>>, %arg5: memref<1x1x128xf32, #tpu.memory_space<vmem>>, %arg6: memref<1x1x128xf32, #tpu.memory_space<vmem>>) attributes {dimension_semantics = [#tpu.dimension_semantics<parallel>, #tpu.dimension_semantics<parallel>], iteration_bounds = array<i64: 2, 1>, scalar_prefetch = 0 : i64, scratch_operands = 0 : i64, tpu.core_type = #tpu.core_type<tc>, window_params = [{transform_indices = @transform_0, window_bounds = array<i64: 1, 3, 3, 512>}, {transform_indices = @transform_1, window_bounds = array<i64: 4, 512, 128>}, {transform_indices = @transform_2, window_bounds = array<i64: 1, 2, 2, 128>}, {transform_indices = @transform_3, window_bounds = array<i64: 1, 1, 128>}, {transform_indices = @transform_4, window_bounds = array<i64: 1, 1, 128>}]} {
    %cst = arith.constant 0.000000e+00 : f32
    %0 = vector.broadcast %cst : f32 to vector<4x128xf32>
    %c0 = arith.constant 0 : index
    %c0_0 = arith.constant 0 : index
    %c0_1 = arith.constant 0 : index
    %c0_2 = arith.constant 0 : index
    %1 = vector.load %arg2[%c0, %c0_0, %c0_1, %c0_2] : memref<1x3x3x512xbf16, #tpu.memory_space<vmem>>, vector<1x2x2x512xbf16>
    %2 = vector.shape_cast %1 : vector<1x2x2x512xbf16> to vector<4x512xbf16>
    %c0_3 = arith.constant 0 : index
    %c0_4 = arith.constant 0 : index
    %c0_5 = arith.constant 0 : index
    %3 = vector.load %arg3[%c0_3, %c0_4, %c0_5] : memref<4x512x128xbf16, #tpu.memory_space<vmem>>, vector<1x512x128xbf16>
    %4 = vector.shape_cast %3 : vector<1x512x128xbf16> to vector<512x128xbf16>
    %cst_6 = arith.constant dense<0.000000e+00> : vector<4x128xf32>
    %5 = tpu.matmul %2, %4, %cst_6 {dimension_numbers = #tpu.dot_dimension_numbers<[1], [0], [0], [1], [0, 0, 1, 1], [], []>} : vector<4x512xbf16>, vector<512x128xbf16>, vector<4x128xf32> -> vector<4x128xf32>
    %6 = arith.addf %0, %5 : vector<4x128xf32>
    %c0_7 = arith.constant 0 : index
    %c0_8 = arith.constant 0 : index
    %c1 = arith.constant 1 : index
    %c0_9 = arith.constant 0 : index
    %7 = vector.load %arg2[%c0_7, %c0_8, %c1, %c0_9] : memref<1x3x3x512xbf16, #tpu.memory_space<vmem>>, vector<1x2x2x512xbf16>
    %8 = vector.shape_cast %7 : vector<1x2x2x512xbf16> to vector<4x512xbf16>
    %c1_10 = arith.constant 1 : index
    %c0_11 = arith.constant 0 : index
    %c0_12 = arith.constant 0 : index
    %9 = vector.load %arg3[%c1_10, %c0_11, %c0_12] : memref<4x512x128xbf16, #tpu.memory_space<vmem>>, vector<1x512x128xbf16>
    %10 = vector.shape_cast %9 : vector<1x512x128xbf16> to vector<512x128xbf16>
    %cst_13 = arith.constant dense<0.000000e+00> : vector<4x128xf32>
    %11 = tpu.matmul %8, %10, %cst_13 {dimension_numbers = #tpu.dot_dimension_numbers<[1], [0], [0], [1], [0, 0, 1, 1], [], []>} : vector<4x512xbf16>, vector<512x128xbf16>, vector<4x128xf32> -> vector<4x128xf32>
    %12 = arith.addf %6, %11 : vector<4x128xf32>
    %c0_14 = arith.constant 0 : index
    %c1_15 = arith.constant 1 : index
    %c0_16 = arith.constant 0 : index
    %c0_17 = arith.constant 0 : index
    %13 = vector.load %arg2[%c0_14, %c1_15, %c0_16, %c0_17] : memref<1x3x3x512xbf16, #tpu.memory_space<vmem>>, vector<1x2x2x512xbf16>
    %14 = vector.shape_cast %13 : vector<1x2x2x512xbf16> to vector<4x512xbf16>
    %c2 = arith.constant 2 : index
    %c0_18 = arith.constant 0 : index
    %c0_19 = arith.constant 0 : index
    %15 = vector.load %arg3[%c2, %c0_18, %c0_19] : memref<4x512x128xbf16, #tpu.memory_space<vmem>>, vector<1x512x128xbf16>
    %16 = vector.shape_cast %15 : vector<1x512x128xbf16> to vector<512x128xbf16>
    %cst_20 = arith.constant dense<0.000000e+00> : vector<4x128xf32>
    %17 = tpu.matmul %14, %16, %cst_20 {dimension_numbers = #tpu.dot_dimension_numbers<[1], [0], [0], [1], [0, 0, 1, 1], [], []>} : vector<4x512xbf16>, vector<512x128xbf16>, vector<4x128xf32> -> vector<4x128xf32>
    %18 = arith.addf %12, %17 : vector<4x128xf32>
    %c0_21 = arith.constant 0 : index
    %c1_22 = arith.constant 1 : index
    %c1_23 = arith.constant 1 : index
    %c0_24 = arith.constant 0 : index
    %19 = vector.load %arg2[%c0_21, %c1_22, %c1_23, %c0_24] : memref<1x3x3x512xbf16, #tpu.memory_space<vmem>>, vector<1x2x2x512xbf16>
    %20 = vector.shape_cast %19 : vector<1x2x2x512xbf16> to vector<4x512xbf16>
    %c3 = arith.constant 3 : index
    %c0_25 = arith.constant 0 : index
    %c0_26 = arith.constant 0 : index
    %21 = vector.load %arg3[%c3, %c0_25, %c0_26] : memref<4x512x128xbf16, #tpu.memory_space<vmem>>, vector<1x512x128xbf16>
    %22 = vector.shape_cast %21 : vector<1x512x128xbf16> to vector<512x128xbf16>
    %cst_27 = arith.constant dense<0.000000e+00> : vector<4x128xf32>
    %23 = tpu.matmul %20, %22, %cst_27 {dimension_numbers = #tpu.dot_dimension_numbers<[1], [0], [0], [1], [0, 0, 1, 1], [], []>} : vector<4x512xbf16>, vector<512x128xbf16>, vector<4x128xf32> -> vector<4x128xf32>
    %24 = arith.addf %18, %23 : vector<4x128xf32>
    %cst_28 = arith.constant dense<0.000000e+00> : vector<128xf32>
    %25 = vector.multi_reduction <add>, %24, %cst_28 [0] : vector<4x128xf32> to vector<128xf32>
    %26 = vector.shape_cast %25 : vector<128xf32> to vector<1x1x128xf32>
    %c0_29 = arith.constant 0 : index
    %c0_30 = arith.constant 0 : index
    %c0_31 = arith.constant 0 : index
    %27 = vector.load %arg5[%c0_29, %c0_30, %c0_31] : memref<1x1x128xf32, #tpu.memory_space<vmem>>, vector<1x1x128xf32>
    tpu.vector_store %arg5[%c0_29, %c0_30, %c0_31], %26 {strides = array<i32>} : memref<1x1x128xf32, #tpu.memory_space<vmem>>, vector<1x1x128xf32>,
    %28 = arith.mulf %24, %24 : vector<4x128xf32>
    %cst_32 = arith.constant dense<0.000000e+00> : vector<128xf32>
    %29 = vector.multi_reduction <add>, %28, %cst_32 [0] : vector<4x128xf32> to vector<128xf32>
    %30 = vector.shape_cast %29 : vector<128xf32> to vector<1x1x128xf32>
    %c0_33 = arith.constant 0 : index
    %c0_34 = arith.constant 0 : index
    %c0_35 = arith.constant 0 : index
    %31 = vector.load %arg6[%c0_33, %c0_34, %c0_35] : memref<1x1x128xf32, #tpu.memory_space<vmem>>, vector<1x1x128xf32>
    tpu.vector_store %arg6[%c0_33, %c0_34, %c0_35], %30 {strides = array<i32>} : memref<1x1x128xf32, #tpu.memory_space<vmem>>, vector<1x1x128xf32>,
    %32 = vector.shape_cast %24 : vector<4x128xf32> to vector<1x2x2x128xf32>
    %33 = arith.truncf %32 : vector<1x2x2x128xf32> to vector<1x2x2x128xbf16>
    %c0_36 = arith.constant 0 : index
    %c0_37 = arith.constant 0 : index
    %c0_38 = arith.constant 0 : index
    %c0_39 = arith.constant 0 : index
    %34 = vector.load %arg4[%c0_36, %c0_37, %c0_38, %c0_39] : memref<1x2x2x128xbf16, #tpu.memory_space<vmem>>, vector<1x2x2x128xbf16>
    tpu.vector_store %arg4[%c0_36, %c0_37, %c0_38, %c0_39], %33 {strides = array<i32>} : memref<1x2x2x128xbf16, #tpu.memory_space<vmem>>, vector<1x2x2x128xbf16>,
    return
  }
  func.func @transform_0(%arg0: i32, %arg1: i32) -> (i32, i32, i32, i32) {
    %c0_i32 = arith.constant 0 : i32
    %c0_i32_0 = arith.constant 0 : i32
    %c0_i32_1 = arith.constant 0 : i32
    %c0_i32_2 = arith.constant 0 : i32
    return %arg0, %c0_i32, %c0_i32_0, %c0_i32_1 : i32, i32, i32, i32
  }
  func.func @transform_1(%arg0: i32, %arg1: i32) -> (i32, i32, i32) {
    %c0_i32 = arith.constant 0 : i32
    %c0_i32_0 = arith.constant 0 : i32
    %c0_i32_1 = arith.constant 0 : i32
    return %c0_i32, %c0_i32_0, %arg1 : i32, i32, i32
  }
  func.func @transform_2(%arg0: i32, %arg1: i32) -> (i32, i32, i32, i32) {
    %c0_i32 = arith.constant 0 : i32
    %c0_i32_0 = arith.constant 0 : i32
    %c0_i32_1 = arith.constant 0 : i32
    return %arg0, %c0_i32, %c0_i32_0, %arg1 : i32, i32, i32, i32
  }
  func.func @transform_3(%arg0: i32, %arg1: i32) -> (i32, i32, i32) {
    %c0_i32 = arith.constant 0 : i32
    %c0_i32_0 = arith.constant 0 : i32
    return %arg0, %c0_i32, %arg1 : i32, i32, i32
  }
  func.func @transform_4(%arg0: i32, %arg1: i32) -> (i32, i32, i32) {
    %c0_i32 = arith.constant 0 : i32
    %c0_i32_0 = arith.constant 0 : i32
    return %arg0, %c0_i32, %arg1 : i32, i32, i32
  }
}

module attributes {stable_mosaic.version = 11 : i64} {
  func.func @_bn_act_kernel(%arg0: i32, %arg1: i32, %arg2: memref<1x2x2x128xbf16, #tpu.memory_space<vmem>>, %arg3: memref<1x128xf32, #tpu.memory_space<vmem>>, %arg4: memref<1x128xf32, #tpu.memory_space<vmem>>, %arg5: memref<1x2x2x128xbf16, #tpu.memory_space<vmem>>) attributes {dimension_semantics = [#tpu.dimension_semantics<parallel>, #tpu.dimension_semantics<parallel>], iteration_bounds = array<i64: 2, 1>, scalar_prefetch = 0 : i64, scratch_operands = 0 : i64, tpu.core_type = #tpu.core_type<tc>, window_params = [{transform_indices = @transform_0, window_bounds = array<i64: 1, 2, 2, 128>}, {transform_indices = @transform_1, window_bounds = array<i64: 1, 128>}, {transform_indices = @transform_2, window_bounds = array<i64: 1, 128>}, {transform_indices = @transform_3, window_bounds = array<i64: 1, 2, 2, 128>}]} {
    %c0 = arith.constant 0 : index
    %c0_0 = arith.constant 0 : index
    %c0_1 = arith.constant 0 : index
    %c0_2 = arith.constant 0 : index
    %0 = vector.load %arg2[%c0, %c0_0, %c0_1, %c0_2] : memref<1x2x2x128xbf16, #tpu.memory_space<vmem>>, vector<1x2x2x128xbf16>
    %1 = arith.extf %0 : vector<1x2x2x128xbf16> to vector<1x2x2x128xf32>
    %c0_3 = arith.constant 0 : index
    %c0_4 = arith.constant 0 : index
    %2 = vector.load %arg3[%c0_3, %c0_4] : memref<1x128xf32, #tpu.memory_space<vmem>>, vector<1x128xf32>
    %3 = vector.shape_cast %2 : vector<1x128xf32> to vector<1x1x1x128xf32>
    %c0_5 = arith.constant 0 : index
    %c0_6 = arith.constant 0 : index
    %4 = vector.load %arg4[%c0_5, %c0_6] : memref<1x128xf32, #tpu.memory_space<vmem>>, vector<1x128xf32>
    %5 = vector.shape_cast %4 : vector<1x128xf32> to vector<1x1x1x128xf32>
    %6 = vector.broadcast %3 : vector<1x1x1x128xf32> to vector<1x2x2x128xf32>
    %7 = arith.mulf %1, %6 : vector<1x2x2x128xf32>
    %8 = vector.broadcast %5 : vector<1x1x1x128xf32> to vector<1x2x2x128xf32>
    %9 = arith.addf %7, %8 : vector<1x2x2x128xf32>
    %cst = arith.constant 0.000000e+00 : f32
    %10 = vector.broadcast %cst : f32 to vector<1x2x2x128xf32>
    %11 = arith.cmpf ogt, %9, %10 : vector<1x2x2x128xf32>
    %cst_7 = arith.constant 2.000000e-01 : f32
    %12 = vector.broadcast %cst_7 : f32 to vector<1x2x2x128xf32>
    %13 = arith.mulf %12, %9 : vector<1x2x2x128xf32>
    %14 = arith.select %11, %9, %13 : vector<1x2x2x128xi1>, vector<1x2x2x128xf32>
    %15 = arith.truncf %14 : vector<1x2x2x128xf32> to vector<1x2x2x128xbf16>
    %c0_8 = arith.constant 0 : index
    %c0_9 = arith.constant 0 : index
    %c0_10 = arith.constant 0 : index
    %c0_11 = arith.constant 0 : index
    %16 = vector.load %arg5[%c0_8, %c0_9, %c0_10, %c0_11] : memref<1x2x2x128xbf16, #tpu.memory_space<vmem>>, vector<1x2x2x128xbf16>
    tpu.vector_store %arg5[%c0_8, %c0_9, %c0_10, %c0_11], %15 {strides = array<i32>} : memref<1x2x2x128xbf16, #tpu.memory_space<vmem>>, vector<1x2x2x128xbf16>,
    return
  }
  func.func @transform_0(%arg0: i32, %arg1: i32) -> (i32, i32, i32, i32) {
    %c0_i32 = arith.constant 0 : i32
    %c0_i32_0 = arith.constant 0 : i32
    %c0_i32_1 = arith.constant 0 : i32
    return %arg0, %c0_i32, %c0_i32_0, %arg1 : i32, i32, i32, i32
  }
  func.func @transform_1(%arg0: i32, %arg1: i32) -> (i32, i32) {
    %c0_i32 = arith.constant 0 : i32
    %c0_i32_0 = arith.constant 0 : i32
    return %c0_i32, %arg1 : i32, i32
  }
  func.func @transform_2(%arg0: i32, %arg1: i32) -> (i32, i32) {
    %c0_i32 = arith.constant 0 : i32
    %c0_i32_0 = arith.constant 0 : i32
    return %c0_i32, %arg1 : i32, i32
  }
  func.func @transform_3(%arg0: i32, %arg1: i32) -> (i32, i32, i32, i32) {
    %c0_i32 = arith.constant 0 : i32
    %c0_i32_0 = arith.constant 0 : i32
    %c0_i32_1 = arith.constant 0 : i32
    return %arg0, %c0_i32, %c0_i32_0, %arg1 : i32, i32, i32, i32
  }
}

module attributes {stable_mosaic.version = 11 : i64} {
  func.func @_conv_kernel(%arg0: i32, %arg1: i32, %arg2: memref<1x4x4x128xbf16, #tpu.memory_space<vmem>>, %arg3: memref<16x128x128xbf16, #tpu.memory_space<vmem>>, %arg4: memref<1x1x1x128xf32, #tpu.memory_space<vmem>>) attributes {dimension_semantics = [#tpu.dimension_semantics<parallel>, #tpu.dimension_semantics<parallel>], iteration_bounds = array<i64: 2, 1>, scalar_prefetch = 0 : i64, scratch_operands = 0 : i64, tpu.core_type = #tpu.core_type<tc>, window_params = [{transform_indices = @transform_0, window_bounds = array<i64: 1, 4, 4, 128>}, {transform_indices = @transform_1, window_bounds = array<i64: 16, 128, 128>}, {transform_indices = @transform_2, window_bounds = array<i64: 1, 1, 1, 128>}]} {
    %cst = arith.constant 0.000000e+00 : f32
    %0 = vector.broadcast %cst : f32 to vector<1x128xf32>
    %c0 = arith.constant 0 : index
    %c0_0 = arith.constant 0 : index
    %c0_1 = arith.constant 0 : index
    %c0_2 = arith.constant 0 : index
    %1 = vector.load %arg2[%c0, %c0_0, %c0_1, %c0_2] : memref<1x4x4x128xbf16, #tpu.memory_space<vmem>>, vector<1x1x1x128xbf16>
    %2 = vector.shape_cast %1 : vector<1x1x1x128xbf16> to vector<1x128xbf16>
    %c0_3 = arith.constant 0 : index
    %c0_4 = arith.constant 0 : index
    %c0_5 = arith.constant 0 : index
    %3 = vector.load %arg3[%c0_3, %c0_4, %c0_5] : memref<16x128x128xbf16, #tpu.memory_space<vmem>>, vector<1x128x128xbf16>
    %4 = vector.shape_cast %3 : vector<1x128x128xbf16> to vector<128x128xbf16>
    %cst_6 = arith.constant dense<0.000000e+00> : vector<1x128xf32>
    %5 = tpu.matmul %2, %4, %cst_6 {dimension_numbers = #tpu.dot_dimension_numbers<[1], [0], [0], [1], [0, 0, 1, 1], [], []>} : vector<1x128xbf16>, vector<128x128xbf16>, vector<1x128xf32> -> vector<1x128xf32>
    %6 = arith.addf %0, %5 : vector<1x128xf32>
    %c0_7 = arith.constant 0 : index
    %c0_8 = arith.constant 0 : index
    %c1 = arith.constant 1 : index
    %c0_9 = arith.constant 0 : index
    %7 = vector.load %arg2[%c0_7, %c0_8, %c1, %c0_9] : memref<1x4x4x128xbf16, #tpu.memory_space<vmem>>, vector<1x1x1x128xbf16>
    %8 = vector.shape_cast %7 : vector<1x1x1x128xbf16> to vector<1x128xbf16>
    %c1_10 = arith.constant 1 : index
    %c0_11 = arith.constant 0 : index
    %c0_12 = arith.constant 0 : index
    %9 = vector.load %arg3[%c1_10, %c0_11, %c0_12] : memref<16x128x128xbf16, #tpu.memory_space<vmem>>, vector<1x128x128xbf16>
    %10 = vector.shape_cast %9 : vector<1x128x128xbf16> to vector<128x128xbf16>
    %cst_13 = arith.constant dense<0.000000e+00> : vector<1x128xf32>
    %11 = tpu.matmul %8, %10, %cst_13 {dimension_numbers = #tpu.dot_dimension_numbers<[1], [0], [0], [1], [0, 0, 1, 1], [], []>} : vector<1x128xbf16>, vector<128x128xbf16>, vector<1x128xf32> -> vector<1x128xf32>
    %12 = arith.addf %6, %11 : vector<1x128xf32>
    %c0_14 = arith.constant 0 : index
    %c0_15 = arith.constant 0 : index
    %c2 = arith.constant 2 : index
    %c0_16 = arith.constant 0 : index
    %13 = vector.load %arg2[%c0_14, %c0_15, %c2, %c0_16] : memref<1x4x4x128xbf16, #tpu.memory_space<vmem>>, vector<1x1x1x128xbf16>
    %14 = vector.shape_cast %13 : vector<1x1x1x128xbf16> to vector<1x128xbf16>
    %c2_17 = arith.constant 2 : index
    %c0_18 = arith.constant 0 : index
    %c0_19 = arith.constant 0 : index
    %15 = vector.load %arg3[%c2_17, %c0_18, %c0_19] : memref<16x128x128xbf16, #tpu.memory_space<vmem>>, vector<1x128x128xbf16>
    %16 = vector.shape_cast %15 : vector<1x128x128xbf16> to vector<128x128xbf16>
    %cst_20 = arith.constant dense<0.000000e+00> : vector<1x128xf32>
    %17 = tpu.matmul %14, %16, %cst_20 {dimension_numbers = #tpu.dot_dimension_numbers<[1], [0], [0], [1], [0, 0, 1, 1], [], []>} : vector<1x128xbf16>, vector<128x128xbf16>, vector<1x128xf32> -> vector<1x128xf32>
    %18 = arith.addf %12, %17 : vector<1x128xf32>
    %c0_21 = arith.constant 0 : index
    %c0_22 = arith.constant 0 : index
    %c3 = arith.constant 3 : index
    %c0_23 = arith.constant 0 : index
    %19 = vector.load %arg2[%c0_21, %c0_22, %c3, %c0_23] : memref<1x4x4x128xbf16, #tpu.memory_space<vmem>>, vector<1x1x1x128xbf16>
    %20 = vector.shape_cast %19 : vector<1x1x1x128xbf16> to vector<1x128xbf16>
    %c3_24 = arith.constant 3 : index
    %c0_25 = arith.constant 0 : index
    %c0_26 = arith.constant 0 : index
    %21 = vector.load %arg3[%c3_24, %c0_25, %c0_26] : memref<16x128x128xbf16, #tpu.memory_space<vmem>>, vector<1x128x128xbf16>
    %22 = vector.shape_cast %21 : vector<1x128x128xbf16> to vector<128x128xbf16>
    %cst_27 = arith.constant dense<0.000000e+00> : vector<1x128xf32>
    %23 = tpu.matmul %20, %22, %cst_27 {dimension_numbers = #tpu.dot_dimension_numbers<[1], [0], [0], [1], [0, 0, 1, 1], [], []>} : vector<1x128xbf16>, vector<128x128xbf16>, vector<1x128xf32> -> vector<1x128xf32>
    %24 = arith.addf %18, %23 : vector<1x128xf32>
    %c0_28 = arith.constant 0 : index
    %c1_29 = arith.constant 1 : index
    %c0_30 = arith.constant 0 : index
    %c0_31 = arith.constant 0 : index
    %25 = vector.load %arg2[%c0_28, %c1_29, %c0_30, %c0_31] : memref<1x4x4x128xbf16, #tpu.memory_space<vmem>>, vector<1x1x1x128xbf16>
    %26 = vector.shape_cast %25 : vector<1x1x1x128xbf16> to vector<1x128xbf16>
    %c4 = arith.constant 4 : index
    %c0_32 = arith.constant 0 : index
    %c0_33 = arith.constant 0 : index
    %27 = vector.load %arg3[%c4, %c0_32, %c0_33] : memref<16x128x128xbf16, #tpu.memory_space<vmem>>, vector<1x128x128xbf16>
    %28 = vector.shape_cast %27 : vector<1x128x128xbf16> to vector<128x128xbf16>
    %cst_34 = arith.constant dense<0.000000e+00> : vector<1x128xf32>
    %29 = tpu.matmul %26, %28, %cst_34 {dimension_numbers = #tpu.dot_dimension_numbers<[1], [0], [0], [1], [0, 0, 1, 1], [], []>} : vector<1x128xbf16>, vector<128x128xbf16>, vector<1x128xf32> -> vector<1x128xf32>
    %30 = arith.addf %24, %29 : vector<1x128xf32>
    %c0_35 = arith.constant 0 : index
    %c1_36 = arith.constant 1 : index
    %c1_37 = arith.constant 1 : index
    %c0_38 = arith.constant 0 : index
    %31 = vector.load %arg2[%c0_35, %c1_36, %c1_37, %c0_38] : memref<1x4x4x128xbf16, #tpu.memory_space<vmem>>, vector<1x1x1x128xbf16>
    %32 = vector.shape_cast %31 : vector<1x1x1x128xbf16> to vector<1x128xbf16>
    %c5 = arith.constant 5 : index
    %c0_39 = arith.constant 0 : index
    %c0_40 = arith.constant 0 : index
    %33 = vector.load %arg3[%c5, %c0_39, %c0_40] : memref<16x128x128xbf16, #tpu.memory_space<vmem>>, vector<1x128x128xbf16>
    %34 = vector.shape_cast %33 : vector<1x128x128xbf16> to vector<128x128xbf16>
    %cst_41 = arith.constant dense<0.000000e+00> : vector<1x128xf32>
    %35 = tpu.matmul %32, %34, %cst_41 {dimension_numbers = #tpu.dot_dimension_numbers<[1], [0], [0], [1], [0, 0, 1, 1], [], []>} : vector<1x128xbf16>, vector<128x128xbf16>, vector<1x128xf32> -> vector<1x128xf32>
    %36 = arith.addf %30, %35 : vector<1x128xf32>
    %c0_42 = arith.constant 0 : index
    %c1_43 = arith.constant 1 : index
    %c2_44 = arith.constant 2 : index
    %c0_45 = arith.constant 0 : index
    %37 = vector.load %arg2[%c0_42, %c1_43, %c2_44, %c0_45] : memref<1x4x4x128xbf16, #tpu.memory_space<vmem>>, vector<1x1x1x128xbf16>
    %38 = vector.shape_cast %37 : vector<1x1x1x128xbf16> to vector<1x128xbf16>
    %c6 = arith.constant 6 : index
    %c0_46 = arith.constant 0 : index
    %c0_47 = arith.constant 0 : index
    %39 = vector.load %arg3[%c6, %c0_46, %c0_47] : memref<16x128x128xbf16, #tpu.memory_space<vmem>>, vector<1x128x128xbf16>
    %40 = vector.shape_cast %39 : vector<1x128x128xbf16> to vector<128x128xbf16>
    %cst_48 = arith.constant dense<0.000000e+00> : vector<1x128xf32>
    %41 = tpu.matmul %38, %40, %cst_48 {dimension_numbers = #tpu.dot_dimension_numbers<[1], [0], [0], [1], [0, 0, 1, 1], [], []>} : vector<1x128xbf16>, vector<128x128xbf16>, vector<1x128xf32> -> vector<1x128xf32>
    %42 = arith.addf %36, %41 : vector<1x128xf32>
    %c0_49 = arith.constant 0 : index
    %c1_50 = arith.constant 1 : index
    %c3_51 = arith.constant 3 : index
    %c0_52 = arith.constant 0 : index
    %43 = vector.load %arg2[%c0_49, %c1_50, %c3_51, %c0_52] : memref<1x4x4x128xbf16, #tpu.memory_space<vmem>>, vector<1x1x1x128xbf16>
    %44 = vector.shape_cast %43 : vector<1x1x1x128xbf16> to vector<1x128xbf16>
    %c7 = arith.constant 7 : index
    %c0_53 = arith.constant 0 : index
    %c0_54 = arith.constant 0 : index
    %45 = vector.load %arg3[%c7, %c0_53, %c0_54] : memref<16x128x128xbf16, #tpu.memory_space<vmem>>, vector<1x128x128xbf16>
    %46 = vector.shape_cast %45 : vector<1x128x128xbf16> to vector<128x128xbf16>
    %cst_55 = arith.constant dense<0.000000e+00> : vector<1x128xf32>
    %47 = tpu.matmul %44, %46, %cst_55 {dimension_numbers = #tpu.dot_dimension_numbers<[1], [0], [0], [1], [0, 0, 1, 1], [], []>} : vector<1x128xbf16>, vector<128x128xbf16>, vector<1x128xf32> -> vector<1x128xf32>
    %48 = arith.addf %42, %47 : vector<1x128xf32>
    %c0_56 = arith.constant 0 : index
    %c2_57 = arith.constant 2 : index
    %c0_58 = arith.constant 0 : index
    %c0_59 = arith.constant 0 : index
    %49 = vector.load %arg2[%c0_56, %c2_57, %c0_58, %c0_59] : memref<1x4x4x128xbf16, #tpu.memory_space<vmem>>, vector<1x1x1x128xbf16>
    %50 = vector.shape_cast %49 : vector<1x1x1x128xbf16> to vector<1x128xbf16>
    %c8 = arith.constant 8 : index
    %c0_60 = arith.constant 0 : index
    %c0_61 = arith.constant 0 : index
    %51 = vector.load %arg3[%c8, %c0_60, %c0_61] : memref<16x128x128xbf16, #tpu.memory_space<vmem>>, vector<1x128x128xbf16>
    %52 = vector.shape_cast %51 : vector<1x128x128xbf16> to vector<128x128xbf16>
    %cst_62 = arith.constant dense<0.000000e+00> : vector<1x128xf32>
    %53 = tpu.matmul %50, %52, %cst_62 {dimension_numbers = #tpu.dot_dimension_numbers<[1], [0], [0], [1], [0, 0, 1, 1], [], []>} : vector<1x128xbf16>, vector<128x128xbf16>, vector<1x128xf32> -> vector<1x128xf32>
    %54 = arith.addf %48, %53 : vector<1x128xf32>
    %c0_63 = arith.constant 0 : index
    %c2_64 = arith.constant 2 : index
    %c1_65 = arith.constant 1 : index
    %c0_66 = arith.constant 0 : index
    %55 = vector.load %arg2[%c0_63, %c2_64, %c1_65, %c0_66] : memref<1x4x4x128xbf16, #tpu.memory_space<vmem>>, vector<1x1x1x128xbf16>
    %56 = vector.shape_cast %55 : vector<1x1x1x128xbf16> to vector<1x128xbf16>
    %c9 = arith.constant 9 : index
    %c0_67 = arith.constant 0 : index
    %c0_68 = arith.constant 0 : index
    %57 = vector.load %arg3[%c9, %c0_67, %c0_68] : memref<16x128x128xbf16, #tpu.memory_space<vmem>>, vector<1x128x128xbf16>
    %58 = vector.shape_cast %57 : vector<1x128x128xbf16> to vector<128x128xbf16>
    %cst_69 = arith.constant dense<0.000000e+00> : vector<1x128xf32>
    %59 = tpu.matmul %56, %58, %cst_69 {dimension_numbers = #tpu.dot_dimension_numbers<[1], [0], [0], [1], [0, 0, 1, 1], [], []>} : vector<1x128xbf16>, vector<128x128xbf16>, vector<1x128xf32> -> vector<1x128xf32>
    %60 = arith.addf %54, %59 : vector<1x128xf32>
    %c0_70 = arith.constant 0 : index
    %c2_71 = arith.constant 2 : index
    %c2_72 = arith.constant 2 : index
    %c0_73 = arith.constant 0 : index
    %61 = vector.load %arg2[%c0_70, %c2_71, %c2_72, %c0_73] : memref<1x4x4x128xbf16, #tpu.memory_space<vmem>>, vector<1x1x1x128xbf16>
    %62 = vector.shape_cast %61 : vector<1x1x1x128xbf16> to vector<1x128xbf16>
    %c10 = arith.constant 10 : index
    %c0_74 = arith.constant 0 : index
    %c0_75 = arith.constant 0 : index
    %63 = vector.load %arg3[%c10, %c0_74, %c0_75] : memref<16x128x128xbf16, #tpu.memory_space<vmem>>, vector<1x128x128xbf16>
    %64 = vector.shape_cast %63 : vector<1x128x128xbf16> to vector<128x128xbf16>
    %cst_76 = arith.constant dense<0.000000e+00> : vector<1x128xf32>
    %65 = tpu.matmul %62, %64, %cst_76 {dimension_numbers = #tpu.dot_dimension_numbers<[1], [0], [0], [1], [0, 0, 1, 1], [], []>} : vector<1x128xbf16>, vector<128x128xbf16>, vector<1x128xf32> -> vector<1x128xf32>
    %66 = arith.addf %60, %65 : vector<1x128xf32>
    %c0_77 = arith.constant 0 : index
    %c2_78 = arith.constant 2 : index
    %c3_79 = arith.constant 3 : index
    %c0_80 = arith.constant 0 : index
    %67 = vector.load %arg2[%c0_77, %c2_78, %c3_79, %c0_80] : memref<1x4x4x128xbf16, #tpu.memory_space<vmem>>, vector<1x1x1x128xbf16>
    %68 = vector.shape_cast %67 : vector<1x1x1x128xbf16> to vector<1x128xbf16>
    %c11 = arith.constant 11 : index
    %c0_81 = arith.constant 0 : index
    %c0_82 = arith.constant 0 : index
    %69 = vector.load %arg3[%c11, %c0_81, %c0_82] : memref<16x128x128xbf16, #tpu.memory_space<vmem>>, vector<1x128x128xbf16>
    %70 = vector.shape_cast %69 : vector<1x128x128xbf16> to vector<128x128xbf16>
    %cst_83 = arith.constant dense<0.000000e+00> : vector<1x128xf32>
    %71 = tpu.matmul %68, %70, %cst_83 {dimension_numbers = #tpu.dot_dimension_numbers<[1], [0], [0], [1], [0, 0, 1, 1], [], []>} : vector<1x128xbf16>, vector<128x128xbf16>, vector<1x128xf32> -> vector<1x128xf32>
    %72 = arith.addf %66, %71 : vector<1x128xf32>
    %c0_84 = arith.constant 0 : index
    %c3_85 = arith.constant 3 : index
    %c0_86 = arith.constant 0 : index
    %c0_87 = arith.constant 0 : index
    %73 = vector.load %arg2[%c0_84, %c3_85, %c0_86, %c0_87] : memref<1x4x4x128xbf16, #tpu.memory_space<vmem>>, vector<1x1x1x128xbf16>
    %74 = vector.shape_cast %73 : vector<1x1x1x128xbf16> to vector<1x128xbf16>
    %c12 = arith.constant 12 : index
    %c0_88 = arith.constant 0 : index
    %c0_89 = arith.constant 0 : index
    %75 = vector.load %arg3[%c12, %c0_88, %c0_89] : memref<16x128x128xbf16, #tpu.memory_space<vmem>>, vector<1x128x128xbf16>
    %76 = vector.shape_cast %75 : vector<1x128x128xbf16> to vector<128x128xbf16>
    %cst_90 = arith.constant dense<0.000000e+00> : vector<1x128xf32>
    %77 = tpu.matmul %74, %76, %cst_90 {dimension_numbers = #tpu.dot_dimension_numbers<[1], [0], [0], [1], [0, 0, 1, 1], [], []>} : vector<1x128xbf16>, vector<128x128xbf16>, vector<1x128xf32> -> vector<1x128xf32>
    %78 = arith.addf %72, %77 : vector<1x128xf32>
    %c0_91 = arith.constant 0 : index
    %c3_92 = arith.constant 3 : index
    %c1_93 = arith.constant 1 : index
    %c0_94 = arith.constant 0 : index
    %79 = vector.load %arg2[%c0_91, %c3_92, %c1_93, %c0_94] : memref<1x4x4x128xbf16, #tpu.memory_space<vmem>>, vector<1x1x1x128xbf16>
    %80 = vector.shape_cast %79 : vector<1x1x1x128xbf16> to vector<1x128xbf16>
    %c13 = arith.constant 13 : index
    %c0_95 = arith.constant 0 : index
    %c0_96 = arith.constant 0 : index
    %81 = vector.load %arg3[%c13, %c0_95, %c0_96] : memref<16x128x128xbf16, #tpu.memory_space<vmem>>, vector<1x128x128xbf16>
    %82 = vector.shape_cast %81 : vector<1x128x128xbf16> to vector<128x128xbf16>
    %cst_97 = arith.constant dense<0.000000e+00> : vector<1x128xf32>
    %83 = tpu.matmul %80, %82, %cst_97 {dimension_numbers = #tpu.dot_dimension_numbers<[1], [0], [0], [1], [0, 0, 1, 1], [], []>} : vector<1x128xbf16>, vector<128x128xbf16>, vector<1x128xf32> -> vector<1x128xf32>
    %84 = arith.addf %78, %83 : vector<1x128xf32>
    %c0_98 = arith.constant 0 : index
    %c3_99 = arith.constant 3 : index
    %c2_100 = arith.constant 2 : index
    %c0_101 = arith.constant 0 : index
    %85 = vector.load %arg2[%c0_98, %c3_99, %c2_100, %c0_101] : memref<1x4x4x128xbf16, #tpu.memory_space<vmem>>, vector<1x1x1x128xbf16>
    %86 = vector.shape_cast %85 : vector<1x1x1x128xbf16> to vector<1x128xbf16>
    %c14 = arith.constant 14 : index
    %c0_102 = arith.constant 0 : index
    %c0_103 = arith.constant 0 : index
    %87 = vector.load %arg3[%c14, %c0_102, %c0_103] : memref<16x128x128xbf16, #tpu.memory_space<vmem>>, vector<1x128x128xbf16>
    %88 = vector.shape_cast %87 : vector<1x128x128xbf16> to vector<128x128xbf16>
    %cst_104 = arith.constant dense<0.000000e+00> : vector<1x128xf32>
    %89 = tpu.matmul %86, %88, %cst_104 {dimension_numbers = #tpu.dot_dimension_numbers<[1], [0], [0], [1], [0, 0, 1, 1], [], []>} : vector<1x128xbf16>, vector<128x128xbf16>, vector<1x128xf32> -> vector<1x128xf32>
    %90 = arith.addf %84, %89 : vector<1x128xf32>
    %c0_105 = arith.constant 0 : index
    %c3_106 = arith.constant 3 : index
    %c3_107 = arith.constant 3 : index
    %c0_108 = arith.constant 0 : index
    %91 = vector.load %arg2[%c0_105, %c3_106, %c3_107, %c0_108] : memref<1x4x4x128xbf16, #tpu.memory_space<vmem>>, vector<1x1x1x128xbf16>
    %92 = vector.shape_cast %91 : vector<1x1x1x128xbf16> to vector<1x128xbf16>
    %c15 = arith.constant 15 : index
    %c0_109 = arith.constant 0 : index
    %c0_110 = arith.constant 0 : index
    %93 = vector.load %arg3[%c15, %c0_109, %c0_110] : memref<16x128x128xbf16, #tpu.memory_space<vmem>>, vector<1x128x128xbf16>
    %94 = vector.shape_cast %93 : vector<1x128x128xbf16> to vector<128x128xbf16>
    %cst_111 = arith.constant dense<0.000000e+00> : vector<1x128xf32>
    %95 = tpu.matmul %92, %94, %cst_111 {dimension_numbers = #tpu.dot_dimension_numbers<[1], [0], [0], [1], [0, 0, 1, 1], [], []>} : vector<1x128xbf16>, vector<128x128xbf16>, vector<1x128xf32> -> vector<1x128xf32>
    %96 = arith.addf %90, %95 : vector<1x128xf32>
    %97 = vector.shape_cast %96 : vector<1x128xf32> to vector<1x1x1x128xf32>
    %c0_112 = arith.constant 0 : index
    %c0_113 = arith.constant 0 : index
    %c0_114 = arith.constant 0 : index
    %c0_115 = arith.constant 0 : index
    %98 = vector.load %arg4[%c0_112, %c0_113, %c0_114, %c0_115] : memref<1x1x1x128xf32, #tpu.memory_space<vmem>>, vector<1x1x1x128xf32>
    tpu.vector_store %arg4[%c0_112, %c0_113, %c0_114, %c0_115], %97 {strides = array<i32>} : memref<1x1x1x128xf32, #tpu.memory_space<vmem>>, vector<1x1x1x128xf32>,
    return
  }
  func.func @transform_0(%arg0: i32, %arg1: i32) -> (i32, i32, i32, i32) {
    %c0_i32 = arith.constant 0 : i32
    %c0_i32_0 = arith.constant 0 : i32
    %c0_i32_1 = arith.constant 0 : i32
    %c0_i32_2 = arith.constant 0 : i32
    return %arg0, %c0_i32, %c0_i32_0, %c0_i32_1 : i32, i32, i32, i32
  }
  func.func @transform_1(%arg0: i32, %arg1: i32) -> (i32, i32, i32) {
    %c0_i32 = arith.constant 0 : i32
    %c0_i32_0 = arith.constant 0 : i32
    %c0_i32_1 = arith.constant 0 : i32
    return %c0_i32, %c0_i32_0, %arg1 : i32, i32, i32
  }
  func.func @transform_2(%arg0: i32, %arg1: i32) -> (i32, i32, i32, i32) {
    %c0_i32 = arith.constant 0 : i32
    %c0_i32_0 = arith.constant 0 : i32
    %c0_i32_1 = arith.constant 0 : i32
    return %arg0, %c0_i32, %c0_i32_0, %arg1 : i32, i32, i32, i32
  }
}

</mosaic_0001>

<llo_original>
// kernel: discriminator_forward.6
$region0: #{discriminator_forward.6}
  #allocation0 [shape = 'u32[]', space=smem, size = 0x4, offset = 0x4, fixed_abs, tag = 'smem constant byte address 0x4 - core index']
  #allocation1 [shape = 'u32[72,128]{1,0:T(1,128)}', space=vmem, size = 0x9000, scoped, tag = 'internal scratch']
  %s0 = inlined_call_operand.vmem [shape: bf16[2,9,9,12], index: 0, kind: input, shape index: {}]
  %s1 = inlined_call_operand.vmem [shape: bf16[4,12,128], index: 1, kind: input, shape index: {}]
  %s2 = inlined_call_operand.vmem [shape: bf16[2,8,8,128], index: 2, kind: output, shape index: {}]
  %s3 = sld [smem:[#allocation0]]
  $region41: #{discriminator_forward.6} parent=0
    _
  %s5 = ssub.s32 1, %s3
  %s6 = scalar_select 0, %s5, %s3
  loop: start=0, step=1, limit=4
  $region2: #{discriminator_forward.6} parent=0 // loop_pre_header
    _
  $region3: #{discriminator_forward.6} parent=0 // loop_header
    %s8 = sphi 0, %s12
    %p9 = scmp.ge.s32.totalorder %s8, 4
    %s15 = sphi 0, %s27
    %s16 = sphi 0, %s23
    %s17 = sphi 0, %s15
    %s18 = sphi 0, %s16
    %s19 = sphi 0, %s17
    %s20 = sphi 0, %s18
    %s30 = sphi 0, %s32
    %s33 = sphi 0, %s30
    %s34 = sphi 0, %s33
    %s50 = sphi 0, %s34
    %s56 = sphi 0, %s58
    %s59 = sphi 0, %s56
    %s60 = sphi 0, %s59
    %s76 = sphi 0, %s60
    %s84 = sphi 0, %s86
    %s87 = sphi 0, %s84
    %s88 = sphi 0, %s87
    %s104 = sphi 0, %s88
  $region4: #{discriminator_forward.6} parent=0 // loop_header_branch
    %11 = sbr.rel (%p9) target = $region8
  $region5: #{discriminator_forward.6} parent=0 // loop_body
    %s13 = ssub.s32 %s8, 1
    %s14 = ssub.s32 %s8, 2
    %s21 = sadd.s32 1, %s16
    %p22 = scmp.ge.s32.totalorder %s21, 1
    %s23 = scalar_select %p22, 0, %s21
    %s24 = sadd.s32 1, %s15
    %s25 = scalar_select %p22, %s24, %s15
    %p26 = scmp.ge.s32.totalorder %s25, 2
    %s27 = scalar_select %p26, 0, %s25
    %s28 = ssub.s32 %s15, %s27
    %p29 = scmp.eq.s32.totalorder %s28, 0
    %s31 = sadd.s32 %s30, 1
    %s32 = scalar_select %p29, %s30, %s31
    %p35 = pneg %p29
    %p36 = scmp.eq.s32.totalorder %s8, 1
    %p37 = por %p35, %p36
    %p38 = scmp.ne.s32.totalorder %s30, %s33
    %p39 = scmp.eq.s32.totalorder %s8, 0
    %p40 = por %p38, %p39
    %p41 = scmp.ne.s32.totalorder %s30, %s33
    %p42 = scmp.eq.s32.totalorder %s13, 1
    %p43 = por %p41, %p42
    %p44 = scmp.ne.s32.totalorder %s33, %s34
    %p45 = scmp.eq.s32.totalorder %s13, 0
    %p46 = por %p44, %p45
    %p47 = scmp.ne.s32.totalorder %s33, %s34
    %p48 = scmp.eq.s32.totalorder %s14, 1
    %p49 = por %p47, %p48
    %p51 = scmp.ne.s32.totalorder %s34, %s50
    %p52 = scmp.eq.s32.totalorder %s14, 0
    %p53 = por %p51, %p52
    %s54 = ssub.s32 %s16, %s23
    %p55 = scmp.eq.s32.totalorder %s54, 0
    %s57 = sadd.s32 %s56, 1
    %s58 = scalar_select %p55, %s56, %s57
    %p61 = pneg %p55
    %p62 = scmp.eq.s32.totalorder %s8, 1
    %p63 = por %p61, %p62
    %p64 = scmp.ne.s32.totalorder %s56, %s59
    %p65 = scmp.eq.s32.totalorder %s8, 0
    %p66 = por %p64, %p65
    %p67 = scmp.ne.s32.totalorder %s56, %s59
    %p68 = scmp.eq.s32.totalorder %s13, 1
    %p69 = por %p67, %p68
    %p70 = scmp.ne.s32.totalorder %s59, %s60
    %p71 = scmp.eq.s32.totalorder %s13, 0
    %p72 = por %p70, %p71
    %p73 = scmp.ne.s32.totalorder %s59, %s60
    %p74 = scmp.eq.s32.totalorder %s14, 1
    %p75 = por %p73, %p74
    %p77 = scmp.ne.s32.totalorder %s60, %s76
    %p78 = scmp.eq.s32.totalorder %s14, 0
    %p79 = por %p77, %p78
    %s80 = ssub.s32 %s15, %s27
    %s81 = ssub.s32 %s16, %s23
    %s82 = sor.u32 %s80, %s81
    %p83 = scmp.eq.s32.totalorder %s82, 0
    %s85 = sadd.s32 %s84, 1
    %s86 = scalar_select %p83, %s84, %s85
    %p89 = pneg %p83
    %p90 = scmp.eq.s32.totalorder %s8, 1
    %p91 = por %p89, %p90
    %p92 = scmp.ne.s32.totalorder %s84, %s87
    %p93 = scmp.eq.s32.totalorder %s8, 0
    %p94 = por %p92, %p93
    %p95 = scmp.ne.s32.totalorder %s84, %s87
    %p96 = scmp.eq.s32.totalorder %s13, 1
    %p97 = por %p95, %p96
    %p98 = scmp.ne.s32.totalorder %s87, %s88
    %p99 = scmp.eq.s32.totalorder %s13, 0
    %p100 = por %p98, %p99
    %p101 = scmp.ne.s32.totalorder %s87, %s88
    %p102 = scmp.eq.s32.totalorder %s14, 1
    %p103 = por %p101, %p102
    %p105 = scmp.ne.s32.totalorder %s88, %s104
    %p106 = scmp.eq.s32.totalorder %s14, 0
    %p107 = por %p105, %p106
    %p108 = scmp.le.s32.totalorder 1, %s8
    %p109 = scmp.lt.s32.totalorder %s8, 3
    %p110 = pnand %p108, %p109
    %p111 = pneg %p110
    // Predicated region
    $region9: #{discriminator_forward.6} parent=5 // pred_check
      _
    $region10: #{discriminator_forward.6} parent=5 // pred_check_branch
      %113 = sbr.rel (%p110) target = $region12
    $region11: #{discriminator_forward.6} parent=5 // pred_region
      %s114 = ssub.s32 %s8, 1
      // Predicated region
      $region13: #{discriminator_forward.6} parent=11 // pred_check
        %p115 = pneg %p72
      $region14: #{discriminator_forward.6} parent=11 // pred_check_branch
        %117 = sbr.rel (%p115) target = $region16
      $region15: #{discriminator_forward.6} parent=11 // pred_region
        %p118 = scmp.lt.s32.totalorder %s18, 0
        %s119 = scalar_select %p118, %s18, 0
        %s120 = smul.addr %s119, 4
        %s121 = scalar_lea.vmem %s1, %s120
      $region16: #{discriminator_forward.6} parent=11 // pred_fallthru
        _
    $region12: #{discriminator_forward.6} parent=5 // pred_fallthru
      _
    %p122 = scmp.lt.s32.totalorder %s8, 2
    // Predicated region
    $region17: #{discriminator_forward.6} parent=5 // pred_check
      %p123 = pneg %p122
    $region18: #{discriminator_forward.6} parent=5 // pred_check_branch
      %125 = sbr.rel (%p123) target = $region20
    $region19: #{discriminator_forward.6} parent=5 // pred_region
      // Predicated region
      $region21: #{discriminator_forward.6} parent=19 // pred_check
        %p126 = pneg %p40
      $region22: #{discriminator_forward.6} parent=19 // pred_check_branch
        %128 = sbr.rel (%p126) target = $region24
      $region23: #{discriminator_forward.6} parent=19 // pred_region
        %p129 = scmp.lt.s32.totalorder %s15, 1
        %s130 = scalar_select %p129, %s15, 1
        %s131 = smul.addr %s130, 18
        %s132 = smul.addr %s131, 4
        %s133 = scalar_lea.vmem %s0, %s132
      $region24: #{discriminator_forward.6} parent=19 // pred_fallthru
        _
    $region20: #{discriminator_forward.6} parent=5 // pred_fallthru
      _
    %p134 = scmp.le.s32.totalorder 1, %s8
    %p135 = scmp.lt.s32.totalorder %s8, 3
    %p136 = pnand %p134, %p135
    %p137 = pneg %p136
    // Predicated region
    $region25: #{discriminator_forward.6} parent=5 // pred_check
      _
    $region26: #{discriminator_forward.6} parent=5 // pred_check_branch
      %139 = sbr.rel (%p136) target = $region28
    $region27: #{discriminator_forward.6} parent=5 // pred_region
      %s140 = ssub.s32 %s8, 1
      %p141 = scmp.lt.s32.totalorder %s17, 1
      %s142 = scalar_select %p141, %s17, 1
      %s143 = smul.addr %s142, 18
      %s144 = smul.addr %s143, 4
      %s145 = scalar_lea.vmem %s0, %s144
      %p146 = pneg %p46
      %p147 = pneg %p43
      %p148 = scmp.lt.s32.totalorder %s18, 0
      %s149 = scalar_select %p148, %s18, 0
      %s150 = smul.addr %s149, 4
      %s151 = scalar_lea.vmem %s1, %s150
      %p152 = pneg %p72
      %p153 = pneg %p69
      %p154 = pneg %p100
      %p155 = pneg %p97
      %p156 = scmp.lt.s32.totalorder %s17, 1
      %s157 = scalar_select %p156, %s17, 1
      %p158 = scmp.lt.s32.totalorder %s18, 0
      %s159 = scalar_select %p158, %s18, 0
      %s160 = smul.addr %s157, 8
      %s161 = sadd.s32 %s159, %s160
      %s162 = smul.addr %s161, 4
      %s163 = scalar_lea.vmem %s2, %s162
      %p164 = scmp.lt.s32.totalorder %s17, 1
      %s165 = scalar_select %p164, %s17, 1
      %s166 = smul.addr %s165, 18
      %s167 = smul.addr %s166, 4
      %s168 = scalar_lea.vmem %s0, %s167
      %p169 = scmp.lt.s32.totalorder %s18, 0
      %s170 = scalar_select %p169, %s18, 0
      %s171 = smul.addr %s170, 4
      %s172 = scalar_lea.vmem %s1, %s171
      %p173 = scmp.lt.s32.totalorder %s17, 1
      %s174 = scalar_select %p173, %s17, 1
      %p175 = scmp.lt.s32.totalorder %s18, 0
      %s176 = scalar_select %p175, %s18, 0
      %s177 = smul.addr %s174, 8
      %s178 = sadd.s32 %s176, %s177
      %s179 = smul.addr %s178, 4
      %s180 = scalar_lea.vmem %s2, %s179
      %v182 = vld [vmem:[%s168] sm:$0xf]
      %v183 = vld [vmem:[%s168 + $0x8] sm:$0xf]
      %v184 = vld [vmem:[%s168 + $0x10] sm:$0xf]
      %v185 = vld [vmem:[%s168 + $0x18] sm:$0xf]
      %v186 = vld [vmem:[%s168 + $0x20] sm:$0xf]
      %v187 = vld [vmem:[%s168 + $0x28] sm:$0xf]
      %v188 = vld [vmem:[%s168 + $0x30] sm:$0xf]
      %v189 = vld [vmem:[%s168 + $0x38] sm:$0xf]
      %v190 = vld [vmem:[%s172] sm:$0xf]
      %v191 = vld [vmem:[%s172 + $0x4] sm:$0x3]
      %v192 = vld [vmem:[%s168 + $0x4] sm:$0x1]
      %v193 = vld [vmem:[%s168 + $0xc] sm:$0x1]
      %v194 = vld [vmem:[%s168 + $0x14] sm:$0x1]
      %v195 = vld [vmem:[%s168 + $0x1c] sm:$0x1]
      %v196 = vld [vmem:[%s168 + $0x24] sm:$0x1]
      %v197 = vld [vmem:[%s168 + $0x2c] sm:$0x1]
      %v198 = vld [vmem:[%s168 + $0x34] sm:$0x1]
      %v199 = vld [vmem:[%s168 + $0x3c] sm:$0x1]
      %vm200 = vsmask.f32 3328
      %vm201 = vsmask.f32 7440
      %vm202 = vmor %vm200, %vm201
      %v204 = vshrl.u32 %v182, 16
      %v206 = vrot.slane %v204, 4
      %v207 = vshll.u32 %v182, 16
      %v209 = vrot.slane %v207, 5
      %v210 = vor.u32 %v206, %v209
      %v211 = vrot.slane %v210, 4
      %v213 = vshll.u32 %v192, 16
      %v215 = vrot.slane %v213, 5
      %v216 = vsel %vm202, %v211, %v215
      %v218 = vshrl.u32 %v183, 16
      %v220 = vrot.slane %v218, 4
      %v221 = vshll.u32 %v183, 16
      %v223 = vrot.slane %v221, 5
      %v224 = vor.u32 %v220, %v223
      %v225 = vrot.slane %v224, 4
      %v227 = vshll.u32 %v193, 16
      %v229 = vrot.slane %v227, 5
      %v230 = vsel %vm202, %v225, %v229
      %v232 = vshrl.u32 %v184, 16
      %v234 = vrot.slane %v232, 4
      %v235 = vshll.u32 %v184, 16
      %v237 = vrot.slane %v235, 5
      %v238 = vor.u32 %v234, %v237
      %v239 = vrot.slane %v238, 4
      %v241 = vshll.u32 %v194, 16
      %v243 = vrot.slane %v241, 5
      %v244 = vsel %vm202, %v239, %v243
      %v246 = vshrl.u32 %v185, 16
      %v248 = vrot.slane %v246, 4
      %v249 = vshll.u32 %v185, 16
      %v251 = vrot.slane %v249, 5
      %v252 = vor.u32 %v248, %v251
      %v253 = vrot.slane %v252, 4
      %v255 = vshll.u32 %v195, 16
      %v257 = vrot.slane %v255, 5
      %v258 = vsel %vm202, %v253, %v257
      %v260 = vshrl.u32 %v186, 16
      %v262 = vrot.slane %v260, 4
      %v263 = vshll.u32 %v186, 16
      %v265 = vrot.slane %v263, 5
      %v266 = vor.u32 %v262, %v265
      %v267 = vrot.slane %v266, 4
      %v269 = vshll.u32 %v196, 16
      %v271 = vrot.slane %v269, 5
      %v272 = vsel %vm202, %v267, %v271
      %v274 = vshrl.u32 %v187, 16
      %v276 = vrot.slane %v274, 4
      %v277 = vshll.u32 %v187, 16
      %v279 = vrot.slane %v277, 5
      %v280 = vor.u32 %v276, %v279
      %v281 = vrot.slane %v280, 4
      %v283 = vshll.u32 %v197, 16
      %v285 = vrot.slane %v283, 5
      %v286 = vsel %vm202, %v281, %v285
      %v288 = vshrl.u32 %v188, 16
      %v290 = vrot.slane %v288, 4
      %v291 = vshll.u32 %v188, 16
      %v293 = vrot.slane %v291, 5
      %v294 = vor.u32 %v290, %v293
      %v295 = vrot.slane %v294, 4
      %v297 = vshll.u32 %v198, 16
      %v299 = vrot.slane %v297, 5
      %v300 = vsel %vm202, %v295, %v299
      %v302 = vshrl.u32 %v189, 16
      %v304 = vrot.slane %v302, 4
      %v305 = vshll.u32 %v189, 16
      %v307 = vrot.slane %v305, 5
      %v308 = vor.u32 %v304, %v307
      %v309 = vrot.slane %v308, 4
      %v311 = vshll.u32 %v199, 16
      %v313 = vrot.slane %v311, 5
      %v314 = vsel %vm202, %v309, %v313
      %s315 = scalar_lea.vmem %s172, 8
      %v316 = vld [vmem:[%s315] sm:$0xf]
      %v317 = vld [vmem:[%s315 + $0x4] sm:$0x3]
      %v318 = vunpack.c.l.b16 %v216
      %v319 = vunpack.c.l.b16 %v230
      %v320 = vunpack.c.l.b16 %v244
      %v321 = vunpack.c.l.b16 %v258
      %v322 = vunpack.c.l.b16 %v272
      %v323 = vunpack.c.l.b16 %v286
      %v324 = vunpack.c.l.b16 %v300
      %v325 = vunpack.c.l.b16 %v314
      %v326 = vpack.c.b16 %v319, %v318
      %v327 = vpack.c.b16 %v321, %v320
      %v328 = vpack.c.b16 %v323, %v322
      %v329 = vpack.c.b16 %v325, %v324
      %v332 = vunpack.c.l.b16 %v316
      %v333 = vunpack.c.l.b16 %v317
      %v334 = vpack.c.b16 %v333, %v332
      %vm335 = vcmask 97280
      %v337 = vsel %vm335, %v326, 0
      %v340 = vsel %vm335, %v327, 0
      %v343 = vsel %vm335, %v328, 0
      %v346 = vsel %vm335, %v329, 0
      %vm348 = vcmask 1045504
      %v350 = vsel %vm348, %v334, 0
      %352 = vmatpush.bf16.msra.mxu0 0
      %353 = vmatpush.bf16.msra.mxu0 0
      %354 = vmatpush.bf16.msra.mxu0 0
      %355 = vmatpush.bf16.msra.mxu0 0
      %356 = vmatpush.bf16.msra.mxu0 0
      %357 = vmatpush.bf16.msra.mxu0 0
      %358 = vmatpush.bf16.msra.mxu0 0
      %359 = vmatpush.bf16.msra.mxu0 %v350
      %360 = vmatmul.bf16.gmra.mxu0 %v337
      %v361 = vpop.f32.mrf.mxu0
      %v362 = vadd.f32 0.0, %v361
      %v363 = vpop.f32.mrf.mxu0
      %v364 = vadd.f32 0.0, %v363
      %365 = vmatmul.bf16.gmra.mxu0 %v340
      %v366 = vpop.f32.mrf.mxu0
      %v367 = vadd.f32 0.0, %v366
      %v368 = vpop.f32.mrf.mxu0
      %v369 = vadd.f32 0.0, %v368
      %370 = vmatmul.bf16.gmra.mxu0 %v343
      %v371 = vpop.f32.mrf.mxu0
      %v372 = vadd.f32 0.0, %v371
      %v373 = vpop.f32.mrf.mxu0
      %v374 = vadd.f32 0.0, %v373
      %375 = vmatmul.bf16.gmra.mxu0 %v346
      %v376 = vpop.f32.mrf.mxu0
      %v377 = vadd.f32 0.0, %v376
      %v378 = vpop.f32.mrf.mxu0
      %v379 = vadd.f32 0.0, %v378
      %380 = vdwg.mxu0
      %v389 = vunpack.c.l.b16 %v182
      %v390 = vunpack.c.l.b16 %v183
      %v391 = vunpack.c.l.b16 %v184
      %v392 = vunpack.c.l.b16 %v185
      %v393 = vunpack.c.l.b16 %v186
      %v394 = vunpack.c.l.b16 %v187
      %v395 = vunpack.c.l.b16 %v188
      %v396 = vunpack.c.l.b16 %v189
      %v397 = vpack.c.b16 %v390, %v389
      %v398 = vpack.c.b16 %v392, %v391
      %v399 = vpack.c.b16 %v394, %v393
      %v400 = vpack.c.b16 %v396, %v395
      %v403 = vunpack.c.l.b16 %v190
      %v404 = vunpack.c.l.b16 %v191
      %v405 = vpack.c.b16 %v404, %v403
      %v407 = vsel %vm335, %v397, 0
      %v410 = vsel %vm335, %v398, 0
      %v413 = vsel %vm335, %v399, 0
      %v416 = vsel %vm335, %v400, 0
      %v419 = vsel %vm348, %v405, 0
      %421 = vmatpush.bf16.msra.mxu0 0
      %422 = vmatpush.bf16.msra.mxu0 0
      %423 = vmatpush.bf16.msra.mxu0 0
      %424 = vmatpush.bf16.msra.mxu0 0
      %425 = vmatpush.bf16.msra.mxu0 0
      %426 = vmatpush.bf16.msra.mxu0 0
      %427 = vmatpush.bf16.msra.mxu0 0
      %428 = vmatpush.bf16.msra.mxu0 %v419
      %429 = vmatmul.bf16.gmra.mxu0 %v407
      %v430 = vpop.f32.mrf.mxu0
      %v431 = vadd.f32 %v362, %v430
      %v432 = vpop.f32.mrf.mxu0
      %v433 = vadd.f32 %v364, %v432
      %434 = vmatmul.bf16.gmra.mxu0 %v410
      %v435 = vpop.f32.mrf.mxu0
      %v436 = vadd.f32 %v367, %v435
      %v437 = vpop.f32.mrf.mxu0
      %v438 = vadd.f32 %v369, %v437
      %439 = vmatmul.bf16.gmra.mxu0 %v413
      %v440 = vpop.f32.mrf.mxu0
      %v441 = vadd.f32 %v372, %v440
      %v442 = vpop.f32.mrf.mxu0
      %v443 = vadd.f32 %v374, %v442
      %444 = vmatmul.bf16.gmra.mxu0 %v416
      %v445 = vpop.f32.mrf.mxu0
      %v446 = vadd.f32 %v377, %v445
      %v447 = vpop.f32.mrf.mxu0
      %v448 = vadd.f32 %v379, %v447
      %449 = vdwg.mxu0
      %s450 = scalar_lea.vmem %s168, 8
      %v451 = vld [vmem:[%s450] sm:$0xf]
      %v452 = vld [vmem:[%s450 + $0x8] sm:$0xf]
      %v453 = vld [vmem:[%s450 + $0x10] sm:$0xf]
      %v454 = vld [vmem:[%s450 + $0x18] sm:$0xf]
      %v455 = vld [vmem:[%s450 + $0x20] sm:$0xf]
      %v456 = vld [vmem:[%s450 + $0x28] sm:$0xf]
      %v457 = vld [vmem:[%s450 + $0x30] sm:$0xf]
      %v458 = vld [vmem:[%s450 + $0x38] sm:$0xf]
      %s459 = scalar_lea.vmem %s172, 16
      %v460 = vld [vmem:[%s459] sm:$0xf]
      %v461 = vld [vmem:[%s459 + $0x4] sm:$0x3]
      %v470 = vunpack.c.l.b16 %v451
      %v471 = vunpack.c.l.b16 %v452
      %v472 = vunpack.c.l.b16 %v453
      %v473 = vunpack.c.l.b16 %v454
      %v474 = vunpack.c.l.b16 %v455
      %v475 = vunpack.c.l.b16 %v456
      %v476 = vunpack.c.l.b16 %v457
      %v477 = vunpack.c.l.b16 %v458
      %v478 = vpack.c.b16 %v471, %v470
      %v479 = vpack.c.b16 %v473, %v472
      %v480 = vpack.c.b16 %v475, %v474
      %v481 = vpack.c.b16 %v477, %v476
      %v484 = vunpack.c.l.b16 %v460
      %v485 = vunpack.c.l.b16 %v461
      %v486 = vpack.c.b16 %v485, %v484
      %v488 = vsel %vm335, %v478, 0
      %v491 = vsel %vm335, %v479, 0
      %v494 = vsel %vm335, %v480, 0
      %v497 = vsel %vm335, %v481, 0
      %v500 = vsel %vm348, %v486, 0
      %502 = vmatpush.bf16.msra.mxu0 0
      %503 = vmatpush.bf16.msra.mxu0 0
      %504 = vmatpush.bf16.msra.mxu0 0
      %505 = vmatpush.bf16.msra.mxu0 0
      %506 = vmatpush.bf16.msra.mxu0 0
      %507 = vmatpush.bf16.msra.mxu0 0
      %508 = vmatpush.bf16.msra.mxu0 0
      %509 = vmatpush.bf16.msra.mxu0 %v500
      %510 = vmatmul.bf16.gmra.mxu0 %v488
      %v511 = vpop.f32.mrf.mxu0
      %v512 = vadd.f32 0.0, %v511
      %v513 = vpop.f32.mrf.mxu0
      %v514 = vadd.f32 0.0, %v513
      %515 = vmatmul.bf16.gmra.mxu0 %v491
      %v516 = vpop.f32.mrf.mxu0
      %v517 = vadd.f32 0.0, %v516
      %v518 = vpop.f32.mrf.mxu0
      %v519 = vadd.f32 0.0, %v518
      %520 = vmatmul.bf16.gmra.mxu0 %v494
      %v521 = vpop.f32.mrf.mxu0
      %v522 = vadd.f32 0.0, %v521
      %v523 = vpop.f32.mrf.mxu0
      %v524 = vadd.f32 0.0, %v523
      %525 = vmatmul.bf16.gmra.mxu0 %v497
      %v526 = vpop.f32.mrf.mxu0
      %v527 = vadd.f32 0.0, %v526
      %v528 = vpop.f32.mrf.mxu0
      %v529 = vadd.f32 0.0, %v528
      %530 = vdwg.mxu0
      %v531 = vadd.f32 %v431, %v512
      %v532 = vadd.f32 %v433, %v514
      %v533 = vadd.f32 %v436, %v517
      %v534 = vadd.f32 %v438, %v519
      %v535 = vadd.f32 %v441, %v522
      %v536 = vadd.f32 %v443, %v524
      %v537 = vadd.f32 %v446, %v527
      %v538 = vadd.f32 %v448, %v529
      %v539 = vld [vmem:[%s450] sm:$0xf]
      %v540 = vld [vmem:[%s450 + $0x4] sm:$0x1]
      %v541 = vld [vmem:[%s450 + $0x8] sm:$0xf]
      %v542 = vld [vmem:[%s450 + $0xc] sm:$0x1]
      %v543 = vld [vmem:[%s450 + $0x10] sm:$0xf]
      %v544 = vld [vmem:[%s450 + $0x14] sm:$0x1]
      %v545 = vld [vmem:[%s450 + $0x18] sm:$0xf]
      %v546 = vld [vmem:[%s450 + $0x1c] sm:$0x1]
      %v547 = vld [vmem:[%s450 + $0x20] sm:$0xf]
      %v548 = vld [vmem:[%s450 + $0x24] sm:$0x1]
      %v549 = vld [vmem:[%s450 + $0x28] sm:$0xf]
      %v550 = vld [vmem:[%s450 + $0x2c] sm:$0x1]
      %v551 = vld [vmem:[%s450 + $0x30] sm:$0xf]
      %v552 = vld [vmem:[%s450 + $0x34] sm:$0x1]
      %v553 = vld [vmem:[%s450 + $0x38] sm:$0xf]
      %v554 = vld [vmem:[%s450 + $0x3c] sm:$0x1]
      %v556 = vshrl.u32 %v539, 16
      %v558 = vrot.slane %v556, 4
      %v559 = vshll.u32 %v539, 16
      %v561 = vrot.slane %v559, 5
      %v562 = vor.u32 %v558, %v561
      %v563 = vrot.slane %v562, 4
      %v565 = vshll.u32 %v540, 16
      %v567 = vrot.slane %v565, 5
      %v568 = vsel %vm202, %v563, %v567
      %v570 = vshrl.u32 %v541, 16
      %v572 = vrot.slane %v570, 4
      %v573 = vshll.u32 %v541, 16
      %v575 = vrot.slane %v573, 5
      %v576 = vor.u32 %v572, %v575
      %v577 = vrot.slane %v576, 4
      %v579 = vshll.u32 %v542, 16
      %v581 = vrot.slane %v579, 5
      %v582 = vsel %vm202, %v577, %v581
      %v584 = vshrl.u32 %v543, 16
      %v586 = vrot.slane %v584, 4
      %v587 = vshll.u32 %v543, 16
      %v589 = vrot.slane %v587, 5
      %v590 = vor.u32 %v586, %v589
      %v591 = vrot.slane %v590, 4
      %v593 = vshll.u32 %v544, 16
      %v595 = vrot.slane %v593, 5
      %v596 = vsel %vm202, %v591, %v595
      %v598 = vshrl.u32 %v545, 16
      %v600 = vrot.slane %v598, 4
      %v601 = vshll.u32 %v545, 16
      %v603 = vrot.slane %v601, 5
      %v604 = vor.u32 %v600, %v603
      %v605 = vrot.slane %v604, 4
      %v607 = vshll.u32 %v546, 16
      %v609 = vrot.slane %v607, 5
      %v610 = vsel %vm202, %v605, %v609
      %v612 = vshrl.u32 %v547, 16
      %v614 = vrot.slane %v612, 4
      %v615 = vshll.u32 %v547, 16
      %v617 = vrot.slane %v615, 5
      %v618 = vor.u32 %v614, %v617
      %v619 = vrot.slane %v618, 4
      %v621 = vshll.u32 %v548, 16
      %v623 = vrot.slane %v621, 5
      %v624 = vsel %vm202, %v619, %v623
      %v626 = vshrl.u32 %v549, 16
      %v628 = vrot.slane %v626, 4
      %v629 = vshll.u32 %v549, 16
      %v631 = vrot.slane %v629, 5
      %v632 = vor.u32 %v628, %v631
      %v633 = vrot.slane %v632, 4
      %v635 = vshll.u32 %v550, 16
      %v637 = vrot.slane %v635, 5
      %v638 = vsel %vm202, %v633, %v637
      %v640 = vshrl.u32 %v551, 16
      %v642 = vrot.slane %v640, 4
      %v643 = vshll.u32 %v551, 16
      %v645 = vrot.slane %v643, 5
      %v646 = vor.u32 %v642, %v645
      %v647 = vrot.slane %v646, 4
      %v649 = vshll.u32 %v552, 16
      %v651 = vrot.slane %v649, 5
      %v652 = vsel %vm202, %v647, %v651
      %v654 = vshrl.u32 %v553, 16
      %v656 = vrot.slane %v654, 4
      %v657 = vshll.u32 %v553, 16
      %v659 = vrot.slane %v657, 5
      %v660 = vor.u32 %v656, %v659
      %v661 = vrot.slane %v660, 4
      %v663 = vshll.u32 %v554, 16
      %v665 = vrot.slane %v663, 5
      %v666 = vsel %vm202, %v661, %v665
      %s667 = scalar_lea.vmem %s172, 24
      %v668 = vld [vmem:[%s667] sm:$0xf]
      %v669 = vld [vmem:[%s667 + $0x4] sm:$0x3]
      %v670 = vunpack.c.l.b16 %v568
      %v671 = vunpack.c.l.b16 %v582
      %v672 = vunpack.c.l.b16 %v596
      %v673 = vunpack.c.l.b16 %v610
      %v674 = vunpack.c.l.b16 %v624
      %v675 = vunpack.c.l.b16 %v638
      %v676 = vunpack.c.l.b16 %v652
      %v677 = vunpack.c.l.b16 %v666
      %v678 = vpack.c.b16 %v671, %v670
      %v679 = vpack.c.b16 %v673, %v672
      %v680 = vpack.c.b16 %v675, %v674
      %v681 = vpack.c.b16 %v677, %v676
      %v684 = vunpack.c.l.b16 %v668
      %v685 = vunpack.c.l.b16 %v669
      %v686 = vpack.c.b16 %v685, %v684
      %v688 = vsel %vm335, %v678, 0
      %v691 = vsel %vm335, %v679, 0
      %v694 = vsel %vm335, %v680, 0
      %v697 = vsel %vm335, %v681, 0
      %v700 = vsel %vm348, %v686, 0
      %702 = vmatpush.bf16.msra.mxu0 0
      %703 = vmatpush.bf16.msra.mxu0 0
      %704 = vmatpush.bf16.msra.mxu0 0
      %705 = vmatpush.bf16.msra.mxu0 0
      %706 = vmatpush.bf16.msra.mxu0 0
      %707 = vmatpush.bf16.msra.mxu0 0
      %708 = vmatpush.bf16.msra.mxu0 0
      %709 = vmatpush.bf16.msra.mxu0 %v700
      %710 = vmatmul.bf16.gmra.mxu0 %v688
      %v711 = vpop.f32.mrf.mxu0
      %v712 = vadd.f32 0.0, %v711
      %v713 = vpop.f32.mrf.mxu0
      %v714 = vadd.f32 0.0, %v713
      %715 = vmatmul.bf16.gmra.mxu0 %v691
      %v716 = vpop.f32.mrf.mxu0
      %v717 = vadd.f32 0.0, %v716
      %v718 = vpop.f32.mrf.mxu0
      %v719 = vadd.f32 0.0, %v718
      %720 = vmatmul.bf16.gmra.mxu0 %v694
      %v721 = vpop.f32.mrf.mxu0
      %v722 = vadd.f32 0.0, %v721
      %v723 = vpop.f32.mrf.mxu0
      %v724 = vadd.f32 0.0, %v723
      %725 = vmatmul.bf16.gmra.mxu0 %v697
      %v726 = vpop.f32.mrf.mxu0
      %v727 = vadd.f32 0.0, %v726
      %v728 = vpop.f32.mrf.mxu0
      %v729 = vadd.f32 0.0, %v728
      %730 = vdwg.mxu0
      %v731 = vadd.f32 %v531, %v712
      %v732 = vadd.f32 %v532, %v714
      %v733 = vadd.f32 %v533, %v717
      %v734 = vadd.f32 %v534, %v719
      %v735 = vadd.f32 %v535, %v722
      %v736 = vadd.f32 %v536, %v724
      %v737 = vadd.f32 %v537, %v727
      %v738 = vadd.f32 %v538, %v729
      %vm739 = vcmp.gt.f32.partialorder %v731, 0.0
      %vm740 = vcmp.gt.f32.partialorder %v732, 0.0
      %vm741 = vcmp.gt.f32.partialorder %v733, 0.0
      %vm742 = vcmp.gt.f32.partialorder %v734, 0.0
      %vm743 = vcmp.gt.f32.partialorder %v735, 0.0
      %vm744 = vcmp.gt.f32.partialorder %v736, 0.0
      %vm745 = vcmp.gt.f32.partialorder %v737, 0.0
      %vm746 = vcmp.gt.f32.partialorder %v738, 0.0
      %v747 = vmul.f32 %v731, 0.2
      %v748 = vmul.f32 %v732, 0.2
      %v749 = vmul.f32 %v733, 0.2
      %v750 = vmul.f32 %v734, 0.2
      %v751 = vmul.f32 %v735, 0.2
      %v752 = vmul.f32 %v736, 0.2
      %v753 = vmul.f32 %v737, 0.2
      %v754 = vmul.f32 %v738, 0.2
      %v755 = vsel %vm739, %v731, %v747
      %v756 = vsel %vm740, %v732, %v748
      %v757 = vsel %vm741, %v733, %v749
      %v758 = vsel %vm742, %v734, %v750
      %v759 = vsel %vm743, %v735, %v751
      %v760 = vsel %vm744, %v736, %v752
      %v761 = vsel %vm745, %v737, %v753
      %v762 = vsel %vm746, %v738, %v754
      %v763 = vpack.c.bf16 %v755, %v755
      %v764 = vpack.c.bf16 %v756, %v756
      %v765 = vpack.c.bf16 %v757, %v757
      %v766 = vpack.c.bf16 %v758, %v758
      %v767 = vpack.c.bf16 %v759, %v759
      %v768 = vpack.c.bf16 %v760, %v760
      %v769 = vpack.c.bf16 %v761, %v761
      %v770 = vpack.c.bf16 %v762, %v762
      %771 = vst [vmem:[%s180] sm:$0xf] %v763
      %772 = vst [vmem:[%s180 + $0x4] sm:$0xf] %v764
      %773 = vst [vmem:[%s180 + $0x8] sm:$0xf] %v765
      %774 = vst [vmem:[%s180 + $0xc] sm:$0xf] %v766
      %775 = vst [vmem:[%s180 + $0x10] sm:$0xf] %v767
      %776 = vst [vmem:[%s180 + $0x14] sm:$0xf] %v768
      %777 = vst [vmem:[%s180 + $0x18] sm:$0xf] %v769
      %778 = vst [vmem:[%s180 + $0x1c] sm:$0xf] %v770
      %p779 = scmp.lt.s32.totalorder %s17, 1
      %s780 = scalar_select %p779, %s17, 1
      %p781 = scmp.lt.s32.totalorder %s18, 0
      %s782 = scalar_select %p781, %s18, 0
      %s783 = smul.addr %s780, 8
      %s784 = sadd.s32 %s782, %s783
      %s785 = smul.addr %s784, 4
      %s786 = scalar_lea.vmem %s2, %s785
      // Predicated region
      $region29: #{discriminator_forward.6} parent=27 // pred_check
        %p787 = pneg %p97
      $region30: #{discriminator_forward.6} parent=27 // pred_check_branch
        %789 = sbr.rel (%p787) target = $region32
      $region31: #{discriminator_forward.6} parent=27 // pred_region
        _
      $region32: #{discriminator_forward.6} parent=27 // pred_fallthru
        _
    $region28: #{discriminator_forward.6} parent=5 // pred_fallthru
      _
    %p790 = scmp.le.s32.totalorder 2, %s8
    // Predicated region
    $region33: #{discriminator_forward.6} parent=5 // pred_check
      %p791 = pneg %p790
    $region34: #{discriminator_forward.6} parent=5 // pred_check_branch
      %793 = sbr.rel (%p791) target = $region36
    $region35: #{discriminator_forward.6} parent=5 // pred_region
      %s794 = ssub.s32 %s8, 2
      // Predicated region
      $region37: #{discriminator_forward.6} parent=35 // pred_check
        %p795 = pneg %p103
      $region38: #{discriminator_forward.6} parent=35 // pred_check_branch
        %797 = sbr.rel (%p795) target = $region40
      $region39: #{discriminator_forward.6} parent=35 // pred_region
        %p798 = scmp.lt.s32.totalorder %s19, 1
        %s799 = scalar_select %p798, %s19, 1
        %p800 = scmp.lt.s32.totalorder %s20, 0
        %s801 = scalar_select %p800, %s20, 0
        %s802 = smul.addr %s799, 8
        %s803 = sadd.s32 %s801, %s802
        %s804 = smul.addr %s803, 4
        %s805 = scalar_lea.vmem %s2, %s804
      $region40: #{discriminator_forward.6} parent=35 // pred_fallthru
        _
    $region36: #{discriminator_forward.6} parent=5 // pred_fallthru
      _
  $region6: #{discriminator_forward.6} parent=0 // loop_footer
    %s12 = sadd.s32 1, %s8
  $region7: #{discriminator_forward.6} parent=0 // loop_footer_branch
    %7 = sbr.rel target = $region3
  $region8: #{discriminator_forward.6} parent=0 // loop_exit
    _

// kernel: discriminator_forward.8
$region0: #{discriminator_forward.8}
  #allocation0 [shape = 'u32[]', space=smem, size = 0x4, offset = 0x4, fixed_abs, tag = 'smem constant byte address 0x4 - core index']
  #allocation1 [shape = 'u32[72,128]{1,0:T(1,128)}', space=vmem, size = 0x9000, scoped, tag = 'internal scratch']
  %s0 = inlined_call_operand.vmem [shape: bf16[2,4,4,128], index: 0, kind: input, shape index: {}]
  %s1 = inlined_call_operand.vmem [shape: f32[1,128], index: 1, kind: input, shape index: {}]
  %s2 = inlined_call_operand.vmem [shape: f32[1,128], index: 2, kind: input, shape index: {}]
  %s3 = inlined_call_operand.vmem [shape: bf16[2,4,4,128], index: 3, kind: output, shape index: {}]
  %s4 = sld [smem:[#allocation0]]
  $region45: #{discriminator_forward.8} parent=0
    _
  %s6 = ssub.s32 1, %s4
  %s7 = scalar_select 0, %s6, %s4
  loop: start=0, step=1, limit=4
  $region2: #{discriminator_forward.8} parent=0 // loop_pre_header
    _
  $region3: #{discriminator_forward.8} parent=0 // loop_header
    %s9 = sphi 0, %s13
    %p10 = scmp.ge.s32.totalorder %s9, 4
    %s16 = sphi 0, %s28
    %s17 = sphi 0, %s24
    %s18 = sphi 0, %s16
    %s19 = sphi 0, %s17
    %s20 = sphi 0, %s18
    %s21 = sphi 0, %s19
    %s33 = sphi 0, %s35
    %s36 = sphi 0, %s33
    %s37 = sphi 0, %s36
    %s53 = sphi 0, %s37
    %s59 = sphi 0, %s61
    %s62 = sphi 0, %s59
    %s63 = sphi 0, %s62
    %s79 = sphi 0, %s63
    %s85 = sphi 0, %s87
    %s88 = sphi 0, %s85
    %s89 = sphi 0, %s88
    %s105 = sphi 0, %s89
    %s113 = sphi 0, %s115
    %s116 = sphi 0, %s113
    %s117 = sphi 0, %s116
    %s133 = sphi 0, %s117
  $region4: #{discriminator_forward.8} parent=0 // loop_header_branch
    %12 = sbr.rel (%p10) target = $region8
  $region5: #{discriminator_forward.8} parent=0 // loop_body
    %s14 = ssub.s32 %s9, 1
    %s15 = ssub.s32 %s9, 2
    %s22 = sadd.s32 1, %s17
    %p23 = scmp.ge.s32.totalorder %s22, 1
    %s24 = scalar_select %p23, 0, %s22
    %s25 = sadd.s32 1, %s16
    %s26 = scalar_select %p23, %s25, %s16
    %p27 = scmp.ge.s32.totalorder %s26, 2
    %s28 = scalar_select %p27, 0, %s26
    %s29 = ssub.s32 %s16, %s28
    %s30 = ssub.s32 %s17, %s24
    %s31 = sor.u32 %s29, %s30
    %p32 = scmp.eq.s32.totalorder %s31, 0
    %s34 = sadd.s32 %s33, 1
    %s35 = scalar_select %p32, %s33, %s34
    %p38 = pneg %p32
    %p39 = scmp.eq.s32.totalorder %s9, 1
    %p40 = por %p38, %p39
    %p41 = scmp.ne.s32.totalorder %s33, %s36
    %p42 = scmp.eq.s32.totalorder %s9, 0
    %p43 = por %p41, %p42
    %p44 = scmp.ne.s32.totalorder %s33, %s36
    %p45 = scmp.eq.s32.totalorder %s14, 1
    %p46 = por %p44, %p45
    %p47 = scmp.ne.s32.totalorder %s36, %s37
    %p48 = scmp.eq.s32.totalorder %s14, 0
    %p49 = por %p47, %p48
    %p50 = scmp.ne.s32.totalorder %s36, %s37
    %p51 = scmp.eq.s32.totalorder %s15, 1
    %p52 = por %p50, %p51
    %p54 = scmp.ne.s32.totalorder %s37, %s53
    %p55 = scmp.eq.s32.totalorder %s15, 0
    %p56 = por %p54, %p55
    %s57 = ssub.s32 %s17, %s24
    %p58 = scmp.eq.s32.totalorder %s57, 0
    %s60 = sadd.s32 %s59, 1
    %s61 = scalar_select %p58, %s59, %s60
    %p64 = pneg %p58
    %p65 = scmp.eq.s32.totalorder %s9, 1
    %p66 = por %p64, %p65
    %p67 = scmp.ne.s32.totalorder %s59, %s62
    %p68 = scmp.eq.s32.totalorder %s9, 0
    %p69 = por %p67, %p68
    %p70 = scmp.ne.s32.totalorder %s59, %s62
    %p71 = scmp.eq.s32.totalorder %s14, 1
    %p72 = por %p70, %p71
    %p73 = scmp.ne.s32.totalorder %s62, %s63
    %p74 = scmp.eq.s32.totalorder %s14, 0
    %p75 = por %p73, %p74
    %p76 = scmp.ne.s32.totalorder %s62, %s63
    %p77 = scmp.eq.s32.totalorder %s15, 1
    %p78 = por %p76, %p77
    %p80 = scmp.ne.s32.totalorder %s63, %s79
    %p81 = scmp.eq.s32.totalorder %s15, 0
    %p82 = por %p80, %p81
    %s83 = ssub.s32 %s17, %s24
    %p84 = scmp.eq.s32.totalorder %s83, 0
    %s86 = sadd.s32 %s85, 1
    %s87 = scalar_select %p84, %s85, %s86
    %p90 = pneg %p84
    %p91 = scmp.eq.s32.totalorder %s9, 1
    %p92 = por %p90, %p91
    %p93 = scmp.ne.s32.totalorder %s85, %s88
    %p94 = scmp.eq.s32.totalorder %s9, 0
    %p95 = por %p93, %p94
    %p96 = scmp.ne.s32.totalorder %s85, %s88
    %p97 = scmp.eq.s32.totalorder %s14, 1
    %p98 = por %p96, %p97
    %p99 = scmp.ne.s32.totalorder %s88, %s89
    %p100 = scmp.eq.s32.totalorder %s14, 0
    %p101 = por %p99, %p100
    %p102 = scmp.ne.s32.totalorder %s88, %s89
    %p103 = scmp.eq.s32.totalorder %s15, 1
    %p104 = por %p102, %p103
    %p106 = scmp.ne.s32.totalorder %s89, %s105
    %p107 = scmp.eq.s32.totalorder %s15, 0
    %p108 = por %p106, %p107
    %s109 = ssub.s32 %s16, %s28
    %s110 = ssub.s32 %s17, %s24
    %s111 = sor.u32 %s109, %s110
    %p112 = scmp.eq.s32.totalorder %s111, 0
    %s114 = sadd.s32 %s113, 1
    %s115 = scalar_select %p112, %s113, %s114
    %p118 = pneg %p112
    %p119 = scmp.eq.s32.totalorder %s9, 1
    %p120 = por %p118, %p119
    %p121 = scmp.ne.s32.totalorder %s113, %s116
    %p122 = scmp.eq.s32.totalorder %s9, 0
    %p123 = por %p121, %p122
    %p124 = scmp.ne.s32.totalorder %s113, %s116
    %p125 = scmp.eq.s32.totalorder %s14, 1
    %p126 = por %p124, %p125
    %p127 = scmp.ne.s32.totalorder %s116, %s117
    %p128 = scmp.eq.s32.totalorder %s14, 0
    %p129 = por %p127, %p128
    %p130 = scmp.ne.s32.totalorder %s116, %s117
    %p131 = scmp.eq.s32.totalorder %s15, 1
    %p132 = por %p130, %p131
    %p134 = scmp.ne.s32.totalorder %s117, %s133
    %p135 = scmp.eq.s32.totalorder %s15, 0
    %p136 = por %p134, %p135
    %p137 = scmp.le.s32.totalorder 1, %s9
    %p138 = scmp.lt.s32.totalorder %s9, 3
    %p139 = pnand %p137, %p138
    %p140 = pneg %p139
    // Predicated region
    $region9: #{discriminator_forward.8} parent=5 // pred_check
      _
    $region10: #{discriminator_forward.8} parent=5 // pred_check_branch
      %142 = sbr.rel (%p139) target = $region12
    $region11: #{discriminator_forward.8} parent=5 // pred_region
      %s143 = ssub.s32 %s9, 1
      // Predicated region
      $region13: #{discriminator_forward.8} parent=11 // pred_check
        %p144 = pneg %p75
      $region14: #{discriminator_forward.8} parent=11 // pred_check_branch
        %146 = sbr.rel (%p144) target = $region16
      $region15: #{discriminator_forward.8} parent=11 // pred_region
        %p147 = scmp.lt.s32.totalorder %s19, 0
        %s148 = scalar_select %p147, %s19, 0
        %s149 = scalar_lea.vmem %s1, %s148
      $region16: #{discriminator_forward.8} parent=11 // pred_fallthru
        _
      // Predicated region
      $region17: #{discriminator_forward.8} parent=11 // pred_check
        %p150 = pneg %p101
      $region18: #{discriminator_forward.8} parent=11 // pred_check_branch
        %152 = sbr.rel (%p150) target = $region20
      $region19: #{discriminator_forward.8} parent=11 // pred_region
        %p153 = scmp.lt.s32.totalorder %s19, 0
        %s154 = scalar_select %p153, %s19, 0
        %s155 = scalar_lea.vmem %s2, %s154
      $region20: #{discriminator_forward.8} parent=11 // pred_fallthru
        _
    $region12: #{discriminator_forward.8} parent=5 // pred_fallthru
      _
    %p156 = scmp.lt.s32.totalorder %s9, 2
    // Predicated region
    $region21: #{discriminator_forward.8} parent=5 // pred_check
      %p157 = pneg %p156
    $region22: #{discriminator_forward.8} parent=5 // pred_check_branch
      %159 = sbr.rel (%p157) target = $region24
    $region23: #{discriminator_forward.8} parent=5 // pred_region
      // Predicated region
      $region25: #{discriminator_forward.8} parent=23 // pred_check
        %p160 = pneg %p43
      $region26: #{discriminator_forward.8} parent=23 // pred_check_branch
        %162 = sbr.rel (%p160) target = $region28
      $region27: #{discriminator_forward.8} parent=23 // pred_region
        %p163 = scmp.lt.s32.totalorder %s16, 1
        %s164 = scalar_select %p163, %s16, 1
        %p165 = scmp.lt.s32.totalorder %s17, 0
        %s166 = scalar_select %p165, %s17, 0
        %s167 = smul.addr %s164, 4
        %s168 = sadd.s32 %s166, %s167
        %s169 = smul.addr %s168, 2
        %s170 = scalar_lea.vmem %s0, %s169
      $region28: #{discriminator_forward.8} parent=23 // pred_fallthru
        _
    $region24: #{discriminator_forward.8} parent=5 // pred_fallthru
      _
    %p171 = scmp.le.s32.totalorder 1, %s9
    %p172 = scmp.lt.s32.totalorder %s9, 3
    %p173 = pnand %p171, %p172
    %p174 = pneg %p173
    // Predicated region
    $region29: #{discriminator_forward.8} parent=5 // pred_check
      _
    $region30: #{discriminator_forward.8} parent=5 // pred_check_branch
      %176 = sbr.rel (%p173) target = $region32
    $region31: #{discriminator_forward.8} parent=5 // pred_region
      %s177 = ssub.s32 %s9, 1
      %p178 = scmp.lt.s32.totalorder %s18, 1
      %s179 = scalar_select %p178, %s18, 1
      %p180 = scmp.lt.s32.totalorder %s19, 0
      %s181 = scalar_select %p180, %s19, 0
      %s182 = smul.addr %s179, 4
      %s183 = sadd.s32 %s181, %s182
      %s184 = smul.addr %s183, 2
      %s185 = scalar_lea.vmem %s0, %s184
      %p186 = pneg %p49
      %p187 = pneg %p46
      %p188 = scmp.lt.s32.totalorder %s19, 0
      %s189 = scalar_select %p188, %s19, 0
      %s190 = scalar_lea.vmem %s1, %s189
      %p191 = pneg %p75
      %p192 = pneg %p72
      %p193 = scmp.lt.s32.totalorder %s19, 0
      %s194 = scalar_select %p193, %s19, 0
      %s195 = scalar_lea.vmem %s2, %s194
      %p196 = pneg %p101
      %p197 = pneg %p98
      %p198 = pneg %p129
      %p199 = pneg %p126
      %p200 = scmp.lt.s32.totalorder %s18, 1
      %s201 = scalar_select %p200, %s18, 1
      %p202 = scmp.lt.s32.totalorder %s19, 0
      %s203 = scalar_select %p202, %s19, 0
      %s204 = smul.addr %s201, 4
      %s205 = sadd.s32 %s203, %s204
      %s206 = smul.addr %s205, 2
      %s207 = scalar_lea.vmem %s3, %s206
      %p208 = scmp.lt.s32.totalorder %s18, 1
      %s209 = scalar_select %p208, %s18, 1
      %p210 = scmp.lt.s32.totalorder %s19, 0
      %s211 = scalar_select %p210, %s19, 0
      %s212 = smul.addr %s209, 4
      %s213 = sadd.s32 %s211, %s212
      %s214 = smul.addr %s213, 2
      %s215 = scalar_lea.vmem %s0, %s214
      %p216 = scmp.lt.s32.totalorder %s19, 0
      %s217 = scalar_select %p216, %s19, 0
      %s218 = scalar_lea.vmem %s1, %s217
      %p219 = scmp.lt.s32.totalorder %s19, 0
      %s220 = scalar_select %p219, %s19, 0
      %s221 = scalar_lea.vmem %s2, %s220
      %p222 = scmp.lt.s32.totalorder %s18, 1
      %s223 = scalar_select %p222, %s18, 1
      %p224 = scmp.lt.s32.totalorder %s19, 0
      %s225 = scalar_select %p224, %s19, 0
      %s226 = smul.addr %s223, 4
      %s227 = sadd.s32 %s225, %s226
      %s228 = smul.addr %s227, 2
      %s229 = scalar_lea.vmem %s3, %s228
      %v230 = vld [vmem:[%s215] sm:$0x3]
      %v231 = vld [vmem:[%s215 + $0x2] sm:$0x3]
      %v232 = vld [vmem:[%s215 + $0x4] sm:$0x3]
      %v233 = vld [vmem:[%s215 + $0x6] sm:$0x3]
      %v234 = vunpack.c.l.bf16 %v230
      %v235 = vunpack.c.l.bf16 %v231
      %v236 = vunpack.c.l.bf16 %v232
      %v237 = vunpack.c.l.bf16 %v233
      %v238 = vld [vmem:[%s218] sm:$0x1]
      %v239 = vld [vmem:[%s221] sm:$0x1]
      %v241 = vperm.slane %v238, 0
      %v243 = vmul.f32 %v234, %v241
      %v244 = vmul.f32 %v235, %v241
      %v245 = vmul.f32 %v236, %v241
      %v246 = vmul.f32 %v237, %v241
      %v248 = vperm.slane %v239, 0
      %v250 = vadd.f32 %v243, %v248
      %v251 = vadd.f32 %v244, %v248
      %v252 = vadd.f32 %v245, %v248
      %v253 = vadd.f32 %v246, %v248
      %vm254 = vcmp.gt.f32.partialorder %v250, 0.0
      %vm255 = vcmp.gt.f32.partialorder %v251, 0.0
      %vm256 = vcmp.gt.f32.partialorder %v252, 0.0
      %vm257 = vcmp.gt.f32.partialorder %v253, 0.0
      %v258 = vmul.f32 %v250, 0.2
      %v259 = vmul.f32 %v251, 0.2
      %v260 = vmul.f32 %v252, 0.2
      %v261 = vmul.f32 %v253, 0.2
      %v262 = vsel %vm254, %v250, %v258
      %v263 = vsel %vm255, %v251, %v259
      %v264 = vsel %vm256, %v252, %v260
      %v265 = vsel %vm257, %v253, %v261
      %v266 = vpack.c.bf16 %v262, %v262
      %v267 = vpack.c.bf16 %v263, %v263
      %v268 = vpack.c.bf16 %v264, %v264
      %v269 = vpack.c.bf16 %v265, %v265
      %270 = vst [vmem:[%s229] sm:$0x3] %v266
      %271 = vst [vmem:[%s229 + $0x2] sm:$0x3] %v267
      %272 = vst [vmem:[%s229 + $0x4] sm:$0x3] %v268
      %273 = vst [vmem:[%s229 + $0x6] sm:$0x3] %v269
      %p274 = scmp.lt.s32.totalorder %s18, 1
      %s275 = scalar_select %p274, %s18, 1
      %p276 = scmp.lt.s32.totalorder %s19, 0
      %s277 = scalar_select %p276, %s19, 0
      %s278 = smul.addr %s275, 4
      %s279 = sadd.s32 %s277, %s278
      %s280 = smul.addr %s279, 2
      %s281 = scalar_lea.vmem %s3, %s280
      // Predicated region
      $region33: #{discriminator_forward.8} parent=31 // pred_check
        %p282 = pneg %p126
      $region34: #{discriminator_forward.8} parent=31 // pred_check_branch
        %284 = sbr.rel (%p282) target = $region36
      $region35: #{discriminator_forward.8} parent=31 // pred_region
        _
      $region36: #{discriminator_forward.8} parent=31 // pred_fallthru
        _
    $region32: #{discriminator_forward.8} parent=5 // pred_fallthru
      _
    %p285 = scmp.le.s32.totalorder 2, %s9
    // Predicated region
    $region37: #{discriminator_forward.8} parent=5 // pred_check
      %p286 = pneg %p285
    $region38: #{discriminator_forward.8} parent=5 // pred_check_branch
      %288 = sbr.rel (%p286) target = $region40
    $region39: #{discriminator_forward.8} parent=5 // pred_region
      %s289 = ssub.s32 %s9, 2
      // Predicated region
      $region41: #{discriminator_forward.8} parent=39 // pred_check
        %p290 = pneg %p132
      $region42: #{discriminator_forward.8} parent=39 // pred_check_branch
        %292 = sbr.rel (%p290) target = $region44
      $region43: #{discriminator_forward.8} parent=39 // pred_region
        %p293 = scmp.lt.s32.totalorder %s20, 1
        %s294 = scalar_select %p293, %s20, 1
        %p295 = scmp.lt.s32.totalorder %s21, 0
        %s296 = scalar_select %p295, %s21, 0
        %s297 = smul.addr %s294, 4
        %s298 = sadd.s32 %s296, %s297
        %s299 = smul.addr %s298, 2
        %s300 = scalar_lea.vmem %s3, %s299
      $region44: #{discriminator_forward.8} parent=39 // pred_fallthru
        _
    $region40: #{discriminator_forward.8} parent=5 // pred_fallthru
      _
  $region6: #{discriminator_forward.8} parent=0 // loop_footer
    %s13 = sadd.s32 1, %s9
  $region7: #{discriminator_forward.8} parent=0 // loop_footer_branch
    %8 = sbr.rel target = $region3
  $region8: #{discriminator_forward.8} parent=0 // loop_exit
    _

// kernel: discriminator_forward.10
$region0: #{discriminator_forward.10}
  #allocation0 [shape = 'u32[]', space=smem, size = 0x4, offset = 0x4, fixed_abs, tag = 'smem constant byte address 0x4 - core index']
  #allocation1 [shape = 'u32[72,128]{1,0:T(1,128)}', space=vmem, size = 0x9000, scoped, tag = 'internal scratch']
  %s0 = inlined_call_operand.vmem [shape: bf16[2,2,2,128], index: 0, kind: input, shape index: {}]
  %s1 = inlined_call_operand.vmem [shape: f32[1,128], index: 1, kind: input, shape index: {}]
  %s2 = inlined_call_operand.vmem [shape: f32[1,128], index: 2, kind: input, shape index: {}]
  %s3 = inlined_call_operand.vmem [shape: bf16[2,2,2,128], index: 3, kind: output, shape index: {}]
  %s4 = sld [smem:[#allocation0]]
  $region45: #{discriminator_forward.10} parent=0
    _
  %s6 = ssub.s32 1, %s4
  %s7 = scalar_select 0, %s6, %s4
  loop: start=0, step=1, limit=4
  $region2: #{discriminator_forward.10} parent=0 // loop_pre_header
    _
  $region3: #{discriminator_forward.10} parent=0 // loop_header
    %s9 = sphi 0, %s13
    %p10 = scmp.ge.s32.totalorder %s9, 4
    %s16 = sphi 0, %s28
    %s17 = sphi 0, %s24
    %s18 = sphi 0, %s16
    %s19 = sphi 0, %s17
    %s20 = sphi 0, %s18
    %s21 = sphi 0, %s19
    %s33 = sphi 0, %s35
    %s36 = sphi 0, %s33
    %s37 = sphi 0, %s36
    %s53 = sphi 0, %s37
    %s59 = sphi 0, %s61
    %s62 = sphi 0, %s59
    %s63 = sphi 0, %s62
    %s79 = sphi 0, %s63
    %s85 = sphi 0, %s87
    %s88 = sphi 0, %s85
    %s89 = sphi 0, %s88
    %s105 = sphi 0, %s89
    %s113 = sphi 0, %s115
    %s116 = sphi 0, %s113
    %s117 = sphi 0, %s116
    %s133 = sphi 0, %s117
  $region4: #{discriminator_forward.10} parent=0 // loop_header_branch
    %12 = sbr.rel (%p10) target = $region8
  $region5: #{discriminator_forward.10} parent=0 // loop_body
    %s14 = ssub.s32 %s9, 1
    %s15 = ssub.s32 %s9, 2
    %s22 = sadd.s32 1, %s17
    %p23 = scmp.ge.s32.totalorder %s22, 1
    %s24 = scalar_select %p23, 0, %s22
    %s25 = sadd.s32 1, %s16
    %s26 = scalar_select %p23, %s25, %s16
    %p27 = scmp.ge.s32.totalorder %s26, 2
    %s28 = scalar_select %p27, 0, %s26
    %s29 = ssub.s32 %s16, %s28
    %s30 = ssub.s32 %s17, %s24
    %s31 = sor.u32 %s29, %s30
    %p32 = scmp.eq.s32.totalorder %s31, 0
    %s34 = sadd.s32 %s33, 1
    %s35 = scalar_select %p32, %s33, %s34
    %p38 = pneg %p32
    %p39 = scmp.eq.s32.totalorder %s9, 1
    %p40 = por %p38, %p39
    %p41 = scmp.ne.s32.totalorder %s33, %s36
    %p42 = scmp.eq.s32.totalorder %s9, 0
    %p43 = por %p41, %p42
    %p44 = scmp.ne.s32.totalorder %s33, %s36
    %p45 = scmp.eq.s32.totalorder %s14, 1
    %p46 = por %p44, %p45
    %p47 = scmp.ne.s32.totalorder %s36, %s37
    %p48 = scmp.eq.s32.totalorder %s14, 0
    %p49 = por %p47, %p48
    %p50 = scmp.ne.s32.totalorder %s36, %s37
    %p51 = scmp.eq.s32.totalorder %s15, 1
    %p52 = por %p50, %p51
    %p54 = scmp.ne.s32.totalorder %s37, %s53
    %p55 = scmp.eq.s32.totalorder %s15, 0
    %p56 = por %p54, %p55
    %s57 = ssub.s32 %s17, %s24
    %p58 = scmp.eq.s32.totalorder %s57, 0
    %s60 = sadd.s32 %s59, 1
    %s61 = scalar_select %p58, %s59, %s60
    %p64 = pneg %p58
    %p65 = scmp.eq.s32.totalorder %s9, 1
    %p66 = por %p64, %p65
    %p67 = scmp.ne.s32.totalorder %s59, %s62
    %p68 = scmp.eq.s32.totalorder %s9, 0
    %p69 = por %p67, %p68
    %p70 = scmp.ne.s32.totalorder %s59, %s62
    %p71 = scmp.eq.s32.totalorder %s14, 1
    %p72 = por %p70, %p71
    %p73 = scmp.ne.s32.totalorder %s62, %s63
    %p74 = scmp.eq.s32.totalorder %s14, 0
    %p75 = por %p73, %p74
    %p76 = scmp.ne.s32.totalorder %s62, %s63
    %p77 = scmp.eq.s32.totalorder %s15, 1
    %p78 = por %p76, %p77
    %p80 = scmp.ne.s32.totalorder %s63, %s79
    %p81 = scmp.eq.s32.totalorder %s15, 0
    %p82 = por %p80, %p81
    %s83 = ssub.s32 %s17, %s24
    %p84 = scmp.eq.s32.totalorder %s83, 0
    %s86 = sadd.s32 %s85, 1
    %s87 = scalar_select %p84, %s85, %s86
    %p90 = pneg %p84
    %p91 = scmp.eq.s32.totalorder %s9, 1
    %p92 = por %p90, %p91
    %p93 = scmp.ne.s32.totalorder %s85, %s88
    %p94 = scmp.eq.s32.totalorder %s9, 0
    %p95 = por %p93, %p94
    %p96 = scmp.ne.s32.totalorder %s85, %s88
    %p97 = scmp.eq.s32.totalorder %s14, 1
    %p98 = por %p96, %p97
    %p99 = scmp.ne.s32.totalorder %s88, %s89
    %p100 = scmp.eq.s32.totalorder %s14, 0
    %p101 = por %p99, %p100
    %p102 = scmp.ne.s32.totalorder %s88, %s89
    %p103 = scmp.eq.s32.totalorder %s15, 1
    %p104 = por %p102, %p103
    %p106 = scmp.ne.s32.totalorder %s89, %s105
    %p107 = scmp.eq.s32.totalorder %s15, 0
    %p108 = por %p106, %p107
    %s109 = ssub.s32 %s16, %s28
    %s110 = ssub.s32 %s17, %s24
    %s111 = sor.u32 %s109, %s110
    %p112 = scmp.eq.s32.totalorder %s111, 0
    %s114 = sadd.s32 %s113, 1
    %s115 = scalar_select %p112, %s113, %s114
    %p118 = pneg %p112
    %p119 = scmp.eq.s32.totalorder %s9, 1
    %p120 = por %p118, %p119
    %p121 = scmp.ne.s32.totalorder %s113, %s116
    %p122 = scmp.eq.s32.totalorder %s9, 0
    %p123 = por %p121, %p122
    %p124 = scmp.ne.s32.totalorder %s113, %s116
    %p125 = scmp.eq.s32.totalorder %s14, 1
    %p126 = por %p124, %p125
    %p127 = scmp.ne.s32.totalorder %s116, %s117
    %p128 = scmp.eq.s32.totalorder %s14, 0
    %p129 = por %p127, %p128
    %p130 = scmp.ne.s32.totalorder %s116, %s117
    %p131 = scmp.eq.s32.totalorder %s15, 1
    %p132 = por %p130, %p131
    %p134 = scmp.ne.s32.totalorder %s117, %s133
    %p135 = scmp.eq.s32.totalorder %s15, 0
    %p136 = por %p134, %p135
    %p137 = scmp.le.s32.totalorder 1, %s9
    %p138 = scmp.lt.s32.totalorder %s9, 3
    %p139 = pnand %p137, %p138
    %p140 = pneg %p139
    // Predicated region
    $region9: #{discriminator_forward.10} parent=5 // pred_check
      _
    $region10: #{discriminator_forward.10} parent=5 // pred_check_branch
      %142 = sbr.rel (%p139) target = $region12
    $region11: #{discriminator_forward.10} parent=5 // pred_region
      %s143 = ssub.s32 %s9, 1
      // Predicated region
      $region13: #{discriminator_forward.10} parent=11 // pred_check
        %p144 = pneg %p75
      $region14: #{discriminator_forward.10} parent=11 // pred_check_branch
        %146 = sbr.rel (%p144) target = $region16
      $region15: #{discriminator_forward.10} parent=11 // pred_region
        %p147 = scmp.lt.s32.totalorder %s19, 0
        %s148 = scalar_select %p147, %s19, 0
        %s149 = scalar_lea.vmem %s1, %s148
      $region16: #{discriminator_forward.10} parent=11 // pred_fallthru
        _
      // Predicated region
      $region17: #{discriminator_forward.10} parent=11 // pred_check
        %p150 = pneg %p101
      $region18: #{discriminator_forward.10} parent=11 // pred_check_branch
        %152 = sbr.rel (%p150) target = $region20
      $region19: #{discriminator_forward.10} parent=11 // pred_region
        %p153 = scmp.lt.s32.totalorder %s19, 0
        %s154 = scalar_select %p153, %s19, 0
        %s155 = scalar_lea.vmem %s2, %s154
      $region20: #{discriminator_forward.10} parent=11 // pred_fallthru
        _
    $region12: #{discriminator_forward.10} parent=5 // pred_fallthru
      _
    %p156 = scmp.lt.s32.totalorder %s9, 2
    // Predicated region
    $region21: #{discriminator_forward.10} parent=5 // pred_check
      %p157 = pneg %p156
    $region22: #{discriminator_forward.10} parent=5 // pred_check_branch
      %159 = sbr.rel (%p157) target = $region24
    $region23: #{discriminator_forward.10} parent=5 // pred_region
      // Predicated region
      $region25: #{discriminator_forward.10} parent=23 // pred_check
        %p160 = pneg %p43
      $region26: #{discriminator_forward.10} parent=23 // pred_check_branch
        %162 = sbr.rel (%p160) target = $region28
      $region27: #{discriminator_forward.10} parent=23 // pred_region
        %p163 = scmp.lt.s32.totalorder %s16, 1
        %s164 = scalar_select %p163, %s16, 1
        %p165 = scmp.lt.s32.totalorder %s17, 0
        %s166 = scalar_select %p165, %s17, 0
        %s167 = smul.addr %s164, 2
        %s168 = sadd.s32 %s166, %s167
        %s169 = scalar_lea.vmem %s0, %s168
      $region28: #{discriminator_forward.10} parent=23 // pred_fallthru
        _
    $region24: #{discriminator_forward.10} parent=5 // pred_fallthru
      _
    %p170 = scmp.le.s32.totalorder 1, %s9
    %p171 = scmp.lt.s32.totalorder %s9, 3
    %p172 = pnand %p170, %p171
    %p173 = pneg %p172
    // Predicated region
    $region29: #{discriminator_forward.10} parent=5 // pred_check
      _
    $region30: #{discriminator_forward.10} parent=5 // pred_check_branch
      %175 = sbr.rel (%p172) target = $region32
    $region31: #{discriminator_forward.10} parent=5 // pred_region
      %s176 = ssub.s32 %s9, 1
      %p177 = scmp.lt.s32.totalorder %s18, 1
      %s178 = scalar_select %p177, %s18, 1
      %p179 = scmp.lt.s32.totalorder %s19, 0
      %s180 = scalar_select %p179, %s19, 0
      %s181 = smul.addr %s178, 2
      %s182 = sadd.s32 %s180, %s181
      %s183 = scalar_lea.vmem %s0, %s182
      %p184 = pneg %p49
      %p185 = pneg %p46
      %p186 = scmp.lt.s32.totalorder %s19, 0
      %s187 = scalar_select %p186, %s19, 0
      %s188 = scalar_lea.vmem %s1, %s187
      %p189 = pneg %p75
      %p190 = pneg %p72
      %p191 = scmp.lt.s32.totalorder %s19, 0
      %s192 = scalar_select %p191, %s19, 0
      %s193 = scalar_lea.vmem %s2, %s192
      %p194 = pneg %p101
      %p195 = pneg %p98
      %p196 = pneg %p129
      %p197 = pneg %p126
      %p198 = scmp.lt.s32.totalorder %s18, 1
      %s199 = scalar_select %p198, %s18, 1
      %p200 = scmp.lt.s32.totalorder %s19, 0
      %s201 = scalar_select %p200, %s19, 0
      %s202 = smul.addr %s199, 2
      %s203 = sadd.s32 %s201, %s202
      %s204 = scalar_lea.vmem %s3, %s203
      %p205 = scmp.lt.s32.totalorder %s18, 1
      %s206 = scalar_select %p205, %s18, 1
      %p207 = scmp.lt.s32.totalorder %s19, 0
      %s208 = scalar_select %p207, %s19, 0
      %s209 = smul.addr %s206, 2
      %s210 = sadd.s32 %s208, %s209
      %s211 = scalar_lea.vmem %s0, %s210
      %p212 = scmp.lt.s32.totalorder %s19, 0
      %s213 = scalar_select %p212, %s19, 0
      %s214 = scalar_lea.vmem %s1, %s213
      %p215 = scmp.lt.s32.totalorder %s19, 0
      %s216 = scalar_select %p215, %s19, 0
      %s217 = scalar_lea.vmem %s2, %s216
      %p218 = scmp.lt.s32.totalorder %s18, 1
      %s219 = scalar_select %p218, %s18, 1
      %p220 = scmp.lt.s32.totalorder %s19, 0
      %s221 = scalar_select %p220, %s19, 0
      %s222 = smul.addr %s219, 2
      %s223 = sadd.s32 %s221, %s222
      %s224 = scalar_lea.vmem %s3, %s223
      %v225 = vld [vmem:[%s211] sm:$0x1]
      %v226 = vld [vmem:[%s211 + $0x1] sm:$0x1]
      %v227 = vunpack.c.l.bf16 %v225
      %v228 = vunpack.c.l.bf16 %v226
      %v229 = vld [vmem:[%s214] sm:$0x1]
      %v230 = vld [vmem:[%s217] sm:$0x1]
      %v232 = vperm.slane %v229, 0
      %v234 = vmul.f32 %v227, %v232
      %v235 = vmul.f32 %v228, %v232
      %v237 = vperm.slane %v230, 0
      %v239 = vadd.f32 %v234, %v237
      %v240 = vadd.f32 %v235, %v237
      %vm241 = vcmp.gt.f32.partialorder %v239, 0.0
      %vm242 = vcmp.gt.f32.partialorder %v240, 0.0
      %v243 = vmul.f32 %v239, 0.2
      %v244 = vmul.f32 %v240, 0.2
      %v245 = vsel %vm241, %v239, %v243
      %v246 = vsel %vm242, %v240, %v244
      %v247 = vpack.c.bf16 %v245, %v245
      %v248 = vpack.c.bf16 %v246, %v246
      %249 = vst [vmem:[%s224] sm:$0x1] %v247
      %250 = vst [vmem:[%s224 + $0x1] sm:$0x1] %v248
      %p251 = scmp.lt.s32.totalorder %s18, 1
      %s252 = scalar_select %p251, %s18, 1
      %p253 = scmp.lt.s32.totalorder %s19, 0
      %s254 = scalar_select %p253, %s19, 0
      %s255 = smul.addr %s252, 2
      %s256 = sadd.s32 %s254, %s255
      %s257 = scalar_lea.vmem %s3, %s256
      // Predicated region
      $region33: #{discriminator_forward.10} parent=31 // pred_check
        %p258 = pneg %p126
      $region34: #{discriminator_forward.10} parent=31 // pred_check_branch
        %260 = sbr.rel (%p258) target = $region36
      $region35: #{discriminator_forward.10} parent=31 // pred_region
        _
      $region36: #{discriminator_forward.10} parent=31 // pred_fallthru
        _
    $region32: #{discriminator_forward.10} parent=5 // pred_fallthru
      _
    %p261 = scmp.le.s32.totalorder 2, %s9
    // Predicated region
    $region37: #{discriminator_forward.10} parent=5 // pred_check
      %p262 = pneg %p261
    $region38: #{discriminator_forward.10} parent=5 // pred_check_branch
      %264 = sbr.rel (%p262) target = $region40
    $region39: #{discriminator_forward.10} parent=5 // pred_region
      %s265 = ssub.s32 %s9, 2
      // Predicated region
      $region41: #{discriminator_forward.10} parent=39 // pred_check
        %p266 = pneg %p132
      $region42: #{discriminator_forward.10} parent=39 // pred_check_branch
        %268 = sbr.rel (%p266) target = $region44
      $region43: #{discriminator_forward.10} parent=39 // pred_region
        %p269 = scmp.lt.s32.totalorder %s20, 1
        %s270 = scalar_select %p269, %s20, 1
        %p271 = scmp.lt.s32.totalorder %s21, 0
        %s272 = scalar_select %p271, %s21, 0
        %s273 = smul.addr %s270, 2
        %s274 = sadd.s32 %s272, %s273
        %s275 = scalar_lea.vmem %s3, %s274
      $region44: #{discriminator_forward.10} parent=39 // pred_fallthru
        _
    $region40: #{discriminator_forward.10} parent=5 // pred_fallthru
      _
  $region6: #{discriminator_forward.10} parent=0 // loop_footer
    %s13 = sadd.s32 1, %s9
  $region7: #{discriminator_forward.10} parent=0 // loop_footer_branch
    %8 = sbr.rel target = $region3
  $region8: #{discriminator_forward.10} parent=0 // loop_exit
    _

// kernel: discriminator_forward.7
$region0: #{discriminator_forward.7}
  #allocation0 [shape = 'u32[]', space=smem, size = 0x4, offset = 0x4, fixed_abs, tag = 'smem constant byte address 0x4 - core index']
  #allocation1 [shape = 'u32[72,128]{1,0:T(1,128)}', space=vmem, size = 0x9000, scoped, tag = 'internal scratch']
  %s0 = inlined_call_operand.vmem [shape: bf16[2,5,5,512], index: 0, kind: input, shape index: {}]
  %s1 = inlined_call_operand.hbm [shape: bf16[4,512,128], index: 1, kind: input, shape index: {}]
  %s2 = inlined_call_operand.vmem [shape: bf16[2,4,4,128], index: 2, kind: output, shape index: {0}]
  %s3 = inlined_call_operand.vmem [shape: f32[2,1,128], index: 3, kind: output, shape index: {1}]
  %s4 = inlined_call_operand.vmem [shape: f32[2,1,128], index: 4, kind: output, shape index: {2}]
  %5 = xla_tuple %s2, %s3, %s4
  %s6 = sld [smem:[#allocation0]]
  $region61: #{discriminator_forward.7} parent=0
    _
  %s8 = ssub.s32 1, %s6
  %s9 = scalar_select 0, %s8, %s6
  $region1: #{discriminator_forward.7} parent=0
    #allocation2 [shape = 'u8[524288]{0}', space=vmem, size = 0x80000, scoped, tag = 'input window, operand 1, single buffered']
    #allocation3 [shape = 's32[2]{0}', space=sflag, size = 0x8, scoped, tag = 'scoped memory for discriminator_forward.7']
    %10 = vsyncpa [#allocation3], 0
    loop: start=0, step=1, limit=4
    $region2: #{discriminator_forward.7} parent=1 // loop_pre_header
      _
    $region3: #{discriminator_forward.7} parent=1 // loop_header
      %s12 = sphi 0, %s16
      %p13 = scmp.ge.s32.totalorder %s12, 4
      %s19 = sphi 0, %s31
      %s20 = sphi 0, %s27
      %s21 = sphi 0, %s19
      %s22 = sphi 0, %s20
      %s23 = sphi 0, %s21
      %s24 = sphi 0, %s22
      %s34 = sphi 0, %s36
      %s37 = sphi 0, %s34
      %s38 = sphi 0, %s37
      %s54 = sphi 0, %s38
      %s60 = sphi 0, %s62
      %s63 = sphi 0, %s60
      %s64 = sphi 0, %s63
      %s80 = sphi 0, %s64
      %s88 = sphi 0, %s90
      %s91 = sphi 0, %s88
      %s92 = sphi 0, %s91
      %s108 = sphi 0, %s92
      %s116 = sphi 0, %s118
      %s119 = sphi 0, %s116
      %s120 = sphi 0, %s119
      %s136 = sphi 0, %s120
      %s144 = sphi 0, %s146
      %s147 = sphi 0, %s144
      %s148 = sphi 0, %s147
      %s164 = sphi 0, %s148
    $region4: #{discriminator_forward.7} parent=1 // loop_header_branch
      %15 = sbr.rel (%p13) target = $region8
    $region5: #{discriminator_forward.7} parent=1 // loop_body
      %s17 = ssub.s32 %s12, 1
      %s18 = ssub.s32 %s12, 2
      %s25 = sadd.s32 1, %s20
      %p26 = scmp.ge.s32.totalorder %s25, 1
      %s27 = scalar_select %p26, 0, %s25
      %s28 = sadd.s32 1, %s19
      %s29 = scalar_select %p26, %s28, %s19
      %p30 = scmp.ge.s32.totalorder %s29, 2
      %s31 = scalar_select %p30, 0, %s29
      %s32 = ssub.s32 %s19, %s31
      %p33 = scmp.eq.s32.totalorder %s32, 0
      %s35 = sadd.s32 %s34, 1
      %s36 = scalar_select %p33, %s34, %s35
      %p39 = pneg %p33
      %p40 = scmp.eq.s32.totalorder %s12, 1
      %p41 = por %p39, %p40
      %p42 = scmp.ne.s32.totalorder %s34, %s37
      %p43 = scmp.eq.s32.totalorder %s12, 0
      %p44 = por %p42, %p43
      %p45 = scmp.ne.s32.totalorder %s34, %s37
      %p46 = scmp.eq.s32.totalorder %s17, 1
      %p47 = por %p45, %p46
      %p48 = scmp.ne.s32.totalorder %s37, %s38
      %p49 = scmp.eq.s32.totalorder %s17, 0
      %p50 = por %p48, %p49
      %p51 = scmp.ne.s32.totalorder %s37, %s38
      %p52 = scmp.eq.s32.totalorder %s18, 1
      %p53 = por %p51, %p52
      %p55 = scmp.ne.s32.totalorder %s38, %s54
      %p56 = scmp.eq.s32.totalorder %s18, 0
      %p57 = por %p55, %p56
      %s58 = ssub.s32 %s20, %s27
      %p59 = scmp.eq.s32.totalorder %s58, 0
      %s61 = sadd.s32 %s60, 1
      %s62 = scalar_select %p59, %s60, %s61
      %p65 = pneg %p59
      %p66 = scmp.eq.s32.totalorder %s12, 1
      %p67 = por %p65, %p66
      %p68 = scmp.ne.s32.totalorder %s60, %s63
      %p69 = scmp.eq.s32.totalorder %s12, 0
      %p70 = por %p68, %p69
      %p71 = scmp.ne.s32.totalorder %s60, %s63
      %p72 = scmp.eq.s32.totalorder %s17, 1
      %p73 = por %p71, %p72
      %p74 = scmp.ne.s32.totalorder %s63, %s64
      %p75 = scmp.eq.s32.totalorder %s17, 0
      %p76 = por %p74, %p75
      %p77 = scmp.ne.s32.totalorder %s63, %s64
      %p78 = scmp.eq.s32.totalorder %s18, 1
      %p79 = por %p77, %p78
      %p81 = scmp.ne.s32.totalorder %s64, %s80
      %p82 = scmp.eq.s32.totalorder %s18, 0
      %p83 = por %p81, %p82
      %s84 = ssub.s32 %s19, %s31
      %s85 = ssub.s32 %s20, %s27
      %s86 = sor.u32 %s84, %s85
      %p87 = scmp.eq.s32.totalorder %s86, 0
      %s89 = sadd.s32 %s88, 1
      %s90 = scalar_select %p87, %s88, %s89
      %p93 = pneg %p87
      %p94 = scmp.eq.s32.totalorder %s12, 1
      %p95 = por %p93, %p94
      %p96 = scmp.ne.s32.totalorder %s88, %s91
      %p97 = scmp.eq.s32.totalorder %s12, 0
      %p98 = por %p96, %p97
      %p99 = scmp.ne.s32.totalorder %s88, %s91
      %p100 = scmp.eq.s32.totalorder %s17, 1
      %p101 = por %p99, %p100
      %p102 = scmp.ne.s32.totalorder %s91, %s92
      %p103 = scmp.eq.s32.totalorder %s17, 0
      %p104 = por %p102, %p103
      %p105 = scmp.ne.s32.totalorder %s91, %s92
      %p106 = scmp.eq.s32.totalorder %s18, 1
      %p107 = por %p105, %p106
      %p109 = scmp.ne.s32.totalorder %s92, %s108
      %p110 = scmp.eq.s32.totalorder %s18, 0
      %p111 = por %p109, %p110
      %s112 = ssub.s32 %s19, %s31
      %s113 = ssub.s32 %s20, %s27
      %s114 = sor.u32 %s112, %s113
      %p115 = scmp.eq.s32.totalorder %s114, 0
      %s117 = sadd.s32 %s116, 1
      %s118 = scalar_select %p115, %s116, %s117
      %p121 = pneg %p115
      %p122 = scmp.eq.s32.totalorder %s12, 1
      %p123 = por %p121, %p122
      %p124 = scmp.ne.s32.totalorder %s116, %s119
      %p125 = scmp.eq.s32.totalorder %s12, 0
      %p126 = por %p124, %p125
      %p127 = scmp.ne.s32.totalorder %s116, %s119
      %p128 = scmp.eq.s32.totalorder %s17, 1
      %p129 = por %p127, %p128
      %p130 = scmp.ne.s32.totalorder %s119, %s120
      %p131 = scmp.eq.s32.totalorder %s17, 0
      %p132 = por %p130, %p131
      %p133 = scmp.ne.s32.totalorder %s119, %s120
      %p134 = scmp.eq.s32.totalorder %s18, 1
      %p135 = por %p133, %p134
      %p137 = scmp.ne.s32.totalorder %s120, %s136
      %p138 = scmp.eq.s32.totalorder %s18, 0
      %p139 = por %p137, %p138
      %s140 = ssub.s32 %s19, %s31
      %s141 = ssub.s32 %s20, %s27
      %s142 = sor.u32 %s140, %s141
      %p143 = scmp.eq.s32.totalorder %s142, 0
      %s145 = sadd.s32 %s144, 1
      %s146 = scalar_select %p143, %s144, %s145
      %p149 = pneg %p143
      %p150 = scmp.eq.s32.totalorder %s12, 1
      %p151 = por %p149, %p150
      %p152 = scmp.ne.s32.totalorder %s144, %s147
      %p153 = scmp.eq.s32.totalorder %s12, 0
      %p154 = por %p152, %p153
      %p155 = scmp.ne.s32.totalorder %s144, %s147
      %p156 = scmp.eq.s32.totalorder %s17, 1
      %p157 = por %p155, %p156
      %p158 = scmp.ne.s32.totalorder %s147, %s148
      %p159 = scmp.eq.s32.totalorder %s17, 0
      %p160 = por %p158, %p159
      %p161 = scmp.ne.s32.totalorder %s147, %s148
      %p162 = scmp.eq.s32.totalorder %s18, 1
      %p163 = por %p161, %p162
      %p165 = scmp.ne.s32.totalorder %s148, %s164
      %p166 = scmp.eq.s32.totalorder %s18, 0
      %p167 = por %p165, %p166
      %p168 = scmp.le.s32.totalorder 1, %s12
      %p169 = scmp.lt.s32.totalorder %s12, 3
      %p170 = pnand %p168, %p169
      %p171 = pneg %p170
      // Predicated region
      $region9: #{discriminator_forward.7} parent=5 // pred_check
        _
      $region10: #{discriminator_forward.7} parent=5 // pred_check_branch
        %173 = sbr.rel (%p170) target = $region12
      $region11: #{discriminator_forward.7} parent=5 // pred_region
        %s174 = ssub.s32 %s12, 1
        // Predicated region
        $region13: #{discriminator_forward.7} parent=11 // pred_check
          %p175 = pneg %p76
        $region14: #{discriminator_forward.7} parent=11 // pred_check_branch
          %177 = sbr.rel (%p175) target = $region16
        $region15: #{discriminator_forward.7} parent=11 // pred_region
          %179 = vsyncadd [#allocation3], 0
          %s180 = smul.addr %s22, 4
          %s181 = scalar_lea.hbm %s1, %s180
          %s182 = sshll.u32 %s181, 4
          %s183 = int_to_ptr.hbm [resolvable:$true] %s182
          %s184 = sshll.u32 [#allocation2], 4
          %s185 = int_to_ptr.vmem [resolvable:$true] %s184
          %190 = dma.hbm_to_vmem [thread:$0]  %s183, 16384, %s185, [#allocation3], 64, 64, 4
        $region16: #{discriminator_forward.7} parent=11 // pred_fallthru
          _
      $region12: #{discriminator_forward.7} parent=5 // pred_fallthru
        _
      %p191 = scmp.lt.s32.totalorder %s12, 2
      // Predicated region
      $region17: #{discriminator_forward.7} parent=5 // pred_check
        %p192 = pneg %p191
      $region18: #{discriminator_forward.7} parent=5 // pred_check_branch
        %194 = sbr.rel (%p192) target = $region20
      $region19: #{discriminator_forward.7} parent=5 // pred_region
        // Predicated region
        $region21: #{discriminator_forward.7} parent=19 // pred_check
          %p195 = pneg %p44
        $region22: #{discriminator_forward.7} parent=19 // pred_check_branch
          %197 = sbr.rel (%p195) target = $region24
        $region23: #{discriminator_forward.7} parent=19 // pred_region
          %p198 = scmp.lt.s32.totalorder %s19, 1
          %s199 = scalar_select %p198, %s19, 1
          %s200 = smul.addr %s199, 20
          %s201 = smul.addr %s200, 4
          %s202 = scalar_lea.vmem %s0, %s201
        $region24: #{discriminator_forward.7} parent=19 // pred_fallthru
          _
      $region20: #{discriminator_forward.7} parent=5 // pred_fallthru
        _
      %p203 = scmp.le.s32.totalorder 1, %s12
      %p204 = scmp.lt.s32.totalorder %s12, 3
      %p205 = pnand %p203, %p204
      %p206 = pneg %p205
      // Predicated region
      $region25: #{discriminator_forward.7} parent=5 // pred_check
        _
      $region26: #{discriminator_forward.7} parent=5 // pred_check_branch
        %208 = sbr.rel (%p205) target = $region28
      $region27: #{discriminator_forward.7} parent=5 // pred_region
        %s209 = ssub.s32 %s12, 1
        // Predicated region
        $region29: #{discriminator_forward.7} parent=27 // pred_check
          %p210 = pneg %p76
        $region30: #{discriminator_forward.7} parent=27 // pred_check_branch
          %212 = sbr.rel (%p210) target = $region32
        $region31: #{discriminator_forward.7} parent=27 // pred_region
          %214 = dma.done [#allocation3], 16384
        $region32: #{discriminator_forward.7} parent=27 // pred_fallthru
          _
        %p215 = scmp.lt.s32.totalorder %s21, 1
        %s216 = scalar_select %p215, %s21, 1
        %s217 = smul.addr %s216, 20
        %s218 = smul.addr %s217, 4
        %s219 = scalar_lea.vmem %s0, %s218
        %p220 = pneg %p50
        %p221 = pneg %p47
        %p222 = pneg %p76
        %p223 = pneg %p73
        %p224 = pneg %p104
        %p225 = pneg %p101
        %p226 = scmp.lt.s32.totalorder %s21, 1
        %s227 = scalar_select %p226, %s21, 1
        %p228 = scmp.lt.s32.totalorder %s22, 0
        %s229 = scalar_select %p228, %s22, 0
        %s230 = smul.addr %s227, 4
        %s231 = sadd.s32 %s229, %s230
        %s232 = smul.addr %s231, 2
        %s233 = scalar_lea.vmem %s2, %s232
        %p234 = pneg %p132
        %p235 = pneg %p129
        %p236 = scmp.lt.s32.totalorder %s21, 1
        %s237 = scalar_select %p236, %s21, 1
        %p238 = scmp.lt.s32.totalorder %s22, 0
        %s239 = scalar_select %p238, %s22, 0
        %s240 = sadd.s32 %s239, %s237
        %s241 = scalar_lea.vmem %s3, %s240
        %p242 = pneg %p160
        %p243 = pneg %p157
        %p244 = scmp.lt.s32.totalorder %s21, 1
        %s245 = scalar_select %p244, %s21, 1
        %p246 = scmp.lt.s32.totalorder %s22, 0
        %s247 = scalar_select %p246, %s22, 0
        %s248 = sadd.s32 %s247, %s245
        %s249 = scalar_lea.vmem %s4, %s248
        %p250 = scmp.lt.s32.totalorder %s21, 1
        %s251 = scalar_select %p250, %s21, 1
        %s252 = smul.addr %s251, 20
        %s253 = smul.addr %s252, 4
        %s254 = scalar_lea.vmem %s0, %s253
        %p255 = scmp.lt.s32.totalorder %s21, 1
        %s256 = scalar_select %p255, %s21, 1
        %p257 = scmp.lt.s32.totalorder %s22, 0
        %s258 = scalar_select %p257, %s22, 0
        %s259 = smul.addr %s256, 4
        %s260 = sadd.s32 %s258, %s259
        %s261 = smul.addr %s260, 2
        %s262 = scalar_lea.vmem %s2, %s261
        %p263 = scmp.lt.s32.totalorder %s21, 1
        %s264 = scalar_select %p263, %s21, 1
        %p265 = scmp.lt.s32.totalorder %s22, 0
        %s266 = scalar_select %p265, %s22, 0
        %s267 = sadd.s32 %s266, %s264
        %s268 = scalar_lea.vmem %s3, %s267
        %p269 = scmp.lt.s32.totalorder %s21, 1
        %s270 = scalar_select %p269, %s21, 1
        %p271 = scmp.lt.s32.totalorder %s22, 0
        %s272 = scalar_select %p271, %s22, 0
        %s273 = sadd.s32 %s272, %s270
        %s274 = scalar_lea.vmem %s4, %s273
        %v275 = vld [vmem:[%s254] sm:$0x33]
        %v276 = vld [vmem:[%s254 + $0x8] sm:$0x33]
        %v277 = vld [vmem:[%s254 + $0x10] sm:$0x33]
        %v278 = vld [vmem:[%s254 + $0x18] sm:$0x33]
        %v279 = vld [vmem:[%s254 + $0x20] sm:$0x33]
        %v280 = vld [vmem:[%s254 + $0x28] sm:$0x33]
        %v281 = vld [vmem:[%s254 + $0x30] sm:$0x33]
        %v282 = vld [vmem:[%s254 + $0x38] sm:$0x33]
        %v291 = vrot.slane %v275, 2
        %v292 = vrot.slane %v276, 4
        %v293 = vrot.slane %v276, 6
        %v294 = vrot.slane %v277, 2
        %v295 = vrot.slane %v278, 4
        %v296 = vrot.slane %v278, 6
        %v297 = vrot.slane %v279, 2
        %v298 = vrot.slane %v280, 4
        %v299 = vrot.slane %v280, 6
        %v300 = vrot.slane %v281, 2
        %v301 = vrot.slane %v282, 4
        %v302 = vrot.slane %v282, 6
        %vm303 = vcmask 1041408
        %v306 = vsel %vm303, %v275, %v291
        %vm307 = vcmask 1045508
        %v310 = vsel %vm307, %v292, %v293
        %vm311 = vcmask 1043456
        %v312 = vsel %vm311, %v306, %v310
        %v315 = vsel %vm303, %v277, %v294
        %v318 = vsel %vm307, %v295, %v296
        %v319 = vsel %vm311, %v315, %v318
        %v322 = vsel %vm303, %v279, %v297
        %v325 = vsel %vm307, %v298, %v299
        %v326 = vsel %vm311, %v322, %v325
        %v329 = vsel %vm303, %v281, %v300
        %v332 = vsel %vm307, %v301, %v302
        %v333 = vsel %vm311, %v329, %v332
        %v334 = vld [vmem:[#allocation2] sm:$0xf]
        %v335 = vld [vmem:[#allocation2 + $0x4] sm:$0xf]
        %v336 = vld [vmem:[#allocation2 + $0x8] sm:$0xf]
        %v337 = vld [vmem:[#allocation2 + $0xc] sm:$0xf]
        %v338 = vld [vmem:[#allocation2 + $0x10] sm:$0xf]
        %v339 = vld [vmem:[#allocation2 + $0x14] sm:$0xf]
        %v340 = vld [vmem:[#allocation2 + $0x18] sm:$0xf]
        %v341 = vld [vmem:[#allocation2 + $0x1c] sm:$0xf]
        %v342 = vld [vmem:[#allocation2 + $0x20] sm:$0xf]
        %v343 = vld [vmem:[#allocation2 + $0x24] sm:$0xf]
        %v344 = vld [vmem:[#allocation2 + $0x28] sm:$0xf]
        %v345 = vld [vmem:[#allocation2 + $0x2c] sm:$0xf]
        %v346 = vld [vmem:[#allocation2 + $0x30] sm:$0xf]
        %v347 = vld [vmem:[#allocation2 + $0x34] sm:$0xf]
        %v348 = vld [vmem:[#allocation2 + $0x38] sm:$0xf]
        %v349 = vld [vmem:[#allocation2 + $0x3c] sm:$0xf]
        %v350 = vld [vmem:[#allocation2 + $0x40] sm:$0xf]
        %v351 = vld [vmem:[#allocation2 + $0x44] sm:$0xf]
        %v352 = vld [vmem:[#allocation2 + $0x48] sm:$0xf]
        %v353 = vld [vmem:[#allocation2 + $0x4c] sm:$0xf]
        %v354 = vld [vmem:[#allocation2 + $0x50] sm:$0xf]
        %v355 = vld [vmem:[#allocation2 + $0x54] sm:$0xf]
        %v356 = vld [vmem:[#allocation2 + $0x58] sm:$0xf]
        %v357 = vld [vmem:[#allocation2 + $0x5c] sm:$0xf]
        %v358 = vld [vmem:[#allocation2 + $0x60] sm:$0xf]
        %v359 = vld [vmem:[#allocation2 + $0x64] sm:$0xf]
        %v360 = vld [vmem:[#allocation2 + $0x68] sm:$0xf]
        %v361 = vld [vmem:[#allocation2 + $0x6c] sm:$0xf]
        %v362 = vld [vmem:[#allocation2 + $0x70] sm:$0xf]
        %v363 = vld [vmem:[#allocation2 + $0x74] sm:$0xf]
        %v364 = vld [vmem:[#allocation2 + $0x78] sm:$0xf]
        %v365 = vld [vmem:[#allocation2 + $0x7c] sm:$0xf]
        %v366 = vld [vmem:[#allocation2 + $0x80] sm:$0xf]
        %v367 = vld [vmem:[#allocation2 + $0x84] sm:$0xf]
        %v368 = vld [vmem:[#allocation2 + $0x88] sm:$0xf]
        %v369 = vld [vmem:[#allocation2 + $0x8c] sm:$0xf]
        %v370 = vld [vmem:[#allocation2 + $0x90] sm:$0xf]
        %v371 = vld [vmem:[#allocation2 + $0x94] sm:$0xf]
        %v372 = vld [vmem:[#allocation2 + $0x98] sm:$0xf]
        %v373 = vld [vmem:[#allocation2 + $0x9c] sm:$0xf]
        %v374 = vld [vmem:[#allocation2 + $0xa0] sm:$0xf]
        %v375 = vld [vmem:[#allocation2 + $0xa4] sm:$0xf]
        %v376 = vld [vmem:[#allocation2 + $0xa8] sm:$0xf]
        %v377 = vld [vmem:[#allocation2 + $0xac] sm:$0xf]
        %v378 = vld [vmem:[#allocation2 + $0xb0] sm:$0xf]
        %v379 = vld [vmem:[#allocation2 + $0xb4] sm:$0xf]
        %v380 = vld [vmem:[#allocation2 + $0xb8] sm:$0xf]
        %v381 = vld [vmem:[#allocation2 + $0xbc] sm:$0xf]
        %v382 = vld [vmem:[#allocation2 + $0xc0] sm:$0xf]
        %v383 = vld [vmem:[#allocation2 + $0xc4] sm:$0xf]
        %v384 = vld [vmem:[#allocation2 + $0xc8] sm:$0xf]
        %v385 = vld [vmem:[#allocation2 + $0xcc] sm:$0xf]
        %v386 = vld [vmem:[#allocation2 + $0xd0] sm:$0xf]
        %v387 = vld [vmem:[#allocation2 + $0xd4] sm:$0xf]
        %v388 = vld [vmem:[#allocation2 + $0xd8] sm:$0xf]
        %v389 = vld [vmem:[#allocation2 + $0xdc] sm:$0xf]
        %v390 = vld [vmem:[#allocation2 + $0xe0] sm:$0xf]
        %v391 = vld [vmem:[#allocation2 + $0xe4] sm:$0xf]
        %v392 = vld [vmem:[#allocation2 + $0xe8] sm:$0xf]
        %v393 = vld [vmem:[#allocation2 + $0xec] sm:$0xf]
        %v394 = vld [vmem:[#allocation2 + $0xf0] sm:$0xf]
        %v395 = vld [vmem:[#allocation2 + $0xf4] sm:$0xf]
        %v396 = vld [vmem:[#allocation2 + $0xf8] sm:$0xf]
        %v397 = vld [vmem:[#allocation2 + $0xfc] sm:$0xf]
        %v398 = vld [vmem:[%s254] sm:$0x77]
        %v399 = vld [vmem:[%s254 + $0x8] sm:$0x77]
        %v400 = vld [vmem:[%s254 + $0x10] sm:$0x77]
        %v401 = vld [vmem:[%s254 + $0x18] sm:$0x77]
        %v402 = vld [vmem:[%s254 + $0x20] sm:$0x77]
        %v403 = vld [vmem:[%s254 + $0x28] sm:$0x77]
        %v404 = vld [vmem:[%s254 + $0x30] sm:$0x77]
        %v405 = vld [vmem:[%s254 + $0x38] sm:$0x77]
        %v414 = vrot.slane %v398, 2
        %v415 = vrot.slane %v399, 4
        %v416 = vrot.slane %v399, 6
        %v417 = vrot.slane %v400, 2
        %v418 = vrot.slane %v401, 4
        %v419 = vrot.slane %v401, 6
        %v420 = vrot.slane %v402, 2
        %v421 = vrot.slane %v403, 4
        %v422 = vrot.slane %v403, 6
        %v423 = vrot.slane %v404, 2
        %v424 = vrot.slane %v405, 4
        %v425 = vrot.slane %v405, 6
        %v428 = vsel %vm303, %v398, %v414
        %v431 = vsel %vm307, %v415, %v416
        %v432 = vsel %vm311, %v428, %v431
        %vm433 = vcmask 1043458
        %v434 = vsel %vm433, %v398, %v414
        %vm435 = vcmask 1045504
        %v436 = vsel %vm435, %v416, %v415
        %vm437 = vcmask 1045506
        %v438 = vsel %vm437, %v434, %v436
        %v440 = vrot.slane %v438, 2
        %v443 = vsel %vm303, %v400, %v417
        %v446 = vsel %vm307, %v418, %v419
        %v447 = vsel %vm311, %v443, %v446
        %v448 = vsel %vm433, %v400, %v417
        %v449 = vsel %vm435, %v419, %v418
        %v450 = vsel %vm437, %v448, %v449
        %v452 = vrot.slane %v450, 2
        %v455 = vsel %vm303, %v402, %v420
        %v458 = vsel %vm307, %v421, %v422
        %v459 = vsel %vm311, %v455, %v458
        %v460 = vsel %vm433, %v402, %v420
        %v461 = vsel %vm435, %v422, %v421
        %v462 = vsel %vm437, %v460, %v461
        %v464 = vrot.slane %v462, 2
        %v467 = vsel %vm303, %v404, %v423
        %v470 = vsel %vm307, %v424, %v425
        %v471 = vsel %vm311, %v467, %v470
        %v472 = vsel %vm433, %v404, %v423
        %v473 = vsel %vm435, %v425, %v424
        %v474 = vsel %vm437, %v472, %v473
        %v476 = vrot.slane %v474, 2
        %vm477 = vsmask.f32 1280
        %vm478 = vsmask.f32 3336
        %vm479 = vmor %vm477, %vm478
        %vm480 = vsmask.f32 5392
        %vm481 = vmor %vm479, %vm480
        %vm482 = vsmask.f32 7448
        %vm483 = vmor %vm481, %vm482
        %v484 = vshrl.u32 %v432, 16
        %v486 = vrot.slane %v484, 6
        %v487 = vshll.u32 %v432, 16
        %v489 = vrot.slane %v487, 7
        %v490 = vor.u32 %v486, %v489
        %v491 = vrot.slane %v490, 2
        %v493 = vshll.u32 %v440, 16
        %v495 = vrot.slane %v493, 7
        %v496 = vsel %vm483, %v491, %v495
        %v497 = vshrl.u32 %v447, 16
        %v499 = vrot.slane %v497, 6
        %v500 = vshll.u32 %v447, 16
        %v502 = vrot.slane %v500, 7
        %v503 = vor.u32 %v499, %v502
        %v504 = vrot.slane %v503, 2
        %v506 = vshll.u32 %v452, 16
        %v508 = vrot.slane %v506, 7
        %v509 = vsel %vm483, %v504, %v508
        %v510 = vshrl.u32 %v459, 16
        %v512 = vrot.slane %v510, 6
        %v513 = vshll.u32 %v459, 16
        %v515 = vrot.slane %v513, 7
        %v516 = vor.u32 %v512, %v515
        %v517 = vrot.slane %v516, 2
        %v519 = vshll.u32 %v464, 16
        %v521 = vrot.slane %v519, 7
        %v522 = vsel %vm483, %v517, %v521
        %v523 = vshrl.u32 %v471, 16
        %v525 = vrot.slane %v523, 6
        %v526 = vshll.u32 %v471, 16
        %v528 = vrot.slane %v526, 7
        %v529 = vor.u32 %v525, %v528
        %v530 = vrot.slane %v529, 2
        %v532 = vshll.u32 %v476, 16
        %v534 = vrot.slane %v532, 7
        %v535 = vsel %vm483, %v530, %v534
        %s536 = scalar_lea.vmem [#allocation2], 256
        %v537 = vld [vmem:[%s536] sm:$0xf]
        %v538 = vld [vmem:[%s536 + $0x4] sm:$0xf]
        %v539 = vld [vmem:[%s536 + $0x8] sm:$0xf]
        %v540 = vld [vmem:[%s536 + $0xc] sm:$0xf]
        %v541 = vld [vmem:[%s536 + $0x10] sm:$0xf]
        %v542 = vld [vmem:[%s536 + $0x14] sm:$0xf]
        %v543 = vld [vmem:[%s536 + $0x18] sm:$0xf]
        %v544 = vld [vmem:[%s536 + $0x1c] sm:$0xf]
        %v545 = vld [vmem:[%s536 + $0x20] sm:$0xf]
        %v546 = vld [vmem:[%s536 + $0x24] sm:$0xf]
        %v547 = vld [vmem:[%s536 + $0x28] sm:$0xf]
        %v548 = vld [vmem:[%s536 + $0x2c] sm:$0xf]
        %v549 = vld [vmem:[%s536 + $0x30] sm:$0xf]
        %v550 = vld [vmem:[%s536 + $0x34] sm:$0xf]
        %v551 = vld [vmem:[%s536 + $0x38] sm:$0xf]
        %v552 = vld [vmem:[%s536 + $0x3c] sm:$0xf]
        %v553 = vld [vmem:[%s536 + $0x40] sm:$0xf]
        %v554 = vld [vmem:[%s536 + $0x44] sm:$0xf]
        %v555 = vld [vmem:[%s536 + $0x48] sm:$0xf]
        %v556 = vld [vmem:[%s536 + $0x4c] sm:$0xf]
        %v557 = vld [vmem:[%s536 + $0x50] sm:$0xf]
        %v558 = vld [vmem:[%s536 + $0x54] sm:$0xf]
        %v559 = vld [vmem:[%s536 + $0x58] sm:$0xf]
        %v560 = vld [vmem:[%s536 + $0x5c] sm:$0xf]
        %v561 = vld [vmem:[%s536 + $0x60] sm:$0xf]
        %v562 = vld [vmem:[%s536 + $0x64] sm:$0xf]
        %v563 = vld [vmem:[%s536 + $0x68] sm:$0xf]
        %v564 = vld [vmem:[%s536 + $0x6c] sm:$0xf]
        %v565 = vld [vmem:[%s536 + $0x70] sm:$0xf]
        %v566 = vld [vmem:[%s536 + $0x74] sm:$0xf]
        %v567 = vld [vmem:[%s536 + $0x78] sm:$0xf]
        %v568 = vld [vmem:[%s536 + $0x7c] sm:$0xf]
        %v569 = vld [vmem:[%s536 + $0x80] sm:$0xf]
        %v570 = vld [vmem:[%s536 + $0x84] sm:$0xf]
        %v571 = vld [vmem:[%s536 + $0x88] sm:$0xf]
        %v572 = vld [vmem:[%s536 + $0x8c] sm:$0xf]
        %v573 = vld [vmem:[%s536 + $0x90] sm:$0xf]
        %v574 = vld [vmem:[%s536 + $0x94] sm:$0xf]
        %v575 = vld [vmem:[%s536 + $0x98] sm:$0xf]
        %v576 = vld [vmem:[%s536 + $0x9c] sm:$0xf]
        %v577 = vld [vmem:[%s536 + $0xa0] sm:$0xf]
        %v578 = vld [vmem:[%s536 + $0xa4] sm:$0xf]
        %v579 = vld [vmem:[%s536 + $0xa8] sm:$0xf]
        %v580 = vld [vmem:[%s536 + $0xac] sm:$0xf]
        %v581 = vld [vmem:[%s536 + $0xb0] sm:$0xf]
        %v582 = vld [vmem:[%s536 + $0xb4] sm:$0xf]
        %v583 = vld [vmem:[%s536 + $0xb8] sm:$0xf]
        %v584 = vld [vmem:[%s536 + $0xbc] sm:$0xf]
        %v585 = vld [vmem:[%s536 + $0xc0] sm:$0xf]
        %v586 = vld [vmem:[%s536 + $0xc4] sm:$0xf]
        %v587 = vld [vmem:[%s536 + $0xc8] sm:$0xf]
        %v588 = vld [vmem:[%s536 + $0xcc] sm:$0xf]
        %v589 = vld [vmem:[%s536 + $0xd0] sm:$0xf]
        %v590 = vld [vmem:[%s536 + $0xd4] sm:$0xf]
        %v591 = vld [vmem:[%s536 + $0xd8] sm:$0xf]
        %v592 = vld [vmem:[%s536 + $0xdc] sm:$0xf]
        %v593 = vld [vmem:[%s536 + $0xe0] sm:$0xf]
        %v594 = vld [vmem:[%s536 + $0xe4] sm:$0xf]
        %v595 = vld [vmem:[%s536 + $0xe8] sm:$0xf]
        %v596 = vld [vmem:[%s536 + $0xec] sm:$0xf]
        %v597 = vld [vmem:[%s536 + $0xf0] sm:$0xf]
        %v598 = vld [vmem:[%s536 + $0xf4] sm:$0xf]
        %v599 = vld [vmem:[%s536 + $0xf8] sm:$0xf]
        %v600 = vld [vmem:[%s536 + $0xfc] sm:$0xf]
        %602 = vst [vmem:[#allocation1] ss:$4 sm:$0xff] %v496
        %s604 = scalar_lea.vmem [#allocation1], 1
        %605 = vst [vmem:[%s604] ss:$4 sm:$0xff] %v509
        %s607 = scalar_lea.vmem [#allocation1], 2
        %608 = vst [vmem:[%s607] ss:$4 sm:$0xff] %v522
        %s610 = scalar_lea.vmem [#allocation1], 3
        %611 = vst [vmem:[%s610] ss:$4 sm:$0xff] %v535
        %v612 = vld.sshfl [vmem:[#allocation1] sm:$0xff pattern:$0x73625140]
        %v613 = vld.sshfl [vmem:[#allocation1 + $0x8] sm:$0xff pattern:$0x73625140]
        %v614 = vld.sshfl [vmem:[#allocation1 + $0x10] sm:$0xff pattern:$0x73625140]
        %v615 = vld.sshfl [vmem:[#allocation1 + $0x18] sm:$0xff pattern:$0x73625140]
        %v684 = vunpack.c.l.b16 %v537
        %v685 = vunpack.c.l.b16 %v538
        %v686 = vunpack.c.l.b16 %v539
        %v687 = vunpack.c.l.b16 %v540
        %v688 = vunpack.c.l.b16 %v541
        %v689 = vunpack.c.l.b16 %v542
        %v690 = vunpack.c.l.b16 %v543
        %v691 = vunpack.c.l.b16 %v544
        %v692 = vunpack.c.l.b16 %v545
        %v693 = vunpack.c.l.b16 %v546
        %v694 = vunpack.c.l.b16 %v547
        %v695 = vunpack.c.l.b16 %v548
        %v696 = vunpack.c.l.b16 %v549
        %v697 = vunpack.c.l.b16 %v550
        %v698 = vunpack.c.l.b16 %v551
        %v699 = vunpack.c.l.b16 %v552
        %v700 = vunpack.c.l.b16 %v553
        %v701 = vunpack.c.l.b16 %v554
        %v702 = vunpack.c.l.b16 %v555
        %v703 = vunpack.c.l.b16 %v556
        %v704 = vunpack.c.l.b16 %v557
        %v705 = vunpack.c.l.b16 %v558
        %v706 = vunpack.c.l.b16 %v559
        %v707 = vunpack.c.l.b16 %v560
        %v708 = vunpack.c.l.b16 %v561
        %v709 = vunpack.c.l.b16 %v562
        %v710 = vunpack.c.l.b16 %v563
        %v711 = vunpack.c.l.b16 %v564
        %v712 = vunpack.c.l.b16 %v565
        %v713 = vunpack.c.l.b16 %v566
        %v714 = vunpack.c.l.b16 %v567
        %v715 = vunpack.c.l.b16 %v568
        %v716 = vunpack.c.l.b16 %v569
        %v717 = vunpack.c.l.b16 %v570
        %v718 = vunpack.c.l.b16 %v571
        %v719 = vunpack.c.l.b16 %v572
        %v720 = vunpack.c.l.b16 %v573
        %v721 = vunpack.c.l.b16 %v574
        %v722 = vunpack.c.l.b16 %v575
        %v723 = vunpack.c.l.b16 %v576
        %v724 = vunpack.c.l.b16 %v577
        %v725 = vunpack.c.l.b16 %v578
        %v726 = vunpack.c.l.b16 %v579
        %v727 = vunpack.c.l.b16 %v580
        %v728 = vunpack.c.l.b16 %v581
        %v729 = vunpack.c.l.b16 %v582
        %v730 = vunpack.c.l.b16 %v583
        %v731 = vunpack.c.l.b16 %v584
        %v732 = vunpack.c.l.b16 %v585
        %v733 = vunpack.c.l.b16 %v586
        %v734 = vunpack.c.l.b16 %v587
        %v735 = vunpack.c.l.b16 %v588
        %v736 = vunpack.c.l.b16 %v589
        %v737 = vunpack.c.l.b16 %v590
        %v738 = vunpack.c.l.b16 %v591
        %v739 = vunpack.c.l.b16 %v592
        %v740 = vunpack.c.l.b16 %v593
        %v741 = vunpack.c.l.b16 %v594
        %v742 = vunpack.c.l.b16 %v595
        %v743 = vunpack.c.l.b16 %v596
        %v744 = vunpack.c.l.b16 %v597
        %v745 = vunpack.c.l.b16 %v598
        %v746 = vunpack.c.l.b16 %v599
        %v747 = vunpack.c.l.b16 %v600
        %v748 = vpack.c.b16 %v685, %v684
        %v749 = vpack.c.b16 %v687, %v686
        %v750 = vpack.c.b16 %v689, %v688
        %v751 = vpack.c.b16 %v691, %v690
        %v752 = vpack.c.b16 %v693, %v692
        %v753 = vpack.c.b16 %v695, %v694
        %v754 = vpack.c.b16 %v697, %v696
        %v755 = vpack.c.b16 %v699, %v698
        %v756 = vpack.c.b16 %v701, %v700
        %v757 = vpack.c.b16 %v703, %v702
        %v758 = vpack.c.b16 %v705, %v704
        %v759 = vpack.c.b16 %v707, %v706
        %v760 = vpack.c.b16 %v709, %v708
        %v761 = vpack.c.b16 %v711, %v710
        %v762 = vpack.c.b16 %v713, %v712
        %v763 = vpack.c.b16 %v715, %v714
        %v764 = vpack.c.b16 %v717, %v716
        %v765 = vpack.c.b16 %v719, %v718
        %v766 = vpack.c.b16 %v721, %v720
        %v767 = vpack.c.b16 %v723, %v722
        %v768 = vpack.c.b16 %v725, %v724
        %v769 = vpack.c.b16 %v727, %v726
        %v770 = vpack.c.b16 %v729, %v728
        %v771 = vpack.c.b16 %v731, %v730
        %v772 = vpack.c.b16 %v733, %v732
        %v773 = vpack.c.b16 %v735, %v734
        %v774 = vpack.c.b16 %v737, %v736
        %v775 = vpack.c.b16 %v739, %v738
        %v776 = vpack.c.b16 %v741, %v740
        %v777 = vpack.c.b16 %v743, %v742
        %v778 = vpack.c.b16 %v745, %v744
        %v779 = vpack.c.b16 %v747, %v746
        %812 = vmatpush.bf16.msra.mxu0 %v755
        %813 = vmatpush.bf16.msra.mxu0 %v754
        %814 = vmatpush.bf16.msra.mxu0 %v753
        %815 = vmatpush.bf16.msra.mxu0 %v752
        %816 = vmatpush.bf16.msra.mxu0 %v751
        %817 = vmatpush.bf16.msra.mxu0 %v750
        %818 = vmatpush.bf16.msra.mxu0 %v749
        %819 = vmatpush.bf16.msra.mxu0 %v748
        %820 = vmatmul.bf16.gmra.mxu0 %v612
        %v821 = vpop.f32.mrf.mxu0
        %v822 = vadd.f32 0.0, %v821
        %v823 = vpop.f32.mrf.mxu0
        %v824 = vadd.f32 0.0, %v823
        %825 = vdwg.mxu0
        %826 = vmatpush.bf16.msra.mxu0 %v763
        %827 = vmatpush.bf16.msra.mxu0 %v762
        %828 = vmatpush.bf16.msra.mxu0 %v761
        %829 = vmatpush.bf16.msra.mxu0 %v760
        %830 = vmatpush.bf16.msra.mxu0 %v759
        %831 = vmatpush.bf16.msra.mxu0 %v758
        %832 = vmatpush.bf16.msra.mxu0 %v757
        %833 = vmatpush.bf16.msra.mxu0 %v756
        %834 = vmatmul.bf16.gmra.mxu0 %v613
        %v835 = vpop.f32.mrf.mxu0
        %v836 = vadd.f32 %v822, %v835
        %v837 = vpop.f32.mrf.mxu0
        %v838 = vadd.f32 %v824, %v837
        %839 = vdwg.mxu0
        %840 = vmatpush.bf16.msra.mxu0 %v771
        %841 = vmatpush.bf16.msra.mxu0 %v770
        %842 = vmatpush.bf16.msra.mxu0 %v769
        %843 = vmatpush.bf16.msra.mxu0 %v768
        %844 = vmatpush.bf16.msra.mxu0 %v767
        %845 = vmatpush.bf16.msra.mxu0 %v766
        %846 = vmatpush.bf16.msra.mxu0 %v765
        %847 = vmatpush.bf16.msra.mxu0 %v764
        %848 = vmatmul.bf16.gmra.mxu0 %v614
        %v849 = vpop.f32.mrf.mxu0
        %v850 = vadd.f32 %v836, %v849
        %v851 = vpop.f32.mrf.mxu0
        %v852 = vadd.f32 %v838, %v851
        %853 = vdwg.mxu0
        %854 = vmatpush.bf16.msra.mxu0 %v779
        %855 = vmatpush.bf16.msra.mxu0 %v778
        %856 = vmatpush.bf16.msra.mxu0 %v777
        %857 = vmatpush.bf16.msra.mxu0 %v776
        %858 = vmatpush.bf16.msra.mxu0 %v775
        %859 = vmatpush.bf16.msra.mxu0 %v774
        %860 = vmatpush.bf16.msra.mxu0 %v773
        %861 = vmatpush.bf16.msra.mxu0 %v772
        %862 = vmatmul.bf16.gmra.mxu0 %v615
        %v863 = vpop.f32.mrf.mxu0
        %v864 = vadd.f32 %v850, %v863
        %v865 = vpop.f32.mrf.mxu0
        %v866 = vadd.f32 %v852, %v865
        %867 = vdwg.mxu0
        %868 = vst [vmem:[#allocation1] ss:$4 sm:$0xff] %v312
        %s869 = scalar_lea.vmem [#allocation1], 1
        %870 = vst [vmem:[%s869] ss:$4 sm:$0xff] %v319
        %s871 = scalar_lea.vmem [#allocation1], 2
        %872 = vst [vmem:[%s871] ss:$4 sm:$0xff] %v326
        %s873 = scalar_lea.vmem [#allocation1], 3
        %874 = vst [vmem:[%s873] ss:$4 sm:$0xff] %v333
        %v875 = vld.sshfl [vmem:[#allocation1] sm:$0xff pattern:$0x73625140]
        %v876 = vld.sshfl [vmem:[#allocation1 + $0x8] sm:$0xff pattern:$0x73625140]
        %v877 = vld.sshfl [vmem:[#allocation1 + $0x10] sm:$0xff pattern:$0x73625140]
        %v878 = vld.sshfl [vmem:[#allocation1 + $0x18] sm:$0xff pattern:$0x73625140]
        %v947 = vunpack.c.l.b16 %v334
        %v948 = vunpack.c.l.b16 %v335
        %v949 = vunpack.c.l.b16 %v336
        %v950 = vunpack.c.l.b16 %v337
        %v951 = vunpack.c.l.b16 %v338
        %v952 = vunpack.c.l.b16 %v339
        %v953 = vunpack.c.l.b16 %v340
        %v954 = vunpack.c.l.b16 %v341
        %v955 = vunpack.c.l.b16 %v342
        %v956 = vunpack.c.l.b16 %v343
        %v957 = vunpack.c.l.b16 %v344
        %v958 = vunpack.c.l.b16 %v345
        %v959 = vunpack.c.l.b16 %v346
        %v960 = vunpack.c.l.b16 %v347
        %v961 = vunpack.c.l.b16 %v348
        %v962 = vunpack.c.l.b16 %v349
        %v963 = vunpack.c.l.b16 %v350
        %v964 = vunpack.c.l.b16 %v351
        %v965 = vunpack.c.l.b16 %v352
        %v966 = vunpack.c.l.b16 %v353
        %v967 = vunpack.c.l.b16 %v354
        %v968 = vunpack.c.l.b16 %v355
        %v969 = vunpack.c.l.b16 %v356
        %v970 = vunpack.c.l.b16 %v357
        %v971 = vunpack.c.l.b16 %v358
        %v972 = vunpack.c.l.b16 %v359
        %v973 = vunpack.c.l.b16 %v360
        %v974 = vunpack.c.l.b16 %v361
        %v975 = vunpack.c.l.b16 %v362
        %v976 = vunpack.c.l.b16 %v363
        %v977 = vunpack.c.l.b16 %v364
        %v978 = vunpack.c.l.b16 %v365
        %v979 = vunpack.c.l.b16 %v366
        %v980 = vunpack.c.l.b16 %v367
        %v981 = vunpack.c.l.b16 %v368
        %v982 = vunpack.c.l.b16 %v369
        %v983 = vunpack.c.l.b16 %v370
        %v984 = vunpack.c.l.b16 %v371
        %v985 = vunpack.c.l.b16 %v372
        %v986 = vunpack.c.l.b16 %v373
        %v987 = vunpack.c.l.b16 %v374
        %v988 = vunpack.c.l.b16 %v375
        %v989 = vunpack.c.l.b16 %v376
        %v990 = vunpack.c.l.b16 %v377
        %v991 = vunpack.c.l.b16 %v378
        %v992 = vunpack.c.l.b16 %v379
        %v993 = vunpack.c.l.b16 %v380
        %v994 = vunpack.c.l.b16 %v381
        %v995 = vunpack.c.l.b16 %v382
        %v996 = vunpack.c.l.b16 %v383
        %v997 = vunpack.c.l.b16 %v384
        %v998 = vunpack.c.l.b16 %v385
        %v999 = vunpack.c.l.b16 %v386
        %v1000 = vunpack.c.l.b16 %v387
        %v1001 = vunpack.c.l.b16 %v388
        %v1002 = vunpack.c.l.b16 %v389
        %v1003 = vunpack.c.l.b16 %v390
        %v1004 = vunpack.c.l.b16 %v391
        %v1005 = vunpack.c.l.b16 %v392
        %v1006 = vunpack.c.l.b16 %v393
        %v1007 = vunpack.c.l.b16 %v394
        %v1008 = vunpack.c.l.b16 %v395
        %v1009 = vunpack.c.l.b16 %v396
        %v1010 = vunpack.c.l.b16 %v397
        %v1011 = vpack.c.b16 %v948, %v947
        %v1012 = vpack.c.b16 %v950, %v949
        %v1013 = vpack.c.b16 %v952, %v951
        %v1014 = vpack.c.b16 %v954, %v953
        %v1015 = vpack.c.b16 %v956, %v955
        %v1016 = vpack.c.b16 %v958, %v957
        %v1017 = vpack.c.b16 %v960, %v959
        %v1018 = vpack.c.b16 %v962, %v961
        %v1019 = vpack.c.b16 %v964, %v963
        %v1020 = vpack.c.b16 %v966, %v965
        %v1021 = vpack.c.b16 %v968, %v967
        %v1022 = vpack.c.b16 %v970, %v969
        %v1023 = vpack.c.b16 %v972, %v971
        %v1024 = vpack.c.b16 %v974, %v973
        %v1025 = vpack.c.b16 %v976, %v975
        %v1026 = vpack.c.b16 %v978, %v977
        %v1027 = vpack.c.b16 %v980, %v979
        %v1028 = vpack.c.b16 %v982, %v981
        %v1029 = vpack.c.b16 %v984, %v983
        %v1030 = vpack.c.b16 %v986, %v985
        %v1031 = vpack.c.b16 %v988, %v987
        %v1032 = vpack.c.b16 %v990, %v989
        %v1033 = vpack.c.b16 %v992, %v991
        %v1034 = vpack.c.b16 %v994, %v993
        %v1035 = vpack.c.b16 %v996, %v995
        %v1036 = vpack.c.b16 %v998, %v997
        %v1037 = vpack.c.b16 %v1000, %v999
        %v1038 = vpack.c.b16 %v1002, %v1001
        %v1039 = vpack.c.b16 %v1004, %v1003
        %v1040 = vpack.c.b16 %v1006, %v1005
        %v1041 = vpack.c.b16 %v1008, %v1007
        %v1042 = vpack.c.b16 %v1010, %v1009
        %1075 = vmatpush.bf16.msra.mxu0 %v1018
        %1076 = vmatpush.bf16.msra.mxu0 %v1017
        %1077 = vmatpush.bf16.msra.mxu0 %v1016
        %1078 = vmatpush.bf16.msra.mxu0 %v1015
        %1079 = vmatpush.bf16.msra.mxu0 %v1014
        %1080 = vmatpush.bf16.msra.mxu0 %v1013
        %1081 = vmatpush.bf16.msra.mxu0 %v1012
        %1082 = vmatpush.bf16.msra.mxu0 %v1011
        %1083 = vmatmul.bf16.gmra.mxu0 %v875
        %v1084 = vpop.f32.mrf.mxu0
        %v1085 = vadd.f32 %v864, %v1084
        %v1086 = vpop.f32.mrf.mxu0
        %v1087 = vadd.f32 %v866, %v1086
        %1088 = vdwg.mxu0
        %1089 = vmatpush.bf16.msra.mxu0 %v1026
        %1090 = vmatpush.bf16.msra.mxu0 %v1025
        %1091 = vmatpush.bf16.msra.mxu0 %v1024
        %1092 = vmatpush.bf16.msra.mxu0 %v1023
        %1093 = vmatpush.bf16.msra.mxu0 %v1022
        %1094 = vmatpush.bf16.msra.mxu0 %v1021
        %1095 = vmatpush.bf16.msra.mxu0 %v1020
        %1096 = vmatpush.bf16.msra.mxu0 %v1019
        %1097 = vmatmul.bf16.gmra.mxu0 %v876
        %v1098 = vpop.f32.mrf.mxu0
        %v1099 = vadd.f32 %v1085, %v1098
        %v1100 = vpop.f32.mrf.mxu0
        %v1101 = vadd.f32 %v1087, %v1100
        %1102 = vdwg.mxu0
        %1103 = vmatpush.bf16.msra.mxu0 %v1034
        %1104 = vmatpush.bf16.msra.mxu0 %v1033
        %1105 = vmatpush.bf16.msra.mxu0 %v1032
        %1106 = vmatpush.bf16.msra.mxu0 %v1031
        %1107 = vmatpush.bf16.msra.mxu0 %v1030
        %1108 = vmatpush.bf16.msra.mxu0 %v1029
        %1109 = vmatpush.bf16.msra.mxu0 %v1028
        %1110 = vmatpush.bf16.msra.mxu0 %v1027
        %1111 = vmatmul.bf16.gmra.mxu0 %v877
        %v1112 = vpop.f32.mrf.mxu0
        %v1113 = vadd.f32 %v1099, %v1112
        %v1114 = vpop.f32.mrf.mxu0
        %v1115 = vadd.f32 %v1101, %v1114
        %1116 = vdwg.mxu0
        %1117 = vmatpush.bf16.msra.mxu0 %v1042
        %1118 = vmatpush.bf16.msra.mxu0 %v1041
        %1119 = vmatpush.bf16.msra.mxu0 %v1040
        %1120 = vmatpush.bf16.msra.mxu0 %v1039
        %1121 = vmatpush.bf16.msra.mxu0 %v1038
        %1122 = vmatpush.bf16.msra.mxu0 %v1037
        %1123 = vmatpush.bf16.msra.mxu0 %v1036
        %1124 = vmatpush.bf16.msra.mxu0 %v1035
        %1125 = vmatmul.bf16.gmra.mxu0 %v878
        %v1126 = vpop.f32.mrf.mxu0
        %v1127 = vadd.f32 %v1113, %v1126
        %v1128 = vpop.f32.mrf.mxu0
        %v1129 = vadd.f32 %v1115, %v1128
        %1130 = vdwg.mxu0
        %s1131 = scalar_lea.vmem %s254, 16
        %v1132 = vld [vmem:[%s1131] sm:$0x33]
        %v1133 = vld [vmem:[%s1131 + $0x8] sm:$0x33]
        %v1134 = vld [vmem:[%s1131 + $0x10] sm:$0x33]
        %v1135 = vld [vmem:[%s1131 + $0x18] sm:$0x33]
        %v1136 = vld [vmem:[%s1131 + $0x20] sm:$0x33]
        %v1137 = vld [vmem:[%s1131 + $0x28] sm:$0x33]
        %v1138 = vld [vmem:[%s1131 + $0x30] sm:$0x33]
        %v1139 = vld [vmem:[%s1131 + $0x38] sm:$0x33]
        %v1148 = vrot.slane %v1132, 2
        %v1149 = vrot.slane %v1133, 4
        %v1150 = vrot.slane %v1133, 6
        %v1151 = vrot.slane %v1134, 2
        %v1152 = vrot.slane %v1135, 4
        %v1153 = vrot.slane %v1135, 6
        %v1154 = vrot.slane %v1136, 2
        %v1155 = vrot.slane %v1137, 4
        %v1156 = vrot.slane %v1137, 6
        %v1157 = vrot.slane %v1138, 2
        %v1158 = vrot.slane %v1139, 4
        %v1159 = vrot.slane %v1139, 6
        %v1162 = vsel %vm303, %v1132, %v1148
        %v1165 = vsel %vm307, %v1149, %v1150
        %v1166 = vsel %vm311, %v1162, %v1165
        %v1169 = vsel %vm303, %v1134, %v1151
        %v1172 = vsel %vm307, %v1152, %v1153
        %v1173 = vsel %vm311, %v1169, %v1172
        %v1176 = vsel %vm303, %v1136, %v1154
        %v1179 = vsel %vm307, %v1155, %v1156
        %v1180 = vsel %vm311, %v1176, %v1179
        %v1183 = vsel %vm303, %v1138, %v1157
        %v1186 = vsel %vm307, %v1158, %v1159
        %v1187 = vsel %vm311, %v1183, %v1186
        %s1188 = scalar_lea.vmem [#allocation2], 512
        %v1189 = vld [vmem:[%s1188] sm:$0xf]
        %v1190 = vld [vmem:[%s1188 + $0x4] sm:$0xf]
        %v1191 = vld [vmem:[%s1188 + $0x8] sm:$0xf]
        %v1192 = vld [vmem:[%s1188 + $0xc] sm:$0xf]
        %v1193 = vld [vmem:[%s1188 + $0x10] sm:$0xf]
        %v1194 = vld [vmem:[%s1188 + $0x14] sm:$0xf]
        %v1195 = vld [vmem:[%s1188 + $0x18] sm:$0xf]
        %v1196 = vld [vmem:[%s1188 + $0x1c] sm:$0xf]
        %v1197 = vld [vmem:[%s1188 + $0x20] sm:$0xf]
        %v1198 = vld [vmem:[%s1188 + $0x24] sm:$0xf]
        %v1199 = vld [vmem:[%s1188 + $0x28] sm:$0xf]
        %v1200 = vld [vmem:[%s1188 + $0x2c] sm:$0xf]
        %v1201 = vld [vmem:[%s1188 + $0x30] sm:$0xf]
        %v1202 = vld [vmem:[%s1188 + $0x34] sm:$0xf]
        %v1203 = vld [vmem:[%s1188 + $0x38] sm:$0xf]
        %v1204 = vld [vmem:[%s1188 + $0x3c] sm:$0xf]
        %v1205 = vld [vmem:[%s1188 + $0x40] sm:$0xf]
        %v1206 = vld [vmem:[%s1188 + $0x44] sm:$0xf]
        %v1207 = vld [vmem:[%s1188 + $0x48] sm:$0xf]
        %v1208 = vld [vmem:[%s1188 + $0x4c] sm:$0xf]
        %v1209 = vld [vmem:[%s1188 + $0x50] sm:$0xf]
        %v1210 = vld [vmem:[%s1188 + $0x54] sm:$0xf]
        %v1211 = vld [vmem:[%s1188 + $0x58] sm:$0xf]
        %v1212 = vld [vmem:[%s1188 + $0x5c] sm:$0xf]
        %v1213 = vld [vmem:[%s1188 + $0x60] sm:$0xf]
        %v1214 = vld [vmem:[%s1188 + $0x64] sm:$0xf]
        %v1215 = vld [vmem:[%s1188 + $0x68] sm:$0xf]
        %v1216 = vld [vmem:[%s1188 + $0x6c] sm:$0xf]
        %v1217 = vld [vmem:[%s1188 + $0x70] sm:$0xf]
        %v1218 = vld [vmem:[%s1188 + $0x74] sm:$0xf]
        %v1219 = vld [vmem:[%s1188 + $0x78] sm:$0xf]
        %v1220 = vld [vmem:[%s1188 + $0x7c] sm:$0xf]
        %v1221 = vld [vmem:[%s1188 + $0x80] sm:$0xf]
        %v1222 = vld [vmem:[%s1188 + $0x84] sm:$0xf]
        %v1223 = vld [vmem:[%s1188 + $0x88] sm:$0xf]
        %v1224 = vld [vmem:[%s1188 + $0x8c] sm:$0xf]
        %v1225 = vld [vmem:[%s1188 + $0x90] sm:$0xf]
        %v1226 = vld [vmem:[%s1188 + $0x94] sm:$0xf]
        %v1227 = vld [vmem:[%s1188 + $0x98] sm:$0xf]
        %v1228 = vld [vmem:[%s1188 + $0x9c] sm:$0xf]
        %v1229 = vld [vmem:[%s1188 + $0xa0] sm:$0xf]
        %v1230 = vld [vmem:[%s1188 + $0xa4] sm:$0xf]
        %v1231 = vld [vmem:[%s1188 + $0xa8] sm:$0xf]
        %v1232 = vld [vmem:[%s1188 + $0xac] sm:$0xf]
        %v1233 = vld [vmem:[%s1188 + $0xb0] sm:$0xf]
        %v1234 = vld [vmem:[%s1188 + $0xb4] sm:$0xf]
        %v1235 = vld [vmem:[%s1188 + $0xb8] sm:$0xf]
        %v1236 = vld [vmem:[%s1188 + $0xbc] sm:$0xf]
        %v1237 = vld [vmem:[%s1188 + $0xc0] sm:$0xf]
        %v1238 = vld [vmem:[%s1188 + $0xc4] sm:$0xf]
        %v1239 = vld [vmem:[%s1188 + $0xc8] sm:$0xf]
        %v1240 = vld [vmem:[%s1188 + $0xcc] sm:$0xf]
        %v1241 = vld [vmem:[%s1188 + $0xd0] sm:$0xf]
        %v1242 = vld [vmem:[%s1188 + $0xd4] sm:$0xf]
        %v1243 = vld [vmem:[%s1188 + $0xd8] sm:$0xf]
        %v1244 = vld [vmem:[%s1188 + $0xdc] sm:$0xf]
        %v1245 = vld [vmem:[%s1188 + $0xe0] sm:$0xf]
        %v1246 = vld [vmem:[%s1188 + $0xe4] sm:$0xf]
        %v1247 = vld [vmem:[%s1188 + $0xe8] sm:$0xf]
        %v1248 = vld [vmem:[%s1188 + $0xec] sm:$0xf]
        %v1249 = vld [vmem:[%s1188 + $0xf0] sm:$0xf]
        %v1250 = vld [vmem:[%s1188 + $0xf4] sm:$0xf]
        %v1251 = vld [vmem:[%s1188 + $0xf8] sm:$0xf]
        %v1252 = vld [vmem:[%s1188 + $0xfc] sm:$0xf]
        %1253 = vst [vmem:[#allocation1] ss:$4 sm:$0xff] %v1166
        %s1254 = scalar_lea.vmem [#allocation1], 1
        %1255 = vst [vmem:[%s1254] ss:$4 sm:$0xff] %v1173
        %s1256 = scalar_lea.vmem [#allocation1], 2
        %1257 = vst [vmem:[%s1256] ss:$4 sm:$0xff] %v1180
        %s1258 = scalar_lea.vmem [#allocation1], 3
        %1259 = vst [vmem:[%s1258] ss:$4 sm:$0xff] %v1187
        %v1260 = vld.sshfl [vmem:[#allocation1] sm:$0xff pattern:$0x73625140]
        %v1261 = vld.sshfl [vmem:[#allocation1 + $0x8] sm:$0xff pattern:$0x73625140]
        %v1262 = vld.sshfl [vmem:[#allocation1 + $0x10] sm:$0xff pattern:$0x73625140]
        %v1263 = vld.sshfl [vmem:[#allocation1 + $0x18] sm:$0xff pattern:$0x73625140]
        %v1332 = vunpack.c.l.b16 %v1189
        %v1333 = vunpack.c.l.b16 %v1190
        %v1334 = vunpack.c.l.b16 %v1191
        %v1335 = vunpack.c.l.b16 %v1192
        %v1336 = vunpack.c.l.b16 %v1193
        %v1337 = vunpack.c.l.b16 %v1194
        %v1338 = vunpack.c.l.b16 %v1195
        %v1339 = vunpack.c.l.b16 %v1196
        %v1340 = vunpack.c.l.b16 %v1197
        %v1341 = vunpack.c.l.b16 %v1198
        %v1342 = vunpack.c.l.b16 %v1199
        %v1343 = vunpack.c.l.b16 %v1200
        %v1344 = vunpack.c.l.b16 %v1201
        %v1345 = vunpack.c.l.b16 %v1202
        %v1346 = vunpack.c.l.b16 %v1203
        %v1347 = vunpack.c.l.b16 %v1204
        %v1348 = vunpack.c.l.b16 %v1205
        %v1349 = vunpack.c.l.b16 %v1206
        %v1350 = vunpack.c.l.b16 %v1207
        %v1351 = vunpack.c.l.b16 %v1208
        %v1352 = vunpack.c.l.b16 %v1209
        %v1353 = vunpack.c.l.b16 %v1210
        %v1354 = vunpack.c.l.b16 %v1211
        %v1355 = vunpack.c.l.b16 %v1212
        %v1356 = vunpack.c.l.b16 %v1213
        %v1357 = vunpack.c.l.b16 %v1214
        %v1358 = vunpack.c.l.b16 %v1215
        %v1359 = vunpack.c.l.b16 %v1216
        %v1360 = vunpack.c.l.b16 %v1217
        %v1361 = vunpack.c.l.b16 %v1218
        %v1362 = vunpack.c.l.b16 %v1219
        %v1363 = vunpack.c.l.b16 %v1220
        %v1364 = vunpack.c.l.b16 %v1221
        %v1365 = vunpack.c.l.b16 %v1222
        %v1366 = vunpack.c.l.b16 %v1223
        %v1367 = vunpack.c.l.b16 %v1224
        %v1368 = vunpack.c.l.b16 %v1225
        %v1369 = vunpack.c.l.b16 %v1226
        %v1370 = vunpack.c.l.b16 %v1227
        %v1371 = vunpack.c.l.b16 %v1228
        %v1372 = vunpack.c.l.b16 %v1229
        %v1373 = vunpack.c.l.b16 %v1230
        %v1374 = vunpack.c.l.b16 %v1231
        %v1375 = vunpack.c.l.b16 %v1232
        %v1376 = vunpack.c.l.b16 %v1233
        %v1377 = vunpack.c.l.b16 %v1234
        %v1378 = vunpack.c.l.b16 %v1235
        %v1379 = vunpack.c.l.b16 %v1236
        %v1380 = vunpack.c.l.b16 %v1237
        %v1381 = vunpack.c.l.b16 %v1238
        %v1382 = vunpack.c.l.b16 %v1239
        %v1383 = vunpack.c.l.b16 %v1240
        %v1384 = vunpack.c.l.b16 %v1241
        %v1385 = vunpack.c.l.b16 %v1242
        %v1386 = vunpack.c.l.b16 %v1243
        %v1387 = vunpack.c.l.b16 %v1244
        %v1388 = vunpack.c.l.b16 %v1245
        %v1389 = vunpack.c.l.b16 %v1246
        %v1390 = vunpack.c.l.b16 %v1247
        %v1391 = vunpack.c.l.b16 %v1248
        %v1392 = vunpack.c.l.b16 %v1249
        %v1393 = vunpack.c.l.b16 %v1250
        %v1394 = vunpack.c.l.b16 %v1251
        %v1395 = vunpack.c.l.b16 %v1252
        %v1396 = vpack.c.b16 %v1333, %v1332
        %v1397 = vpack.c.b16 %v1335, %v1334
        %v1398 = vpack.c.b16 %v1337, %v1336
        %v1399 = vpack.c.b16 %v1339, %v1338
        %v1400 = vpack.c.b16 %v1341, %v1340
        %v1401 = vpack.c.b16 %v1343, %v1342
        %v1402 = vpack.c.b16 %v1345, %v1344
        %v1403 = vpack.c.b16 %v1347, %v1346
        %v1404 = vpack.c.b16 %v1349, %v1348
        %v1405 = vpack.c.b16 %v1351, %v1350
        %v1406 = vpack.c.b16 %v1353, %v1352
        %v1407 = vpack.c.b16 %v1355, %v1354
        %v1408 = vpack.c.b16 %v1357, %v1356
        %v1409 = vpack.c.b16 %v1359, %v1358
        %v1410 = vpack.c.b16 %v1361, %v1360
        %v1411 = vpack.c.b16 %v1363, %v1362
        %v1412 = vpack.c.b16 %v1365, %v1364
        %v1413 = vpack.c.b16 %v1367, %v1366
        %v1414 = vpack.c.b16 %v1369, %v1368
        %v1415 = vpack.c.b16 %v1371, %v1370
        %v1416 = vpack.c.b16 %v1373, %v1372
        %v1417 = vpack.c.b16 %v1375, %v1374
        %v1418 = vpack.c.b16 %v1377, %v1376
        %v1419 = vpack.c.b16 %v1379, %v1378
        %v1420 = vpack.c.b16 %v1381, %v1380
        %v1421 = vpack.c.b16 %v1383, %v1382
        %v1422 = vpack.c.b16 %v1385, %v1384
        %v1423 = vpack.c.b16 %v1387, %v1386
        %v1424 = vpack.c.b16 %v1389, %v1388
        %v1425 = vpack.c.b16 %v1391, %v1390
        %v1426 = vpack.c.b16 %v1393, %v1392
        %v1427 = vpack.c.b16 %v1395, %v1394
        %1460 = vmatpush.bf16.msra.mxu0 %v1403
        %1461 = vmatpush.bf16.msra.mxu0 %v1402
        %1462 = vmatpush.bf16.msra.mxu0 %v1401
        %1463 = vmatpush.bf16.msra.mxu0 %v1400
        %1464 = vmatpush.bf16.msra.mxu0 %v1399
        %1465 = vmatpush.bf16.msra.mxu0 %v1398
        %1466 = vmatpush.bf16.msra.mxu0 %v1397
        %1467 = vmatpush.bf16.msra.mxu0 %v1396
        %1468 = vmatmul.bf16.gmra.mxu0 %v1260
        %v1469 = vpop.f32.mrf.mxu0
        %v1470 = vadd.f32 0.0, %v1469
        %v1471 = vpop.f32.mrf.mxu0
        %v1472 = vadd.f32 0.0, %v1471
        %1473 = vdwg.mxu0
        %1474 = vmatpush.bf16.msra.mxu0 %v1411
        %1475 = vmatpush.bf16.msra.mxu0 %v1410
        %1476 = vmatpush.bf16.msra.mxu0 %v1409
        %1477 = vmatpush.bf16.msra.mxu0 %v1408
        %1478 = vmatpush.bf16.msra.mxu0 %v1407
        %1479 = vmatpush.bf16.msra.mxu0 %v1406
        %1480 = vmatpush.bf16.msra.mxu0 %v1405
        %1481 = vmatpush.bf16.msra.mxu0 %v1404
        %1482 = vmatmul.bf16.gmra.mxu0 %v1261
        %v1483 = vpop.f32.mrf.mxu0
        %v1484 = vadd.f32 %v1470, %v1483
        %v1485 = vpop.f32.mrf.mxu0
        %v1486 = vadd.f32 %v1472, %v1485
        %1487 = vdwg.mxu0
        %1488 = vmatpush.bf16.msra.mxu0 %v1419
        %1489 = vmatpush.bf16.msra.mxu0 %v1418
        %1490 = vmatpush.bf16.msra.mxu0 %v1417
        %1491 = vmatpush.bf16.msra.mxu0 %v1416
        %1492 = vmatpush.bf16.msra.mxu0 %v1415
        %1493 = vmatpush.bf16.msra.mxu0 %v1414
        %1494 = vmatpush.bf16.msra.mxu0 %v1413
        %1495 = vmatpush.bf16.msra.mxu0 %v1412
        %1496 = vmatmul.bf16.gmra.mxu0 %v1262
        %v1497 = vpop.f32.mrf.mxu0
        %v1498 = vadd.f32 %v1484, %v1497
        %v1499 = vpop.f32.mrf.mxu0
        %v1500 = vadd.f32 %v1486, %v1499
        %1501 = vdwg.mxu0
        %1502 = vmatpush.bf16.msra.mxu0 %v1427
        %1503 = vmatpush.bf16.msra.mxu0 %v1426
        %1504 = vmatpush.bf16.msra.mxu0 %v1425
        %1505 = vmatpush.bf16.msra.mxu0 %v1424
        %1506 = vmatpush.bf16.msra.mxu0 %v1423
        %1507 = vmatpush.bf16.msra.mxu0 %v1422
        %1508 = vmatpush.bf16.msra.mxu0 %v1421
        %1509 = vmatpush.bf16.msra.mxu0 %v1420
        %1510 = vmatmul.bf16.gmra.mxu0 %v1263
        %v1511 = vpop.f32.mrf.mxu0
        %v1512 = vadd.f32 %v1498, %v1511
        %v1513 = vpop.f32.mrf.mxu0
        %v1514 = vadd.f32 %v1500, %v1513
        %1515 = vdwg.mxu0
        %v1516 = vadd.f32 %v1127, %v1512
        %v1517 = vadd.f32 %v1129, %v1514
        %v1518 = vld [vmem:[%s1131] sm:$0x77]
        %v1519 = vld [vmem:[%s1131 + $0x8] sm:$0x77]
        %v1520 = vld [vmem:[%s1131 + $0x10] sm:$0x77]
        %v1521 = vld [vmem:[%s1131 + $0x18] sm:$0x77]
        %v1522 = vld [vmem:[%s1131 + $0x20] sm:$0x77]
        %v1523 = vld [vmem:[%s1131 + $0x28] sm:$0x77]
        %v1524 = vld [vmem:[%s1131 + $0x30] sm:$0x77]
        %v1525 = vld [vmem:[%s1131 + $0x38] sm:$0x77]
        %v1534 = vrot.slane %v1518, 2
        %v1535 = vrot.slane %v1519, 4
        %v1536 = vrot.slane %v1519, 6
        %v1537 = vrot.slane %v1520, 2
        %v1538 = vrot.slane %v1521, 4
        %v1539 = vrot.slane %v1521, 6
        %v1540 = vrot.slane %v1522, 2
        %v1541 = vrot.slane %v1523, 4
        %v1542 = vrot.slane %v1523, 6
        %v1543 = vrot.slane %v1524, 2
        %v1544 = vrot.slane %v1525, 4
        %v1545 = vrot.slane %v1525, 6
        %v1548 = vsel %vm303, %v1518, %v1534
        %v1551 = vsel %vm307, %v1535, %v1536
        %v1552 = vsel %vm311, %v1548, %v1551
        %v1553 = vsel %vm433, %v1518, %v1534
        %v1554 = vsel %vm435, %v1536, %v1535
        %v1555 = vsel %vm437, %v1553, %v1554
        %v1557 = vrot.slane %v1555, 2
        %v1560 = vsel %vm303, %v1520, %v1537
        %v1563 = vsel %vm307, %v1538, %v1539
        %v1564 = vsel %vm311, %v1560, %v1563
        %v1565 = vsel %vm433, %v1520, %v1537
        %v1566 = vsel %vm435, %v1539, %v1538
        %v1567 = vsel %vm437, %v1565, %v1566
        %v1569 = vrot.slane %v1567, 2
        %v1572 = vsel %vm303, %v1522, %v1540
        %v1575 = vsel %vm307, %v1541, %v1542
        %v1576 = vsel %vm311, %v1572, %v1575
        %v1577 = vsel %vm433, %v1522, %v1540
        %v1578 = vsel %vm435, %v1542, %v1541
        %v1579 = vsel %vm437, %v1577, %v1578
        %v1581 = vrot.slane %v1579, 2
        %v1584 = vsel %vm303, %v1524, %v1543
        %v1587 = vsel %vm307, %v1544, %v1545
        %v1588 = vsel %vm311, %v1584, %v1587
        %v1589 = vsel %vm433, %v1524, %v1543
        %v1590 = vsel %vm435, %v1545, %v1544
        %v1591 = vsel %vm437, %v1589, %v1590
        %v1593 = vrot.slane %v1591, 2
        %v1594 = vshrl.u32 %v1552, 16
        %v1596 = vrot.slane %v1594, 6
        %v1597 = vshll.u32 %v1552, 16
        %v1599 = vrot.slane %v1597, 7
        %v1600 = vor.u32 %v1596, %v1599
        %v1601 = vrot.slane %v1600, 2
        %v1603 = vshll.u32 %v1557, 16
        %v1605 = vrot.slane %v1603, 7
        %v1606 = vsel %vm483, %v1601, %v1605
        %v1607 = vshrl.u32 %v1564, 16
        %v1609 = vrot.slane %v1607, 6
        %v1610 = vshll.u32 %v1564, 16
        %v1612 = vrot.slane %v1610, 7
        %v1613 = vor.u32 %v1609, %v1612
        %v1614 = vrot.slane %v1613, 2
        %v1616 = vshll.u32 %v1569, 16
        %v1618 = vrot.slane %v1616, 7
        %v1619 = vsel %vm483, %v1614, %v1618
        %v1620 = vshrl.u32 %v1576, 16
        %v1622 = vrot.slane %v1620, 6
        %v1623 = vshll.u32 %v1576, 16
        %v1625 = vrot.slane %v1623, 7
        %v1626 = vor.u32 %v1622, %v1625
        %v1627 = vrot.slane %v1626, 2
        %v1629 = vshll.u32 %v1581, 16
        %v1631 = vrot.slane %v1629, 7
        %v1632 = vsel %vm483, %v1627, %v1631
        %v1633 = vshrl.u32 %v1588, 16
        %v1635 = vrot.slane %v1633, 6
        %v1636 = vshll.u32 %v1588, 16
        %v1638 = vrot.slane %v1636, 7
        %v1639 = vor.u32 %v1635, %v1638
        %v1640 = vrot.slane %v1639, 2
        %v1642 = vshll.u32 %v1593, 16
        %v1644 = vrot.slane %v1642, 7
        %v1645 = vsel %vm483, %v1640, %v1644
        %s1646 = scalar_lea.vmem [#allocation2], 768
        %v1647 = vld [vmem:[%s1646] sm:$0xf]
        %v1648 = vld [vmem:[%s1646 + $0x4] sm:$0xf]
        %v1649 = vld [vmem:[%s1646 + $0x8] sm:$0xf]
        %v1650 = vld [vmem:[%s1646 + $0xc] sm:$0xf]
        %v1651 = vld [vmem:[%s1646 + $0x10] sm:$0xf]
        %v1652 = vld [vmem:[%s1646 + $0x14] sm:$0xf]
        %v1653 = vld [vmem:[%s1646 + $0x18] sm:$0xf]
        %v1654 = vld [vmem:[%s1646 + $0x1c] sm:$0xf]
        %v1655 = vld [vmem:[%s1646 + $0x20] sm:$0xf]
        %v1656 = vld [vmem:[%s1646 + $0x24] sm:$0xf]
        %v1657 = vld [vmem:[%s1646 + $0x28] sm:$0xf]
        %v1658 = vld [vmem:[%s1646 + $0x2c] sm:$0xf]
        %v1659 = vld [vmem:[%s1646 + $0x30] sm:$0xf]
        %v1660 = vld [vmem:[%s1646 + $0x34] sm:$0xf]
        %v1661 = vld [vmem:[%s1646 + $0x38] sm:$0xf]
        %v1662 = vld [vmem:[%s1646 + $0x3c] sm:$0xf]
        %v1663 = vld [vmem:[%s1646 + $0x40] sm:$0xf]
        %v1664 = vld [vmem:[%s1646 + $0x44] sm:$0xf]
        %v1665 = vld [vmem:[%s1646 + $0x48] sm:$0xf]
        %v1666 = vld [vmem:[%s1646 + $0x4c] sm:$0xf]
        %v1667 = vld [vmem:[%s1646 + $0x50] sm:$0xf]
        %v1668 = vld [vmem:[%s1646 + $0x54] sm:$0xf]
        %v1669 = vld [vmem:[%s1646 + $0x58] sm:$0xf]
        %v1670 = vld [vmem:[%s1646 + $0x5c] sm:$0xf]
        %v1671 = vld [vmem:[%s1646 + $0x60] sm:$0xf]
        %v1672 = vld [vmem:[%s1646 + $0x64] sm:$0xf]
        %v1673 = vld [vmem:[%s1646 + $0x68] sm:$0xf]
        %v1674 = vld [vmem:[%s1646 + $0x6c] sm:$0xf]
        %v1675 = vld [vmem:[%s1646 + $0x70] sm:$0xf]
        %v1676 = vld [vmem:[%s1646 + $0x74] sm:$0xf]
        %v1677 = vld [vmem:[%s1646 + $0x78] sm:$0xf]
        %v1678 = vld [vmem:[%s1646 + $0x7c] sm:$0xf]
        %v1679 = vld [vmem:[%s1646 + $0x80] sm:$0xf]
        %v1680 = vld [vmem:[%s1646 + $0x84] sm:$0xf]
        %v1681 = vld [vmem:[%s1646 + $0x88] sm:$0xf]
        %v1682 = vld [vmem:[%s1646 + $0x8c] sm:$0xf]
        %v1683 = vld [vmem:[%s1646 + $0x90] sm:$0xf]
        %v1684 = vld [vmem:[%s1646 + $0x94] sm:$0xf]
        %v1685 = vld [vmem:[%s1646 + $0x98] sm:$0xf]
        %v1686 = vld [vmem:[%s1646 + $0x9c] sm:$0xf]
        %v1687 = vld [vmem:[%s1646 + $0xa0] sm:$0xf]
        %v1688 = vld [vmem:[%s1646 + $0xa4] sm:$0xf]
        %v1689 = vld [vmem:[%s1646 + $0xa8] sm:$0xf]
        %v1690 = vld [vmem:[%s1646 + $0xac] sm:$0xf]
        %v1691 = vld [vmem:[%s1646 + $0xb0] sm:$0xf]
        %v1692 = vld [vmem:[%s1646 + $0xb4] sm:$0xf]
        %v1693 = vld [vmem:[%s1646 + $0xb8] sm:$0xf]
        %v1694 = vld [vmem:[%s1646 + $0xbc] sm:$0xf]
        %v1695 = vld [vmem:[%s1646 + $0xc0] sm:$0xf]
        %v1696 = vld [vmem:[%s1646 + $0xc4] sm:$0xf]
        %v1697 = vld [vmem:[%s1646 + $0xc8] sm:$0xf]
        %v1698 = vld [vmem:[%s1646 + $0xcc] sm:$0xf]
        %v1699 = vld [vmem:[%s1646 + $0xd0] sm:$0xf]
        %v1700 = vld [vmem:[%s1646 + $0xd4] sm:$0xf]
        %v1701 = vld [vmem:[%s1646 + $0xd8] sm:$0xf]
        %v1702 = vld [vmem:[%s1646 + $0xdc] sm:$0xf]
        %v1703 = vld [vmem:[%s1646 + $0xe0] sm:$0xf]
        %v1704 = vld [vmem:[%s1646 + $0xe4] sm:$0xf]
        %v1705 = vld [vmem:[%s1646 + $0xe8] sm:$0xf]
        %v1706 = vld [vmem:[%s1646 + $0xec] sm:$0xf]
        %v1707 = vld [vmem:[%s1646 + $0xf0] sm:$0xf]
        %v1708 = vld [vmem:[%s1646 + $0xf4] sm:$0xf]
        %v1709 = vld [vmem:[%s1646 + $0xf8] sm:$0xf]
        %v1710 = vld [vmem:[%s1646 + $0xfc] sm:$0xf]
        %1712 = vst [vmem:[#allocation1] ss:$4 sm:$0xff] %v1606
        %s1714 = scalar_lea.vmem [#allocation1], 1
        %1715 = vst [vmem:[%s1714] ss:$4 sm:$0xff] %v1619
        %s1717 = scalar_lea.vmem [#allocation1], 2
        %1718 = vst [vmem:[%s1717] ss:$4 sm:$0xff] %v1632
        %s1720 = scalar_lea.vmem [#allocation1], 3
        %1721 = vst [vmem:[%s1720] ss:$4 sm:$0xff] %v1645
        %v1722 = vld.sshfl [vmem:[#allocation1] sm:$0xff pattern:$0x73625140]
        %v1723 = vld.sshfl [vmem:[#allocation1 + $0x8] sm:$0xff pattern:$0x73625140]
        %v1724 = vld.sshfl [vmem:[#allocation1 + $0x10] sm:$0xff pattern:$0x73625140]
        %v1725 = vld.sshfl [vmem:[#allocation1 + $0x18] sm:$0xff pattern:$0x73625140]
        %v1794 = vunpack.c.l.b16 %v1647
        %v1795 = vunpack.c.l.b16 %v1648
        %v1796 = vunpack.c.l.b16 %v1649
        %v1797 = vunpack.c.l.b16 %v1650
        %v1798 = vunpack.c.l.b16 %v1651
        %v1799 = vunpack.c.l.b16 %v1652
        %v1800 = vunpack.c.l.b16 %v1653
        %v1801 = vunpack.c.l.b16 %v1654
        %v1802 = vunpack.c.l.b16 %v1655
        %v1803 = vunpack.c.l.b16 %v1656
        %v1804 = vunpack.c.l.b16 %v1657
        %v1805 = vunpack.c.l.b16 %v1658
        %v1806 = vunpack.c.l.b16 %v1659
        %v1807 = vunpack.c.l.b16 %v1660
        %v1808 = vunpack.c.l.b16 %v1661
        %v1809 = vunpack.c.l.b16 %v1662
        %v1810 = vunpack.c.l.b16 %v1663
        %v1811 = vunpack.c.l.b16 %v1664
        %v1812 = vunpack.c.l.b16 %v1665
        %v1813 = vunpack.c.l.b16 %v1666
        %v1814 = vunpack.c.l.b16 %v1667
        %v1815 = vunpack.c.l.b16 %v1668
        %v1816 = vunpack.c.l.b16 %v1669
        %v1817 = vunpack.c.l.b16 %v1670
        %v1818 = vunpack.c.l.b16 %v1671
        %v1819 = vunpack.c.l.b16 %v1672
        %v1820 = vunpack.c.l.b16 %v1673
        %v1821 = vunpack.c.l.b16 %v1674
        %v1822 = vunpack.c.l.b16 %v1675
        %v1823 = vunpack.c.l.b16 %v1676
        %v1824 = vunpack.c.l.b16 %v1677
        %v1825 = vunpack.c.l.b16 %v1678
        %v1826 = vunpack.c.l.b16 %v1679
        %v1827 = vunpack.c.l.b16 %v1680
        %v1828 = vunpack.c.l.b16 %v1681
        %v1829 = vunpack.c.l.b16 %v1682
        %v1830 = vunpack.c.l.b16 %v1683
        %v1831 = vunpack.c.l.b16 %v1684
        %v1832 = vunpack.c.l.b16 %v1685
        %v1833 = vunpack.c.l.b16 %v1686
        %v1834 = vunpack.c.l.b16 %v1687
        %v1835 = vunpack.c.l.b16 %v1688
        %v1836 = vunpack.c.l.b16 %v1689
        %v1837 = vunpack.c.l.b16 %v1690
        %v1838 = vunpack.c.l.b16 %v1691
        %v1839 = vunpack.c.l.b16 %v1692
        %v1840 = vunpack.c.l.b16 %v1693
        %v1841 = vunpack.c.l.b16 %v1694
        %v1842 = vunpack.c.l.b16 %v1695
        %v1843 = vunpack.c.l.b16 %v1696
        %v1844 = vunpack.c.l.b16 %v1697
        %v1845 = vunpack.c.l.b16 %v1698
        %v1846 = vunpack.c.l.b16 %v1699
        %v1847 = vunpack.c.l.b16 %v1700
        %v1848 = vunpack.c.l.b16 %v1701
        %v1849 = vunpack.c.l.b16 %v1702
        %v1850 = vunpack.c.l.b16 %v1703
        %v1851 = vunpack.c.l.b16 %v1704
        %v1852 = vunpack.c.l.b16 %v1705
        %v1853 = vunpack.c.l.b16 %v1706
        %v1854 = vunpack.c.l.b16 %v1707
        %v1855 = vunpack.c.l.b16 %v1708
        %v1856 = vunpack.c.l.b16 %v1709
        %v1857 = vunpack.c.l.b16 %v1710
        %v1858 = vpack.c.b16 %v1795, %v1794
        %v1859 = vpack.c.b16 %v1797, %v1796
        %v1860 = vpack.c.b16 %v1799, %v1798
        %v1861 = vpack.c.b16 %v1801, %v1800
        %v1862 = vpack.c.b16 %v1803, %v1802
        %v1863 = vpack.c.b16 %v1805, %v1804
        %v1864 = vpack.c.b16 %v1807, %v1806
        %v1865 = vpack.c.b16 %v1809, %v1808
        %v1866 = vpack.c.b16 %v1811, %v1810
        %v1867 = vpack.c.b16 %v1813, %v1812
        %v1868 = vpack.c.b16 %v1815, %v1814
        %v1869 = vpack.c.b16 %v1817, %v1816
        %v1870 = vpack.c.b16 %v1819, %v1818
        %v1871 = vpack.c.b16 %v1821, %v1820
        %v1872 = vpack.c.b16 %v1823, %v1822
        %v1873 = vpack.c.b16 %v1825, %v1824
        %v1874 = vpack.c.b16 %v1827, %v1826
        %v1875 = vpack.c.b16 %v1829, %v1828
        %v1876 = vpack.c.b16 %v1831, %v1830
        %v1877 = vpack.c.b16 %v1833, %v1832
        %v1878 = vpack.c.b16 %v1835, %v1834
        %v1879 = vpack.c.b16 %v1837, %v1836
        %v1880 = vpack.c.b16 %v1839, %v1838
        %v1881 = vpack.c.b16 %v1841, %v1840
        %v1882 = vpack.c.b16 %v1843, %v1842
        %v1883 = vpack.c.b16 %v1845, %v1844
        %v1884 = vpack.c.b16 %v1847, %v1846
        %v1885 = vpack.c.b16 %v1849, %v1848
        %v1886 = vpack.c.b16 %v1851, %v1850
        %v1887 = vpack.c.b16 %v1853, %v1852
        %v1888 = vpack.c.b16 %v1855, %v1854
        %v1889 = vpack.c.b16 %v1857, %v1856
        %1922 = vmatpush.bf16.msra.mxu0 %v1865
        %1923 = vmatpush.bf16.msra.mxu0 %v1864
        %1924 = vmatpush.bf16.msra.mxu0 %v1863
        %1925 = vmatpush.bf16.msra.mxu0 %v1862
        %1926 = vmatpush.bf16.msra.mxu0 %v1861
        %1927 = vmatpush.bf16.msra.mxu0 %v1860
        %1928 = vmatpush.bf16.msra.mxu0 %v1859
        %1929 = vmatpush.bf16.msra.mxu0 %v1858
        %1930 = vmatmul.bf16.gmra.mxu0 %v1722
        %v1931 = vpop.f32.mrf.mxu0
        %v1932 = vadd.f32 0.0, %v1931
        %v1933 = vpop.f32.mrf.mxu0
        %v1934 = vadd.f32 0.0, %v1933
        %1935 = vdwg.mxu0
        %1936 = vmatpush.bf16.msra.mxu0 %v1873
        %1937 = vmatpush.bf16.msra.mxu0 %v1872
        %1938 = vmatpush.bf16.msra.mxu0 %v1871
        %1939 = vmatpush.bf16.msra.mxu0 %v1870
        %1940 = vmatpush.bf16.msra.mxu0 %v1869
        %1941 = vmatpush.bf16.msra.mxu0 %v1868
        %1942 = vmatpush.bf16.msra.mxu0 %v1867
        %1943 = vmatpush.bf16.msra.mxu0 %v1866
        %1944 = vmatmul.bf16.gmra.mxu0 %v1723
        %v1945 = vpop.f32.mrf.mxu0
        %v1946 = vadd.f32 %v1932, %v1945
        %v1947 = vpop.f32.mrf.mxu0
        %v1948 = vadd.f32 %v1934, %v1947
        %1949 = vdwg.mxu0
        %1950 = vmatpush.bf16.msra.mxu0 %v1881
        %1951 = vmatpush.bf16.msra.mxu0 %v1880
        %1952 = vmatpush.bf16.msra.mxu0 %v1879
        %1953 = vmatpush.bf16.msra.mxu0 %v1878
        %1954 = vmatpush.bf16.msra.mxu0 %v1877
        %1955 = vmatpush.bf16.msra.mxu0 %v1876
        %1956 = vmatpush.bf16.msra.mxu0 %v1875
        %1957 = vmatpush.bf16.msra.mxu0 %v1874
        %1958 = vmatmul.bf16.gmra.mxu0 %v1724
        %v1959 = vpop.f32.mrf.mxu0
        %v1960 = vadd.f32 %v1946, %v1959
        %v1961 = vpop.f32.mrf.mxu0
        %v1962 = vadd.f32 %v1948, %v1961
        %1963 = vdwg.mxu0
        %1964 = vmatpush.bf16.msra.mxu0 %v1889
        %1965 = vmatpush.bf16.msra.mxu0 %v1888
        %1966 = vmatpush.bf16.msra.mxu0 %v1887
        %1967 = vmatpush.bf16.msra.mxu0 %v1886
        %1968 = vmatpush.bf16.msra.mxu0 %v1885
        %1969 = vmatpush.bf16.msra.mxu0 %v1884
        %1970 = vmatpush.bf16.msra.mxu0 %v1883
        %1971 = vmatpush.bf16.msra.mxu0 %v1882
        %1972 = vmatmul.bf16.gmra.mxu0 %v1725
        %v1973 = vpop.f32.mrf.mxu0
        %v1974 = vadd.f32 %v1960, %v1973
        %v1975 = vpop.f32.mrf.mxu0
        %v1976 = vadd.f32 %v1962, %v1975
        %1977 = vdwg.mxu0
        %v1978 = vadd.f32 %v1516, %v1974
        %v1979 = vadd.f32 %v1517, %v1976
        %v1980 = vadd.f32 %v1978, %v1979
        %v1981 = vrot.slane %v1980, 4
        %v1982 = vadd.f32 %v1980, %v1981
        %v1983 = vrot.slane %v1982, 2
        %v1984 = vadd.f32 %v1982, %v1983
        %v1985 = vrot.slane %v1984, 1
        %v1986 = vadd.f32 %v1984, %v1985
        %1987 = vst [vmem:[%s268] sm:$0x1] %v1986
        %v1988 = vmul.f32 %v1978, %v1978
        %v1989 = vmul.f32 %v1979, %v1979
        %v1990 = vadd.f32 %v1988, %v1989
        %v1991 = vrot.slane %v1990, 4
        %v1992 = vadd.f32 %v1990, %v1991
        %v1993 = vrot.slane %v1992, 2
        %v1994 = vadd.f32 %v1992, %v1993
        %v1995 = vrot.slane %v1994, 1
        %v1996 = vadd.f32 %v1994, %v1995
        %1997 = vst [vmem:[%s274] sm:$0x1] %v1996
        %v2000 = vrot.slane %v1978, 4
        %v2001 = vrot.slane %v1979, 4
        %v2004 = vpack.c.bf16 %v1978, %v1978
        %v2005 = vpack.c.bf16 %v2000, %v2000
        %v2006 = vpack.c.bf16 %v1979, %v1979
        %v2007 = vpack.c.bf16 %v2001, %v2001
        %2008 = vst [vmem:[%s262] sm:$0x3] %v2004
        %2009 = vst [vmem:[%s262 + $0x2] sm:$0x3] %v2005
        %2010 = vst [vmem:[%s262 + $0x4] sm:$0x3] %v2006
        %2011 = vst [vmem:[%s262 + $0x6] sm:$0x3] %v2007
        %p2012 = scmp.lt.s32.totalorder %s21, 1
        %s2013 = scalar_select %p2012, %s21, 1
        %p2014 = scmp.lt.s32.totalorder %s22, 0
        %s2015 = scalar_select %p2014, %s22, 0
        %s2016 = smul.addr %s2013, 4
        %s2017 = sadd.s32 %s2015, %s2016
        %s2018 = smul.addr %s2017, 2
        %s2019 = scalar_lea.vmem %s2, %s2018
        %p2020 = scmp.lt.s32.totalorder %s21, 1
        %s2021 = scalar_select %p2020, %s21, 1
        %p2022 = scmp.lt.s32.totalorder %s22, 0
        %s2023 = scalar_select %p2022, %s22, 0
        %s2024 = sadd.s32 %s2023, %s2021
        %s2025 = scalar_lea.vmem %s3, %s2024
        %p2026 = scmp.lt.s32.totalorder %s21, 1
        %s2027 = scalar_select %p2026, %s21, 1
        %p2028 = scmp.lt.s32.totalorder %s22, 0
        %s2029 = scalar_select %p2028, %s22, 0
        %s2030 = sadd.s32 %s2029, %s2027
        %s2031 = scalar_lea.vmem %s4, %s2030
        // Predicated region
        $region33: #{discriminator_forward.7} parent=27 // pred_check
          %p2032 = pneg %p101
        $region34: #{discriminator_forward.7} parent=27 // pred_check_branch
          %2034 = sbr.rel (%p2032) target = $region36
        $region35: #{discriminator_forward.7} parent=27 // pred_region
          _
        $region36: #{discriminator_forward.7} parent=27 // pred_fallthru
          _
        // Predicated region
        $region37: #{discriminator_forward.7} parent=27 // pred_check
          %p2035 = pneg %p129
        $region38: #{discriminator_forward.7} parent=27 // pred_check_branch
          %2037 = sbr.rel (%p2035) target = $region40
        $region39: #{discriminator_forward.7} parent=27 // pred_region
          _
        $region40: #{discriminator_forward.7} parent=27 // pred_fallthru
          _
        // Predicated region
        $region41: #{discriminator_forward.7} parent=27 // pred_check
          %p2038 = pneg %p157
        $region42: #{discriminator_forward.7} parent=27 // pred_check_branch
          %2040 = sbr.rel (%p2038) target = $region44
        $region43: #{discriminator_forward.7} parent=27 // pred_region
          _
        $region44: #{discriminator_forward.7} parent=27 // pred_fallthru
          _
      $region28: #{discriminator_forward.7} parent=5 // pred_fallthru
        _
      %p2041 = scmp.le.s32.totalorder 2, %s12
      // Predicated region
      $region45: #{discriminator_forward.7} parent=5 // pred_check
        %p2042 = pneg %p2041
      $region46: #{discriminator_forward.7} parent=5 // pred_check_branch
        %2044 = sbr.rel (%p2042) target = $region48
      $region47: #{discriminator_forward.7} parent=5 // pred_region
        %s2045 = ssub.s32 %s12, 2
        // Predicated region
        $region49: #{discriminator_forward.7} parent=47 // pred_check
          %p2046 = pneg %p107
        $region50: #{discriminator_forward.7} parent=47 // pred_check_branch
          %2048 = sbr.rel (%p2046) target = $region52
        $region51: #{discriminator_forward.7} parent=47 // pred_region
          %p2049 = scmp.lt.s32.totalorder %s23, 1
          %s2050 = scalar_select %p2049, %s23, 1
          %p2051 = scmp.lt.s32.totalorder %s24, 0
          %s2052 = scalar_select %p2051, %s24, 0
          %s2053 = smul.addr %s2050, 4
          %s2054 = sadd.s32 %s2052, %s2053
          %s2055 = smul.addr %s2054, 2
          %s2056 = scalar_lea.vmem %s2, %s2055
        $region52: #{discriminator_forward.7} parent=47 // pred_fallthru
          _
        // Predicated region
        $region53: #{discriminator_forward.7} parent=47 // pred_check
          %p2057 = pneg %p135
        $region54: #{discriminator_forward.7} parent=47 // pred_check_branch
          %2059 = sbr.rel (%p2057) target = $region56
        $region55: #{discriminator_forward.7} parent=47 // pred_region
          %p2060 = scmp.lt.s32.totalorder %s23, 1
          %s2061 = scalar_select %p2060, %s23, 1
          %p2062 = scmp.lt.s32.totalorder %s24, 0
          %s2063 = scalar_select %p2062, %s24, 0
          %s2064 = sadd.s32 %s2063, %s2061
          %s2065 = scalar_lea.vmem %s3, %s2064
        $region56: #{discriminator_forward.7} parent=47 // pred_fallthru
          _
        // Predicated region
        $region57: #{discriminator_forward.7} parent=47 // pred_check
          %p2066 = pneg %p163
        $region58: #{discriminator_forward.7} parent=47 // pred_check_branch
          %2068 = sbr.rel (%p2066) target = $region60
        $region59: #{discriminator_forward.7} parent=47 // pred_region
          %p2069 = scmp.lt.s32.totalorder %s23, 1
          %s2070 = scalar_select %p2069, %s23, 1
          %p2071 = scmp.lt.s32.totalorder %s24, 0
          %s2072 = scalar_select %p2071, %s24, 0
          %s2073 = sadd.s32 %s2072, %s2070
          %s2074 = scalar_lea.vmem %s4, %s2073
        $region60: #{discriminator_forward.7} parent=47 // pred_fallthru
          _
      $region48: #{discriminator_forward.7} parent=5 // pred_fallthru
        _
    $region6: #{discriminator_forward.7} parent=1 // loop_footer
      %s16 = sadd.s32 1, %s12
    $region7: #{discriminator_forward.7} parent=1 // loop_footer_branch
      %11 = sbr.rel target = $region3
    $region8: #{discriminator_forward.7} parent=1 // loop_exit
      _
    %2075 = vsyncpa [#allocation3], 1
    %s2076 = scalar_lea.sflag [#allocation3], 1
    %2077 = vsyncpa %s2076, 1

// kernel: discriminator_forward.9
$region0: #{discriminator_forward.9}
  #allocation0 [shape = 'u32[]', space=smem, size = 0x4, offset = 0x4, fixed_abs, tag = 'smem constant byte address 0x4 - core index']
  #allocation1 [shape = 'u32[72,128]{1,0:T(1,128)}', space=vmem, size = 0x9000, scoped, tag = 'internal scratch']
  %s0 = inlined_call_operand.vmem [shape: bf16[2,3,3,512], index: 0, kind: input, shape index: {}]
  %s1 = inlined_call_operand.vmem [shape: bf16[4,512,128], index: 1, kind: input, shape index: {}]
  %s2 = inlined_call_operand.vmem [shape: bf16[2,2,2,128], index: 2, kind: output, shape index: {0}]
  %s3 = inlined_call_operand.vmem [shape: f32[2,1,128], index: 3, kind: output, shape index: {1}]
  %s4 = inlined_call_operand.vmem [shape: f32[2,1,128], index: 4, kind: output, shape index: {2}]
  %5 = xla_tuple %s2, %s3, %s4
  %s6 = sld [smem:[#allocation0]]
  $region57: #{discriminator_forward.9} parent=0
    _
  %s8 = ssub.s32 1, %s6
  %s9 = scalar_select 0, %s8, %s6
  loop: start=0, step=1, limit=4
  $region2: #{discriminator_forward.9} parent=0 // loop_pre_header
    _
  $region3: #{discriminator_forward.9} parent=0 // loop_header
    %s11 = sphi 0, %s15
    %p12 = scmp.ge.s32.totalorder %s11, 4
    %s18 = sphi 0, %s30
    %s19 = sphi 0, %s26
    %s20 = sphi 0, %s18
    %s21 = sphi 0, %s19
    %s22 = sphi 0, %s20
    %s23 = sphi 0, %s21
    %s33 = sphi 0, %s35
    %s36 = sphi 0, %s33
    %s37 = sphi 0, %s36
    %s53 = sphi 0, %s37
    %s59 = sphi 0, %s61
    %s62 = sphi 0, %s59
    %s63 = sphi 0, %s62
    %s79 = sphi 0, %s63
    %s87 = sphi 0, %s89
    %s90 = sphi 0, %s87
    %s91 = sphi 0, %s90
    %s107 = sphi 0, %s91
    %s115 = sphi 0, %s117
    %s118 = sphi 0, %s115
    %s119 = sphi 0, %s118
    %s135 = sphi 0, %s119
    %s143 = sphi 0, %s145
    %s146 = sphi 0, %s143
    %s147 = sphi 0, %s146
    %s163 = sphi 0, %s147
  $region4: #{discriminator_forward.9} parent=0 // loop_header_branch
    %14 = sbr.rel (%p12) target = $region8
  $region5: #{discriminator_forward.9} parent=0 // loop_body
    %s16 = ssub.s32 %s11, 1
    %s17 = ssub.s32 %s11, 2
    %s24 = sadd.s32 1, %s19
    %p25 = scmp.ge.s32.totalorder %s24, 1
    %s26 = scalar_select %p25, 0, %s24
    %s27 = sadd.s32 1, %s18
    %s28 = scalar_select %p25, %s27, %s18
    %p29 = scmp.ge.s32.totalorder %s28, 2
    %s30 = scalar_select %p29, 0, %s28
    %s31 = ssub.s32 %s18, %s30
    %p32 = scmp.eq.s32.totalorder %s31, 0
    %s34 = sadd.s32 %s33, 1
    %s35 = scalar_select %p32, %s33, %s34
    %p38 = pneg %p32
    %p39 = scmp.eq.s32.totalorder %s11, 1
    %p40 = por %p38, %p39
    %p41 = scmp.ne.s32.totalorder %s33, %s36
    %p42 = scmp.eq.s32.totalorder %s11, 0
    %p43 = por %p41, %p42
    %p44 = scmp.ne.s32.totalorder %s33, %s36
    %p45 = scmp.eq.s32.totalorder %s16, 1
    %p46 = por %p44, %p45
    %p47 = scmp.ne.s32.totalorder %s36, %s37
    %p48 = scmp.eq.s32.totalorder %s16, 0
    %p49 = por %p47, %p48
    %p50 = scmp.ne.s32.totalorder %s36, %s37
    %p51 = scmp.eq.s32.totalorder %s17, 1
    %p52 = por %p50, %p51
    %p54 = scmp.ne.s32.totalorder %s37, %s53
    %p55 = scmp.eq.s32.totalorder %s17, 0
    %p56 = por %p54, %p55
    %s57 = ssub.s32 %s19, %s26
    %p58 = scmp.eq.s32.totalorder %s57, 0
    %s60 = sadd.s32 %s59, 1
    %s61 = scalar_select %p58, %s59, %s60
    %p64 = pneg %p58
    %p65 = scmp.eq.s32.totalorder %s11, 1
    %p66 = por %p64, %p65
    %p67 = scmp.ne.s32.totalorder %s59, %s62
    %p68 = scmp.eq.s32.totalorder %s11, 0
    %p69 = por %p67, %p68
    %p70 = scmp.ne.s32.totalorder %s59, %s62
    %p71 = scmp.eq.s32.totalorder %s16, 1
    %p72 = por %p70, %p71
    %p73 = scmp.ne.s32.totalorder %s62, %s63
    %p74 = scmp.eq.s32.totalorder %s16, 0
    %p75 = por %p73, %p74
    %p76 = scmp.ne.s32.totalorder %s62, %s63
    %p77 = scmp.eq.s32.totalorder %s17, 1
    %p78 = por %p76, %p77
    %p80 = scmp.ne.s32.totalorder %s63, %s79
    %p81 = scmp.eq.s32.totalorder %s17, 0
    %p82 = por %p80, %p81
    %s83 = ssub.s32 %s18, %s30
    %s84 = ssub.s32 %s19, %s26
    %s85 = sor.u32 %s83, %s84
    %p86 = scmp.eq.s32.totalorder %s85, 0
    %s88 = sadd.s32 %s87, 1
    %s89 = scalar_select %p86, %s87, %s88
    %p92 = pneg %p86
    %p93 = scmp.eq.s32.totalorder %s11, 1
    %p94 = por %p92, %p93
    %p95 = scmp.ne.s32.totalorder %s87, %s90
    %p96 = scmp.eq.s32.totalorder %s11, 0
    %p97 = por %p95, %p96
    %p98 = scmp.ne.s32.totalorder %s87, %s90
    %p99 = scmp.eq.s32.totalorder %s16, 1
    %p100 = por %p98, %p99
    %p101 = scmp.ne.s32.totalorder %s90, %s91
    %p102 = scmp.eq.s32.totalorder %s16, 0
    %p103 = por %p101, %p102
    %p104 = scmp.ne.s32.totalorder %s90, %s91
    %p105 = scmp.eq.s32.totalorder %s17, 1
    %p106 = por %p104, %p105
    %p108 = scmp.ne.s32.totalorder %s91, %s107
    %p109 = scmp.eq.s32.totalorder %s17, 0
    %p110 = por %p108, %p109
    %s111 = ssub.s32 %s18, %s30
    %s112 = ssub.s32 %s19, %s26
    %s113 = sor.u32 %s111, %s112
    %p114 = scmp.eq.s32.totalorder %s113, 0
    %s116 = sadd.s32 %s115, 1
    %s117 = scalar_select %p114, %s115, %s116
    %p120 = pneg %p114
    %p121 = scmp.eq.s32.totalorder %s11, 1
    %p122 = por %p120, %p121
    %p123 = scmp.ne.s32.totalorder %s115, %s118
    %p124 = scmp.eq.s32.totalorder %s11, 0
    %p125 = por %p123, %p124
    %p126 = scmp.ne.s32.totalorder %s115, %s118
    %p127 = scmp.eq.s32.totalorder %s16, 1
    %p128 = por %p126, %p127
    %p129 = scmp.ne.s32.totalorder %s118, %s119
    %p130 = scmp.eq.s32.totalorder %s16, 0
    %p131 = por %p129, %p130
    %p132 = scmp.ne.s32.totalorder %s118, %s119
    %p133 = scmp.eq.s32.totalorder %s17, 1
    %p134 = por %p132, %p133
    %p136 = scmp.ne.s32.totalorder %s119, %s135
    %p137 = scmp.eq.s32.totalorder %s17, 0
    %p138 = por %p136, %p137
    %s139 = ssub.s32 %s18, %s30
    %s140 = ssub.s32 %s19, %s26
    %s141 = sor.u32 %s139, %s140
    %p142 = scmp.eq.s32.totalorder %s141, 0
    %s144 = sadd.s32 %s143, 1
    %s145 = scalar_select %p142, %s143, %s144
    %p148 = pneg %p142
    %p149 = scmp.eq.s32.totalorder %s11, 1
    %p150 = por %p148, %p149
    %p151 = scmp.ne.s32.totalorder %s143, %s146
    %p152 = scmp.eq.s32.totalorder %s11, 0
    %p153 = por %p151, %p152
    %p154 = scmp.ne.s32.totalorder %s143, %s146
    %p155 = scmp.eq.s32.totalorder %s16, 1
    %p156 = por %p154, %p155
    %p157 = scmp.ne.s32.totalorder %s146, %s147
    %p158 = scmp.eq.s32.totalorder %s16, 0
    %p159 = por %p157, %p158
    %p160 = scmp.ne.s32.totalorder %s146, %s147
    %p161 = scmp.eq.s32.totalorder %s17, 1
    %p162 = por %p160, %p161
    %p164 = scmp.ne.s32.totalorder %s147, %s163
    %p165 = scmp.eq.s32.totalorder %s17, 0
    %p166 = por %p164, %p165
    %p167 = scmp.le.s32.totalorder 1, %s11
    %p168 = scmp.lt.s32.totalorder %s11, 3
    %p169 = pnand %p167, %p168
    %p170 = pneg %p169
    // Predicated region
    $region9: #{discriminator_forward.9} parent=5 // pred_check
      _
    $region10: #{discriminator_forward.9} parent=5 // pred_check_branch
      %172 = sbr.rel (%p169) target = $region12
    $region11: #{discriminator_forward.9} parent=5 // pred_region
      %s173 = ssub.s32 %s11, 1
      // Predicated region
      $region13: #{discriminator_forward.9} parent=11 // pred_check
        %p174 = pneg %p75
      $region14: #{discriminator_forward.9} parent=11 // pred_check_branch
        %176 = sbr.rel (%p174) target = $region16
      $region15: #{discriminator_forward.9} parent=11 // pred_region
        %p177 = scmp.lt.s32.totalorder %s21, 0
        %s178 = scalar_select %p177, %s21, 0
        %s179 = smul.addr %s178, 4
        %s180 = scalar_lea.vmem %s1, %s179
      $region16: #{discriminator_forward.9} parent=11 // pred_fallthru
        _
    $region12: #{discriminator_forward.9} parent=5 // pred_fallthru
      _
    %p181 = scmp.lt.s32.totalorder %s11, 2
    // Predicated region
    $region17: #{discriminator_forward.9} parent=5 // pred_check
      %p182 = pneg %p181
    $region18: #{discriminator_forward.9} parent=5 // pred_check_branch
      %184 = sbr.rel (%p182) target = $region20
    $region19: #{discriminator_forward.9} parent=5 // pred_region
      // Predicated region
      $region21: #{discriminator_forward.9} parent=19 // pred_check
        %p185 = pneg %p43
      $region22: #{discriminator_forward.9} parent=19 // pred_check_branch
        %187 = sbr.rel (%p185) target = $region24
      $region23: #{discriminator_forward.9} parent=19 // pred_region
        %p188 = scmp.lt.s32.totalorder %s18, 1
        %s189 = scalar_select %p188, %s18, 1
        %s190 = smul.addr %s189, 12
        %s191 = smul.addr %s190, 2
        %s192 = scalar_lea.vmem %s0, %s191
      $region24: #{discriminator_forward.9} parent=19 // pred_fallthru
        _
    $region20: #{discriminator_forward.9} parent=5 // pred_fallthru
      _
    %p193 = scmp.le.s32.totalorder 1, %s11
    %p194 = scmp.lt.s32.totalorder %s11, 3
    %p195 = pnand %p193, %p194
    %p196 = pneg %p195
    // Predicated region
    $region25: #{discriminator_forward.9} parent=5 // pred_check
      _
    $region26: #{discriminator_forward.9} parent=5 // pred_check_branch
      %198 = sbr.rel (%p195) target = $region28
    $region27: #{discriminator_forward.9} parent=5 // pred_region
      %s199 = ssub.s32 %s11, 1
      %p200 = scmp.lt.s32.totalorder %s20, 1
      %s201 = scalar_select %p200, %s20, 1
      %s202 = smul.addr %s201, 12
      %s203 = smul.addr %s202, 2
      %s204 = scalar_lea.vmem %s0, %s203
      %p205 = pneg %p49
      %p206 = pneg %p46
      %p207 = scmp.lt.s32.totalorder %s21, 0
      %s208 = scalar_select %p207, %s21, 0
      %s209 = smul.addr %s208, 4
      %s210 = scalar_lea.vmem %s1, %s209
      %p211 = pneg %p75
      %p212 = pneg %p72
      %p213 = pneg %p103
      %p214 = pneg %p100
      %p215 = scmp.lt.s32.totalorder %s20, 1
      %s216 = scalar_select %p215, %s20, 1
      %p217 = scmp.lt.s32.totalorder %s21, 0
      %s218 = scalar_select %p217, %s21, 0
      %s219 = smul.addr %s216, 2
      %s220 = sadd.s32 %s218, %s219
      %s221 = scalar_lea.vmem %s2, %s220
      %p222 = pneg %p131
      %p223 = pneg %p128
      %p224 = scmp.lt.s32.totalorder %s20, 1
      %s225 = scalar_select %p224, %s20, 1
      %p226 = scmp.lt.s32.totalorder %s21, 0
      %s227 = scalar_select %p226, %s21, 0
      %s228 = sadd.s32 %s227, %s225
      %s229 = scalar_lea.vmem %s3, %s228
      %p230 = pneg %p159
      %p231 = pneg %p156
      %p232 = scmp.lt.s32.totalorder %s20, 1
      %s233 = scalar_select %p232, %s20, 1
      %p234 = scmp.lt.s32.totalorder %s21, 0
      %s235 = scalar_select %p234, %s21, 0
      %s236 = sadd.s32 %s235, %s233
      %s237 = scalar_lea.vmem %s4, %s236
      %p238 = scmp.lt.s32.totalorder %s20, 1
      %s239 = scalar_select %p238, %s20, 1
      %s240 = smul.addr %s239, 12
      %s241 = smul.addr %s240, 2
      %s242 = scalar_lea.vmem %s0, %s241
      %p243 = scmp.lt.s32.totalorder %s21, 0
      %s244 = scalar_select %p243, %s21, 0
      %s245 = smul.addr %s244, 4
      %s246 = scalar_lea.vmem %s1, %s245
      %p247 = scmp.lt.s32.totalorder %s20, 1
      %s248 = scalar_select %p247, %s20, 1
      %p249 = scmp.lt.s32.totalorder %s21, 0
      %s250 = scalar_select %p249, %s21, 0
      %s251 = smul.addr %s248, 2
      %s252 = sadd.s32 %s250, %s251
      %s253 = scalar_lea.vmem %s2, %s252
      %p254 = scmp.lt.s32.totalorder %s20, 1
      %s255 = scalar_select %p254, %s20, 1
      %p256 = scmp.lt.s32.totalorder %s21, 0
      %s257 = scalar_select %p256, %s21, 0
      %s258 = sadd.s32 %s257, %s255
      %s259 = scalar_lea.vmem %s3, %s258
      %p260 = scmp.lt.s32.totalorder %s20, 1
      %s261 = scalar_select %p260, %s20, 1
      %p262 = scmp.lt.s32.totalorder %s21, 0
      %s263 = scalar_select %p262, %s21, 0
      %s264 = sadd.s32 %s263, %s261
      %s265 = scalar_lea.vmem %s4, %s264
      %v266 = vld [vmem:[%s242] sm:$0x55]
      %v267 = vld [vmem:[%s242 + $0x8] sm:$0x55]
      %v270 = vrot.slane %v266, 1
      %v271 = vrot.slane %v266, 2
      %v272 = vrot.slane %v266, 3
      %v273 = vrot.slane %v267, 1
      %v274 = vrot.slane %v267, 2
      %v275 = vrot.slane %v267, 3
      %vm276 = vcmask 1040384
      %v279 = vsel %vm276, %v266, %v270
      %vm280 = vcmask 1042434
      %v283 = vsel %vm280, %v271, %v272
      %vm284 = vcmask 1041408
      %v285 = vsel %vm284, %v279, %v283
      %v288 = vsel %vm276, %v267, %v273
      %v291 = vsel %vm280, %v274, %v275
      %v292 = vsel %vm284, %v288, %v291
      %v293 = vld [vmem:[%s246] sm:$0xf]
      %v294 = vld [vmem:[%s246 + $0x4] sm:$0xf]
      %v295 = vld [vmem:[%s246 + $0x8] sm:$0xf]
      %v296 = vld [vmem:[%s246 + $0xc] sm:$0xf]
      %v297 = vld [vmem:[%s246 + $0x10] sm:$0xf]
      %v298 = vld [vmem:[%s246 + $0x14] sm:$0xf]
      %v299 = vld [vmem:[%s246 + $0x18] sm:$0xf]
      %v300 = vld [vmem:[%s246 + $0x1c] sm:$0xf]
      %v301 = vld [vmem:[%s246 + $0x20] sm:$0xf]
      %v302 = vld [vmem:[%s246 + $0x24] sm:$0xf]
      %v303 = vld [vmem:[%s246 + $0x28] sm:$0xf]
      %v304 = vld [vmem:[%s246 + $0x2c] sm:$0xf]
      %v305 = vld [vmem:[%s246 + $0x30] sm:$0xf]
      %v306 = vld [vmem:[%s246 + $0x34] sm:$0xf]
      %v307 = vld [vmem:[%s246 + $0x38] sm:$0xf]
      %v308 = vld [vmem:[%s246 + $0x3c] sm:$0xf]
      %v309 = vld [vmem:[%s246 + $0x40] sm:$0xf]
      %v310 = vld [vmem:[%s246 + $0x44] sm:$0xf]
      %v311 = vld [vmem:[%s246 + $0x48] sm:$0xf]
      %v312 = vld [vmem:[%s246 + $0x4c] sm:$0xf]
      %v313 = vld [vmem:[%s246 + $0x50] sm:$0xf]
      %v314 = vld [vmem:[%s246 + $0x54] sm:$0xf]
      %v315 = vld [vmem:[%s246 + $0x58] sm:$0xf]
      %v316 = vld [vmem:[%s246 + $0x5c] sm:$0xf]
      %v317 = vld [vmem:[%s246 + $0x60] sm:$0xf]
      %v318 = vld [vmem:[%s246 + $0x64] sm:$0xf]
      %v319 = vld [vmem:[%s246 + $0x68] sm:$0xf]
      %v320 = vld [vmem:[%s246 + $0x6c] sm:$0xf]
      %v321 = vld [vmem:[%s246 + $0x70] sm:$0xf]
      %v322 = vld [vmem:[%s246 + $0x74] sm:$0xf]
      %v323 = vld [vmem:[%s246 + $0x78] sm:$0xf]
      %v324 = vld [vmem:[%s246 + $0x7c] sm:$0xf]
      %v325 = vld [vmem:[%s246 + $0x80] sm:$0xf]
      %v326 = vld [vmem:[%s246 + $0x84] sm:$0xf]
      %v327 = vld [vmem:[%s246 + $0x88] sm:$0xf]
      %v328 = vld [vmem:[%s246 + $0x8c] sm:$0xf]
      %v329 = vld [vmem:[%s246 + $0x90] sm:$0xf]
      %v330 = vld [vmem:[%s246 + $0x94] sm:$0xf]
      %v331 = vld [vmem:[%s246 + $0x98] sm:$0xf]
      %v332 = vld [vmem:[%s246 + $0x9c] sm:$0xf]
      %v333 = vld [vmem:[%s246 + $0xa0] sm:$0xf]
      %v334 = vld [vmem:[%s246 + $0xa4] sm:$0xf]
      %v335 = vld [vmem:[%s246 + $0xa8] sm:$0xf]
      %v336 = vld [vmem:[%s246 + $0xac] sm:$0xf]
      %v337 = vld [vmem:[%s246 + $0xb0] sm:$0xf]
      %v338 = vld [vmem:[%s246 + $0xb4] sm:$0xf]
      %v339 = vld [vmem:[%s246 + $0xb8] sm:$0xf]
      %v340 = vld [vmem:[%s246 + $0xbc] sm:$0xf]
      %v341 = vld [vmem:[%s246 + $0xc0] sm:$0xf]
      %v342 = vld [vmem:[%s246 + $0xc4] sm:$0xf]
      %v343 = vld [vmem:[%s246 + $0xc8] sm:$0xf]
      %v344 = vld [vmem:[%s246 + $0xcc] sm:$0xf]
      %v345 = vld [vmem:[%s246 + $0xd0] sm:$0xf]
      %v346 = vld [vmem:[%s246 + $0xd4] sm:$0xf]
      %v347 = vld [vmem:[%s246 + $0xd8] sm:$0xf]
      %v348 = vld [vmem:[%s246 + $0xdc] sm:$0xf]
      %v349 = vld [vmem:[%s246 + $0xe0] sm:$0xf]
      %v350 = vld [vmem:[%s246 + $0xe4] sm:$0xf]
      %v351 = vld [vmem:[%s246 + $0xe8] sm:$0xf]
      %v352 = vld [vmem:[%s246 + $0xec] sm:$0xf]
      %v353 = vld [vmem:[%s246 + $0xf0] sm:$0xf]
      %v354 = vld [vmem:[%s246 + $0xf4] sm:$0xf]
      %v355 = vld [vmem:[%s246 + $0xf8] sm:$0xf]
      %v356 = vld [vmem:[%s246 + $0xfc] sm:$0xf]
      %v357 = vld [vmem:[%s242] sm:$0xff]
      %v358 = vld [vmem:[%s242 + $0x8] sm:$0xff]
      %v361 = vrot.slane %v357, 1
      %v362 = vrot.slane %v357, 2
      %v363 = vrot.slane %v357, 3
      %v364 = vrot.slane %v358, 1
      %v365 = vrot.slane %v358, 2
      %v366 = vrot.slane %v358, 3
      %v369 = vsel %vm276, %v357, %v361
      %v372 = vsel %vm280, %v362, %v363
      %v373 = vsel %vm284, %v369, %v372
      %vm374 = vcmask 1041409
      %v375 = vsel %vm374, %v357, %v361
      %vm376 = vcmask 1043459
      %v377 = vsel %vm376, %v362, %v363
      %vm378 = vcmask 1042433
      %v379 = vsel %vm378, %v375, %v377
      %v381 = vrot.slane %v379, 1
      %v384 = vsel %vm276, %v358, %v364
      %v387 = vsel %vm280, %v365, %v366
      %v388 = vsel %vm284, %v384, %v387
      %v389 = vsel %vm374, %v358, %v364
      %v390 = vsel %vm376, %v365, %v366
      %v391 = vsel %vm378, %v389, %v390
      %v393 = vrot.slane %v391, 1
      %vm394 = vsmask.f32 256
      %vm395 = vsmask.f32 1284
      %vm396 = vmor %vm394, %vm395
      %vm397 = vsmask.f32 2312
      %vm398 = vmor %vm396, %vm397
      %vm399 = vsmask.f32 3340
      %vm400 = vmor %vm398, %vm399
      %vm401 = vsmask.f32 4368
      %vm402 = vmor %vm400, %vm401
      %vm403 = vsmask.f32 5396
      %vm404 = vmor %vm402, %vm403
      %vm405 = vsmask.f32 6424
      %vm406 = vmor %vm404, %vm405
      %vm407 = vsmask.f32 7452
      %vm408 = vmor %vm406, %vm407
      %v409 = vshrl.u32 %v373, 16
      %v411 = vrot.slane %v409, 7
      %v412 = vrot.slane %v411, 1
      %v414 = vshll.u32 %v381, 16
      %v416 = vsel %vm408, %v412, %v414
      %v417 = vshrl.u32 %v388, 16
      %v419 = vrot.slane %v417, 7
      %v420 = vrot.slane %v419, 1
      %v422 = vshll.u32 %v393, 16
      %v424 = vsel %vm408, %v420, %v422
      %s425 = scalar_lea.vmem %s246, 256
      %v426 = vld [vmem:[%s425] sm:$0xf]
      %v427 = vld [vmem:[%s425 + $0x4] sm:$0xf]
      %v428 = vld [vmem:[%s425 + $0x8] sm:$0xf]
      %v429 = vld [vmem:[%s425 + $0xc] sm:$0xf]
      %v430 = vld [vmem:[%s425 + $0x10] sm:$0xf]
      %v431 = vld [vmem:[%s425 + $0x14] sm:$0xf]
      %v432 = vld [vmem:[%s425 + $0x18] sm:$0xf]
      %v433 = vld [vmem:[%s425 + $0x1c] sm:$0xf]
      %v434 = vld [vmem:[%s425 + $0x20] sm:$0xf]
      %v435 = vld [vmem:[%s425 + $0x24] sm:$0xf]
      %v436 = vld [vmem:[%s425 + $0x28] sm:$0xf]
      %v437 = vld [vmem:[%s425 + $0x2c] sm:$0xf]
      %v438 = vld [vmem:[%s425 + $0x30] sm:$0xf]
      %v439 = vld [vmem:[%s425 + $0x34] sm:$0xf]
      %v440 = vld [vmem:[%s425 + $0x38] sm:$0xf]
      %v441 = vld [vmem:[%s425 + $0x3c] sm:$0xf]
      %v442 = vld [vmem:[%s425 + $0x40] sm:$0xf]
      %v443 = vld [vmem:[%s425 + $0x44] sm:$0xf]
      %v444 = vld [vmem:[%s425 + $0x48] sm:$0xf]
      %v445 = vld [vmem:[%s425 + $0x4c] sm:$0xf]
      %v446 = vld [vmem:[%s425 + $0x50] sm:$0xf]
      %v447 = vld [vmem:[%s425 + $0x54] sm:$0xf]
      %v448 = vld [vmem:[%s425 + $0x58] sm:$0xf]
      %v449 = vld [vmem:[%s425 + $0x5c] sm:$0xf]
      %v450 = vld [vmem:[%s425 + $0x60] sm:$0xf]
      %v451 = vld [vmem:[%s425 + $0x64] sm:$0xf]
      %v452 = vld [vmem:[%s425 + $0x68] sm:$0xf]
      %v453 = vld [vmem:[%s425 + $0x6c] sm:$0xf]
      %v454 = vld [vmem:[%s425 + $0x70] sm:$0xf]
      %v455 = vld [vmem:[%s425 + $0x74] sm:$0xf]
      %v456 = vld [vmem:[%s425 + $0x78] sm:$0xf]
      %v457 = vld [vmem:[%s425 + $0x7c] sm:$0xf]
      %v458 = vld [vmem:[%s425 + $0x80] sm:$0xf]
      %v459 = vld [vmem:[%s425 + $0x84] sm:$0xf]
      %v460 = vld [vmem:[%s425 + $0x88] sm:$0xf]
      %v461 = vld [vmem:[%s425 + $0x8c] sm:$0xf]
      %v462 = vld [vmem:[%s425 + $0x90] sm:$0xf]
      %v463 = vld [vmem:[%s425 + $0x94] sm:$0xf]
      %v464 = vld [vmem:[%s425 + $0x98] sm:$0xf]
      %v465 = vld [vmem:[%s425 + $0x9c] sm:$0xf]
      %v466 = vld [vmem:[%s425 + $0xa0] sm:$0xf]
      %v467 = vld [vmem:[%s425 + $0xa4] sm:$0xf]
      %v468 = vld [vmem:[%s425 + $0xa8] sm:$0xf]
      %v469 = vld [vmem:[%s425 + $0xac] sm:$0xf]
      %v470 = vld [vmem:[%s425 + $0xb0] sm:$0xf]
      %v471 = vld [vmem:[%s425 + $0xb4] sm:$0xf]
      %v472 = vld [vmem:[%s425 + $0xb8] sm:$0xf]
      %v473 = vld [vmem:[%s425 + $0xbc] sm:$0xf]
      %v474 = vld [vmem:[%s425 + $0xc0] sm:$0xf]
      %v475 = vld [vmem:[%s425 + $0xc4] sm:$0xf]
      %v476 = vld [vmem:[%s425 + $0xc8] sm:$0xf]
      %v477 = vld [vmem:[%s425 + $0xcc] sm:$0xf]
      %v478 = vld [vmem:[%s425 + $0xd0] sm:$0xf]
      %v479 = vld [vmem:[%s425 + $0xd4] sm:$0xf]
      %v480 = vld [vmem:[%s425 + $0xd8] sm:$0xf]
      %v481 = vld [vmem:[%s425 + $0xdc] sm:$0xf]
      %v482 = vld [vmem:[%s425 + $0xe0] sm:$0xf]
      %v483 = vld [vmem:[%s425 + $0xe4] sm:$0xf]
      %v484 = vld [vmem:[%s425 + $0xe8] sm:$0xf]
      %v485 = vld [vmem:[%s425 + $0xec] sm:$0xf]
      %v486 = vld [vmem:[%s425 + $0xf0] sm:$0xf]
      %v487 = vld [vmem:[%s425 + $0xf4] sm:$0xf]
      %v488 = vld [vmem:[%s425 + $0xf8] sm:$0xf]
      %v489 = vld [vmem:[%s425 + $0xfc] sm:$0xf]
      %491 = vst [vmem:[#allocation1] ss:$9 sm:$0xff] %v416
      %s493 = scalar_lea.vmem [#allocation1], 1
      %494 = vst [vmem:[%s493] ss:$9 sm:$0xff] %v424
      %v495 = vld [vmem:[#allocation1] sm:$0xff]
      %v496 = vld [vmem:[#allocation1 + $0x9] sm:$0xff]
      %v497 = vld [vmem:[#allocation1 + $0x12] sm:$0xff]
      %v498 = vld [vmem:[#allocation1 + $0x1b] sm:$0xff]
      %v567 = vunpack.c.l.b16 %v426
      %v568 = vunpack.c.l.b16 %v427
      %v569 = vunpack.c.l.b16 %v428
      %v570 = vunpack.c.l.b16 %v429
      %v571 = vunpack.c.l.b16 %v430
      %v572 = vunpack.c.l.b16 %v431
      %v573 = vunpack.c.l.b16 %v432
      %v574 = vunpack.c.l.b16 %v433
      %v575 = vunpack.c.l.b16 %v434
      %v576 = vunpack.c.l.b16 %v435
      %v577 = vunpack.c.l.b16 %v436
      %v578 = vunpack.c.l.b16 %v437
      %v579 = vunpack.c.l.b16 %v438
      %v580 = vunpack.c.l.b16 %v439
      %v581 = vunpack.c.l.b16 %v440
      %v582 = vunpack.c.l.b16 %v441
      %v583 = vunpack.c.l.b16 %v442
      %v584 = vunpack.c.l.b16 %v443
      %v585 = vunpack.c.l.b16 %v444
      %v586 = vunpack.c.l.b16 %v445
      %v587 = vunpack.c.l.b16 %v446
      %v588 = vunpack.c.l.b16 %v447
      %v589 = vunpack.c.l.b16 %v448
      %v590 = vunpack.c.l.b16 %v449
      %v591 = vunpack.c.l.b16 %v450
      %v592 = vunpack.c.l.b16 %v451
      %v593 = vunpack.c.l.b16 %v452
      %v594 = vunpack.c.l.b16 %v453
      %v595 = vunpack.c.l.b16 %v454
      %v596 = vunpack.c.l.b16 %v455
      %v597 = vunpack.c.l.b16 %v456
      %v598 = vunpack.c.l.b16 %v457
      %v599 = vunpack.c.l.b16 %v458
      %v600 = vunpack.c.l.b16 %v459
      %v601 = vunpack.c.l.b16 %v460
      %v602 = vunpack.c.l.b16 %v461
      %v603 = vunpack.c.l.b16 %v462
      %v604 = vunpack.c.l.b16 %v463
      %v605 = vunpack.c.l.b16 %v464
      %v606 = vunpack.c.l.b16 %v465
      %v607 = vunpack.c.l.b16 %v466
      %v608 = vunpack.c.l.b16 %v467
      %v609 = vunpack.c.l.b16 %v468
      %v610 = vunpack.c.l.b16 %v469
      %v611 = vunpack.c.l.b16 %v470
      %v612 = vunpack.c.l.b16 %v471
      %v613 = vunpack.c.l.b16 %v472
      %v614 = vunpack.c.l.b16 %v473
      %v615 = vunpack.c.l.b16 %v474
      %v616 = vunpack.c.l.b16 %v475
      %v617 = vunpack.c.l.b16 %v476
      %v618 = vunpack.c.l.b16 %v477
      %v619 = vunpack.c.l.b16 %v478
      %v620 = vunpack.c.l.b16 %v479
      %v621 = vunpack.c.l.b16 %v480
      %v622 = vunpack.c.l.b16 %v481
      %v623 = vunpack.c.l.b16 %v482
      %v624 = vunpack.c.l.b16 %v483
      %v625 = vunpack.c.l.b16 %v484
      %v626 = vunpack.c.l.b16 %v485
      %v627 = vunpack.c.l.b16 %v486
      %v628 = vunpack.c.l.b16 %v487
      %v629 = vunpack.c.l.b16 %v488
      %v630 = vunpack.c.l.b16 %v489
      %v631 = vpack.c.b16 %v568, %v567
      %v632 = vpack.c.b16 %v570, %v569
      %v633 = vpack.c.b16 %v572, %v571
      %v634 = vpack.c.b16 %v574, %v573
      %v635 = vpack.c.b16 %v576, %v575
      %v636 = vpack.c.b16 %v578, %v577
      %v637 = vpack.c.b16 %v580, %v579
      %v638 = vpack.c.b16 %v582, %v581
      %v639 = vpack.c.b16 %v584, %v583
      %v640 = vpack.c.b16 %v586, %v585
      %v641 = vpack.c.b16 %v588, %v587
      %v642 = vpack.c.b16 %v590, %v589
      %v643 = vpack.c.b16 %v592, %v591
      %v644 = vpack.c.b16 %v594, %v593
      %v645 = vpack.c.b16 %v596, %v595
      %v646 = vpack.c.b16 %v598, %v597
      %v647 = vpack.c.b16 %v600, %v599
      %v648 = vpack.c.b16 %v602, %v601
      %v649 = vpack.c.b16 %v604, %v603
      %v650 = vpack.c.b16 %v606, %v605
      %v651 = vpack.c.b16 %v608, %v607
      %v652 = vpack.c.b16 %v610, %v609
      %v653 = vpack.c.b16 %v612, %v611
      %v654 = vpack.c.b16 %v614, %v613
      %v655 = vpack.c.b16 %v616, %v615
      %v656 = vpack.c.b16 %v618, %v617
      %v657 = vpack.c.b16 %v620, %v619
      %v658 = vpack.c.b16 %v622, %v621
      %v659 = vpack.c.b16 %v624, %v623
      %v660 = vpack.c.b16 %v626, %v625
      %v661 = vpack.c.b16 %v628, %v627
      %v662 = vpack.c.b16 %v630, %v629
      %695 = vmatpush.bf16.msra.mxu0 %v638
      %696 = vmatpush.bf16.msra.mxu0 %v637
      %697 = vmatpush.bf16.msra.mxu0 %v636
      %698 = vmatpush.bf16.msra.mxu0 %v635
      %699 = vmatpush.bf16.msra.mxu0 %v634
      %700 = vmatpush.bf16.msra.mxu0 %v633
      %701 = vmatpush.bf16.msra.mxu0 %v632
      %702 = vmatpush.bf16.msra.mxu0 %v631
      %703 = vmatmul.bf16.gmra.mxu0 %v495
      %v704 = vpop.f32.mrf.mxu0
      %v705 = vadd.f32 0.0, %v704
      %v706 = vpop.f32.mrf.mxu0
      %707 = vdwg.mxu0
      %708 = vmatpush.bf16.msra.mxu0 %v646
      %709 = vmatpush.bf16.msra.mxu0 %v645
      %710 = vmatpush.bf16.msra.mxu0 %v644
      %711 = vmatpush.bf16.msra.mxu0 %v643
      %712 = vmatpush.bf16.msra.mxu0 %v642
      %713 = vmatpush.bf16.msra.mxu0 %v641
      %714 = vmatpush.bf16.msra.mxu0 %v640
      %715 = vmatpush.bf16.msra.mxu0 %v639
      %716 = vmatmul.bf16.gmra.mxu0 %v496
      %v717 = vpop.f32.mrf.mxu0
      %v718 = vadd.f32 %v705, %v717
      %v719 = vpop.f32.mrf.mxu0
      %720 = vdwg.mxu0
      %721 = vmatpush.bf16.msra.mxu0 %v654
      %722 = vmatpush.bf16.msra.mxu0 %v653
      %723 = vmatpush.bf16.msra.mxu0 %v652
      %724 = vmatpush.bf16.msra.mxu0 %v651
      %725 = vmatpush.bf16.msra.mxu0 %v650
      %726 = vmatpush.bf16.msra.mxu0 %v649
      %727 = vmatpush.bf16.msra.mxu0 %v648
      %728 = vmatpush.bf16.msra.mxu0 %v647
      %729 = vmatmul.bf16.gmra.mxu0 %v497
      %v730 = vpop.f32.mrf.mxu0
      %v731 = vadd.f32 %v718, %v730
      %v732 = vpop.f32.mrf.mxu0
      %733 = vdwg.mxu0
      %734 = vmatpush.bf16.msra.mxu0 %v662
      %735 = vmatpush.bf16.msra.mxu0 %v661
      %736 = vmatpush.bf16.msra.mxu0 %v660
      %737 = vmatpush.bf16.msra.mxu0 %v659
      %738 = vmatpush.bf16.msra.mxu0 %v658
      %739 = vmatpush.bf16.msra.mxu0 %v657
      %740 = vmatpush.bf16.msra.mxu0 %v656
      %741 = vmatpush.bf16.msra.mxu0 %v655
      %742 = vmatmul.bf16.gmra.mxu0 %v498
      %v743 = vpop.f32.mrf.mxu0
      %v744 = vadd.f32 %v731, %v743
      %v745 = vpop.f32.mrf.mxu0
      %746 = vdwg.mxu0
      %747 = vst [vmem:[#allocation1] ss:$9 sm:$0xff] %v285
      %s748 = scalar_lea.vmem [#allocation1], 1
      %749 = vst [vmem:[%s748] ss:$9 sm:$0xff] %v292
      %v750 = vld [vmem:[#allocation1] sm:$0xff]
      %v751 = vld [vmem:[#allocation1 + $0x9] sm:$0xff]
      %v752 = vld [vmem:[#allocation1 + $0x12] sm:$0xff]
      %v753 = vld [vmem:[#allocation1 + $0x1b] sm:$0xff]
      %v822 = vunpack.c.l.b16 %v293
      %v823 = vunpack.c.l.b16 %v294
      %v824 = vunpack.c.l.b16 %v295
      %v825 = vunpack.c.l.b16 %v296
      %v826 = vunpack.c.l.b16 %v297
      %v827 = vunpack.c.l.b16 %v298
      %v828 = vunpack.c.l.b16 %v299
      %v829 = vunpack.c.l.b16 %v300
      %v830 = vunpack.c.l.b16 %v301
      %v831 = vunpack.c.l.b16 %v302
      %v832 = vunpack.c.l.b16 %v303
      %v833 = vunpack.c.l.b16 %v304
      %v834 = vunpack.c.l.b16 %v305
      %v835 = vunpack.c.l.b16 %v306
      %v836 = vunpack.c.l.b16 %v307
      %v837 = vunpack.c.l.b16 %v308
      %v838 = vunpack.c.l.b16 %v309
      %v839 = vunpack.c.l.b16 %v310
      %v840 = vunpack.c.l.b16 %v311
      %v841 = vunpack.c.l.b16 %v312
      %v842 = vunpack.c.l.b16 %v313
      %v843 = vunpack.c.l.b16 %v314
      %v844 = vunpack.c.l.b16 %v315
      %v845 = vunpack.c.l.b16 %v316
      %v846 = vunpack.c.l.b16 %v317
      %v847 = vunpack.c.l.b16 %v318
      %v848 = vunpack.c.l.b16 %v319
      %v849 = vunpack.c.l.b16 %v320
      %v850 = vunpack.c.l.b16 %v321
      %v851 = vunpack.c.l.b16 %v322
      %v852 = vunpack.c.l.b16 %v323
      %v853 = vunpack.c.l.b16 %v324
      %v854 = vunpack.c.l.b16 %v325
      %v855 = vunpack.c.l.b16 %v326
      %v856 = vunpack.c.l.b16 %v327
      %v857 = vunpack.c.l.b16 %v328
      %v858 = vunpack.c.l.b16 %v329
      %v859 = vunpack.c.l.b16 %v330
      %v860 = vunpack.c.l.b16 %v331
      %v861 = vunpack.c.l.b16 %v332
      %v862 = vunpack.c.l.b16 %v333
      %v863 = vunpack.c.l.b16 %v334
      %v864 = vunpack.c.l.b16 %v335
      %v865 = vunpack.c.l.b16 %v336
      %v866 = vunpack.c.l.b16 %v337
      %v867 = vunpack.c.l.b16 %v338
      %v868 = vunpack.c.l.b16 %v339
      %v869 = vunpack.c.l.b16 %v340
      %v870 = vunpack.c.l.b16 %v341
      %v871 = vunpack.c.l.b16 %v342
      %v872 = vunpack.c.l.b16 %v343
      %v873 = vunpack.c.l.b16 %v344
      %v874 = vunpack.c.l.b16 %v345
      %v875 = vunpack.c.l.b16 %v346
      %v876 = vunpack.c.l.b16 %v347
      %v877 = vunpack.c.l.b16 %v348
      %v878 = vunpack.c.l.b16 %v349
      %v879 = vunpack.c.l.b16 %v350
      %v880 = vunpack.c.l.b16 %v351
      %v881 = vunpack.c.l.b16 %v352
      %v882 = vunpack.c.l.b16 %v353
      %v883 = vunpack.c.l.b16 %v354
      %v884 = vunpack.c.l.b16 %v355
      %v885 = vunpack.c.l.b16 %v356
      %v886 = vpack.c.b16 %v823, %v822
      %v887 = vpack.c.b16 %v825, %v824
      %v888 = vpack.c.b16 %v827, %v826
      %v889 = vpack.c.b16 %v829, %v828
      %v890 = vpack.c.b16 %v831, %v830
      %v891 = vpack.c.b16 %v833, %v832
      %v892 = vpack.c.b16 %v835, %v834
      %v893 = vpack.c.b16 %v837, %v836
      %v894 = vpack.c.b16 %v839, %v838
      %v895 = vpack.c.b16 %v841, %v840
      %v896 = vpack.c.b16 %v843, %v842
      %v897 = vpack.c.b16 %v845, %v844
      %v898 = vpack.c.b16 %v847, %v846
      %v899 = vpack.c.b16 %v849, %v848
      %v900 = vpack.c.b16 %v851, %v850
      %v901 = vpack.c.b16 %v853, %v852
      %v902 = vpack.c.b16 %v855, %v854
      %v903 = vpack.c.b16 %v857, %v856
      %v904 = vpack.c.b16 %v859, %v858
      %v905 = vpack.c.b16 %v861, %v860
      %v906 = vpack.c.b16 %v863, %v862
      %v907 = vpack.c.b16 %v865, %v864
      %v908 = vpack.c.b16 %v867, %v866
      %v909 = vpack.c.b16 %v869, %v868
      %v910 = vpack.c.b16 %v871, %v870
      %v911 = vpack.c.b16 %v873, %v872
      %v912 = vpack.c.b16 %v875, %v874
      %v913 = vpack.c.b16 %v877, %v876
      %v914 = vpack.c.b16 %v879, %v878
      %v915 = vpack.c.b16 %v881, %v880
      %v916 = vpack.c.b16 %v883, %v882
      %v917 = vpack.c.b16 %v885, %v884
      %950 = vmatpush.bf16.msra.mxu0 %v893
      %951 = vmatpush.bf16.msra.mxu0 %v892
      %952 = vmatpush.bf16.msra.mxu0 %v891
      %953 = vmatpush.bf16.msra.mxu0 %v890
      %954 = vmatpush.bf16.msra.mxu0 %v889
      %955 = vmatpush.bf16.msra.mxu0 %v888
      %956 = vmatpush.bf16.msra.mxu0 %v887
      %957 = vmatpush.bf16.msra.mxu0 %v886
      %958 = vmatmul.bf16.gmra.mxu0 %v750
      %v959 = vpop.f32.mrf.mxu0
      %v960 = vadd.f32 %v744, %v959
      %v961 = vpop.f32.mrf.mxu0
      %962 = vdwg.mxu0
      %963 = vmatpush.bf16.msra.mxu0 %v901
      %964 = vmatpush.bf16.msra.mxu0 %v900
      %965 = vmatpush.bf16.msra.mxu0 %v899
      %966 = vmatpush.bf16.msra.mxu0 %v898
      %967 = vmatpush.bf16.msra.mxu0 %v897
      %968 = vmatpush.bf16.msra.mxu0 %v896
      %969 = vmatpush.bf16.msra.mxu0 %v895
      %970 = vmatpush.bf16.msra.mxu0 %v894
      %971 = vmatmul.bf16.gmra.mxu0 %v751
      %v972 = vpop.f32.mrf.mxu0
      %v973 = vadd.f32 %v960, %v972
      %v974 = vpop.f32.mrf.mxu0
      %975 = vdwg.mxu0
      %976 = vmatpush.bf16.msra.mxu0 %v909
      %977 = vmatpush.bf16.msra.mxu0 %v908
      %978 = vmatpush.bf16.msra.mxu0 %v907
      %979 = vmatpush.bf16.msra.mxu0 %v906
      %980 = vmatpush.bf16.msra.mxu0 %v905
      %981 = vmatpush.bf16.msra.mxu0 %v904
      %982 = vmatpush.bf16.msra.mxu0 %v903
      %983 = vmatpush.bf16.msra.mxu0 %v902
      %984 = vmatmul.bf16.gmra.mxu0 %v752
      %v985 = vpop.f32.mrf.mxu0
      %v986 = vadd.f32 %v973, %v985
      %v987 = vpop.f32.mrf.mxu0
      %988 = vdwg.mxu0
      %989 = vmatpush.bf16.msra.mxu0 %v917
      %990 = vmatpush.bf16.msra.mxu0 %v916
      %991 = vmatpush.bf16.msra.mxu0 %v915
      %992 = vmatpush.bf16.msra.mxu0 %v914
      %993 = vmatpush.bf16.msra.mxu0 %v913
      %994 = vmatpush.bf16.msra.mxu0 %v912
      %995 = vmatpush.bf16.msra.mxu0 %v911
      %996 = vmatpush.bf16.msra.mxu0 %v910
      %997 = vmatmul.bf16.gmra.mxu0 %v753
      %v998 = vpop.f32.mrf.mxu0
      %v999 = vadd.f32 %v986, %v998
      %v1000 = vpop.f32.mrf.mxu0
      %1001 = vdwg.mxu0
      %s1002 = scalar_lea.vmem %s242, 8
      %v1003 = vld [vmem:[%s1002] sm:$0x55]
      %v1004 = vld [vmem:[%s1002 + $0x8] sm:$0x55]
      %v1007 = vrot.slane %v1003, 1
      %v1008 = vrot.slane %v1003, 2
      %v1009 = vrot.slane %v1003, 3
      %v1010 = vrot.slane %v1004, 1
      %v1011 = vrot.slane %v1004, 2
      %v1012 = vrot.slane %v1004, 3
      %v1015 = vsel %vm276, %v1003, %v1007
      %v1018 = vsel %vm280, %v1008, %v1009
      %v1019 = vsel %vm284, %v1015, %v1018
      %v1022 = vsel %vm276, %v1004, %v1010
      %v1025 = vsel %vm280, %v1011, %v1012
      %v1026 = vsel %vm284, %v1022, %v1025
      %s1027 = scalar_lea.vmem %s246, 512
      %v1028 = vld [vmem:[%s1027] sm:$0xf]
      %v1029 = vld [vmem:[%s1027 + $0x4] sm:$0xf]
      %v1030 = vld [vmem:[%s1027 + $0x8] sm:$0xf]
      %v1031 = vld [vmem:[%s1027 + $0xc] sm:$0xf]
      %v1032 = vld [vmem:[%s1027 + $0x10] sm:$0xf]
      %v1033 = vld [vmem:[%s1027 + $0x14] sm:$0xf]
      %v1034 = vld [vmem:[%s1027 + $0x18] sm:$0xf]
      %v1035 = vld [vmem:[%s1027 + $0x1c] sm:$0xf]
      %v1036 = vld [vmem:[%s1027 + $0x20] sm:$0xf]
      %v1037 = vld [vmem:[%s1027 + $0x24] sm:$0xf]
      %v1038 = vld [vmem:[%s1027 + $0x28] sm:$0xf]
      %v1039 = vld [vmem:[%s1027 + $0x2c] sm:$0xf]
      %v1040 = vld [vmem:[%s1027 + $0x30] sm:$0xf]
      %v1041 = vld [vmem:[%s1027 + $0x34] sm:$0xf]
      %v1042 = vld [vmem:[%s1027 + $0x38] sm:$0xf]
      %v1043 = vld [vmem:[%s1027 + $0x3c] sm:$0xf]
      %v1044 = vld [vmem:[%s1027 + $0x40] sm:$0xf]
      %v1045 = vld [vmem:[%s1027 + $0x44] sm:$0xf]
      %v1046 = vld [vmem:[%s1027 + $0x48] sm:$0xf]
      %v1047 = vld [vmem:[%s1027 + $0x4c] sm:$0xf]
      %v1048 = vld [vmem:[%s1027 + $0x50] sm:$0xf]
      %v1049 = vld [vmem:[%s1027 + $0x54] sm:$0xf]
      %v1050 = vld [vmem:[%s1027 + $0x58] sm:$0xf]
      %v1051 = vld [vmem:[%s1027 + $0x5c] sm:$0xf]
      %v1052 = vld [vmem:[%s1027 + $0x60] sm:$0xf]
      %v1053 = vld [vmem:[%s1027 + $0x64] sm:$0xf]
      %v1054 = vld [vmem:[%s1027 + $0x68] sm:$0xf]
      %v1055 = vld [vmem:[%s1027 + $0x6c] sm:$0xf]
      %v1056 = vld [vmem:[%s1027 + $0x70] sm:$0xf]
      %v1057 = vld [vmem:[%s1027 + $0x74] sm:$0xf]
      %v1058 = vld [vmem:[%s1027 + $0x78] sm:$0xf]
      %v1059 = vld [vmem:[%s1027 + $0x7c] sm:$0xf]
      %v1060 = vld [vmem:[%s1027 + $0x80] sm:$0xf]
      %v1061 = vld [vmem:[%s1027 + $0x84] sm:$0xf]
      %v1062 = vld [vmem:[%s1027 + $0x88] sm:$0xf]
      %v1063 = vld [vmem:[%s1027 + $0x8c] sm:$0xf]
      %v1064 = vld [vmem:[%s1027 + $0x90] sm:$0xf]
      %v1065 = vld [vmem:[%s1027 + $0x94] sm:$0xf]
      %v1066 = vld [vmem:[%s1027 + $0x98] sm:$0xf]
      %v1067 = vld [vmem:[%s1027 + $0x9c] sm:$0xf]
      %v1068 = vld [vmem:[%s1027 + $0xa0] sm:$0xf]
      %v1069 = vld [vmem:[%s1027 + $0xa4] sm:$0xf]
      %v1070 = vld [vmem:[%s1027 + $0xa8] sm:$0xf]
      %v1071 = vld [vmem:[%s1027 + $0xac] sm:$0xf]
      %v1072 = vld [vmem:[%s1027 + $0xb0] sm:$0xf]
      %v1073 = vld [vmem:[%s1027 + $0xb4] sm:$0xf]
      %v1074 = vld [vmem:[%s1027 + $0xb8] sm:$0xf]
      %v1075 = vld [vmem:[%s1027 + $0xbc] sm:$0xf]
      %v1076 = vld [vmem:[%s1027 + $0xc0] sm:$0xf]
      %v1077 = vld [vmem:[%s1027 + $0xc4] sm:$0xf]
      %v1078 = vld [vmem:[%s1027 + $0xc8] sm:$0xf]
      %v1079 = vld [vmem:[%s1027 + $0xcc] sm:$0xf]
      %v1080 = vld [vmem:[%s1027 + $0xd0] sm:$0xf]
      %v1081 = vld [vmem:[%s1027 + $0xd4] sm:$0xf]
      %v1082 = vld [vmem:[%s1027 + $0xd8] sm:$0xf]
      %v1083 = vld [vmem:[%s1027 + $0xdc] sm:$0xf]
      %v1084 = vld [vmem:[%s1027 + $0xe0] sm:$0xf]
      %v1085 = vld [vmem:[%s1027 + $0xe4] sm:$0xf]
      %v1086 = vld [vmem:[%s1027 + $0xe8] sm:$0xf]
      %v1087 = vld [vmem:[%s1027 + $0xec] sm:$0xf]
      %v1088 = vld [vmem:[%s1027 + $0xf0] sm:$0xf]
      %v1089 = vld [vmem:[%s1027 + $0xf4] sm:$0xf]
      %v1090 = vld [vmem:[%s1027 + $0xf8] sm:$0xf]
      %v1091 = vld [vmem:[%s1027 + $0xfc] sm:$0xf]
      %1092 = vst [vmem:[#allocation1] ss:$9 sm:$0xff] %v1019
      %s1093 = scalar_lea.vmem [#allocation1], 1
      %1094 = vst [vmem:[%s1093] ss:$9 sm:$0xff] %v1026
      %v1095 = vld [vmem:[#allocation1] sm:$0xff]
      %v1096 = vld [vmem:[#allocation1 + $0x9] sm:$0xff]
      %v1097 = vld [vmem:[#allocation1 + $0x12] sm:$0xff]
      %v1098 = vld [vmem:[#allocation1 + $0x1b] sm:$0xff]
      %v1167 = vunpack.c.l.b16 %v1028
      %v1168 = vunpack.c.l.b16 %v1029
      %v1169 = vunpack.c.l.b16 %v1030
      %v1170 = vunpack.c.l.b16 %v1031
      %v1171 = vunpack.c.l.b16 %v1032
      %v1172 = vunpack.c.l.b16 %v1033
      %v1173 = vunpack.c.l.b16 %v1034
      %v1174 = vunpack.c.l.b16 %v1035
      %v1175 = vunpack.c.l.b16 %v1036
      %v1176 = vunpack.c.l.b16 %v1037
      %v1177 = vunpack.c.l.b16 %v1038
      %v1178 = vunpack.c.l.b16 %v1039
      %v1179 = vunpack.c.l.b16 %v1040
      %v1180 = vunpack.c.l.b16 %v1041
      %v1181 = vunpack.c.l.b16 %v1042
      %v1182 = vunpack.c.l.b16 %v1043
      %v1183 = vunpack.c.l.b16 %v1044
      %v1184 = vunpack.c.l.b16 %v1045
      %v1185 = vunpack.c.l.b16 %v1046
      %v1186 = vunpack.c.l.b16 %v1047
      %v1187 = vunpack.c.l.b16 %v1048
      %v1188 = vunpack.c.l.b16 %v1049
      %v1189 = vunpack.c.l.b16 %v1050
      %v1190 = vunpack.c.l.b16 %v1051
      %v1191 = vunpack.c.l.b16 %v1052
      %v1192 = vunpack.c.l.b16 %v1053
      %v1193 = vunpack.c.l.b16 %v1054
      %v1194 = vunpack.c.l.b16 %v1055
      %v1195 = vunpack.c.l.b16 %v1056
      %v1196 = vunpack.c.l.b16 %v1057
      %v1197 = vunpack.c.l.b16 %v1058
      %v1198 = vunpack.c.l.b16 %v1059
      %v1199 = vunpack.c.l.b16 %v1060
      %v1200 = vunpack.c.l.b16 %v1061
      %v1201 = vunpack.c.l.b16 %v1062
      %v1202 = vunpack.c.l.b16 %v1063
      %v1203 = vunpack.c.l.b16 %v1064
      %v1204 = vunpack.c.l.b16 %v1065
      %v1205 = vunpack.c.l.b16 %v1066
      %v1206 = vunpack.c.l.b16 %v1067
      %v1207 = vunpack.c.l.b16 %v1068
      %v1208 = vunpack.c.l.b16 %v1069
      %v1209 = vunpack.c.l.b16 %v1070
      %v1210 = vunpack.c.l.b16 %v1071
      %v1211 = vunpack.c.l.b16 %v1072
      %v1212 = vunpack.c.l.b16 %v1073
      %v1213 = vunpack.c.l.b16 %v1074
      %v1214 = vunpack.c.l.b16 %v1075
      %v1215 = vunpack.c.l.b16 %v1076
      %v1216 = vunpack.c.l.b16 %v1077
      %v1217 = vunpack.c.l.b16 %v1078
      %v1218 = vunpack.c.l.b16 %v1079
      %v1219 = vunpack.c.l.b16 %v1080
      %v1220 = vunpack.c.l.b16 %v1081
      %v1221 = vunpack.c.l.b16 %v1082
      %v1222 = vunpack.c.l.b16 %v1083
      %v1223 = vunpack.c.l.b16 %v1084
      %v1224 = vunpack.c.l.b16 %v1085
      %v1225 = vunpack.c.l.b16 %v1086
      %v1226 = vunpack.c.l.b16 %v1087
      %v1227 = vunpack.c.l.b16 %v1088
      %v1228 = vunpack.c.l.b16 %v1089
      %v1229 = vunpack.c.l.b16 %v1090
      %v1230 = vunpack.c.l.b16 %v1091
      %v1231 = vpack.c.b16 %v1168, %v1167
      %v1232 = vpack.c.b16 %v1170, %v1169
      %v1233 = vpack.c.b16 %v1172, %v1171
      %v1234 = vpack.c.b16 %v1174, %v1173
      %v1235 = vpack.c.b16 %v1176, %v1175
      %v1236 = vpack.c.b16 %v1178, %v1177
      %v1237 = vpack.c.b16 %v1180, %v1179
      %v1238 = vpack.c.b16 %v1182, %v1181
      %v1239 = vpack.c.b16 %v1184, %v1183
      %v1240 = vpack.c.b16 %v1186, %v1185
      %v1241 = vpack.c.b16 %v1188, %v1187
      %v1242 = vpack.c.b16 %v1190, %v1189
      %v1243 = vpack.c.b16 %v1192, %v1191
      %v1244 = vpack.c.b16 %v1194, %v1193
      %v1245 = vpack.c.b16 %v1196, %v1195
      %v1246 = vpack.c.b16 %v1198, %v1197
      %v1247 = vpack.c.b16 %v1200, %v1199
      %v1248 = vpack.c.b16 %v1202, %v1201
      %v1249 = vpack.c.b16 %v1204, %v1203
      %v1250 = vpack.c.b16 %v1206, %v1205
      %v1251 = vpack.c.b16 %v1208, %v1207
      %v1252 = vpack.c.b16 %v1210, %v1209
      %v1253 = vpack.c.b16 %v1212, %v1211
      %v1254 = vpack.c.b16 %v1214, %v1213
      %v1255 = vpack.c.b16 %v1216, %v1215
      %v1256 = vpack.c.b16 %v1218, %v1217
      %v1257 = vpack.c.b16 %v1220, %v1219
      %v1258 = vpack.c.b16 %v1222, %v1221
      %v1259 = vpack.c.b16 %v1224, %v1223
      %v1260 = vpack.c.b16 %v1226, %v1225
      %v1261 = vpack.c.b16 %v1228, %v1227
      %v1262 = vpack.c.b16 %v1230, %v1229
      %1295 = vmatpush.bf16.msra.mxu0 %v1238
      %1296 = vmatpush.bf16.msra.mxu0 %v1237
      %1297 = vmatpush.bf16.msra.mxu0 %v1236
      %1298 = vmatpush.bf16.msra.mxu0 %v1235
      %1299 = vmatpush.bf16.msra.mxu0 %v1234
      %1300 = vmatpush.bf16.msra.mxu0 %v1233
      %1301 = vmatpush.bf16.msra.mxu0 %v1232
      %1302 = vmatpush.bf16.msra.mxu0 %v1231
      %1303 = vmatmul.bf16.gmra.mxu0 %v1095
      %v1304 = vpop.f32.mrf.mxu0
      %v1305 = vadd.f32 0.0, %v1304
      %v1306 = vpop.f32.mrf.mxu0
      %1307 = vdwg.mxu0
      %1308 = vmatpush.bf16.msra.mxu0 %v1246
      %1309 = vmatpush.bf16.msra.mxu0 %v1245
      %1310 = vmatpush.bf16.msra.mxu0 %v1244
      %1311 = vmatpush.bf16.msra.mxu0 %v1243
      %1312 = vmatpush.bf16.msra.mxu0 %v1242
      %1313 = vmatpush.bf16.msra.mxu0 %v1241
      %1314 = vmatpush.bf16.msra.mxu0 %v1240
      %1315 = vmatpush.bf16.msra.mxu0 %v1239
      %1316 = vmatmul.bf16.gmra.mxu0 %v1096
      %v1317 = vpop.f32.mrf.mxu0
      %v1318 = vadd.f32 %v1305, %v1317
      %v1319 = vpop.f32.mrf.mxu0
      %1320 = vdwg.mxu0
      %1321 = vmatpush.bf16.msra.mxu0 %v1254
      %1322 = vmatpush.bf16.msra.mxu0 %v1253
      %1323 = vmatpush.bf16.msra.mxu0 %v1252
      %1324 = vmatpush.bf16.msra.mxu0 %v1251
      %1325 = vmatpush.bf16.msra.mxu0 %v1250
      %1326 = vmatpush.bf16.msra.mxu0 %v1249
      %1327 = vmatpush.bf16.msra.mxu0 %v1248
      %1328 = vmatpush.bf16.msra.mxu0 %v1247
      %1329 = vmatmul.bf16.gmra.mxu0 %v1097
      %v1330 = vpop.f32.mrf.mxu0
      %v1331 = vadd.f32 %v1318, %v1330
      %v1332 = vpop.f32.mrf.mxu0
      %1333 = vdwg.mxu0
      %1334 = vmatpush.bf16.msra.mxu0 %v1262
      %1335 = vmatpush.bf16.msra.mxu0 %v1261
      %1336 = vmatpush.bf16.msra.mxu0 %v1260
      %1337 = vmatpush.bf16.msra.mxu0 %v1259
      %1338 = vmatpush.bf16.msra.mxu0 %v1258
      %1339 = vmatpush.bf16.msra.mxu0 %v1257
      %1340 = vmatpush.bf16.msra.mxu0 %v1256
      %1341 = vmatpush.bf16.msra.mxu0 %v1255
      %1342 = vmatmul.bf16.gmra.mxu0 %v1098
      %v1343 = vpop.f32.mrf.mxu0
      %v1344 = vadd.f32 %v1331, %v1343
      %v1345 = vpop.f32.mrf.mxu0
      %1346 = vdwg.mxu0
      %v1347 = vadd.f32 %v999, %v1344
      %v1348 = vld [vmem:[%s1002] sm:$0xff]
      %v1349 = vld [vmem:[%s1002 + $0x8] sm:$0xff]
      %v1352 = vrot.slane %v1348, 1
      %v1353 = vrot.slane %v1348, 2
      %v1354 = vrot.slane %v1348, 3
      %v1355 = vrot.slane %v1349, 1
      %v1356 = vrot.slane %v1349, 2
      %v1357 = vrot.slane %v1349, 3
      %v1360 = vsel %vm276, %v1348, %v1352
      %v1363 = vsel %vm280, %v1353, %v1354
      %v1364 = vsel %vm284, %v1360, %v1363
      %v1365 = vsel %vm374, %v1348, %v1352
      %v1366 = vsel %vm376, %v1353, %v1354
      %v1367 = vsel %vm378, %v1365, %v1366
      %v1369 = vrot.slane %v1367, 1
      %v1372 = vsel %vm276, %v1349, %v1355
      %v1375 = vsel %vm280, %v1356, %v1357
      %v1376 = vsel %vm284, %v1372, %v1375
      %v1377 = vsel %vm374, %v1349, %v1355
      %v1378 = vsel %vm376, %v1356, %v1357
      %v1379 = vsel %vm378, %v1377, %v1378
      %v1381 = vrot.slane %v1379, 1
      %v1382 = vshrl.u32 %v1364, 16
      %v1384 = vrot.slane %v1382, 7
      %v1385 = vrot.slane %v1384, 1
      %v1387 = vshll.u32 %v1369, 16
      %v1389 = vsel %vm408, %v1385, %v1387
      %v1390 = vshrl.u32 %v1376, 16
      %v1392 = vrot.slane %v1390, 7
      %v1393 = vrot.slane %v1392, 1
      %v1395 = vshll.u32 %v1381, 16
      %v1397 = vsel %vm408, %v1393, %v1395
      %s1398 = scalar_lea.vmem %s246, 768
      %v1399 = vld [vmem:[%s1398] sm:$0xf]
      %v1400 = vld [vmem:[%s1398 + $0x4] sm:$0xf]
      %v1401 = vld [vmem:[%s1398 + $0x8] sm:$0xf]
      %v1402 = vld [vmem:[%s1398 + $0xc] sm:$0xf]
      %v1403 = vld [vmem:[%s1398 + $0x10] sm:$0xf]
      %v1404 = vld [vmem:[%s1398 + $0x14] sm:$0xf]
      %v1405 = vld [vmem:[%s1398 + $0x18] sm:$0xf]
      %v1406 = vld [vmem:[%s1398 + $0x1c] sm:$0xf]
      %v1407 = vld [vmem:[%s1398 + $0x20] sm:$0xf]
      %v1408 = vld [vmem:[%s1398 + $0x24] sm:$0xf]
      %v1409 = vld [vmem:[%s1398 + $0x28] sm:$0xf]
      %v1410 = vld [vmem:[%s1398 + $0x2c] sm:$0xf]
      %v1411 = vld [vmem:[%s1398 + $0x30] sm:$0xf]
      %v1412 = vld [vmem:[%s1398 + $0x34] sm:$0xf]
      %v1413 = vld [vmem:[%s1398 + $0x38] sm:$0xf]
      %v1414 = vld [vmem:[%s1398 + $0x3c] sm:$0xf]
      %v1415 = vld [vmem:[%s1398 + $0x40] sm:$0xf]
      %v1416 = vld [vmem:[%s1398 + $0x44] sm:$0xf]
      %v1417 = vld [vmem:[%s1398 + $0x48] sm:$0xf]
      %v1418 = vld [vmem:[%s1398 + $0x4c] sm:$0xf]
      %v1419 = vld [vmem:[%s1398 + $0x50] sm:$0xf]
      %v1420 = vld [vmem:[%s1398 + $0x54] sm:$0xf]
      %v1421 = vld [vmem:[%s1398 + $0x58] sm:$0xf]
      %v1422 = vld [vmem:[%s1398 + $0x5c] sm:$0xf]
      %v1423 = vld [vmem:[%s1398 + $0x60] sm:$0xf]
      %v1424 = vld [vmem:[%s1398 + $0x64] sm:$0xf]
      %v1425 = vld [vmem:[%s1398 + $0x68] sm:$0xf]
      %v1426 = vld [vmem:[%s1398 + $0x6c] sm:$0xf]
      %v1427 = vld [vmem:[%s1398 + $0x70] sm:$0xf]
      %v1428 = vld [vmem:[%s1398 + $0x74] sm:$0xf]
      %v1429 = vld [vmem:[%s1398 + $0x78] sm:$0xf]
      %v1430 = vld [vmem:[%s1398 + $0x7c] sm:$0xf]
      %v1431 = vld [vmem:[%s1398 + $0x80] sm:$0xf]
      %v1432 = vld [vmem:[%s1398 + $0x84] sm:$0xf]
      %v1433 = vld [vmem:[%s1398 + $0x88] sm:$0xf]
      %v1434 = vld [vmem:[%s1398 + $0x8c] sm:$0xf]
      %v1435 = vld [vmem:[%s1398 + $0x90] sm:$0xf]
      %v1436 = vld [vmem:[%s1398 + $0x94] sm:$0xf]
      %v1437 = vld [vmem:[%s1398 + $0x98] sm:$0xf]
      %v1438 = vld [vmem:[%s1398 + $0x9c] sm:$0xf]
      %v1439 = vld [vmem:[%s1398 + $0xa0] sm:$0xf]
      %v1440 = vld [vmem:[%s1398 + $0xa4] sm:$0xf]
      %v1441 = vld [vmem:[%s1398 + $0xa8] sm:$0xf]
      %v1442 = vld [vmem:[%s1398 + $0xac] sm:$0xf]
      %v1443 = vld [vmem:[%s1398 + $0xb0] sm:$0xf]
      %v1444 = vld [vmem:[%s1398 + $0xb4] sm:$0xf]
      %v1445 = vld [vmem:[%s1398 + $0xb8] sm:$0xf]
      %v1446 = vld [vmem:[%s1398 + $0xbc] sm:$0xf]
      %v1447 = vld [vmem:[%s1398 + $0xc0] sm:$0xf]
      %v1448 = vld [vmem:[%s1398 + $0xc4] sm:$0xf]
      %v1449 = vld [vmem:[%s1398 + $0xc8] sm:$0xf]
      %v1450 = vld [vmem:[%s1398 + $0xcc] sm:$0xf]
      %v1451 = vld [vmem:[%s1398 + $0xd0] sm:$0xf]
      %v1452 = vld [vmem:[%s1398 + $0xd4] sm:$0xf]
      %v1453 = vld [vmem:[%s1398 + $0xd8] sm:$0xf]
      %v1454 = vld [vmem:[%s1398 + $0xdc] sm:$0xf]
      %v1455 = vld [vmem:[%s1398 + $0xe0] sm:$0xf]
      %v1456 = vld [vmem:[%s1398 + $0xe4] sm:$0xf]
      %v1457 = vld [vmem:[%s1398 + $0xe8] sm:$0xf]
      %v1458 = vld [vmem:[%s1398 + $0xec] sm:$0xf]
      %v1459 = vld [vmem:[%s1398 + $0xf0] sm:$0xf]
      %v1460 = vld [vmem:[%s1398 + $0xf4] sm:$0xf]
      %v1461 = vld [vmem:[%s1398 + $0xf8] sm:$0xf]
      %v1462 = vld [vmem:[%s1398 + $0xfc] sm:$0xf]
      %1464 = vst [vmem:[#allocation1] ss:$9 sm:$0xff] %v1389
      %s1466 = scalar_lea.vmem [#allocation1], 1
      %1467 = vst [vmem:[%s1466] ss:$9 sm:$0xff] %v1397
      %v1468 = vld [vmem:[#allocation1] sm:$0xff]
      %v1469 = vld [vmem:[#allocation1 + $0x9] sm:$0xff]
      %v1470 = vld [vmem:[#allocation1 + $0x12] sm:$0xff]
      %v1471 = vld [vmem:[#allocation1 + $0x1b] sm:$0xff]
      %v1540 = vunpack.c.l.b16 %v1399
      %v1541 = vunpack.c.l.b16 %v1400
      %v1542 = vunpack.c.l.b16 %v1401
      %v1543 = vunpack.c.l.b16 %v1402
      %v1544 = vunpack.c.l.b16 %v1403
      %v1545 = vunpack.c.l.b16 %v1404
      %v1546 = vunpack.c.l.b16 %v1405
      %v1547 = vunpack.c.l.b16 %v1406
      %v1548 = vunpack.c.l.b16 %v1407
      %v1549 = vunpack.c.l.b16 %v1408
      %v1550 = vunpack.c.l.b16 %v1409
      %v1551 = vunpack.c.l.b16 %v1410
      %v1552 = vunpack.c.l.b16 %v1411
      %v1553 = vunpack.c.l.b16 %v1412
      %v1554 = vunpack.c.l.b16 %v1413
      %v1555 = vunpack.c.l.b16 %v1414
      %v1556 = vunpack.c.l.b16 %v1415
      %v1557 = vunpack.c.l.b16 %v1416
      %v1558 = vunpack.c.l.b16 %v1417
      %v1559 = vunpack.c.l.b16 %v1418
      %v1560 = vunpack.c.l.b16 %v1419
      %v1561 = vunpack.c.l.b16 %v1420
      %v1562 = vunpack.c.l.b16 %v1421
      %v1563 = vunpack.c.l.b16 %v1422
      %v1564 = vunpack.c.l.b16 %v1423
      %v1565 = vunpack.c.l.b16 %v1424
      %v1566 = vunpack.c.l.b16 %v1425
      %v1567 = vunpack.c.l.b16 %v1426
      %v1568 = vunpack.c.l.b16 %v1427
      %v1569 = vunpack.c.l.b16 %v1428
      %v1570 = vunpack.c.l.b16 %v1429
      %v1571 = vunpack.c.l.b16 %v1430
      %v1572 = vunpack.c.l.b16 %v1431
      %v1573 = vunpack.c.l.b16 %v1432
      %v1574 = vunpack.c.l.b16 %v1433
      %v1575 = vunpack.c.l.b16 %v1434
      %v1576 = vunpack.c.l.b16 %v1435
      %v1577 = vunpack.c.l.b16 %v1436
      %v1578 = vunpack.c.l.b16 %v1437
      %v1579 = vunpack.c.l.b16 %v1438
      %v1580 = vunpack.c.l.b16 %v1439
      %v1581 = vunpack.c.l.b16 %v1440
      %v1582 = vunpack.c.l.b16 %v1441
      %v1583 = vunpack.c.l.b16 %v1442
      %v1584 = vunpack.c.l.b16 %v1443
      %v1585 = vunpack.c.l.b16 %v1444
      %v1586 = vunpack.c.l.b16 %v1445
      %v1587 = vunpack.c.l.b16 %v1446
      %v1588 = vunpack.c.l.b16 %v1447
      %v1589 = vunpack.c.l.b16 %v1448
      %v1590 = vunpack.c.l.b16 %v1449
      %v1591 = vunpack.c.l.b16 %v1450
      %v1592 = vunpack.c.l.b16 %v1451
      %v1593 = vunpack.c.l.b16 %v1452
      %v1594 = vunpack.c.l.b16 %v1453
      %v1595 = vunpack.c.l.b16 %v1454
      %v1596 = vunpack.c.l.b16 %v1455
      %v1597 = vunpack.c.l.b16 %v1456
      %v1598 = vunpack.c.l.b16 %v1457
      %v1599 = vunpack.c.l.b16 %v1458
      %v1600 = vunpack.c.l.b16 %v1459
      %v1601 = vunpack.c.l.b16 %v1460
      %v1602 = vunpack.c.l.b16 %v1461
      %v1603 = vunpack.c.l.b16 %v1462
      %v1604 = vpack.c.b16 %v1541, %v1540
      %v1605 = vpack.c.b16 %v1543, %v1542
      %v1606 = vpack.c.b16 %v1545, %v1544
      %v1607 = vpack.c.b16 %v1547, %v1546
      %v1608 = vpack.c.b16 %v1549, %v1548
      %v1609 = vpack.c.b16 %v1551, %v1550
      %v1610 = vpack.c.b16 %v1553, %v1552
      %v1611 = vpack.c.b16 %v1555, %v1554
      %v1612 = vpack.c.b16 %v1557, %v1556
      %v1613 = vpack.c.b16 %v1559, %v1558
      %v1614 = vpack.c.b16 %v1561, %v1560
      %v1615 = vpack.c.b16 %v1563, %v1562
      %v1616 = vpack.c.b16 %v1565, %v1564
      %v1617 = vpack.c.b16 %v1567, %v1566
      %v1618 = vpack.c.b16 %v1569, %v1568
      %v1619 = vpack.c.b16 %v1571, %v1570
      %v1620 = vpack.c.b16 %v1573, %v1572
      %v1621 = vpack.c.b16 %v1575, %v1574
      %v1622 = vpack.c.b16 %v1577, %v1576
      %v1623 = vpack.c.b16 %v1579, %v1578
      %v1624 = vpack.c.b16 %v1581, %v1580
      %v1625 = vpack.c.b16 %v1583, %v1582
      %v1626 = vpack.c.b16 %v1585, %v1584
      %v1627 = vpack.c.b16 %v1587, %v1586
      %v1628 = vpack.c.b16 %v1589, %v1588
      %v1629 = vpack.c.b16 %v1591, %v1590
      %v1630 = vpack.c.b16 %v1593, %v1592
      %v1631 = vpack.c.b16 %v1595, %v1594
      %v1632 = vpack.c.b16 %v1597, %v1596
      %v1633 = vpack.c.b16 %v1599, %v1598
      %v1634 = vpack.c.b16 %v1601, %v1600
      %v1635 = vpack.c.b16 %v1603, %v1602
      %1668 = vmatpush.bf16.msra.mxu0 %v1611
      %1669 = vmatpush.bf16.msra.mxu0 %v1610
      %1670 = vmatpush.bf16.msra.mxu0 %v1609
      %1671 = vmatpush.bf16.msra.mxu0 %v1608
      %1672 = vmatpush.bf16.msra.mxu0 %v1607
      %1673 = vmatpush.bf16.msra.mxu0 %v1606
      %1674 = vmatpush.bf16.msra.mxu0 %v1605
      %1675 = vmatpush.bf16.msra.mxu0 %v1604
      %1676 = vmatmul.bf16.gmra.mxu0 %v1468
      %v1677 = vpop.f32.mrf.mxu0
      %v1678 = vadd.f32 0.0, %v1677
      %v1679 = vpop.f32.mrf.mxu0
      %1680 = vdwg.mxu0
      %1681 = vmatpush.bf16.msra.mxu0 %v1619
      %1682 = vmatpush.bf16.msra.mxu0 %v1618
      %1683 = vmatpush.bf16.msra.mxu0 %v1617
      %1684 = vmatpush.bf16.msra.mxu0 %v1616
      %1685 = vmatpush.bf16.msra.mxu0 %v1615
      %1686 = vmatpush.bf16.msra.mxu0 %v1614
      %1687 = vmatpush.bf16.msra.mxu0 %v1613
      %1688 = vmatpush.bf16.msra.mxu0 %v1612
      %1689 = vmatmul.bf16.gmra.mxu0 %v1469
      %v1690 = vpop.f32.mrf.mxu0
      %v1691 = vadd.f32 %v1678, %v1690
      %v1692 = vpop.f32.mrf.mxu0
      %1693 = vdwg.mxu0
      %1694 = vmatpush.bf16.msra.mxu0 %v1627
      %1695 = vmatpush.bf16.msra.mxu0 %v1626
      %1696 = vmatpush.bf16.msra.mxu0 %v1625
      %1697 = vmatpush.bf16.msra.mxu0 %v1624
      %1698 = vmatpush.bf16.msra.mxu0 %v1623
      %1699 = vmatpush.bf16.msra.mxu0 %v1622
      %1700 = vmatpush.bf16.msra.mxu0 %v1621
      %1701 = vmatpush.bf16.msra.mxu0 %v1620
      %1702 = vmatmul.bf16.gmra.mxu0 %v1470
      %v1703 = vpop.f32.mrf.mxu0
      %v1704 = vadd.f32 %v1691, %v1703
      %v1705 = vpop.f32.mrf.mxu0
      %1706 = vdwg.mxu0
      %1707 = vmatpush.bf16.msra.mxu0 %v1635
      %1708 = vmatpush.bf16.msra.mxu0 %v1634
      %1709 = vmatpush.bf16.msra.mxu0 %v1633
      %1710 = vmatpush.bf16.msra.mxu0 %v1632
      %1711 = vmatpush.bf16.msra.mxu0 %v1631
      %1712 = vmatpush.bf16.msra.mxu0 %v1630
      %1713 = vmatpush.bf16.msra.mxu0 %v1629
      %1714 = vmatpush.bf16.msra.mxu0 %v1628
      %1715 = vmatmul.bf16.gmra.mxu0 %v1471
      %v1716 = vpop.f32.mrf.mxu0
      %v1717 = vadd.f32 %v1704, %v1716
      %v1718 = vpop.f32.mrf.mxu0
      %1719 = vdwg.mxu0
      %v1720 = vadd.f32 %v1347, %v1717
      %vm1721 = vcmask 1043456
      %v1722 = vsel %vm1721, %v1720, 0.0
      %v1723 = vrot.slane %v1722, 4
      %v1724 = vadd.f32 %v1722, %v1723
      %v1725 = vrot.slane %v1724, 2
      %v1726 = vadd.f32 %v1724, %v1725
      %v1727 = vrot.slane %v1726, 1
      %v1728 = vadd.f32 %v1726, %v1727
      %1729 = vst [vmem:[%s259] sm:$0x1] %v1728
      %v1730 = vmul.f32 %v1720, %v1720
      %v1731 = vsel %vm1721, %v1730, 0.0
      %v1732 = vrot.slane %v1731, 4
      %v1733 = vadd.f32 %v1731, %v1732
      %v1734 = vrot.slane %v1733, 2
      %v1735 = vadd.f32 %v1733, %v1734
      %v1736 = vrot.slane %v1735, 1
      %v1737 = vadd.f32 %v1735, %v1736
      %1738 = vst [vmem:[%s265] sm:$0x1] %v1737
      %v1740 = vrot.slane %v1720, 2
      %v1742 = vpack.c.bf16 %v1720, %v1720
      %v1743 = vpack.c.bf16 %v1740, %v1740
      %1744 = vst [vmem:[%s253] sm:$0x1] %v1742
      %1745 = vst [vmem:[%s253 + $0x1] sm:$0x1] %v1743
      %p1746 = scmp.lt.s32.totalorder %s20, 1
      %s1747 = scalar_select %p1746, %s20, 1
      %p1748 = scmp.lt.s32.totalorder %s21, 0
      %s1749 = scalar_select %p1748, %s21, 0
      %s1750 = smul.addr %s1747, 2
      %s1751 = sadd.s32 %s1749, %s1750
      %s1752 = scalar_lea.vmem %s2, %s1751
      %p1753 = scmp.lt.s32.totalorder %s20, 1
      %s1754 = scalar_select %p1753, %s20, 1
      %p1755 = scmp.lt.s32.totalorder %s21, 0
      %s1756 = scalar_select %p1755, %s21, 0
      %s1757 = sadd.s32 %s1756, %s1754
      %s1758 = scalar_lea.vmem %s3, %s1757
      %p1759 = scmp.lt.s32.totalorder %s20, 1
      %s1760 = scalar_select %p1759, %s20, 1
      %p1761 = scmp.lt.s32.totalorder %s21, 0
      %s1762 = scalar_select %p1761, %s21, 0
      %s1763 = sadd.s32 %s1762, %s1760
      %s1764 = scalar_lea.vmem %s4, %s1763
      // Predicated region
      $region29: #{discriminator_forward.9} parent=27 // pred_check
        %p1765 = pneg %p100
      $region30: #{discriminator_forward.9} parent=27 // pred_check_branch
        %1767 = sbr.rel (%p1765) target = $region32
      $region31: #{discriminator_forward.9} parent=27 // pred_region
        _
      $region32: #{discriminator_forward.9} parent=27 // pred_fallthru
        _
      // Predicated region
      $region33: #{discriminator_forward.9} parent=27 // pred_check
        %p1768 = pneg %p128
      $region34: #{discriminator_forward.9} parent=27 // pred_check_branch
        %1770 = sbr.rel (%p1768) target = $region36
      $region35: #{discriminator_forward.9} parent=27 // pred_region
        _
      $region36: #{discriminator_forward.9} parent=27 // pred_fallthru
        _
      // Predicated region
      $region37: #{discriminator_forward.9} parent=27 // pred_check
        %p1771 = pneg %p156
      $region38: #{discriminator_forward.9} parent=27 // pred_check_branch
        %1773 = sbr.rel (%p1771) target = $region40
      $region39: #{discriminator_forward.9} parent=27 // pred_region
        _
      $region40: #{discriminator_forward.9} parent=27 // pred_fallthru
        _
    $region28: #{discriminator_forward.9} parent=5 // pred_fallthru
      _
    %p1774 = scmp.le.s32.totalorder 2, %s11
    // Predicated region
    $region41: #{discriminator_forward.9} parent=5 // pred_check
      %p1775 = pneg %p1774
    $region42: #{discriminator_forward.9} parent=5 // pred_check_branch
      %1777 = sbr.rel (%p1775) target = $region44
    $region43: #{discriminator_forward.9} parent=5 // pred_region
      %s1778 = ssub.s32 %s11, 2
      // Predicated region
      $region45: #{discriminator_forward.9} parent=43 // pred_check
        %p1779 = pneg %p106
      $region46: #{discriminator_forward.9} parent=43 // pred_check_branch
        %1781 = sbr.rel (%p1779) target = $region48
      $region47: #{discriminator_forward.9} parent=43 // pred_region
        %p1782 = scmp.lt.s32.totalorder %s22, 1
        %s1783 = scalar_select %p1782, %s22, 1
        %p1784 = scmp.lt.s32.totalorder %s23, 0
        %s1785 = scalar_select %p1784, %s23, 0
        %s1786 = smul.addr %s1783, 2
        %s1787 = sadd.s32 %s1785, %s1786
        %s1788 = scalar_lea.vmem %s2, %s1787
      $region48: #{discriminator_forward.9} parent=43 // pred_fallthru
        _
      // Predicated region
      $region49: #{discriminator_forward.9} parent=43 // pred_check
        %p1789 = pneg %p134
      $region50: #{discriminator_forward.9} parent=43 // pred_check_branch
        %1791 = sbr.rel (%p1789) target = $region52
      $region51: #{discriminator_forward.9} parent=43 // pred_region
        %p1792 = scmp.lt.s32.totalorder %s22, 1
        %s1793 = scalar_select %p1792, %s22, 1
        %p1794 = scmp.lt.s32.totalorder %s23, 0
        %s1795 = scalar_select %p1794, %s23, 0
        %s1796 = sadd.s32 %s1795, %s1793
        %s1797 = scalar_lea.vmem %s3, %s1796
      $region52: #{discriminator_forward.9} parent=43 // pred_fallthru
        _
      // Predicated region
      $region53: #{discriminator_forward.9} parent=43 // pred_check
        %p1798 = pneg %p162
      $region54: #{discriminator_forward.9} parent=43 // pred_check_branch
        %1800 = sbr.rel (%p1798) target = $region56
      $region55: #{discriminator_forward.9} parent=43 // pred_region
        %p1801 = scmp.lt.s32.totalorder %s22, 1
        %s1802 = scalar_select %p1801, %s22, 1
        %p1803 = scmp.lt.s32.totalorder %s23, 0
        %s1804 = scalar_select %p1803, %s23, 0
        %s1805 = sadd.s32 %s1804, %s1802
        %s1806 = scalar_lea.vmem %s4, %s1805
      $region56: #{discriminator_forward.9} parent=43 // pred_fallthru
        _
    $region44: #{discriminator_forward.9} parent=5 // pred_fallthru
      _
  $region6: #{discriminator_forward.9} parent=0 // loop_footer
    %s15 = sadd.s32 1, %s11
  $region7: #{discriminator_forward.9} parent=0 // loop_footer_branch
    %10 = sbr.rel target = $region3
  $region8: #{discriminator_forward.9} parent=0 // loop_exit
    _

// kernel: discriminator_forward.11
$region0: #{discriminator_forward.11}
  #allocation0 [shape = 'u32[]', space=smem, size = 0x4, offset = 0x4, fixed_abs, tag = 'smem constant byte address 0x4 - core index']
  #allocation1 [shape = 'u32[72,128]{1,0:T(1,128)}', space=vmem, size = 0x9000, scoped, tag = 'internal scratch']
  %s0 = inlined_call_operand.vmem [shape: bf16[2,4,4,128], index: 0, kind: input, shape index: {}]
  %s1 = inlined_call_operand.vmem [shape: bf16[16,128,128], index: 1, kind: input, shape index: {}]
  %s2 = inlined_call_operand.vmem [shape: f32[2,1,1,128], index: 2, kind: output, shape index: {}]
  %s3 = sld [smem:[#allocation0]]
  $region41: #{discriminator_forward.11} parent=0
    _
  %s5 = ssub.s32 1, %s3
  %s6 = scalar_select 0, %s5, %s3
  loop: start=0, step=1, limit=4
  $region2: #{discriminator_forward.11} parent=0 // loop_pre_header
    _
  $region3: #{discriminator_forward.11} parent=0 // loop_header
    %s8 = sphi 0, %s12
    %p9 = scmp.ge.s32.totalorder %s8, 4
    %s15 = sphi 0, %s27
    %s16 = sphi 0, %s23
    %s17 = sphi 0, %s15
    %s18 = sphi 0, %s16
    %s19 = sphi 0, %s17
    %s20 = sphi 0, %s18
    %s30 = sphi 0, %s32
    %s33 = sphi 0, %s30
    %s34 = sphi 0, %s33
    %s50 = sphi 0, %s34
    %s56 = sphi 0, %s58
    %s59 = sphi 0, %s56
    %s60 = sphi 0, %s59
    %s76 = sphi 0, %s60
    %s84 = sphi 0, %s86
    %s87 = sphi 0, %s84
    %s88 = sphi 0, %s87
    %s104 = sphi 0, %s88
  $region4: #{discriminator_forward.11} parent=0 // loop_header_branch
    %11 = sbr.rel (%p9) target = $region8
  $region5: #{discriminator_forward.11} parent=0 // loop_body
    %s13 = ssub.s32 %s8, 1
    %s14 = ssub.s32 %s8, 2
    %s21 = sadd.s32 1, %s16
    %p22 = scmp.ge.s32.totalorder %s21, 1
    %s23 = scalar_select %p22, 0, %s21
    %s24 = sadd.s32 1, %s15
    %s25 = scalar_select %p22, %s24, %s15
    %p26 = scmp.ge.s32.totalorder %s25, 2
    %s27 = scalar_select %p26, 0, %s25
    %s28 = ssub.s32 %s15, %s27
    %p29 = scmp.eq.s32.totalorder %s28, 0
    %s31 = sadd.s32 %s30, 1
    %s32 = scalar_select %p29, %s30, %s31
    %p35 = pneg %p29
    %p36 = scmp.eq.s32.totalorder %s8, 1
    %p37 = por %p35, %p36
    %p38 = scmp.ne.s32.totalorder %s30, %s33
    %p39 = scmp.eq.s32.totalorder %s8, 0
    %p40 = por %p38, %p39
    %p41 = scmp.ne.s32.totalorder %s30, %s33
    %p42 = scmp.eq.s32.totalorder %s13, 1
    %p43 = por %p41, %p42
    %p44 = scmp.ne.s32.totalorder %s33, %s34
    %p45 = scmp.eq.s32.totalorder %s13, 0
    %p46 = por %p44, %p45
    %p47 = scmp.ne.s32.totalorder %s33, %s34
    %p48 = scmp.eq.s32.totalorder %s14, 1
    %p49 = por %p47, %p48
    %p51 = scmp.ne.s32.totalorder %s34, %s50
    %p52 = scmp.eq.s32.totalorder %s14, 0
    %p53 = por %p51, %p52
    %s54 = ssub.s32 %s16, %s23
    %p55 = scmp.eq.s32.totalorder %s54, 0
    %s57 = sadd.s32 %s56, 1
    %s58 = scalar_select %p55, %s56, %s57
    %p61 = pneg %p55
    %p62 = scmp.eq.s32.totalorder %s8, 1
    %p63 = por %p61, %p62
    %p64 = scmp.ne.s32.totalorder %s56, %s59
    %p65 = scmp.eq.s32.totalorder %s8, 0
    %p66 = por %p64, %p65
    %p67 = scmp.ne.s32.totalorder %s56, %s59
    %p68 = scmp.eq.s32.totalorder %s13, 1
    %p69 = por %p67, %p68
    %p70 = scmp.ne.s32.totalorder %s59, %s60
    %p71 = scmp.eq.s32.totalorder %s13, 0
    %p72 = por %p70, %p71
    %p73 = scmp.ne.s32.totalorder %s59, %s60
    %p74 = scmp.eq.s32.totalorder %s14, 1
    %p75 = por %p73, %p74
    %p77 = scmp.ne.s32.totalorder %s60, %s76
    %p78 = scmp.eq.s32.totalorder %s14, 0
    %p79 = por %p77, %p78
    %s80 = ssub.s32 %s15, %s27
    %s81 = ssub.s32 %s16, %s23
    %s82 = sor.u32 %s80, %s81
    %p83 = scmp.eq.s32.totalorder %s82, 0
    %s85 = sadd.s32 %s84, 1
    %s86 = scalar_select %p83, %s84, %s85
    %p89 = pneg %p83
    %p90 = scmp.eq.s32.totalorder %s8, 1
    %p91 = por %p89, %p90
    %p92 = scmp.ne.s32.totalorder %s84, %s87
    %p93 = scmp.eq.s32.totalorder %s8, 0
    %p94 = por %p92, %p93
    %p95 = scmp.ne.s32.totalorder %s84, %s87
    %p96 = scmp.eq.s32.totalorder %s13, 1
    %p97 = por %p95, %p96
    %p98 = scmp.ne.s32.totalorder %s87, %s88
    %p99 = scmp.eq.s32.totalorder %s13, 0
    %p100 = por %p98, %p99
    %p101 = scmp.ne.s32.totalorder %s87, %s88
    %p102 = scmp.eq.s32.totalorder %s14, 1
    %p103 = por %p101, %p102
    %p105 = scmp.ne.s32.totalorder %s88, %s104
    %p106 = scmp.eq.s32.totalorder %s14, 0
    %p107 = por %p105, %p106
    %p108 = scmp.le.s32.totalorder 1, %s8
    %p109 = scmp.lt.s32.totalorder %s8, 3
    %p110 = pnand %p108, %p109
    %p111 = pneg %p110
    // Predicated region
    $region9: #{discriminator_forward.11} parent=5 // pred_check
      _
    $region10: #{discriminator_forward.11} parent=5 // pred_check_branch
      %113 = sbr.rel (%p110) target = $region12
    $region11: #{discriminator_forward.11} parent=5 // pred_region
      %s114 = ssub.s32 %s8, 1
      // Predicated region
      $region13: #{discriminator_forward.11} parent=11 // pred_check
        %p115 = pneg %p72
      $region14: #{discriminator_forward.11} parent=11 // pred_check_branch
        %117 = sbr.rel (%p115) target = $region16
      $region15: #{discriminator_forward.11} parent=11 // pred_region
        %p118 = scmp.lt.s32.totalorder %s18, 0
        %s119 = scalar_select %p118, %s18, 0
        %s120 = smul.addr %s119, 4
        %s121 = scalar_lea.vmem %s1, %s120
      $region16: #{discriminator_forward.11} parent=11 // pred_fallthru
        _
    $region12: #{discriminator_forward.11} parent=5 // pred_fallthru
      _
    %p122 = scmp.lt.s32.totalorder %s8, 2
    // Predicated region
    $region17: #{discriminator_forward.11} parent=5 // pred_check
      %p123 = pneg %p122
    $region18: #{discriminator_forward.11} parent=5 // pred_check_branch
      %125 = sbr.rel (%p123) target = $region20
    $region19: #{discriminator_forward.11} parent=5 // pred_region
      // Predicated region
      $region21: #{discriminator_forward.11} parent=19 // pred_check
        %p126 = pneg %p40
      $region22: #{discriminator_forward.11} parent=19 // pred_check_branch
        %128 = sbr.rel (%p126) target = $region24
      $region23: #{discriminator_forward.11} parent=19 // pred_region
        %p129 = scmp.lt.s32.totalorder %s15, 1
        %s130 = scalar_select %p129, %s15, 1
        %s131 = smul.addr %s130, 4
        %s132 = smul.addr %s131, 2
        %s133 = scalar_lea.vmem %s0, %s132
      $region24: #{discriminator_forward.11} parent=19 // pred_fallthru
        _
    $region20: #{discriminator_forward.11} parent=5 // pred_fallthru
      _
    %p134 = scmp.le.s32.totalorder 1, %s8
    %p135 = scmp.lt.s32.totalorder %s8, 3
    %p136 = pnand %p134, %p135
    %p137 = pneg %p136
    // Predicated region
    $region25: #{discriminator_forward.11} parent=5 // pred_check
      _
    $region26: #{discriminator_forward.11} parent=5 // pred_check_branch
      %139 = sbr.rel (%p136) target = $region28
    $region27: #{discriminator_forward.11} parent=5 // pred_region
      %s140 = ssub.s32 %s8, 1
      %p141 = scmp.lt.s32.totalorder %s17, 1
      %s142 = scalar_select %p141, %s17, 1
      %s143 = smul.addr %s142, 4
      %s144 = smul.addr %s143, 2
      %s145 = scalar_lea.vmem %s0, %s144
      %p146 = pneg %p46
      %p147 = pneg %p43
      %p148 = scmp.lt.s32.totalorder %s18, 0
      %s149 = scalar_select %p148, %s18, 0
      %s150 = smul.addr %s149, 4
      %s151 = scalar_lea.vmem %s1, %s150
      %p152 = pneg %p72
      %p153 = pneg %p69
      %p154 = pneg %p100
      %p155 = pneg %p97
      %p156 = scmp.lt.s32.totalorder %s17, 1
      %s157 = scalar_select %p156, %s17, 1
      %p158 = scmp.lt.s32.totalorder %s18, 0
      %s159 = scalar_select %p158, %s18, 0
      %s160 = sadd.s32 %s159, %s157
      %s161 = scalar_lea.vmem %s2, %s160
      %p162 = scmp.lt.s32.totalorder %s17, 1
      %s163 = scalar_select %p162, %s17, 1
      %s164 = smul.addr %s163, 4
      %s165 = smul.addr %s164, 2
      %s166 = scalar_lea.vmem %s0, %s165
      %p167 = scmp.lt.s32.totalorder %s18, 0
      %s168 = scalar_select %p167, %s18, 0
      %s169 = smul.addr %s168, 4
      %s170 = scalar_lea.vmem %s1, %s169
      %p171 = scmp.lt.s32.totalorder %s17, 1
      %s172 = scalar_select %p171, %s17, 1
      %p173 = scmp.lt.s32.totalorder %s18, 0
      %s174 = scalar_select %p173, %s18, 0
      %s175 = sadd.s32 %s174, %s172
      %s176 = scalar_lea.vmem %s2, %s175
      %v177 = vld [vmem:[%s166] sm:$0x1]
      %v178 = vld [vmem:[%s170] sm:$0xf]
      %v179 = vld [vmem:[%s170 + $0x4] sm:$0xf]
      %v180 = vld [vmem:[%s170 + $0x8] sm:$0xf]
      %v181 = vld [vmem:[%s170 + $0xc] sm:$0xf]
      %v182 = vld [vmem:[%s170 + $0x10] sm:$0xf]
      %v183 = vld [vmem:[%s170 + $0x14] sm:$0xf]
      %v184 = vld [vmem:[%s170 + $0x18] sm:$0xf]
      %v185 = vld [vmem:[%s170 + $0x1c] sm:$0xf]
      %v186 = vld [vmem:[%s170 + $0x20] sm:$0xf]
      %v187 = vld [vmem:[%s170 + $0x24] sm:$0xf]
      %v188 = vld [vmem:[%s170 + $0x28] sm:$0xf]
      %v189 = vld [vmem:[%s170 + $0x2c] sm:$0xf]
      %v190 = vld [vmem:[%s170 + $0x30] sm:$0xf]
      %v191 = vld [vmem:[%s170 + $0x34] sm:$0xf]
      %v192 = vld [vmem:[%s170 + $0x38] sm:$0xf]
      %v193 = vld [vmem:[%s170 + $0x3c] sm:$0xf]
      %s194 = scalar_lea.vmem %s170, 64
      %v195 = vld [vmem:[%s194] sm:$0xf]
      %v196 = vld [vmem:[%s194 + $0x4] sm:$0xf]
      %v197 = vld [vmem:[%s194 + $0x8] sm:$0xf]
      %v198 = vld [vmem:[%s194 + $0xc] sm:$0xf]
      %v199 = vld [vmem:[%s194 + $0x10] sm:$0xf]
      %v200 = vld [vmem:[%s194 + $0x14] sm:$0xf]
      %v201 = vld [vmem:[%s194 + $0x18] sm:$0xf]
      %v202 = vld [vmem:[%s194 + $0x1c] sm:$0xf]
      %v203 = vld [vmem:[%s194 + $0x20] sm:$0xf]
      %v204 = vld [vmem:[%s194 + $0x24] sm:$0xf]
      %v205 = vld [vmem:[%s194 + $0x28] sm:$0xf]
      %v206 = vld [vmem:[%s194 + $0x2c] sm:$0xf]
      %v207 = vld [vmem:[%s194 + $0x30] sm:$0xf]
      %v208 = vld [vmem:[%s194 + $0x34] sm:$0xf]
      %v209 = vld [vmem:[%s194 + $0x38] sm:$0xf]
      %v210 = vld [vmem:[%s194 + $0x3c] sm:$0xf]
      %212 = vst [vmem:[#allocation1] ss:$4 sm:$0xff] %v177
      %v213 = vld.sshfl [vmem:[#allocation1] sm:$0xff pattern:$0x73625140]
      %v214 = vshrl.u32 %v213, 16
      %v233 = vunpack.c.l.b16 %v195
      %v234 = vunpack.c.l.b16 %v196
      %v235 = vunpack.c.l.b16 %v197
      %v236 = vunpack.c.l.b16 %v198
      %v237 = vunpack.c.l.b16 %v199
      %v238 = vunpack.c.l.b16 %v200
      %v239 = vunpack.c.l.b16 %v201
      %v240 = vunpack.c.l.b16 %v202
      %v241 = vunpack.c.l.b16 %v203
      %v242 = vunpack.c.l.b16 %v204
      %v243 = vunpack.c.l.b16 %v205
      %v244 = vunpack.c.l.b16 %v206
      %v245 = vunpack.c.l.b16 %v207
      %v246 = vunpack.c.l.b16 %v208
      %v247 = vunpack.c.l.b16 %v209
      %v248 = vunpack.c.l.b16 %v210
      %v249 = vpack.c.b16 %v234, %v233
      %v250 = vpack.c.b16 %v236, %v235
      %v251 = vpack.c.b16 %v238, %v237
      %v252 = vpack.c.b16 %v240, %v239
      %v253 = vpack.c.b16 %v242, %v241
      %v254 = vpack.c.b16 %v244, %v243
      %v255 = vpack.c.b16 %v246, %v245
      %v256 = vpack.c.b16 %v248, %v247
      %265 = vmatpush.bf16.msra.mxu0 %v256
      %266 = vmatpush.bf16.msra.mxu0 %v255
      %267 = vmatpush.bf16.msra.mxu0 %v254
      %268 = vmatpush.bf16.msra.mxu0 %v253
      %269 = vmatpush.bf16.msra.mxu0 %v252
      %270 = vmatpush.bf16.msra.mxu0 %v251
      %271 = vmatpush.bf16.msra.mxu0 %v250
      %272 = vmatpush.bf16.msra.mxu0 %v249
      %273 = vmatmul.bf16.gmra.mxu0 %v214
      %v274 = vpop.f32.mrf.mxu0
      %v275 = vadd.f32 0.0, %v274
      %v276 = vpop.f32.mrf.mxu0
      %277 = vdwg.mxu0
      %v294 = vunpack.c.l.b16 %v178
      %v295 = vunpack.c.l.b16 %v179
      %v296 = vunpack.c.l.b16 %v180
      %v297 = vunpack.c.l.b16 %v181
      %v298 = vunpack.c.l.b16 %v182
      %v299 = vunpack.c.l.b16 %v183
      %v300 = vunpack.c.l.b16 %v184
      %v301 = vunpack.c.l.b16 %v185
      %v302 = vunpack.c.l.b16 %v186
      %v303 = vunpack.c.l.b16 %v187
      %v304 = vunpack.c.l.b16 %v188
      %v305 = vunpack.c.l.b16 %v189
      %v306 = vunpack.c.l.b16 %v190
      %v307 = vunpack.c.l.b16 %v191
      %v308 = vunpack.c.l.b16 %v192
      %v309 = vunpack.c.l.b16 %v193
      %v310 = vpack.c.b16 %v295, %v294
      %v311 = vpack.c.b16 %v297, %v296
      %v312 = vpack.c.b16 %v299, %v298
      %v313 = vpack.c.b16 %v301, %v300
      %v314 = vpack.c.b16 %v303, %v302
      %v315 = vpack.c.b16 %v305, %v304
      %v316 = vpack.c.b16 %v307, %v306
      %v317 = vpack.c.b16 %v309, %v308
      %326 = vmatpush.bf16.msra.mxu0 %v317
      %327 = vmatpush.bf16.msra.mxu0 %v316
      %328 = vmatpush.bf16.msra.mxu0 %v315
      %329 = vmatpush.bf16.msra.mxu0 %v314
      %330 = vmatpush.bf16.msra.mxu0 %v313
      %331 = vmatpush.bf16.msra.mxu0 %v312
      %332 = vmatpush.bf16.msra.mxu0 %v311
      %333 = vmatpush.bf16.msra.mxu0 %v310
      %334 = vmatmul.bf16.gmra.mxu0 %v177
      %v335 = vpop.f32.mrf.mxu0
      %v336 = vadd.f32 %v275, %v335
      %v337 = vpop.f32.mrf.mxu0
      %338 = vdwg.mxu0
      %v339 = vld [vmem:[%s166] sm:$0x2]
      %s340 = scalar_lea.vmem %s170, 128
      %v341 = vld [vmem:[%s340] sm:$0xf]
      %v342 = vld [vmem:[%s340 + $0x4] sm:$0xf]
      %v343 = vld [vmem:[%s340 + $0x8] sm:$0xf]
      %v344 = vld [vmem:[%s340 + $0xc] sm:$0xf]
      %v345 = vld [vmem:[%s340 + $0x10] sm:$0xf]
      %v346 = vld [vmem:[%s340 + $0x14] sm:$0xf]
      %v347 = vld [vmem:[%s340 + $0x18] sm:$0xf]
      %v348 = vld [vmem:[%s340 + $0x1c] sm:$0xf]
      %v349 = vld [vmem:[%s340 + $0x20] sm:$0xf]
      %v350 = vld [vmem:[%s340 + $0x24] sm:$0xf]
      %v351 = vld [vmem:[%s340 + $0x28] sm:$0xf]
      %v352 = vld [vmem:[%s340 + $0x2c] sm:$0xf]
      %v353 = vld [vmem:[%s340 + $0x30] sm:$0xf]
      %v354 = vld [vmem:[%s340 + $0x34] sm:$0xf]
      %v355 = vld [vmem:[%s340 + $0x38] sm:$0xf]
      %v356 = vld [vmem:[%s340 + $0x3c] sm:$0xf]
      %358 = vst [vmem:[#allocation1] ss:$4 sm:$0xff] %v339
      %v359 = vld.sshfl [vmem:[#allocation1] sm:$0xff pattern:$0x73625140]
      %v361 = vrot.slane %v359, 1
      %v379 = vunpack.c.l.b16 %v341
      %v380 = vunpack.c.l.b16 %v342
      %v381 = vunpack.c.l.b16 %v343
      %v382 = vunpack.c.l.b16 %v344
      %v383 = vunpack.c.l.b16 %v345
      %v384 = vunpack.c.l.b16 %v346
      %v385 = vunpack.c.l.b16 %v347
      %v386 = vunpack.c.l.b16 %v348
      %v387 = vunpack.c.l.b16 %v349
      %v388 = vunpack.c.l.b16 %v350
      %v389 = vunpack.c.l.b16 %v351
      %v390 = vunpack.c.l.b16 %v352
      %v391 = vunpack.c.l.b16 %v353
      %v392 = vunpack.c.l.b16 %v354
      %v393 = vunpack.c.l.b16 %v355
      %v394 = vunpack.c.l.b16 %v356
      %v395 = vpack.c.b16 %v380, %v379
      %v396 = vpack.c.b16 %v382, %v381
      %v397 = vpack.c.b16 %v384, %v383
      %v398 = vpack.c.b16 %v386, %v385
      %v399 = vpack.c.b16 %v388, %v387
      %v400 = vpack.c.b16 %v390, %v389
      %v401 = vpack.c.b16 %v392, %v391
      %v402 = vpack.c.b16 %v394, %v393
      %411 = vmatpush.bf16.msra.mxu0 %v402
      %412 = vmatpush.bf16.msra.mxu0 %v401
      %413 = vmatpush.bf16.msra.mxu0 %v400
      %414 = vmatpush.bf16.msra.mxu0 %v399
      %415 = vmatpush.bf16.msra.mxu0 %v398
      %416 = vmatpush.bf16.msra.mxu0 %v397
      %417 = vmatpush.bf16.msra.mxu0 %v396
      %418 = vmatpush.bf16.msra.mxu0 %v395
      %419 = vmatmul.bf16.gmra.mxu0 %v361
      %v420 = vpop.f32.mrf.mxu0
      %v421 = vadd.f32 0.0, %v420
      %v422 = vpop.f32.mrf.mxu0
      %423 = vdwg.mxu0
      %v424 = vadd.f32 %v336, %v421
      %v425 = vld [vmem:[%s166] sm:$0x2]
      %s426 = scalar_lea.vmem %s170, 192
      %v427 = vld [vmem:[%s426] sm:$0xf]
      %v428 = vld [vmem:[%s426 + $0x4] sm:$0xf]
      %v429 = vld [vmem:[%s426 + $0x8] sm:$0xf]
      %v430 = vld [vmem:[%s426 + $0xc] sm:$0xf]
      %v431 = vld [vmem:[%s426 + $0x10] sm:$0xf]
      %v432 = vld [vmem:[%s426 + $0x14] sm:$0xf]
      %v433 = vld [vmem:[%s426 + $0x18] sm:$0xf]
      %v434 = vld [vmem:[%s426 + $0x1c] sm:$0xf]
      %v435 = vld [vmem:[%s426 + $0x20] sm:$0xf]
      %v436 = vld [vmem:[%s426 + $0x24] sm:$0xf]
      %v437 = vld [vmem:[%s426 + $0x28] sm:$0xf]
      %v438 = vld [vmem:[%s426 + $0x2c] sm:$0xf]
      %v439 = vld [vmem:[%s426 + $0x30] sm:$0xf]
      %v440 = vld [vmem:[%s426 + $0x34] sm:$0xf]
      %v441 = vld [vmem:[%s426 + $0x38] sm:$0xf]
      %v442 = vld [vmem:[%s426 + $0x3c] sm:$0xf]
      %444 = vst [vmem:[#allocation1] ss:$4 sm:$0xff] %v425
      %v445 = vld.sshfl [vmem:[#allocation1] sm:$0xff pattern:$0x73625140]
      %v446 = vshrl.u32 %v445, 16
      %v448 = vrot.slane %v446, 1
      %v466 = vunpack.c.l.b16 %v427
      %v467 = vunpack.c.l.b16 %v428
      %v468 = vunpack.c.l.b16 %v429
      %v469 = vunpack.c.l.b16 %v430
      %v470 = vunpack.c.l.b16 %v431
      %v471 = vunpack.c.l.b16 %v432
      %v472 = vunpack.c.l.b16 %v433
      %v473 = vunpack.c.l.b16 %v434
      %v474 = vunpack.c.l.b16 %v435
      %v475 = vunpack.c.l.b16 %v436
      %v476 = vunpack.c.l.b16 %v437
      %v477 = vunpack.c.l.b16 %v438
      %v478 = vunpack.c.l.b16 %v439
      %v479 = vunpack.c.l.b16 %v440
      %v480 = vunpack.c.l.b16 %v441
      %v481 = vunpack.c.l.b16 %v442
      %v482 = vpack.c.b16 %v467, %v466
      %v483 = vpack.c.b16 %v469, %v468
      %v484 = vpack.c.b16 %v471, %v470
      %v485 = vpack.c.b16 %v473, %v472
      %v486 = vpack.c.b16 %v475, %v474
      %v487 = vpack.c.b16 %v477, %v476
      %v488 = vpack.c.b16 %v479, %v478
      %v489 = vpack.c.b16 %v481, %v480
      %498 = vmatpush.bf16.msra.mxu0 %v489
      %499 = vmatpush.bf16.msra.mxu0 %v488
      %500 = vmatpush.bf16.msra.mxu0 %v487
      %501 = vmatpush.bf16.msra.mxu0 %v486
      %502 = vmatpush.bf16.msra.mxu0 %v485
      %503 = vmatpush.bf16.msra.mxu0 %v484
      %504 = vmatpush.bf16.msra.mxu0 %v483
      %505 = vmatpush.bf16.msra.mxu0 %v482
      %506 = vmatmul.bf16.gmra.mxu0 %v448
      %v507 = vpop.f32.mrf.mxu0
      %v508 = vadd.f32 0.0, %v507
      %v509 = vpop.f32.mrf.mxu0
      %510 = vdwg.mxu0
      %v511 = vadd.f32 %v424, %v508
      %s512 = scalar_lea.vmem %s166, 2
      %v513 = vld [vmem:[%s512] sm:$0x1]
      %s514 = scalar_lea.vmem %s170, 256
      %v515 = vld [vmem:[%s514] sm:$0xf]
      %v516 = vld [vmem:[%s514 + $0x4] sm:$0xf]
      %v517 = vld [vmem:[%s514 + $0x8] sm:$0xf]
      %v518 = vld [vmem:[%s514 + $0xc] sm:$0xf]
      %v519 = vld [vmem:[%s514 + $0x10] sm:$0xf]
      %v520 = vld [vmem:[%s514 + $0x14] sm:$0xf]
      %v521 = vld [vmem:[%s514 + $0x18] sm:$0xf]
      %v522 = vld [vmem:[%s514 + $0x1c] sm:$0xf]
      %v523 = vld [vmem:[%s514 + $0x20] sm:$0xf]
      %v524 = vld [vmem:[%s514 + $0x24] sm:$0xf]
      %v525 = vld [vmem:[%s514 + $0x28] sm:$0xf]
      %v526 = vld [vmem:[%s514 + $0x2c] sm:$0xf]
      %v527 = vld [vmem:[%s514 + $0x30] sm:$0xf]
      %v528 = vld [vmem:[%s514 + $0x34] sm:$0xf]
      %v529 = vld [vmem:[%s514 + $0x38] sm:$0xf]
      %v530 = vld [vmem:[%s514 + $0x3c] sm:$0xf]
      %v547 = vunpack.c.l.b16 %v515
      %v548 = vunpack.c.l.b16 %v516
      %v549 = vunpack.c.l.b16 %v517
      %v550 = vunpack.c.l.b16 %v518
      %v551 = vunpack.c.l.b16 %v519
      %v552 = vunpack.c.l.b16 %v520
      %v553 = vunpack.c.l.b16 %v521
      %v554 = vunpack.c.l.b16 %v522
      %v555 = vunpack.c.l.b16 %v523
      %v556 = vunpack.c.l.b16 %v524
      %v557 = vunpack.c.l.b16 %v525
      %v558 = vunpack.c.l.b16 %v526
      %v559 = vunpack.c.l.b16 %v527
      %v560 = vunpack.c.l.b16 %v528
      %v561 = vunpack.c.l.b16 %v529
      %v562 = vunpack.c.l.b16 %v530
      %v563 = vpack.c.b16 %v548, %v547
      %v564 = vpack.c.b16 %v550, %v549
      %v565 = vpack.c.b16 %v552, %v551
      %v566 = vpack.c.b16 %v554, %v553
      %v567 = vpack.c.b16 %v556, %v555
      %v568 = vpack.c.b16 %v558, %v557
      %v569 = vpack.c.b16 %v560, %v559
      %v570 = vpack.c.b16 %v562, %v561
      %579 = vmatpush.bf16.msra.mxu0 %v570
      %580 = vmatpush.bf16.msra.mxu0 %v569
      %581 = vmatpush.bf16.msra.mxu0 %v568
      %582 = vmatpush.bf16.msra.mxu0 %v567
      %583 = vmatpush.bf16.msra.mxu0 %v566
      %584 = vmatpush.bf16.msra.mxu0 %v565
      %585 = vmatpush.bf16.msra.mxu0 %v564
      %586 = vmatpush.bf16.msra.mxu0 %v563
      %587 = vmatmul.bf16.gmra.mxu0 %v513
      %v588 = vpop.f32.mrf.mxu0
      %v589 = vadd.f32 0.0, %v588
      %v590 = vpop.f32.mrf.mxu0
      %591 = vdwg.mxu0
      %v592 = vadd.f32 %v511, %v589
      %s593 = scalar_lea.vmem %s170, 320
      %v594 = vld [vmem:[%s593] sm:$0xf]
      %v595 = vld [vmem:[%s593 + $0x4] sm:$0xf]
      %v596 = vld [vmem:[%s593 + $0x8] sm:$0xf]
      %v597 = vld [vmem:[%s593 + $0xc] sm:$0xf]
      %v598 = vld [vmem:[%s593 + $0x10] sm:$0xf]
      %v599 = vld [vmem:[%s593 + $0x14] sm:$0xf]
      %v600 = vld [vmem:[%s593 + $0x18] sm:$0xf]
      %v601 = vld [vmem:[%s593 + $0x1c] sm:$0xf]
      %v602 = vld [vmem:[%s593 + $0x20] sm:$0xf]
      %v603 = vld [vmem:[%s593 + $0x24] sm:$0xf]
      %v604 = vld [vmem:[%s593 + $0x28] sm:$0xf]
      %v605 = vld [vmem:[%s593 + $0x2c] sm:$0xf]
      %v606 = vld [vmem:[%s593 + $0x30] sm:$0xf]
      %v607 = vld [vmem:[%s593 + $0x34] sm:$0xf]
      %v608 = vld [vmem:[%s593 + $0x38] sm:$0xf]
      %v609 = vld [vmem:[%s593 + $0x3c] sm:$0xf]
      %611 = vst [vmem:[#allocation1] ss:$4 sm:$0xff] %v513
      %v612 = vld.sshfl [vmem:[#allocation1] sm:$0xff pattern:$0x73625140]
      %v613 = vshrl.u32 %v612, 16
      %v632 = vunpack.c.l.b16 %v594
      %v633 = vunpack.c.l.b16 %v595
      %v634 = vunpack.c.l.b16 %v596
      %v635 = vunpack.c.l.b16 %v597
      %v636 = vunpack.c.l.b16 %v598
      %v637 = vunpack.c.l.b16 %v599
      %v638 = vunpack.c.l.b16 %v600
      %v639 = vunpack.c.l.b16 %v601
      %v640 = vunpack.c.l.b16 %v602
      %v641 = vunpack.c.l.b16 %v603
      %v642 = vunpack.c.l.b16 %v604
      %v643 = vunpack.c.l.b16 %v605
      %v644 = vunpack.c.l.b16 %v606
      %v645 = vunpack.c.l.b16 %v607
      %v646 = vunpack.c.l.b16 %v608
      %v647 = vunpack.c.l.b16 %v609
      %v648 = vpack.c.b16 %v633, %v632
      %v649 = vpack.c.b16 %v635, %v634
      %v650 = vpack.c.b16 %v637, %v636
      %v651 = vpack.c.b16 %v639, %v638
      %v652 = vpack.c.b16 %v641, %v640
      %v653 = vpack.c.b16 %v643, %v642
      %v654 = vpack.c.b16 %v645, %v644
      %v655 = vpack.c.b16 %v647, %v646
      %664 = vmatpush.bf16.msra.mxu0 %v655
      %665 = vmatpush.bf16.msra.mxu0 %v654
      %666 = vmatpush.bf16.msra.mxu0 %v653
      %667 = vmatpush.bf16.msra.mxu0 %v652
      %668 = vmatpush.bf16.msra.mxu0 %v651
      %669 = vmatpush.bf16.msra.mxu0 %v650
      %670 = vmatpush.bf16.msra.mxu0 %v649
      %671 = vmatpush.bf16.msra.mxu0 %v648
      %672 = vmatmul.bf16.gmra.mxu0 %v613
      %v673 = vpop.f32.mrf.mxu0
      %v674 = vadd.f32 0.0, %v673
      %v675 = vpop.f32.mrf.mxu0
      %676 = vdwg.mxu0
      %v677 = vadd.f32 %v592, %v674
      %v678 = vld [vmem:[%s512] sm:$0x2]
      %s679 = scalar_lea.vmem %s170, 384
      %v680 = vld [vmem:[%s679] sm:$0xf]
      %v681 = vld [vmem:[%s679 + $0x4] sm:$0xf]
      %v682 = vld [vmem:[%s679 + $0x8] sm:$0xf]
      %v683 = vld [vmem:[%s679 + $0xc] sm:$0xf]
      %v684 = vld [vmem:[%s679 + $0x10] sm:$0xf]
      %v685 = vld [vmem:[%s679 + $0x14] sm:$0xf]
      %v686 = vld [vmem:[%s679 + $0x18] sm:$0xf]
      %v687 = vld [vmem:[%s679 + $0x1c] sm:$0xf]
      %v688 = vld [vmem:[%s679 + $0x20] sm:$0xf]
      %v689 = vld [vmem:[%s679 + $0x24] sm:$0xf]
      %v690 = vld [vmem:[%s679 + $0x28] sm:$0xf]
      %v691 = vld [vmem:[%s679 + $0x2c] sm:$0xf]
      %v692 = vld [vmem:[%s679 + $0x30] sm:$0xf]
      %v693 = vld [vmem:[%s679 + $0x34] sm:$0xf]
      %v694 = vld [vmem:[%s679 + $0x38] sm:$0xf]
      %v695 = vld [vmem:[%s679 + $0x3c] sm:$0xf]
      %697 = vst [vmem:[#allocation1] ss:$4 sm:$0xff] %v678
      %v698 = vld.sshfl [vmem:[#allocation1] sm:$0xff pattern:$0x73625140]
      %v700 = vrot.slane %v698, 1
      %v718 = vunpack.c.l.b16 %v680
      %v719 = vunpack.c.l.b16 %v681
      %v720 = vunpack.c.l.b16 %v682
      %v721 = vunpack.c.l.b16 %v683
      %v722 = vunpack.c.l.b16 %v684
      %v723 = vunpack.c.l.b16 %v685
      %v724 = vunpack.c.l.b16 %v686
      %v725 = vunpack.c.l.b16 %v687
      %v726 = vunpack.c.l.b16 %v688
      %v727 = vunpack.c.l.b16 %v689
      %v728 = vunpack.c.l.b16 %v690
      %v729 = vunpack.c.l.b16 %v691
      %v730 = vunpack.c.l.b16 %v692
      %v731 = vunpack.c.l.b16 %v693
      %v732 = vunpack.c.l.b16 %v694
      %v733 = vunpack.c.l.b16 %v695
      %v734 = vpack.c.b16 %v719, %v718
      %v735 = vpack.c.b16 %v721, %v720
      %v736 = vpack.c.b16 %v723, %v722
      %v737 = vpack.c.b16 %v725, %v724
      %v738 = vpack.c.b16 %v727, %v726
      %v739 = vpack.c.b16 %v729, %v728
      %v740 = vpack.c.b16 %v731, %v730
      %v741 = vpack.c.b16 %v733, %v732
      %750 = vmatpush.bf16.msra.mxu0 %v741
      %751 = vmatpush.bf16.msra.mxu0 %v740
      %752 = vmatpush.bf16.msra.mxu0 %v739
      %753 = vmatpush.bf16.msra.mxu0 %v738
      %754 = vmatpush.bf16.msra.mxu0 %v737
      %755 = vmatpush.bf16.msra.mxu0 %v736
      %756 = vmatpush.bf16.msra.mxu0 %v735
      %757 = vmatpush.bf16.msra.mxu0 %v734
      %758 = vmatmul.bf16.gmra.mxu0 %v700
      %v759 = vpop.f32.mrf.mxu0
      %v760 = vadd.f32 0.0, %v759
      %v761 = vpop.f32.mrf.mxu0
      %762 = vdwg.mxu0
      %v763 = vadd.f32 %v677, %v760
      %v764 = vld [vmem:[%s512] sm:$0x2]
      %s765 = scalar_lea.vmem %s170, 448
      %v766 = vld [vmem:[%s765] sm:$0xf]
      %v767 = vld [vmem:[%s765 + $0x4] sm:$0xf]
      %v768 = vld [vmem:[%s765 + $0x8] sm:$0xf]
      %v769 = vld [vmem:[%s765 + $0xc] sm:$0xf]
      %v770 = vld [vmem:[%s765 + $0x10] sm:$0xf]
      %v771 = vld [vmem:[%s765 + $0x14] sm:$0xf]
      %v772 = vld [vmem:[%s765 + $0x18] sm:$0xf]
      %v773 = vld [vmem:[%s765 + $0x1c] sm:$0xf]
      %v774 = vld [vmem:[%s765 + $0x20] sm:$0xf]
      %v775 = vld [vmem:[%s765 + $0x24] sm:$0xf]
      %v776 = vld [vmem:[%s765 + $0x28] sm:$0xf]
      %v777 = vld [vmem:[%s765 + $0x2c] sm:$0xf]
      %v778 = vld [vmem:[%s765 + $0x30] sm:$0xf]
      %v779 = vld [vmem:[%s765 + $0x34] sm:$0xf]
      %v780 = vld [vmem:[%s765 + $0x38] sm:$0xf]
      %v781 = vld [vmem:[%s765 + $0x3c] sm:$0xf]
      %783 = vst [vmem:[#allocation1] ss:$4 sm:$0xff] %v764
      %v784 = vld.sshfl [vmem:[#allocation1] sm:$0xff pattern:$0x73625140]
      %v785 = vshrl.u32 %v784, 16
      %v787 = vrot.slane %v785, 1
      %v805 = vunpack.c.l.b16 %v766
      %v806 = vunpack.c.l.b16 %v767
      %v807 = vunpack.c.l.b16 %v768
      %v808 = vunpack.c.l.b16 %v769
      %v809 = vunpack.c.l.b16 %v770
      %v810 = vunpack.c.l.b16 %v771
      %v811 = vunpack.c.l.b16 %v772
      %v812 = vunpack.c.l.b16 %v773
      %v813 = vunpack.c.l.b16 %v774
      %v814 = vunpack.c.l.b16 %v775
      %v815 = vunpack.c.l.b16 %v776
      %v816 = vunpack.c.l.b16 %v777
      %v817 = vunpack.c.l.b16 %v778
      %v818 = vunpack.c.l.b16 %v779
      %v819 = vunpack.c.l.b16 %v780
      %v820 = vunpack.c.l.b16 %v781
      %v821 = vpack.c.b16 %v806, %v805
      %v822 = vpack.c.b16 %v808, %v807
      %v823 = vpack.c.b16 %v810, %v809
      %v824 = vpack.c.b16 %v812, %v811
      %v825 = vpack.c.b16 %v814, %v813
      %v826 = vpack.c.b16 %v816, %v815
      %v827 = vpack.c.b16 %v818, %v817
      %v828 = vpack.c.b16 %v820, %v819
      %837 = vmatpush.bf16.msra.mxu0 %v828
      %838 = vmatpush.bf16.msra.mxu0 %v827
      %839 = vmatpush.bf16.msra.mxu0 %v826
      %840 = vmatpush.bf16.msra.mxu0 %v825
      %841 = vmatpush.bf16.msra.mxu0 %v824
      %842 = vmatpush.bf16.msra.mxu0 %v823
      %843 = vmatpush.bf16.msra.mxu0 %v822
      %844 = vmatpush.bf16.msra.mxu0 %v821
      %845 = vmatmul.bf16.gmra.mxu0 %v787
      %v846 = vpop.f32.mrf.mxu0
      %v847 = vadd.f32 0.0, %v846
      %v848 = vpop.f32.mrf.mxu0
      %849 = vdwg.mxu0
      %v850 = vadd.f32 %v763, %v847
      %s851 = scalar_lea.vmem %s166, 4
      %v852 = vld [vmem:[%s851] sm:$0x1]
      %s853 = scalar_lea.vmem %s170, 512
      %v854 = vld [vmem:[%s853] sm:$0xf]
      %v855 = vld [vmem:[%s853 + $0x4] sm:$0xf]
      %v856 = vld [vmem:[%s853 + $0x8] sm:$0xf]
      %v857 = vld [vmem:[%s853 + $0xc] sm:$0xf]
      %v858 = vld [vmem:[%s853 + $0x10] sm:$0xf]
      %v859 = vld [vmem:[%s853 + $0x14] sm:$0xf]
      %v860 = vld [vmem:[%s853 + $0x18] sm:$0xf]
      %v861 = vld [vmem:[%s853 + $0x1c] sm:$0xf]
      %v862 = vld [vmem:[%s853 + $0x20] sm:$0xf]
      %v863 = vld [vmem:[%s853 + $0x24] sm:$0xf]
      %v864 = vld [vmem:[%s853 + $0x28] sm:$0xf]
      %v865 = vld [vmem:[%s853 + $0x2c] sm:$0xf]
      %v866 = vld [vmem:[%s853 + $0x30] sm:$0xf]
      %v867 = vld [vmem:[%s853 + $0x34] sm:$0xf]
      %v868 = vld [vmem:[%s853 + $0x38] sm:$0xf]
      %v869 = vld [vmem:[%s853 + $0x3c] sm:$0xf]
      %v886 = vunpack.c.l.b16 %v854
      %v887 = vunpack.c.l.b16 %v855
      %v888 = vunpack.c.l.b16 %v856
      %v889 = vunpack.c.l.b16 %v857
      %v890 = vunpack.c.l.b16 %v858
      %v891 = vunpack.c.l.b16 %v859
      %v892 = vunpack.c.l.b16 %v860
      %v893 = vunpack.c.l.b16 %v861
      %v894 = vunpack.c.l.b16 %v862
      %v895 = vunpack.c.l.b16 %v863
      %v896 = vunpack.c.l.b16 %v864
      %v897 = vunpack.c.l.b16 %v865
      %v898 = vunpack.c.l.b16 %v866
      %v899 = vunpack.c.l.b16 %v867
      %v900 = vunpack.c.l.b16 %v868
      %v901 = vunpack.c.l.b16 %v869
      %v902 = vpack.c.b16 %v887, %v886
      %v903 = vpack.c.b16 %v889, %v888
      %v904 = vpack.c.b16 %v891, %v890
      %v905 = vpack.c.b16 %v893, %v892
      %v906 = vpack.c.b16 %v895, %v894
      %v907 = vpack.c.b16 %v897, %v896
      %v908 = vpack.c.b16 %v899, %v898
      %v909 = vpack.c.b16 %v901, %v900
      %918 = vmatpush.bf16.msra.mxu0 %v909
      %919 = vmatpush.bf16.msra.mxu0 %v908
      %920 = vmatpush.bf16.msra.mxu0 %v907
      %921 = vmatpush.bf16.msra.mxu0 %v906
      %922 = vmatpush.bf16.msra.mxu0 %v905
      %923 = vmatpush.bf16.msra.mxu0 %v904
      %924 = vmatpush.bf16.msra.mxu0 %v903
      %925 = vmatpush.bf16.msra.mxu0 %v902
      %926 = vmatmul.bf16.gmra.mxu0 %v852
      %v927 = vpop.f32.mrf.mxu0
      %v928 = vadd.f32 0.0, %v927
      %v929 = vpop.f32.mrf.mxu0
      %930 = vdwg.mxu0
      %v931 = vadd.f32 %v850, %v928
      %s932 = scalar_lea.vmem %s170, 576
      %v933 = vld [vmem:[%s932] sm:$0xf]
      %v934 = vld [vmem:[%s932 + $0x4] sm:$0xf]
      %v935 = vld [vmem:[%s932 + $0x8] sm:$0xf]
      %v936 = vld [vmem:[%s932 + $0xc] sm:$0xf]
      %v937 = vld [vmem:[%s932 + $0x10] sm:$0xf]
      %v938 = vld [vmem:[%s932 + $0x14] sm:$0xf]
      %v939 = vld [vmem:[%s932 + $0x18] sm:$0xf]
      %v940 = vld [vmem:[%s932 + $0x1c] sm:$0xf]
      %v941 = vld [vmem:[%s932 + $0x20] sm:$0xf]
      %v942 = vld [vmem:[%s932 + $0x24] sm:$0xf]
      %v943 = vld [vmem:[%s932 + $0x28] sm:$0xf]
      %v944 = vld [vmem:[%s932 + $0x2c] sm:$0xf]
      %v945 = vld [vmem:[%s932 + $0x30] sm:$0xf]
      %v946 = vld [vmem:[%s932 + $0x34] sm:$0xf]
      %v947 = vld [vmem:[%s932 + $0x38] sm:$0xf]
      %v948 = vld [vmem:[%s932 + $0x3c] sm:$0xf]
      %950 = vst [vmem:[#allocation1] ss:$4 sm:$0xff] %v852
      %v951 = vld.sshfl [vmem:[#allocation1] sm:$0xff pattern:$0x73625140]
      %v952 = vshrl.u32 %v951, 16
      %v971 = vunpack.c.l.b16 %v933
      %v972 = vunpack.c.l.b16 %v934
      %v973 = vunpack.c.l.b16 %v935
      %v974 = vunpack.c.l.b16 %v936
      %v975 = vunpack.c.l.b16 %v937
      %v976 = vunpack.c.l.b16 %v938
      %v977 = vunpack.c.l.b16 %v939
      %v978 = vunpack.c.l.b16 %v940
      %v979 = vunpack.c.l.b16 %v941
      %v980 = vunpack.c.l.b16 %v942
      %v981 = vunpack.c.l.b16 %v943
      %v982 = vunpack.c.l.b16 %v944
      %v983 = vunpack.c.l.b16 %v945
      %v984 = vunpack.c.l.b16 %v946
      %v985 = vunpack.c.l.b16 %v947
      %v986 = vunpack.c.l.b16 %v948
      %v987 = vpack.c.b16 %v972, %v971
      %v988 = vpack.c.b16 %v974, %v973
      %v989 = vpack.c.b16 %v976, %v975
      %v990 = vpack.c.b16 %v978, %v977
      %v991 = vpack.c.b16 %v980, %v979
      %v992 = vpack.c.b16 %v982, %v981
      %v993 = vpack.c.b16 %v984, %v983
      %v994 = vpack.c.b16 %v986, %v985
      %1003 = vmatpush.bf16.msra.mxu0 %v994
      %1004 = vmatpush.bf16.msra.mxu0 %v993
      %1005 = vmatpush.bf16.msra.mxu0 %v992
      %1006 = vmatpush.bf16.msra.mxu0 %v991
      %1007 = vmatpush.bf16.msra.mxu0 %v990
      %1008 = vmatpush.bf16.msra.mxu0 %v989
      %1009 = vmatpush.bf16.msra.mxu0 %v988
      %1010 = vmatpush.bf16.msra.mxu0 %v987
      %1011 = vmatmul.bf16.gmra.mxu0 %v952
      %v1012 = vpop.f32.mrf.mxu0
      %v1013 = vadd.f32 0.0, %v1012
      %v1014 = vpop.f32.mrf.mxu0
      %1015 = vdwg.mxu0
      %v1016 = vadd.f32 %v931, %v1013
      %v1017 = vld [vmem:[%s851] sm:$0x2]
      %s1018 = scalar_lea.vmem %s170, 640
      %v1019 = vld [vmem:[%s1018] sm:$0xf]
      %v1020 = vld [vmem:[%s1018 + $0x4] sm:$0xf]
      %v1021 = vld [vmem:[%s1018 + $0x8] sm:$0xf]
      %v1022 = vld [vmem:[%s1018 + $0xc] sm:$0xf]
      %v1023 = vld [vmem:[%s1018 + $0x10] sm:$0xf]
      %v1024 = vld [vmem:[%s1018 + $0x14] sm:$0xf]
      %v1025 = vld [vmem:[%s1018 + $0x18] sm:$0xf]
      %v1026 = vld [vmem:[%s1018 + $0x1c] sm:$0xf]
      %v1027 = vld [vmem:[%s1018 + $0x20] sm:$0xf]
      %v1028 = vld [vmem:[%s1018 + $0x24] sm:$0xf]
      %v1029 = vld [vmem:[%s1018 + $0x28] sm:$0xf]
      %v1030 = vld [vmem:[%s1018 + $0x2c] sm:$0xf]
      %v1031 = vld [vmem:[%s1018 + $0x30] sm:$0xf]
      %v1032 = vld [vmem:[%s1018 + $0x34] sm:$0xf]
      %v1033 = vld [vmem:[%s1018 + $0x38] sm:$0xf]
      %v1034 = vld [vmem:[%s1018 + $0x3c] sm:$0xf]
      %1036 = vst [vmem:[#allocation1] ss:$4 sm:$0xff] %v1017
      %v1037 = vld.sshfl [vmem:[#allocation1] sm:$0xff pattern:$0x73625140]
      %v1039 = vrot.slane %v1037, 1
      %v1057 = vunpack.c.l.b16 %v1019
      %v1058 = vunpack.c.l.b16 %v1020
      %v1059 = vunpack.c.l.b16 %v1021
      %v1060 = vunpack.c.l.b16 %v1022
      %v1061 = vunpack.c.l.b16 %v1023
      %v1062 = vunpack.c.l.b16 %v1024
      %v1063 = vunpack.c.l.b16 %v1025
      %v1064 = vunpack.c.l.b16 %v1026
      %v1065 = vunpack.c.l.b16 %v1027
      %v1066 = vunpack.c.l.b16 %v1028
      %v1067 = vunpack.c.l.b16 %v1029
      %v1068 = vunpack.c.l.b16 %v1030
      %v1069 = vunpack.c.l.b16 %v1031
      %v1070 = vunpack.c.l.b16 %v1032
      %v1071 = vunpack.c.l.b16 %v1033
      %v1072 = vunpack.c.l.b16 %v1034
      %v1073 = vpack.c.b16 %v1058, %v1057
      %v1074 = vpack.c.b16 %v1060, %v1059
      %v1075 = vpack.c.b16 %v1062, %v1061
      %v1076 = vpack.c.b16 %v1064, %v1063
      %v1077 = vpack.c.b16 %v1066, %v1065
      %v1078 = vpack.c.b16 %v1068, %v1067
      %v1079 = vpack.c.b16 %v1070, %v1069
      %v1080 = vpack.c.b16 %v1072, %v1071
      %1089 = vmatpush.bf16.msra.mxu0 %v1080
      %1090 = vmatpush.bf16.msra.mxu0 %v1079
      %1091 = vmatpush.bf16.msra.mxu0 %v1078
      %1092 = vmatpush.bf16.msra.mxu0 %v1077
      %1093 = vmatpush.bf16.msra.mxu0 %v1076
      %1094 = vmatpush.bf16.msra.mxu0 %v1075
      %1095 = vmatpush.bf16.msra.mxu0 %v1074
      %1096 = vmatpush.bf16.msra.mxu0 %v1073
      %1097 = vmatmul.bf16.gmra.mxu0 %v1039
      %v1098 = vpop.f32.mrf.mxu0
      %v1099 = vadd.f32 0.0, %v1098
      %v1100 = vpop.f32.mrf.mxu0
      %1101 = vdwg.mxu0
      %v1102 = vadd.f32 %v1016, %v1099
      %v1103 = vld [vmem:[%s851] sm:$0x2]
      %s1104 = scalar_lea.vmem %s170, 704
      %v1105 = vld [vmem:[%s1104] sm:$0xf]
      %v1106 = vld [vmem:[%s1104 + $0x4] sm:$0xf]
      %v1107 = vld [vmem:[%s1104 + $0x8] sm:$0xf]
      %v1108 = vld [vmem:[%s1104 + $0xc] sm:$0xf]
      %v1109 = vld [vmem:[%s1104 + $0x10] sm:$0xf]
      %v1110 = vld [vmem:[%s1104 + $0x14] sm:$0xf]
      %v1111 = vld [vmem:[%s1104 + $0x18] sm:$0xf]
      %v1112 = vld [vmem:[%s1104 + $0x1c] sm:$0xf]
      %v1113 = vld [vmem:[%s1104 + $0x20] sm:$0xf]
      %v1114 = vld [vmem:[%s1104 + $0x24] sm:$0xf]
      %v1115 = vld [vmem:[%s1104 + $0x28] sm:$0xf]
      %v1116 = vld [vmem:[%s1104 + $0x2c] sm:$0xf]
      %v1117 = vld [vmem:[%s1104 + $0x30] sm:$0xf]
      %v1118 = vld [vmem:[%s1104 + $0x34] sm:$0xf]
      %v1119 = vld [vmem:[%s1104 + $0x38] sm:$0xf]
      %v1120 = vld [vmem:[%s1104 + $0x3c] sm:$0xf]
      %1122 = vst [vmem:[#allocation1] ss:$4 sm:$0xff] %v1103
      %v1123 = vld.sshfl [vmem:[#allocation1] sm:$0xff pattern:$0x73625140]
      %v1124 = vshrl.u32 %v1123, 16
      %v1126 = vrot.slane %v1124, 1
      %v1144 = vunpack.c.l.b16 %v1105
      %v1145 = vunpack.c.l.b16 %v1106
      %v1146 = vunpack.c.l.b16 %v1107
      %v1147 = vunpack.c.l.b16 %v1108
      %v1148 = vunpack.c.l.b16 %v1109
      %v1149 = vunpack.c.l.b16 %v1110
      %v1150 = vunpack.c.l.b16 %v1111
      %v1151 = vunpack.c.l.b16 %v1112
      %v1152 = vunpack.c.l.b16 %v1113
      %v1153 = vunpack.c.l.b16 %v1114
      %v1154 = vunpack.c.l.b16 %v1115
      %v1155 = vunpack.c.l.b16 %v1116
      %v1156 = vunpack.c.l.b16 %v1117
      %v1157 = vunpack.c.l.b16 %v1118
      %v1158 = vunpack.c.l.b16 %v1119
      %v1159 = vunpack.c.l.b16 %v1120
      %v1160 = vpack.c.b16 %v1145, %v1144
      %v1161 = vpack.c.b16 %v1147, %v1146
      %v1162 = vpack.c.b16 %v1149, %v1148
      %v1163 = vpack.c.b16 %v1151, %v1150
      %v1164 = vpack.c.b16 %v1153, %v1152
      %v1165 = vpack.c.b16 %v1155, %v1154
      %v1166 = vpack.c.b16 %v1157, %v1156
      %v1167 = vpack.c.b16 %v1159, %v1158
      %1176 = vmatpush.bf16.msra.mxu0 %v1167
      %1177 = vmatpush.bf16.msra.mxu0 %v1166
      %1178 = vmatpush.bf16.msra.mxu0 %v1165
      %1179 = vmatpush.bf16.msra.mxu0 %v1164
      %1180 = vmatpush.bf16.msra.mxu0 %v1163
      %1181 = vmatpush.bf16.msra.mxu0 %v1162
      %1182 = vmatpush.bf16.msra.mxu0 %v1161
      %1183 = vmatpush.bf16.msra.mxu0 %v1160
      %1184 = vmatmul.bf16.gmra.mxu0 %v1126
      %v1185 = vpop.f32.mrf.mxu0
      %v1186 = vadd.f32 0.0, %v1185
      %v1187 = vpop.f32.mrf.mxu0
      %1188 = vdwg.mxu0
      %v1189 = vadd.f32 %v1102, %v1186
      %s1190 = scalar_lea.vmem %s166, 6
      %v1191 = vld [vmem:[%s1190] sm:$0x1]
      %s1192 = scalar_lea.vmem %s170, 768
      %v1193 = vld [vmem:[%s1192] sm:$0xf]
      %v1194 = vld [vmem:[%s1192 + $0x4] sm:$0xf]
      %v1195 = vld [vmem:[%s1192 + $0x8] sm:$0xf]
      %v1196 = vld [vmem:[%s1192 + $0xc] sm:$0xf]
      %v1197 = vld [vmem:[%s1192 + $0x10] sm:$0xf]
      %v1198 = vld [vmem:[%s1192 + $0x14] sm:$0xf]
      %v1199 = vld [vmem:[%s1192 + $0x18] sm:$0xf]
      %v1200 = vld [vmem:[%s1192 + $0x1c] sm:$0xf]
      %v1201 = vld [vmem:[%s1192 + $0x20] sm:$0xf]
      %v1202 = vld [vmem:[%s1192 + $0x24] sm:$0xf]
      %v1203 = vld [vmem:[%s1192 + $0x28] sm:$0xf]
      %v1204 = vld [vmem:[%s1192 + $0x2c] sm:$0xf]
      %v1205 = vld [vmem:[%s1192 + $0x30] sm:$0xf]
      %v1206 = vld [vmem:[%s1192 + $0x34] sm:$0xf]
      %v1207 = vld [vmem:[%s1192 + $0x38] sm:$0xf]
      %v1208 = vld [vmem:[%s1192 + $0x3c] sm:$0xf]
      %v1225 = vunpack.c.l.b16 %v1193
      %v1226 = vunpack.c.l.b16 %v1194
      %v1227 = vunpack.c.l.b16 %v1195
      %v1228 = vunpack.c.l.b16 %v1196
      %v1229 = vunpack.c.l.b16 %v1197
      %v1230 = vunpack.c.l.b16 %v1198
      %v1231 = vunpack.c.l.b16 %v1199
      %v1232 = vunpack.c.l.b16 %v1200
      %v1233 = vunpack.c.l.b16 %v1201
      %v1234 = vunpack.c.l.b16 %v1202
      %v1235 = vunpack.c.l.b16 %v1203
      %v1236 = vunpack.c.l.b16 %v1204
      %v1237 = vunpack.c.l.b16 %v1205
      %v1238 = vunpack.c.l.b16 %v1206
      %v1239 = vunpack.c.l.b16 %v1207
      %v1240 = vunpack.c.l.b16 %v1208
      %v1241 = vpack.c.b16 %v1226, %v1225
      %v1242 = vpack.c.b16 %v1228, %v1227
      %v1243 = vpack.c.b16 %v1230, %v1229
      %v1244 = vpack.c.b16 %v1232, %v1231
      %v1245 = vpack.c.b16 %v1234, %v1233
      %v1246 = vpack.c.b16 %v1236, %v1235
      %v1247 = vpack.c.b16 %v1238, %v1237
      %v1248 = vpack.c.b16 %v1240, %v1239
      %1257 = vmatpush.bf16.msra.mxu0 %v1248
      %1258 = vmatpush.bf16.msra.mxu0 %v1247
      %1259 = vmatpush.bf16.msra.mxu0 %v1246
      %1260 = vmatpush.bf16.msra.mxu0 %v1245
      %1261 = vmatpush.bf16.msra.mxu0 %v1244
      %1262 = vmatpush.bf16.msra.mxu0 %v1243
      %1263 = vmatpush.bf16.msra.mxu0 %v1242
      %1264 = vmatpush.bf16.msra.mxu0 %v1241
      %1265 = vmatmul.bf16.gmra.mxu0 %v1191
      %v1266 = vpop.f32.mrf.mxu0
      %v1267 = vadd.f32 0.0, %v1266
      %v1268 = vpop.f32.mrf.mxu0
      %1269 = vdwg.mxu0
      %v1270 = vadd.f32 %v1189, %v1267
      %s1271 = scalar_lea.vmem %s170, 832
      %v1272 = vld [vmem:[%s1271] sm:$0xf]
      %v1273 = vld [vmem:[%s1271 + $0x4] sm:$0xf]
      %v1274 = vld [vmem:[%s1271 + $0x8] sm:$0xf]
      %v1275 = vld [vmem:[%s1271 + $0xc] sm:$0xf]
      %v1276 = vld [vmem:[%s1271 + $0x10] sm:$0xf]
      %v1277 = vld [vmem:[%s1271 + $0x14] sm:$0xf]
      %v1278 = vld [vmem:[%s1271 + $0x18] sm:$0xf]
      %v1279 = vld [vmem:[%s1271 + $0x1c] sm:$0xf]
      %v1280 = vld [vmem:[%s1271 + $0x20] sm:$0xf]
      %v1281 = vld [vmem:[%s1271 + $0x24] sm:$0xf]
      %v1282 = vld [vmem:[%s1271 + $0x28] sm:$0xf]
      %v1283 = vld [vmem:[%s1271 + $0x2c] sm:$0xf]
      %v1284 = vld [vmem:[%s1271 + $0x30] sm:$0xf]
      %v1285 = vld [vmem:[%s1271 + $0x34] sm:$0xf]
      %v1286 = vld [vmem:[%s1271 + $0x38] sm:$0xf]
      %v1287 = vld [vmem:[%s1271 + $0x3c] sm:$0xf]
      %1289 = vst [vmem:[#allocation1] ss:$4 sm:$0xff] %v1191
      %v1290 = vld.sshfl [vmem:[#allocation1] sm:$0xff pattern:$0x73625140]
      %v1291 = vshrl.u32 %v1290, 16
      %v1310 = vunpack.c.l.b16 %v1272
      %v1311 = vunpack.c.l.b16 %v1273
      %v1312 = vunpack.c.l.b16 %v1274
      %v1313 = vunpack.c.l.b16 %v1275
      %v1314 = vunpack.c.l.b16 %v1276
      %v1315 = vunpack.c.l.b16 %v1277
      %v1316 = vunpack.c.l.b16 %v1278
      %v1317 = vunpack.c.l.b16 %v1279
      %v1318 = vunpack.c.l.b16 %v1280
      %v1319 = vunpack.c.l.b16 %v1281
      %v1320 = vunpack.c.l.b16 %v1282
      %v1321 = vunpack.c.l.b16 %v1283
      %v1322 = vunpack.c.l.b16 %v1284
      %v1323 = vunpack.c.l.b16 %v1285
      %v1324 = vunpack.c.l.b16 %v1286
      %v1325 = vunpack.c.l.b16 %v1287
      %v1326 = vpack.c.b16 %v1311, %v1310
      %v1327 = vpack.c.b16 %v1313, %v1312
      %v1328 = vpack.c.b16 %v1315, %v1314
      %v1329 = vpack.c.b16 %v1317, %v1316
      %v1330 = vpack.c.b16 %v1319, %v1318
      %v1331 = vpack.c.b16 %v1321, %v1320
      %v1332 = vpack.c.b16 %v1323, %v1322
      %v1333 = vpack.c.b16 %v1325, %v1324
      %1342 = vmatpush.bf16.msra.mxu0 %v1333
      %1343 = vmatpush.bf16.msra.mxu0 %v1332
      %1344 = vmatpush.bf16.msra.mxu0 %v1331
      %1345 = vmatpush.bf16.msra.mxu0 %v1330
      %1346 = vmatpush.bf16.msra.mxu0 %v1329
      %1347 = vmatpush.bf16.msra.mxu0 %v1328
      %1348 = vmatpush.bf16.msra.mxu0 %v1327
      %1349 = vmatpush.bf16.msra.mxu0 %v1326
      %1350 = vmatmul.bf16.gmra.mxu0 %v1291
      %v1351 = vpop.f32.mrf.mxu0
      %v1352 = vadd.f32 0.0, %v1351
      %v1353 = vpop.f32.mrf.mxu0
      %1354 = vdwg.mxu0
      %v1355 = vadd.f32 %v1270, %v1352
      %v1356 = vld [vmem:[%s1190] sm:$0x2]
      %s1357 = scalar_lea.vmem %s170, 896
      %v1358 = vld [vmem:[%s1357] sm:$0xf]
      %v1359 = vld [vmem:[%s1357 + $0x4] sm:$0xf]
      %v1360 = vld [vmem:[%s1357 + $0x8] sm:$0xf]
      %v1361 = vld [vmem:[%s1357 + $0xc] sm:$0xf]
      %v1362 = vld [vmem:[%s1357 + $0x10] sm:$0xf]
      %v1363 = vld [vmem:[%s1357 + $0x14] sm:$0xf]
      %v1364 = vld [vmem:[%s1357 + $0x18] sm:$0xf]
      %v1365 = vld [vmem:[%s1357 + $0x1c] sm:$0xf]
      %v1366 = vld [vmem:[%s1357 + $0x20] sm:$0xf]
      %v1367 = vld [vmem:[%s1357 + $0x24] sm:$0xf]
      %v1368 = vld [vmem:[%s1357 + $0x28] sm:$0xf]
      %v1369 = vld [vmem:[%s1357 + $0x2c] sm:$0xf]
      %v1370 = vld [vmem:[%s1357 + $0x30] sm:$0xf]
      %v1371 = vld [vmem:[%s1357 + $0x34] sm:$0xf]
      %v1372 = vld [vmem:[%s1357 + $0x38] sm:$0xf]
      %v1373 = vld [vmem:[%s1357 + $0x3c] sm:$0xf]
      %1375 = vst [vmem:[#allocation1] ss:$4 sm:$0xff] %v1356
      %v1376 = vld.sshfl [vmem:[#allocation1] sm:$0xff pattern:$0x73625140]
      %v1378 = vrot.slane %v1376, 1
      %v1396 = vunpack.c.l.b16 %v1358
      %v1397 = vunpack.c.l.b16 %v1359
      %v1398 = vunpack.c.l.b16 %v1360
      %v1399 = vunpack.c.l.b16 %v1361
      %v1400 = vunpack.c.l.b16 %v1362
      %v1401 = vunpack.c.l.b16 %v1363
      %v1402 = vunpack.c.l.b16 %v1364
      %v1403 = vunpack.c.l.b16 %v1365
      %v1404 = vunpack.c.l.b16 %v1366
      %v1405 = vunpack.c.l.b16 %v1367
      %v1406 = vunpack.c.l.b16 %v1368
      %v1407 = vunpack.c.l.b16 %v1369
      %v1408 = vunpack.c.l.b16 %v1370
      %v1409 = vunpack.c.l.b16 %v1371
      %v1410 = vunpack.c.l.b16 %v1372
      %v1411 = vunpack.c.l.b16 %v1373
      %v1412 = vpack.c.b16 %v1397, %v1396
      %v1413 = vpack.c.b16 %v1399, %v1398
      %v1414 = vpack.c.b16 %v1401, %v1400
      %v1415 = vpack.c.b16 %v1403, %v1402
      %v1416 = vpack.c.b16 %v1405, %v1404
      %v1417 = vpack.c.b16 %v1407, %v1406
      %v1418 = vpack.c.b16 %v1409, %v1408
      %v1419 = vpack.c.b16 %v1411, %v1410
      %1428 = vmatpush.bf16.msra.mxu0 %v1419
      %1429 = vmatpush.bf16.msra.mxu0 %v1418
      %1430 = vmatpush.bf16.msra.mxu0 %v1417
      %1431 = vmatpush.bf16.msra.mxu0 %v1416
      %1432 = vmatpush.bf16.msra.mxu0 %v1415
      %1433 = vmatpush.bf16.msra.mxu0 %v1414
      %1434 = vmatpush.bf16.msra.mxu0 %v1413
      %1435 = vmatpush.bf16.msra.mxu0 %v1412
      %1436 = vmatmul.bf16.gmra.mxu0 %v1378
      %v1437 = vpop.f32.mrf.mxu0
      %v1438 = vadd.f32 0.0, %v1437
      %v1439 = vpop.f32.mrf.mxu0
      %1440 = vdwg.mxu0
      %v1441 = vadd.f32 %v1355, %v1438
      %v1442 = vld [vmem:[%s1190] sm:$0x2]
      %s1443 = scalar_lea.vmem %s170, 960
      %v1444 = vld [vmem:[%s1443] sm:$0xf]
      %v1445 = vld [vmem:[%s1443 + $0x4] sm:$0xf]
      %v1446 = vld [vmem:[%s1443 + $0x8] sm:$0xf]
      %v1447 = vld [vmem:[%s1443 + $0xc] sm:$0xf]
      %v1448 = vld [vmem:[%s1443 + $0x10] sm:$0xf]
      %v1449 = vld [vmem:[%s1443 + $0x14] sm:$0xf]
      %v1450 = vld [vmem:[%s1443 + $0x18] sm:$0xf]
      %v1451 = vld [vmem:[%s1443 + $0x1c] sm:$0xf]
      %v1452 = vld [vmem:[%s1443 + $0x20] sm:$0xf]
      %v1453 = vld [vmem:[%s1443 + $0x24] sm:$0xf]
      %v1454 = vld [vmem:[%s1443 + $0x28] sm:$0xf]
      %v1455 = vld [vmem:[%s1443 + $0x2c] sm:$0xf]
      %v1456 = vld [vmem:[%s1443 + $0x30] sm:$0xf]
      %v1457 = vld [vmem:[%s1443 + $0x34] sm:$0xf]
      %v1458 = vld [vmem:[%s1443 + $0x38] sm:$0xf]
      %v1459 = vld [vmem:[%s1443 + $0x3c] sm:$0xf]
      %1461 = vst [vmem:[#allocation1] ss:$4 sm:$0xff] %v1442
      %v1462 = vld.sshfl [vmem:[#allocation1] sm:$0xff pattern:$0x73625140]
      %v1463 = vshrl.u32 %v1462, 16
      %v1465 = vrot.slane %v1463, 1
      %v1483 = vunpack.c.l.b16 %v1444
      %v1484 = vunpack.c.l.b16 %v1445
      %v1485 = vunpack.c.l.b16 %v1446
      %v1486 = vunpack.c.l.b16 %v1447
      %v1487 = vunpack.c.l.b16 %v1448
      %v1488 = vunpack.c.l.b16 %v1449
      %v1489 = vunpack.c.l.b16 %v1450
      %v1490 = vunpack.c.l.b16 %v1451
      %v1491 = vunpack.c.l.b16 %v1452
      %v1492 = vunpack.c.l.b16 %v1453
      %v1493 = vunpack.c.l.b16 %v1454
      %v1494 = vunpack.c.l.b16 %v1455
      %v1495 = vunpack.c.l.b16 %v1456
      %v1496 = vunpack.c.l.b16 %v1457
      %v1497 = vunpack.c.l.b16 %v1458
      %v1498 = vunpack.c.l.b16 %v1459
      %v1499 = vpack.c.b16 %v1484, %v1483
      %v1500 = vpack.c.b16 %v1486, %v1485
      %v1501 = vpack.c.b16 %v1488, %v1487
      %v1502 = vpack.c.b16 %v1490, %v1489
      %v1503 = vpack.c.b16 %v1492, %v1491
      %v1504 = vpack.c.b16 %v1494, %v1493
      %v1505 = vpack.c.b16 %v1496, %v1495
      %v1506 = vpack.c.b16 %v1498, %v1497
      %1515 = vmatpush.bf16.msra.mxu0 %v1506
      %1516 = vmatpush.bf16.msra.mxu0 %v1505
      %1517 = vmatpush.bf16.msra.mxu0 %v1504
      %1518 = vmatpush.bf16.msra.mxu0 %v1503
      %1519 = vmatpush.bf16.msra.mxu0 %v1502
      %1520 = vmatpush.bf16.msra.mxu0 %v1501
      %1521 = vmatpush.bf16.msra.mxu0 %v1500
      %1522 = vmatpush.bf16.msra.mxu0 %v1499
      %1523 = vmatmul.bf16.gmra.mxu0 %v1465
      %v1524 = vpop.f32.mrf.mxu0
      %v1525 = vadd.f32 0.0, %v1524
      %v1526 = vpop.f32.mrf.mxu0
      %1527 = vdwg.mxu0
      %v1528 = vadd.f32 %v1441, %v1525
      %1529 = vst [vmem:[%s176] sm:$0x1] %v1528
      %p1530 = scmp.lt.s32.totalorder %s17, 1
      %s1531 = scalar_select %p1530, %s17, 1
      %p1532 = scmp.lt.s32.totalorder %s18, 0
      %s1533 = scalar_select %p1532, %s18, 0
      %s1534 = sadd.s32 %s1533, %s1531
      %s1535 = scalar_lea.vmem %s2, %s1534
      // Predicated region
      $region29: #{discriminator_forward.11} parent=27 // pred_check
        %p1536 = pneg %p97
      $region30: #{discriminator_forward.11} parent=27 // pred_check_branch
        %1538 = sbr.rel (%p1536) target = $region32
      $region31: #{discriminator_forward.11} parent=27 // pred_region
        _
      $region32: #{discriminator_forward.11} parent=27 // pred_fallthru
        _
    $region28: #{discriminator_forward.11} parent=5 // pred_fallthru
      _
    %p1539 = scmp.le.s32.totalorder 2, %s8
    // Predicated region
    $region33: #{discriminator_forward.11} parent=5 // pred_check
      %p1540 = pneg %p1539
    $region34: #{discriminator_forward.11} parent=5 // pred_check_branch
      %1542 = sbr.rel (%p1540) target = $region36
    $region35: #{discriminator_forward.11} parent=5 // pred_region
      %s1543 = ssub.s32 %s8, 2
      // Predicated region
      $region37: #{discriminator_forward.11} parent=35 // pred_check
        %p1544 = pneg %p103
      $region38: #{discriminator_forward.11} parent=35 // pred_check_branch
        %1546 = sbr.rel (%p1544) target = $region40
      $region39: #{discriminator_forward.11} parent=35 // pred_region
        %p1547 = scmp.lt.s32.totalorder %s19, 1
        %s1548 = scalar_select %p1547, %s19, 1
        %p1549 = scmp.lt.s32.totalorder %s20, 0
        %s1550 = scalar_select %p1549, %s20, 0
        %s1551 = sadd.s32 %s1550, %s1548
        %s1552 = scalar_lea.vmem %s2, %s1551
      $region40: #{discriminator_forward.11} parent=35 // pred_fallthru
        _
    $region36: #{discriminator_forward.11} parent=5 // pred_fallthru
      _
  $region6: #{discriminator_forward.11} parent=0 // loop_footer
    %s12 = sadd.s32 1, %s8
  $region7: #{discriminator_forward.11} parent=0 // loop_footer_branch
    %7 = sbr.rel target = $region3
  $region8: #{discriminator_forward.11} parent=0 // loop_exit
    _

</llo_original>
